<compile_context>
chip_gen: v5e
topology: v5e:2x2
jax: 0.10.0
libtpu: 0.0.40
codegen_flags: <defaults>
</compile_context>

<pallas_src>
import functools

import jax
import jax.numpy as jnp
from jax import lax
from jax.experimental import pallas as pl
from jax.experimental.pallas import tpu as pltpu

EMBED_SIZE = 300          # embed_size in the reference module
HIDDEN = 128              # self.hidden_size
N_CLASSES = 6             # stand-in for len(le.classes_)
MAX_FEATURES = 2000       # reduced vocab for the synthetic test (module uses 120000);
                          # vocab size only affects the (glue) gather, not the kernel math.
HEAD_HID = 64             # Linear(4H -> 64)
HEAD_HID_PAD = 128        # lane-dense padded width of the hidden head layer
HEAD_PAD = 128            # lane-dense padded width of the classifier-head output


def _detect_tpu():
    """Generation-aware VMEM capacity + chip flags (trace-time, best effort)."""
    kind = ""
    try:
        kind = jax.devices()[0].device_kind.lower()
    except Exception:
        pass
    try:
        vmem = int(pltpu.get_tpu_info().vmem_capacity_bytes)
    except Exception:
        vmem = (64 if "v7" in kind else 128) * 1024 * 1024
    is_v7 = "v7" in kind
    is_v5e = ("v5" in kind) and ("v5p" not in kind)
    return vmem, is_v7, is_v5e


VMEM_CAP_BYTES, IS_V7X, IS_V5E = _detect_tpu()
VMEM_LIMIT_BYTES = (VMEM_CAP_BYTES * 3) // 4            # 48 MiB v7x, 96 MiB v5e/v6e
TILE_BUDGET_BYTES = VMEM_CAP_BYTES // 2 - 2 * 1024 * 1024   # leave room for resident weights
# v6e/v7x MXU is 256-wide in K -> fuse both directions' recurrent matmuls into
# one block-diagonal K=256 pass.  v5e MXU is 128-wide -> keep two K=128 dots.
FUSE_RECURRENT = not IS_V5E


def bilstm_kernel(x_ref,                 # (T, Bt, E)        bf16 embeddings, time-major batch tile
                  wih_ref,               # (E, 8H)           bf16 [fwd|bwd], gate order [i,f,g,o]
                  b_ref,                 # (1, 8H)           f32 fused biases (b_ih+b_hh, fwd|bwd)
                  whh_ref,               # (2H, 8H)          bf16 block-diag [whh_f 0; 0 whh_b]
                  w1_ref, b1_ref,        # (4H, 128),(1,128) f32, cols 64:128 zero
                  w2_ref, b2_ref,        # (128, HEAD_PAD),(1, HEAD_PAD) f32, zero-padded
                  out_ref,               # (Bt, HEAD_PAD)    f32
                  xg_scr,                # (T, Bt, 8H)       f32 fused gate preacts [fwd|bwd]
                  conc_scr,              # (Bt, 4H)          f32 pooled features / accumulators
                  *, fuse_rec):
    T, Bt, E = x_ref.shape
    H = HIDDEN
    fourH = 4 * H

    # --- Phase 1: one fused bf16 MXU pass over x for BOTH directions, stored
    #     directly into the single preact scratch (no temporary, no split copy).
    x2d = x_ref[...].reshape(T * Bt, E)
    xg_scr[...] = (jnp.dot(x2d, wih_ref[...], preferred_element_type=jnp.float32)
                   + b_ref[...]).reshape(T, Bt, 2 * fourH)

    def sig(v):
        # tanh-form sigmoid: one EUP push instead of exp + reciprocal.
        return 0.5 * jnp.tanh(0.5 * v) + 0.5

    def gates(g, c):
        # PyTorch LSTM cell, gate order [i, f, g, o]; all gate math in f32.
        i = sig(g[:, 0:H])
        f = sig(g[:, H:2 * H])
        gg = jnp.tanh(g[:, 2 * H:3 * H])
        o = sig(g[:, 3 * H:4 * H])
        c_new = f * c + i * gg
        h_new = o * jnp.tanh(c_new)
        return h_new, c_new

    # Pooling accumulators live in the pooled-feature scratch so the loop carry
    # stays at 4 small (Bt, H) arrays.
    conc_scr[:, 0:2 * H] = jnp.zeros((Bt, 2 * H), jnp.float32)
    conc_scr[:, 2 * H:4 * H] = jnp.full((Bt, 2 * H), -jnp.inf, jnp.float32)

    # --- Phase 2: fwd + bwd recurrent chains interleaved in ONE loop. ----------
    def body(s, carry):
        hf, cf, hb, cb = carry
        t_b = T - 1 - s
        gxf = xg_scr[s, :, 0:fourH]                      # fwd preacts, lanes 0:512
        gxb = xg_scr[t_b, :, fourH:2 * fourH]            # bwd preacts, lanes 512:1024
        if fuse_rec:
            # One K=2H=256 bf16 pass for both directions via block-diag weight.
            h_cat = jnp.concatenate([hf, hb], axis=1).astype(jnp.bfloat16)
            rec = jnp.dot(h_cat, whh_ref[...], preferred_element_type=jnp.float32)
            gf = gxf + rec[:, 0:fourH]
            gb = gxb + rec[:, fourH:2 * fourH]
        else:
            # v5e path: two K=128 bf16 matmuls (MXU is 128-wide there).
            gf = gxf + jnp.dot(hf.astype(jnp.bfloat16), whh_ref[0:H, 0:fourH],
                               preferred_element_type=jnp.float32)
            gb = gxb + jnp.dot(hb.astype(jnp.bfloat16), whh_ref[H:2 * H, fourH:2 * fourH],
                               preferred_element_type=jnp.float32)
        hf, cf = gates(gf, cf)
        hb, cb = gates(gb, cb)
        # In-place pooled accumulation at static 128-lane offsets.
        conc_scr[:, 0:H] = conc_scr[:, 0:H] + hf
        conc_scr[:, H:2 * H] = conc_scr[:, H:2 * H] + hb
        conc_scr[:, 2 * H:3 * H] = jnp.maximum(conc_scr[:, 2 * H:3 * H], hf)
        conc_scr[:, 3 * H:4 * H] = jnp.maximum(conc_scr[:, 3 * H:4 * H], hb)
        return hf, cf, hb, cb

    if T <= 16:
        unroll = T
    elif T % 4 == 0:
        unroll = 4
    elif T % 2 == 0:
        unroll = 2
    else:
        unroll = 1
    zeros = jnp.zeros((Bt, H), jnp.float32)
    _ = lax.fori_loop(0, T, body, (zeros, zeros, zeros, zeros), unroll=unroll)

    # --- Phase 3: finish pooling + lane-dense classifier head. -----------------
    conc_scr[:, 0:2 * H] = conc_scr[:, 0:2 * H] * jnp.float32(1.0 / T)
    hid = jnp.maximum(
        jnp.dot(conc_scr[...], w1_ref[...], preferred_element_type=jnp.float32)
        + b1_ref[...], 0.0)
    # TODO(synk): nn.Dropout(0.5) implemented as identity (eval/inference semantics).
    out_ref[...] = (jnp.dot(hid, w2_ref[...], preferred_element_type=jnp.float32)
                    + b2_ref[...])


def _pick_batch_tile(B_pad8, T):
    """Largest batch tile whose per-tile working set fits the generation-aware
    VMEM tile budget.  Accounts for the E=300->384 lane padding of the bf16
    input tile (double-buffered by BlockSpec) and the (T, Bt, 8H) f32 preact
    scratch."""
    E_pad = ((EMBED_SIZE + 127) // 128) * 128                 # 300 -> 384 lanes
    per_row = T * (E_pad * 2 * 2 + 8 * HIDDEN * 4)            # bytes per batch row
    bt = 8
    for cand in (1024, 512, 256, 128, 64, 32, 16, 8):
        if cand * per_row <= TILE_BUDGET_BYTES:
            bt = cand
            break
    bt = min(bt, B_pad8)
    # v7x has 2 TensorCores: make the "parallel" batch axis span both whenever
    # the batch is big enough to split.
    if IS_V7X and B_pad8 >= 16 and bt >= B_pad8:
        bt = ((B_pad8 // 2 + 7) // 8) * 8
    return bt


@jax.jit
def bilstm_forward(tokens, params):
    B, T = tokens.shape
    H = HIDDEN

    B_pad8 = ((B + 7) // 8) * 8
    bt = _pick_batch_tile(B_pad8, T)
    n_tiles = -(-B_pad8 // bt)
    B_pad = n_tiles * bt
    if B_pad != B:
        tokens = jnp.pad(tokens, ((0, B_pad - B), (0, 0)))    # pad with token id 0

    # Glue: embedding gather directly in time-major layout (transpose the tiny
    # int32 token matrix, not the (B, T, 300) activation).
    # TODO(synk): could move the gather in-kernel via scalar-prefetch row DMA
    # to avoid the HBM round-trip of the embedded activation entirely.
    x = jnp.take(params["embedding"], tokens.T, axis=0).astype(jnp.bfloat16)  # (T,B_pad,E)

    # Fuse both directions' input projections into one (E, 8H) bf16 weight.
    wih_cat = jnp.concatenate(
        [params["wih_f"], params["wih_b"]], axis=1).astype(jnp.bfloat16)      # (E, 8H)
    b_cat = jnp.concatenate([params["b_f"], params["b_b"]], axis=1)           # (1, 8H) f32

    # Block-diagonal bf16 recurrent weight: [whh_f 0; 0 whh_b] -> (2H, 8H).
    whh_bd = jnp.zeros((2 * H, 8 * H), jnp.float32)
    whh_bd = whh_bd.at[:H, :4 * H].set(params["whh_f"])
    whh_bd = whh_bd.at[H:, 4 * H:].set(params["whh_b"])
    whh_bd = whh_bd.astype(jnp.bfloat16)

    # Lane-dense classifier head: pad hidden 64 -> 128 and classes 6 -> 128.
    w1p = jnp.zeros((4 * H, HEAD_HID_PAD), jnp.float32).at[:, :HEAD_HID].set(params["w1"])
    b1p = jnp.zeros((1, HEAD_HID_PAD), jnp.float32).at[:, :HEAD_HID].set(params["b1"])
    w2p = jnp.zeros((HEAD_HID_PAD, HEAD_PAD), jnp.float32).at[:HEAD_HID, :N_CLASSES].set(
        params["w2"])
    b2p = jnp.zeros((1, HEAD_PAD), jnp.float32).at[:, :N_CLASSES].set(params["b2"])

    kernel = functools.partial(bilstm_kernel, fuse_rec=FUSE_RECURRENT)

    out_pad = pl.pallas_call(
        kernel,
        out_shape=jax.ShapeDtypeStruct((B_pad, HEAD_PAD), jnp.float32),
        grid=(n_tiles,),
        in_specs=[
            pl.BlockSpec((T, bt, EMBED_SIZE), lambda i: (0, i, 0)),     # x (batch-tiled)
            pl.BlockSpec((EMBED_SIZE, 8 * H), lambda i: (0, 0)),        # wih_cat (resident)
            pl.BlockSpec((1, 8 * H), lambda i: (0, 0)),                 # b_cat
            pl.BlockSpec((2 * H, 8 * H), lambda i: (0, 0)),             # whh block-diag (bf16)
            pl.BlockSpec((4 * H, HEAD_HID_PAD), lambda i: (0, 0)),      # w1 (padded)
            pl.BlockSpec((1, HEAD_HID_PAD), lambda i: (0, 0)),          # b1 (padded)
            pl.BlockSpec((HEAD_HID_PAD, HEAD_PAD), lambda i: (0, 0)),   # w2 (padded)
            pl.BlockSpec((1, HEAD_PAD), lambda i: (0, 0)),              # b2 (padded)
        ],
        out_specs=pl.BlockSpec((bt, HEAD_PAD), lambda i: (i, 0)),
        scratch_shapes=[
            pltpu.VMEM((T, bt, 8 * H), jnp.float32),   # fused fwd|bwd gate preacts
            pltpu.VMEM((bt, 4 * H), jnp.float32),      # pooled features / accumulators
        ],
        compiler_params=pltpu.CompilerParams(
            dimension_semantics=("parallel",),
            vmem_limit_bytes=VMEM_LIMIT_BYTES),
    )(x, wih_cat, b_cat, whh_bd, w1p, b1p, w2p, b2p)

    return out_pad[:B, :N_CLASSES]


def init_params(key):
    H, E = HIDDEN, EMBED_SIZE
    ks = jax.random.split(key, 14)
    u = lambda k, shape, scale: jax.random.uniform(k, shape, jnp.float32, -scale, scale)
    k_lstm = 1.0 / jnp.sqrt(H)
    return {
        "embedding": jax.random.normal(ks[0], (MAX_FEATURES, E), jnp.float32) * 0.1,
        # weight_ih (4H,E)->(E,4H), weight_hh (4H,H)->(H,4H), b = b_ih + b_hh.
        "wih_f": u(ks[1], (E, 4 * H), k_lstm),
        "whh_f": u(ks[2], (H, 4 * H), k_lstm),
        "b_f":   u(ks[3], (1, 4 * H), k_lstm) + u(ks[4], (1, 4 * H), k_lstm),
        "wih_b": u(ks[5], (E, 4 * H), k_lstm),
        "whh_b": u(ks[6], (H, 4 * H), k_lstm),
        "b_b":   u(ks[7], (1, 4 * H), k_lstm) + u(ks[8], (1, 4 * H), k_lstm),
        # Linear(4H -> 64), Linear(64 -> C), weights pre-transposed to (in, out).
        "w1": u(ks[9], (4 * H, 64), 1.0 / jnp.sqrt(4 * H)),
        "b1": u(ks[10], (1, 64), 1.0 / jnp.sqrt(4 * H)),
        "w2": u(ks[11], (64, N_CLASSES), 1.0 / jnp.sqrt(64)),
        "b2": u(ks[12], (1, N_CLASSES), 1.0 / jnp.sqrt(64)),
    }


def reference_forward(tokens, params):
    """Pure-JAX f32 reference matching torch semantics (eval mode)."""
    H = HIDDEN
    emb = jnp.take(params["embedding"], tokens, axis=0)      # (B, T, E)
    B, T, _ = emb.shape
    x = jnp.transpose(emb, (1, 0, 2))                        # (T, B, E)

    def run_dir(x_seq, wih, whh, b):
        def step(carry, x_t):
            h, c = carry
            g = x_t @ wih + h @ whh + b
            i = jax.nn.sigmoid(g[:, :H])
            f = jax.nn.sigmoid(g[:, H:2 * H])
            gg = jnp.tanh(g[:, 2 * H:3 * H])
            o = jax.nn.sigmoid(g[:, 3 * H:])
            c = f * c + i * gg
            h = o * jnp.tanh(c)
            return (h, c), h
        init = (jnp.zeros((B, H), jnp.float32), jnp.zeros((B, H), jnp.float32))
        _, hs = lax.scan(step, init, x_seq)
        return hs                                            # (T, B, H)

    h_f = run_dir(x, params["wih_f"], params["whh_f"], params["b_f"][0])
    h_b = run_dir(x[::-1], params["wih_b"], params["whh_b"], params["b_b"][0])[::-1]
    h_lstm = jnp.concatenate([h_f, h_b], axis=-1)            # (T, B, 2H)
    h_lstm = jnp.transpose(h_lstm, (1, 0, 2))                # (B, T, 2H)
    avg_pool = jnp.mean(h_lstm, axis=1)
    max_pool = jnp.max(h_lstm, axis=1)
    conc = jnp.concatenate([avg_pool, max_pool], axis=1)     # (B, 4H)
    hid = jnp.maximum(conc @ params["w1"] + params["b1"], 0.0)
    return hid @ params["w2"] + params["b2"]


if __name__ == "__main__":
    key = jax.random.PRNGKey(0)
    k_tok, k_par = jax.random.split(key)

    B, T = 2, 8
    tokens = jax.random.randint(k_tok, (B, T), 0, MAX_FEATURES, dtype=jnp.int32)
    params = init_params(k_par)

    out = bilstm_forward(tokens, params)
    out = jax.block_until_ready(out)

    ref = reference_forward(tokens, params)
    max_diff = float(jnp.max(jnp.abs(out - ref)))
    assert out.shape == (B, N_CLASSES), out.shape
    # bf16 is used for the input projection AND the recurrent matmul operands
    # (f32 accumulation, f32 gate math); observed error stays well below 1e-2
    # at these magnitudes — tolerance left slightly looser for safety.
    assert max_diff < 2e-2, f"mismatch vs reference: {max_diff}"

    print("KERNEL_OK")
</pallas_src>

<mosaic_0001>
module attributes {stable_mosaic.version = 11 : i64} {
  func.func @bilstm_kernel(%arg0: i32, %arg1: memref<8x8x300xbf16, #tpu.memory_space<vmem>>, %arg2: memref<300x1024xbf16, #tpu.memory_space<vmem>>, %arg3: memref<1x1024xf32, #tpu.memory_space<vmem>>, %arg4: memref<256x1024xbf16, #tpu.memory_space<vmem>>, %arg5: memref<512x128xf32, #tpu.memory_space<vmem>>, %arg6: memref<1x128xf32, #tpu.memory_space<vmem>>, %arg7: memref<128x128xf32, #tpu.memory_space<vmem>>, %arg8: memref<1x128xf32, #tpu.memory_space<vmem>>, %arg9: memref<8x128xf32, #tpu.memory_space<vmem>>, %arg10: memref<8x8x1024xf32, #tpu.memory_space<vmem>>, %arg11: memref<8x512xf32, #tpu.memory_space<vmem>>) attributes {dimension_semantics = [#tpu.dimension_semantics<parallel>], iteration_bounds = array<i64: 1>, scalar_prefetch = 0 : i64, scratch_operands = 2 : i64, tpu.core_type = #tpu.core_type<tc>, window_params = [{transform_indices = @transform_0, window_bounds = array<i64: 8, 8, 300>}, {pipeline_mode = #tpu.pipeline_mode<synchronous>, transform_indices = @transform_1, window_bounds = array<i64: 300, 1024>}, {pipeline_mode = #tpu.pipeline_mode<synchronous>, transform_indices = @transform_2, window_bounds = array<i64: 1, 1024>}, {pipeline_mode = #tpu.pipeline_mode<synchronous>, transform_indices = @transform_3, window_bounds = array<i64: 256, 1024>}, {pipeline_mode = #tpu.pipeline_mode<synchronous>, transform_indices = @transform_4, window_bounds = array<i64: 512, 128>}, {pipeline_mode = #tpu.pipeline_mode<synchronous>, transform_indices = @transform_5, window_bounds = array<i64: 1, 128>}, {pipeline_mode = #tpu.pipeline_mode<synchronous>, transform_indices = @transform_6, window_bounds = array<i64: 128, 128>}, {pipeline_mode = #tpu.pipeline_mode<synchronous>, transform_indices = @transform_7, window_bounds = array<i64: 1, 128>}, {transform_indices = @transform_8, window_bounds = array<i64: 8, 128>}]} {
    %c0 = arith.constant 0 : index
    %c0_0 = arith.constant 0 : index
    %c0_1 = arith.constant 0 : index
    %0 = vector.load %arg1[%c0, %c0_0, %c0_1] : memref<8x8x300xbf16, #tpu.memory_space<vmem>>, vector<8x8x300xbf16>
    %1 = vector.shape_cast %0 : vector<8x8x300xbf16> to vector<64x300xbf16>
    %c0_2 = arith.constant 0 : index
    %c0_3 = arith.constant 0 : index
    %2 = vector.load %arg2[%c0_2, %c0_3] : memref<300x1024xbf16, #tpu.memory_space<vmem>>, vector<300x1024xbf16>
    %cst = arith.constant dense<0.000000e+00> : vector<64x1024xf32>
    %3 = tpu.matmul %1, %2, %cst {dimension_numbers = #tpu.dot_dimension_numbers<[1], [0], [0], [1], [0, 0, 1, 1], [], []>} : vector<64x300xbf16>, vector<300x1024xbf16>, vector<64x1024xf32> -> vector<64x1024xf32>
    %c0_4 = arith.constant 0 : index
    %c0_5 = arith.constant 0 : index
    %4 = vector.load %arg3[%c0_4, %c0_5] : memref<1x1024xf32, #tpu.memory_space<vmem>>, vector<1x1024xf32>
    %5 = vector.broadcast %4 : vector<1x1024xf32> to vector<64x1024xf32>
    %6 = arith.addf %3, %5 : vector<64x1024xf32>
    %7 = vector.shape_cast %6 : vector<64x1024xf32> to vector<8x8x1024xf32>
    %c0_6 = arith.constant 0 : index
    %c0_7 = arith.constant 0 : index
    %c0_8 = arith.constant 0 : index
    %8 = vector.load %arg10[%c0_6, %c0_7, %c0_8] : memref<8x8x1024xf32, #tpu.memory_space<vmem>>, vector<8x8x1024xf32>
    tpu.vector_store %arg10[%c0_6, %c0_7, %c0_8], %7 {strides = array<i32>} : memref<8x8x1024xf32, #tpu.memory_space<vmem>>, vector<8x8x1024xf32>,
    %cst_9 = arith.constant 0.000000e+00 : f32
    %9 = vector.broadcast %cst_9 : f32 to vector<8x256xf32>
    %c0_10 = arith.constant 0 : index
    %c0_11 = arith.constant 0 : index
    %10 = vector.load %arg11[%c0_10, %c0_11] : memref<8x512xf32, #tpu.memory_space<vmem>>, vector<8x256xf32>
    tpu.vector_store %arg11[%c0_10, %c0_11], %9 {strides = array<i32>} : memref<8x512xf32, #tpu.memory_space<vmem>>, vector<8x256xf32>,
    %cst_12 = arith.constant 0xFF800000 : f32
    %11 = vector.broadcast %cst_12 : f32 to vector<8x256xf32>
    %c0_13 = arith.constant 0 : index
    %c256 = arith.constant 256 : index
    %12 = vector.load %arg11[%c0_13, %c256] : memref<8x512xf32, #tpu.memory_space<vmem>>, vector<8x256xf32>
    tpu.vector_store %arg11[%c0_13, %c256], %11 {strides = array<i32>} : memref<8x512xf32, #tpu.memory_space<vmem>>, vector<8x256xf32>,
    %cst_14 = arith.constant 0.000000e+00 : f32
    %13 = vector.broadcast %cst_14 : f32 to vector<8x128xf32>
    %c0_i32 = arith.constant 0 : i32
    %c7_i32 = arith.constant 7 : i32
    %14 = arith.subi %c7_i32, %c0_i32 : i32
    %15 = arith.index_cast %c0_i32 : i32 to index
    %c0_15 = arith.constant 0 : index
    %c0_16 = arith.constant 0 : index
    %16 = vector.load %arg10[%15, %c0_15, %c0_16] : memref<8x8x1024xf32, #tpu.memory_space<vmem>>, vector<1x8x512xf32>
    %17 = vector.shape_cast %16 : vector<1x8x512xf32> to vector<8x512xf32>
    %18 = arith.index_cast %14 : i32 to index
    %c0_17 = arith.constant 0 : index
    %c512 = arith.constant 512 : index
    %19 = vector.load %arg10[%18, %c0_17, %c512] : memref<8x8x1024xf32, #tpu.memory_space<vmem>>, vector<1x8x512xf32>
    %20 = vector.shape_cast %19 : vector<1x8x512xf32> to vector<8x512xf32>
    %21 = tpu.concatenate %13, %13 in 1 : vector<8x128xf32>, vector<8x128xf32> -> vector<8x256xf32>
    %22 = arith.truncf %21 : vector<8x256xf32> to vector<8x256xbf16>
    %c0_18 = arith.constant 0 : index
    %c0_19 = arith.constant 0 : index
    %23 = vector.load %arg4[%c0_18, %c0_19] : memref<256x1024xbf16, #tpu.memory_space<vmem>>, vector<256x1024xbf16>
    %cst_20 = arith.constant dense<0.000000e+00> : vector<8x1024xf32>
    %24 = tpu.matmul %22, %23, %cst_20 {dimension_numbers = #tpu.dot_dimension_numbers<[1], [0], [0], [1], [0, 0, 1, 1], [], []>} : vector<8x256xbf16>, vector<256x1024xbf16>, vector<8x1024xf32> -> vector<8x1024xf32>
    %25 = vector.extract_strided_slice %24 {offsets = [0, 0], sizes = [8, 512], strides = [1, 1]} : vector<8x1024xf32> to vector<8x512xf32>
    %26 = arith.addf %17, %25 : vector<8x512xf32>
    %27 = vector.extract_strided_slice %24 {offsets = [0, 512], sizes = [8, 512], strides = [1, 1]} : vector<8x1024xf32> to vector<8x512xf32>
    %28 = arith.addf %20, %27 : vector<8x512xf32>
    %29 = vector.extract_strided_slice %26 {offsets = [0, 0], sizes = [8, 128], strides = [1, 1]} : vector<8x512xf32> to vector<8x128xf32>
    %cst_21 = arith.constant 5.000000e-01 : f32
    %30 = vector.broadcast %cst_21 : f32 to vector<8x128xf32>
    %31 = arith.mulf %30, %29 : vector<8x128xf32>
    %32 = math.tanh %31 : vector<8x128xf32>
    %cst_22 = arith.constant 5.000000e-01 : f32
    %33 = vector.broadcast %cst_22 : f32 to vector<8x128xf32>
    %34 = arith.mulf %33, %32 : vector<8x128xf32>
    %cst_23 = arith.constant 5.000000e-01 : f32
    %35 = vector.broadcast %cst_23 : f32 to vector<8x128xf32>
    %36 = arith.addf %34, %35 : vector<8x128xf32>
    %37 = vector.extract_strided_slice %26 {offsets = [0, 128], sizes = [8, 128], strides = [1, 1]} : vector<8x512xf32> to vector<8x128xf32>
    %cst_24 = arith.constant 5.000000e-01 : f32
    %38 = vector.broadcast %cst_24 : f32 to vector<8x128xf32>
    %39 = arith.mulf %38, %37 : vector<8x128xf32>
    %40 = math.tanh %39 : vector<8x128xf32>
    %cst_25 = arith.constant 5.000000e-01 : f32
    %41 = vector.broadcast %cst_25 : f32 to vector<8x128xf32>
    %42 = arith.mulf %41, %40 : vector<8x128xf32>
    %cst_26 = arith.constant 5.000000e-01 : f32
    %43 = vector.broadcast %cst_26 : f32 to vector<8x128xf32>
    %44 = arith.addf %42, %43 : vector<8x128xf32>
    %45 = vector.extract_strided_slice %26 {offsets = [0, 256], sizes = [8, 128], strides = [1, 1]} : vector<8x512xf32> to vector<8x128xf32>
    %46 = math.tanh %45 : vector<8x128xf32>
    %47 = vector.extract_strided_slice %26 {offsets = [0, 384], sizes = [8, 128], strides = [1, 1]} : vector<8x512xf32> to vector<8x128xf32>
    %cst_27 = arith.constant 5.000000e-01 : f32
    %48 = vector.broadcast %cst_27 : f32 to vector<8x128xf32>
    %49 = arith.mulf %48, %47 : vector<8x128xf32>
    %50 = math.tanh %49 : vector<8x128xf32>
    %cst_28 = arith.constant 5.000000e-01 : f32
    %51 = vector.broadcast %cst_28 : f32 to vector<8x128xf32>
    %52 = arith.mulf %51, %50 : vector<8x128xf32>
    %cst_29 = arith.constant 5.000000e-01 : f32
    %53 = vector.broadcast %cst_29 : f32 to vector<8x128xf32>
    %54 = arith.addf %52, %53 : vector<8x128xf32>
    %55 = arith.mulf %44, %13 : vector<8x128xf32>
    %56 = arith.mulf %36, %46 : vector<8x128xf32>
    %57 = arith.addf %55, %56 : vector<8x128xf32>
    %58 = math.tanh %57 : vector<8x128xf32>
    %59 = arith.mulf %54, %58 : vector<8x128xf32>
    %60 = vector.extract_strided_slice %28 {offsets = [0, 0], sizes = [8, 128], strides = [1, 1]} : vector<8x512xf32> to vector<8x128xf32>
    %cst_30 = arith.constant 5.000000e-01 : f32
    %61 = vector.broadcast %cst_30 : f32 to vector<8x128xf32>
    %62 = arith.mulf %61, %60 : vector<8x128xf32>
    %63 = math.tanh %62 : vector<8x128xf32>
    %cst_31 = arith.constant 5.000000e-01 : f32
    %64 = vector.broadcast %cst_31 : f32 to vector<8x128xf32>
    %65 = arith.mulf %64, %63 : vector<8x128xf32>
    %cst_32 = arith.constant 5.000000e-01 : f32
    %66 = vector.broadcast %cst_32 : f32 to vector<8x128xf32>
    %67 = arith.addf %65, %66 : vector<8x128xf32>
    %68 = vector.extract_strided_slice %28 {offsets = [0, 128], sizes = [8, 128], strides = [1, 1]} : vector<8x512xf32> to vector<8x128xf32>
    %cst_33 = arith.constant 5.000000e-01 : f32
    %69 = vector.broadcast %cst_33 : f32 to vector<8x128xf32>
    %70 = arith.mulf %69, %68 : vector<8x128xf32>
    %71 = math.tanh %70 : vector<8x128xf32>
    %cst_34 = arith.constant 5.000000e-01 : f32
    %72 = vector.broadcast %cst_34 : f32 to vector<8x128xf32>
    %73 = arith.mulf %72, %71 : vector<8x128xf32>
    %cst_35 = arith.constant 5.000000e-01 : f32
    %74 = vector.broadcast %cst_35 : f32 to vector<8x128xf32>
    %75 = arith.addf %73, %74 : vector<8x128xf32>
    %76 = vector.extract_strided_slice %28 {offsets = [0, 256], sizes = [8, 128], strides = [1, 1]} : vector<8x512xf32> to vector<8x128xf32>
    %77 = math.tanh %76 : vector<8x128xf32>
    %78 = vector.extract_strided_slice %28 {offsets = [0, 384], sizes = [8, 128], strides = [1, 1]} : vector<8x512xf32> to vector<8x128xf32>
    %cst_36 = arith.constant 5.000000e-01 : f32
    %79 = vector.broadcast %cst_36 : f32 to vector<8x128xf32>
    %80 = arith.mulf %79, %78 : vector<8x128xf32>
    %81 = math.tanh %80 : vector<8x128xf32>
    %cst_37 = arith.constant 5.000000e-01 : f32
    %82 = vector.broadcast %cst_37 : f32 to vector<8x128xf32>
    %83 = arith.mulf %82, %81 : vector<8x128xf32>
    %cst_38 = arith.constant 5.000000e-01 : f32
    %84 = vector.broadcast %cst_38 : f32 to vector<8x128xf32>
    %85 = arith.addf %83, %84 : vector<8x128xf32>
    %86 = arith.mulf %75, %13 : vector<8x128xf32>
    %87 = arith.mulf %67, %77 : vector<8x128xf32>
    %88 = arith.addf %86, %87 : vector<8x128xf32>
    %89 = math.tanh %88 : vector<8x128xf32>
    %90 = arith.mulf %85, %89 : vector<8x128xf32>
    %c0_39 = arith.constant 0 : index
    %c0_40 = arith.constant 0 : index
    %91 = vector.load %arg11[%c0_39, %c0_40] : memref<8x512xf32, #tpu.memory_space<vmem>>, vector<8x128xf32>
    %92 = arith.addf %91, %59 : vector<8x128xf32>
    %c0_41 = arith.constant 0 : index
    %c0_42 = arith.constant 0 : index
    %93 = vector.load %arg11[%c0_41, %c0_42] : memref<8x512xf32, #tpu.memory_space<vmem>>, vector<8x128xf32>
    tpu.vector_store %arg11[%c0_41, %c0_42], %92 {strides = array<i32>} : memref<8x512xf32, #tpu.memory_space<vmem>>, vector<8x128xf32>,
    %c0_43 = arith.constant 0 : index
    %c128 = arith.constant 128 : index
    %94 = vector.load %arg11[%c0_43, %c128] : memref<8x512xf32, #tpu.memory_space<vmem>>, vector<8x128xf32>
    %95 = arith.addf %94, %90 : vector<8x128xf32>
    %c0_44 = arith.constant 0 : index
    %c128_45 = arith.constant 128 : index
    %96 = vector.load %arg11[%c0_44, %c128_45] : memref<8x512xf32, #tpu.memory_space<vmem>>, vector<8x128xf32>
    tpu.vector_store %arg11[%c0_44, %c128_45], %95 {strides = array<i32>} : memref<8x512xf32, #tpu.memory_space<vmem>>, vector<8x128xf32>,
    %c0_46 = arith.constant 0 : index
    %c256_47 = arith.constant 256 : index
    %97 = vector.load %arg11[%c0_46, %c256_47] : memref<8x512xf32, #tpu.memory_space<vmem>>, vector<8x128xf32>
    %98 = arith.maximumf %97, %59 : vector<8x128xf32>
    %c0_48 = arith.constant 0 : index
    %c256_49 = arith.constant 256 : index
    %99 = vector.load %arg11[%c0_48, %c256_49] : memref<8x512xf32, #tpu.memory_space<vmem>>, vector<8x128xf32>
    tpu.vector_store %arg11[%c0_48, %c256_49], %98 {strides = array<i32>} : memref<8x512xf32, #tpu.memory_space<vmem>>, vector<8x128xf32>,
    %c0_50 = arith.constant 0 : index
    %c384 = arith.constant 384 : index
    %100 = vector.load %arg11[%c0_50, %c384] : memref<8x512xf32, #tpu.memory_space<vmem>>, vector<8x128xf32>
    %101 = arith.maximumf %100, %90 : vector<8x128xf32>
    %c0_51 = arith.constant 0 : index
    %c384_52 = arith.constant 384 : index
    %102 = vector.load %arg11[%c0_51, %c384_52] : memref<8x512xf32, #tpu.memory_space<vmem>>, vector<8x128xf32>
    tpu.vector_store %arg11[%c0_51, %c384_52], %101 {strides = array<i32>} : memref<8x512xf32, #tpu.memory_space<vmem>>, vector<8x128xf32>,
    %c1_i32 = arith.constant 1 : i32
    %c7_i32_53 = arith.constant 7 : i32
    %103 = arith.subi %c7_i32_53, %c1_i32 : i32
    %104 = arith.index_cast %c1_i32 : i32 to index
    %c0_54 = arith.constant 0 : index
    %c0_55 = arith.constant 0 : index
    %105 = vector.load %arg10[%104, %c0_54, %c0_55] : memref<8x8x1024xf32, #tpu.memory_space<vmem>>, vector<1x8x512xf32>
    %106 = vector.shape_cast %105 : vector<1x8x512xf32> to vector<8x512xf32>
    %107 = arith.index_cast %103 : i32 to index
    %c0_56 = arith.constant 0 : index
    %c512_57 = arith.constant 512 : index
    %108 = vector.load %arg10[%107, %c0_56, %c512_57] : memref<8x8x1024xf32, #tpu.memory_space<vmem>>, vector<1x8x512xf32>
    %109 = vector.shape_cast %108 : vector<1x8x512xf32> to vector<8x512xf32>
    %110 = tpu.concatenate %59, %90 in 1 : vector<8x128xf32>, vector<8x128xf32> -> vector<8x256xf32>
    %111 = arith.truncf %110 : vector<8x256xf32> to vector<8x256xbf16>
    %c0_58 = arith.constant 0 : index
    %c0_59 = arith.constant 0 : index
    %112 = vector.load %arg4[%c0_58, %c0_59] : memref<256x1024xbf16, #tpu.memory_space<vmem>>, vector<256x1024xbf16>
    %cst_60 = arith.constant dense<0.000000e+00> : vector<8x1024xf32>
    %113 = tpu.matmul %111, %112, %cst_60 {dimension_numbers = #tpu.dot_dimension_numbers<[1], [0], [0], [1], [0, 0, 1, 1], [], []>} : vector<8x256xbf16>, vector<256x1024xbf16>, vector<8x1024xf32> -> vector<8x1024xf32>
    %114 = vector.extract_strided_slice %113 {offsets = [0, 0], sizes = [8, 512], strides = [1, 1]} : vector<8x1024xf32> to vector<8x512xf32>
    %115 = arith.addf %106, %114 : vector<8x512xf32>
    %116 = vector.extract_strided_slice %113 {offsets = [0, 512], sizes = [8, 512], strides = [1, 1]} : vector<8x1024xf32> to vector<8x512xf32>
    %117 = arith.addf %109, %116 : vector<8x512xf32>
    %118 = vector.extract_strided_slice %115 {offsets = [0, 0], sizes = [8, 128], strides = [1, 1]} : vector<8x512xf32> to vector<8x128xf32>
    %cst_61 = arith.constant 5.000000e-01 : f32
    %119 = vector.broadcast %cst_61 : f32 to vector<8x128xf32>
    %120 = arith.mulf %119, %118 : vector<8x128xf32>
    %121 = math.tanh %120 : vector<8x128xf32>
    %cst_62 = arith.constant 5.000000e-01 : f32
    %122 = vector.broadcast %cst_62 : f32 to vector<8x128xf32>
    %123 = arith.mulf %122, %121 : vector<8x128xf32>
    %cst_63 = arith.constant 5.000000e-01 : f32
    %124 = vector.broadcast %cst_63 : f32 to vector<8x128xf32>
    %125 = arith.addf %123, %124 : vector<8x128xf32>
    %126 = vector.extract_strided_slice %115 {offsets = [0, 128], sizes = [8, 128], strides = [1, 1]} : vector<8x512xf32> to vector<8x128xf32>
    %cst_64 = arith.constant 5.000000e-01 : f32
    %127 = vector.broadcast %cst_64 : f32 to vector<8x128xf32>
    %128 = arith.mulf %127, %126 : vector<8x128xf32>
    %129 = math.tanh %128 : vector<8x128xf32>
    %cst_65 = arith.constant 5.000000e-01 : f32
    %130 = vector.broadcast %cst_65 : f32 to vector<8x128xf32>
    %131 = arith.mulf %130, %129 : vector<8x128xf32>
    %cst_66 = arith.constant 5.000000e-01 : f32
    %132 = vector.broadcast %cst_66 : f32 to vector<8x128xf32>
    %133 = arith.addf %131, %132 : vector<8x128xf32>
    %134 = vector.extract_strided_slice %115 {offsets = [0, 256], sizes = [8, 128], strides = [1, 1]} : vector<8x512xf32> to vector<8x128xf32>
    %135 = math.tanh %134 : vector<8x128xf32>
    %136 = vector.extract_strided_slice %115 {offsets = [0, 384], sizes = [8, 128], strides = [1, 1]} : vector<8x512xf32> to vector<8x128xf32>
    %cst_67 = arith.constant 5.000000e-01 : f32
    %137 = vector.broadcast %cst_67 : f32 to vector<8x128xf32>
    %138 = arith.mulf %137, %136 : vector<8x128xf32>
    %139 = math.tanh %138 : vector<8x128xf32>
    %cst_68 = arith.constant 5.000000e-01 : f32
    %140 = vector.broadcast %cst_68 : f32 to vector<8x128xf32>
    %141 = arith.mulf %140, %139 : vector<8x128xf32>
    %cst_69 = arith.constant 5.000000e-01 : f32
    %142 = vector.broadcast %cst_69 : f32 to vector<8x128xf32>
    %143 = arith.addf %141, %142 : vector<8x128xf32>
    %144 = arith.mulf %133, %57 : vector<8x128xf32>
    %145 = arith.mulf %125, %135 : vector<8x128xf32>
    %146 = arith.addf %144, %145 : vector<8x128xf32>
    %147 = math.tanh %146 : vector<8x128xf32>
    %148 = arith.mulf %143, %147 : vector<8x128xf32>
    %149 = vector.extract_strided_slice %117 {offsets = [0, 0], sizes = [8, 128], strides = [1, 1]} : vector<8x512xf32> to vector<8x128xf32>
    %cst_70 = arith.constant 5.000000e-01 : f32
    %150 = vector.broadcast %cst_70 : f32 to vector<8x128xf32>
    %151 = arith.mulf %150, %149 : vector<8x128xf32>
    %152 = math.tanh %151 : vector<8x128xf32>
    %cst_71 = arith.constant 5.000000e-01 : f32
    %153 = vector.broadcast %cst_71 : f32 to vector<8x128xf32>
    %154 = arith.mulf %153, %152 : vector<8x128xf32>
    %cst_72 = arith.constant 5.000000e-01 : f32
    %155 = vector.broadcast %cst_72 : f32 to vector<8x128xf32>
    %156 = arith.addf %154, %155 : vector<8x128xf32>
    %157 = vector.extract_strided_slice %117 {offsets = [0, 128], sizes = [8, 128], strides = [1, 1]} : vector<8x512xf32> to vector<8x128xf32>
    %cst_73 = arith.constant 5.000000e-01 : f32
    %158 = vector.broadcast %cst_73 : f32 to vector<8x128xf32>
    %159 = arith.mulf %158, %157 : vector<8x128xf32>
    %160 = math.tanh %159 : vector<8x128xf32>
    %cst_74 = arith.constant 5.000000e-01 : f32
    %161 = vector.broadcast %cst_74 : f32 to vector<8x128xf32>
    %162 = arith.mulf %161, %160 : vector<8x128xf32>
    %cst_75 = arith.constant 5.000000e-01 : f32
    %163 = vector.broadcast %cst_75 : f32 to vector<8x128xf32>
    %164 = arith.addf %162, %163 : vector<8x128xf32>
    %165 = vector.extract_strided_slice %117 {offsets = [0, 256], sizes = [8, 128], strides = [1, 1]} : vector<8x512xf32> to vector<8x128xf32>
    %166 = math.tanh %165 : vector<8x128xf32>
    %167 = vector.extract_strided_slice %117 {offsets = [0, 384], sizes = [8, 128], strides = [1, 1]} : vector<8x512xf32> to vector<8x128xf32>
    %cst_76 = arith.constant 5.000000e-01 : f32
    %168 = vector.broadcast %cst_76 : f32 to vector<8x128xf32>
    %169 = arith.mulf %168, %167 : vector<8x128xf32>
    %170 = math.tanh %169 : vector<8x128xf32>
    %cst_77 = arith.constant 5.000000e-01 : f32
    %171 = vector.broadcast %cst_77 : f32 to vector<8x128xf32>
    %172 = arith.mulf %171, %170 : vector<8x128xf32>
    %cst_78 = arith.constant 5.000000e-01 : f32
    %173 = vector.broadcast %cst_78 : f32 to vector<8x128xf32>
    %174 = arith.addf %172, %173 : vector<8x128xf32>
    %175 = arith.mulf %164, %88 : vector<8x128xf32>
    %176 = arith.mulf %156, %166 : vector<8x128xf32>
    %177 = arith.addf %175, %176 : vector<8x128xf32>
    %178 = math.tanh %177 : vector<8x128xf32>
    %179 = arith.mulf %174, %178 : vector<8x128xf32>
    %c0_79 = arith.constant 0 : index
    %c0_80 = arith.constant 0 : index
    %180 = vector.load %arg11[%c0_79, %c0_80] : memref<8x512xf32, #tpu.memory_space<vmem>>, vector<8x128xf32>
    %181 = arith.addf %180, %148 : vector<8x128xf32>
    %c0_81 = arith.constant 0 : index
    %c0_82 = arith.constant 0 : index
    %182 = vector.load %arg11[%c0_81, %c0_82] : memref<8x512xf32, #tpu.memory_space<vmem>>, vector<8x128xf32>
    tpu.vector_store %arg11[%c0_81, %c0_82], %181 {strides = array<i32>} : memref<8x512xf32, #tpu.memory_space<vmem>>, vector<8x128xf32>,
    %c0_83 = arith.constant 0 : index
    %c128_84 = arith.constant 128 : index
    %183 = vector.load %arg11[%c0_83, %c128_84] : memref<8x512xf32, #tpu.memory_space<vmem>>, vector<8x128xf32>
    %184 = arith.addf %183, %179 : vector<8x128xf32>
    %c0_85 = arith.constant 0 : index
    %c128_86 = arith.constant 128 : index
    %185 = vector.load %arg11[%c0_85, %c128_86] : memref<8x512xf32, #tpu.memory_space<vmem>>, vector<8x128xf32>
    tpu.vector_store %arg11[%c0_85, %c128_86], %184 {strides = array<i32>} : memref<8x512xf32, #tpu.memory_space<vmem>>, vector<8x128xf32>,
    %c0_87 = arith.constant 0 : index
    %c256_88 = arith.constant 256 : index
    %186 = vector.load %arg11[%c0_87, %c256_88] : memref<8x512xf32, #tpu.memory_space<vmem>>, vector<8x128xf32>
    %187 = arith.maximumf %186, %148 : vector<8x128xf32>
    %c0_89 = arith.constant 0 : index
    %c256_90 = arith.constant 256 : index
    %188 = vector.load %arg11[%c0_89, %c256_90] : memref<8x512xf32, #tpu.memory_space<vmem>>, vector<8x128xf32>
    tpu.vector_store %arg11[%c0_89, %c256_90], %187 {strides = array<i32>} : memref<8x512xf32, #tpu.memory_space<vmem>>, vector<8x128xf32>,
    %c0_91 = arith.constant 0 : index
    %c384_92 = arith.constant 384 : index
    %189 = vector.load %arg11[%c0_91, %c384_92] : memref<8x512xf32, #tpu.memory_space<vmem>>, vector<8x128xf32>
    %190 = arith.maximumf %189, %179 : vector<8x128xf32>
    %c0_93 = arith.constant 0 : index
    %c384_94 = arith.constant 384 : index
    %191 = vector.load %arg11[%c0_93, %c384_94] : memref<8x512xf32, #tpu.memory_space<vmem>>, vector<8x128xf32>
    tpu.vector_store %arg11[%c0_93, %c384_94], %190 {strides = array<i32>} : memref<8x512xf32, #tpu.memory_space<vmem>>, vector<8x128xf32>,
    %c2_i32 = arith.constant 2 : i32
    %c7_i32_95 = arith.constant 7 : i32
    %192 = arith.subi %c7_i32_95, %c2_i32 : i32
    %193 = arith.index_cast %c2_i32 : i32 to index
    %c0_96 = arith.constant 0 : index
    %c0_97 = arith.constant 0 : index
    %194 = vector.load %arg10[%193, %c0_96, %c0_97] : memref<8x8x1024xf32, #tpu.memory_space<vmem>>, vector<1x8x512xf32>
    %195 = vector.shape_cast %194 : vector<1x8x512xf32> to vector<8x512xf32>
    %196 = arith.index_cast %192 : i32 to index
    %c0_98 = arith.constant 0 : index
    %c512_99 = arith.constant 512 : index
    %197 = vector.load %arg10[%196, %c0_98, %c512_99] : memref<8x8x1024xf32, #tpu.memory_space<vmem>>, vector<1x8x512xf32>
    %198 = vector.shape_cast %197 : vector<1x8x512xf32> to vector<8x512xf32>
    %199 = tpu.concatenate %148, %179 in 1 : vector<8x128xf32>, vector<8x128xf32> -> vector<8x256xf32>
    %200 = arith.truncf %199 : vector<8x256xf32> to vector<8x256xbf16>
    %c0_100 = arith.constant 0 : index
    %c0_101 = arith.constant 0 : index
    %201 = vector.load %arg4[%c0_100, %c0_101] : memref<256x1024xbf16, #tpu.memory_space<vmem>>, vector<256x1024xbf16>
    %cst_102 = arith.constant dense<0.000000e+00> : vector<8x1024xf32>
    %202 = tpu.matmul %200, %201, %cst_102 {dimension_numbers = #tpu.dot_dimension_numbers<[1], [0], [0], [1], [0, 0, 1, 1], [], []>} : vector<8x256xbf16>, vector<256x1024xbf16>, vector<8x1024xf32> -> vector<8x1024xf32>
    %203 = vector.extract_strided_slice %202 {offsets = [0, 0], sizes = [8, 512], strides = [1, 1]} : vector<8x1024xf32> to vector<8x512xf32>
    %204 = arith.addf %195, %203 : vector<8x512xf32>
    %205 = vector.extract_strided_slice %202 {offsets = [0, 512], sizes = [8, 512], strides = [1, 1]} : vector<8x1024xf32> to vector<8x512xf32>
    %206 = arith.addf %198, %205 : vector<8x512xf32>
    %207 = vector.extract_strided_slice %204 {offsets = [0, 0], sizes = [8, 128], strides = [1, 1]} : vector<8x512xf32> to vector<8x128xf32>
    %cst_103 = arith.constant 5.000000e-01 : f32
    %208 = vector.broadcast %cst_103 : f32 to vector<8x128xf32>
    %209 = arith.mulf %208, %207 : vector<8x128xf32>
    %210 = math.tanh %209 : vector<8x128xf32>
    %cst_104 = arith.constant 5.000000e-01 : f32
    %211 = vector.broadcast %cst_104 : f32 to vector<8x128xf32>
    %212 = arith.mulf %211, %210 : vector<8x128xf32>
    %cst_105 = arith.constant 5.000000e-01 : f32
    %213 = vector.broadcast %cst_105 : f32 to vector<8x128xf32>
    %214 = arith.addf %212, %213 : vector<8x128xf32>
    %215 = vector.extract_strided_slice %204 {offsets = [0, 128], sizes = [8, 128], strides = [1, 1]} : vector<8x512xf32> to vector<8x128xf32>
    %cst_106 = arith.constant 5.000000e-01 : f32
    %216 = vector.broadcast %cst_106 : f32 to vector<8x128xf32>
    %217 = arith.mulf %216, %215 : vector<8x128xf32>
    %218 = math.tanh %217 : vector<8x128xf32>
    %cst_107 = arith.constant 5.000000e-01 : f32
    %219 = vector.broadcast %cst_107 : f32 to vector<8x128xf32>
    %220 = arith.mulf %219, %218 : vector<8x128xf32>
    %cst_108 = arith.constant 5.000000e-01 : f32
    %221 = vector.broadcast %cst_108 : f32 to vector<8x128xf32>
    %222 = arith.addf %220, %221 : vector<8x128xf32>
    %223 = vector.extract_strided_slice %204 {offsets = [0, 256], sizes = [8, 128], strides = [1, 1]} : vector<8x512xf32> to vector<8x128xf32>
    %224 = math.tanh %223 : vector<8x128xf32>
    %225 = vector.extract_strided_slice %204 {offsets = [0, 384], sizes = [8, 128], strides = [1, 1]} : vector<8x512xf32> to vector<8x128xf32>
    %cst_109 = arith.constant 5.000000e-01 : f32
    %226 = vector.broadcast %cst_109 : f32 to vector<8x128xf32>
    %227 = arith.mulf %226, %225 : vector<8x128xf32>
    %228 = math.tanh %227 : vector<8x128xf32>
    %cst_110 = arith.constant 5.000000e-01 : f32
    %229 = vector.broadcast %cst_110 : f32 to vector<8x128xf32>
    %230 = arith.mulf %229, %228 : vector<8x128xf32>
    %cst_111 = arith.constant 5.000000e-01 : f32
    %231 = vector.broadcast %cst_111 : f32 to vector<8x128xf32>
    %232 = arith.addf %230, %231 : vector<8x128xf32>
    %233 = arith.mulf %222, %146 : vector<8x128xf32>
    %234 = arith.mulf %214, %224 : vector<8x128xf32>
    %235 = arith.addf %233, %234 : vector<8x128xf32>
    %236 = math.tanh %235 : vector<8x128xf32>
    %237 = arith.mulf %232, %236 : vector<8x128xf32>
    %238 = vector.extract_strided_slice %206 {offsets = [0, 0], sizes = [8, 128], strides = [1, 1]} : vector<8x512xf32> to vector<8x128xf32>
    %cst_112 = arith.constant 5.000000e-01 : f32
    %239 = vector.broadcast %cst_112 : f32 to vector<8x128xf32>
    %240 = arith.mulf %239, %238 : vector<8x128xf32>
    %241 = math.tanh %240 : vector<8x128xf32>
    %cst_113 = arith.constant 5.000000e-01 : f32
    %242 = vector.broadcast %cst_113 : f32 to vector<8x128xf32>
    %243 = arith.mulf %242, %241 : vector<8x128xf32>
    %cst_114 = arith.constant 5.000000e-01 : f32
    %244 = vector.broadcast %cst_114 : f32 to vector<8x128xf32>
    %245 = arith.addf %243, %244 : vector<8x128xf32>
    %246 = vector.extract_strided_slice %206 {offsets = [0, 128], sizes = [8, 128], strides = [1, 1]} : vector<8x512xf32> to vector<8x128xf32>
    %cst_115 = arith.constant 5.000000e-01 : f32
    %247 = vector.broadcast %cst_115 : f32 to vector<8x128xf32>
    %248 = arith.mulf %247, %246 : vector<8x128xf32>
    %249 = math.tanh %248 : vector<8x128xf32>
    %cst_116 = arith.constant 5.000000e-01 : f32
    %250 = vector.broadcast %cst_116 : f32 to vector<8x128xf32>
    %251 = arith.mulf %250, %249 : vector<8x128xf32>
    %cst_117 = arith.constant 5.000000e-01 : f32
    %252 = vector.broadcast %cst_117 : f32 to vector<8x128xf32>
    %253 = arith.addf %251, %252 : vector<8x128xf32>
    %254 = vector.extract_strided_slice %206 {offsets = [0, 256], sizes = [8, 128], strides = [1, 1]} : vector<8x512xf32> to vector<8x128xf32>
    %255 = math.tanh %254 : vector<8x128xf32>
    %256 = vector.extract_strided_slice %206 {offsets = [0, 384], sizes = [8, 128], strides = [1, 1]} : vector<8x512xf32> to vector<8x128xf32>
    %cst_118 = arith.constant 5.000000e-01 : f32
    %257 = vector.broadcast %cst_118 : f32 to vector<8x128xf32>
    %258 = arith.mulf %257, %256 : vector<8x128xf32>
    %259 = math.tanh %258 : vector<8x128xf32>
    %cst_119 = arith.constant 5.000000e-01 : f32
    %260 = vector.broadcast %cst_119 : f32 to vector<8x128xf32>
    %261 = arith.mulf %260, %259 : vector<8x128xf32>
    %cst_120 = arith.constant 5.000000e-01 : f32
    %262 = vector.broadcast %cst_120 : f32 to vector<8x128xf32>
    %263 = arith.addf %261, %262 : vector<8x128xf32>
    %264 = arith.mulf %253, %177 : vector<8x128xf32>
    %265 = arith.mulf %245, %255 : vector<8x128xf32>
    %266 = arith.addf %264, %265 : vector<8x128xf32>
    %267 = math.tanh %266 : vector<8x128xf32>
    %268 = arith.mulf %263, %267 : vector<8x128xf32>
    %c0_121 = arith.constant 0 : index
    %c0_122 = arith.constant 0 : index
    %269 = vector.load %arg11[%c0_121, %c0_122] : memref<8x512xf32, #tpu.memory_space<vmem>>, vector<8x128xf32>
    %270 = arith.addf %269, %237 : vector<8x128xf32>
    %c0_123 = arith.constant 0 : index
    %c0_124 = arith.constant 0 : index
    %271 = vector.load %arg11[%c0_123, %c0_124] : memref<8x512xf32, #tpu.memory_space<vmem>>, vector<8x128xf32>
    tpu.vector_store %arg11[%c0_123, %c0_124], %270 {strides = array<i32>} : memref<8x512xf32, #tpu.memory_space<vmem>>, vector<8x128xf32>,
    %c0_125 = arith.constant 0 : index
    %c128_126 = arith.constant 128 : index
    %272 = vector.load %arg11[%c0_125, %c128_126] : memref<8x512xf32, #tpu.memory_space<vmem>>, vector<8x128xf32>
    %273 = arith.addf %272, %268 : vector<8x128xf32>
    %c0_127 = arith.constant 0 : index
    %c128_128 = arith.constant 128 : index
    %274 = vector.load %arg11[%c0_127, %c128_128] : memref<8x512xf32, #tpu.memory_space<vmem>>, vector<8x128xf32>
    tpu.vector_store %arg11[%c0_127, %c128_128], %273 {strides = array<i32>} : memref<8x512xf32, #tpu.memory_space<vmem>>, vector<8x128xf32>,
    %c0_129 = arith.constant 0 : index
    %c256_130 = arith.constant 256 : index
    %275 = vector.load %arg11[%c0_129, %c256_130] : memref<8x512xf32, #tpu.memory_space<vmem>>, vector<8x128xf32>
    %276 = arith.maximumf %275, %237 : vector<8x128xf32>
    %c0_131 = arith.constant 0 : index
    %c256_132 = arith.constant 256 : index
    %277 = vector.load %arg11[%c0_131, %c256_132] : memref<8x512xf32, #tpu.memory_space<vmem>>, vector<8x128xf32>
    tpu.vector_store %arg11[%c0_131, %c256_132], %276 {strides = array<i32>} : memref<8x512xf32, #tpu.memory_space<vmem>>, vector<8x128xf32>,
    %c0_133 = arith.constant 0 : index
    %c384_134 = arith.constant 384 : index
    %278 = vector.load %arg11[%c0_133, %c384_134] : memref<8x512xf32, #tpu.memory_space<vmem>>, vector<8x128xf32>
    %279 = arith.maximumf %278, %268 : vector<8x128xf32>
    %c0_135 = arith.constant 0 : index
    %c384_136 = arith.constant 384 : index
    %280 = vector.load %arg11[%c0_135, %c384_136] : memref<8x512xf32, #tpu.memory_space<vmem>>, vector<8x128xf32>
    tpu.vector_store %arg11[%c0_135, %c384_136], %279 {strides = array<i32>} : memref<8x512xf32, #tpu.memory_space<vmem>>, vector<8x128xf32>,
    %c3_i32 = arith.constant 3 : i32
    %c7_i32_137 = arith.constant 7 : i32
    %281 = arith.subi %c7_i32_137, %c3_i32 : i32
    %282 = arith.index_cast %c3_i32 : i32 to index
    %c0_138 = arith.constant 0 : index
    %c0_139 = arith.constant 0 : index
    %283 = vector.load %arg10[%282, %c0_138, %c0_139] : memref<8x8x1024xf32, #tpu.memory_space<vmem>>, vector<1x8x512xf32>
    %284 = vector.shape_cast %283 : vector<1x8x512xf32> to vector<8x512xf32>
    %285 = arith.index_cast %281 : i32 to index
    %c0_140 = arith.constant 0 : index
    %c512_141 = arith.constant 512 : index
    %286 = vector.load %arg10[%285, %c0_140, %c512_141] : memref<8x8x1024xf32, #tpu.memory_space<vmem>>, vector<1x8x512xf32>
    %287 = vector.shape_cast %286 : vector<1x8x512xf32> to vector<8x512xf32>
    %288 = tpu.concatenate %237, %268 in 1 : vector<8x128xf32>, vector<8x128xf32> -> vector<8x256xf32>
    %289 = arith.truncf %288 : vector<8x256xf32> to vector<8x256xbf16>
    %c0_142 = arith.constant 0 : index
    %c0_143 = arith.constant 0 : index
    %290 = vector.load %arg4[%c0_142, %c0_143] : memref<256x1024xbf16, #tpu.memory_space<vmem>>, vector<256x1024xbf16>
    %cst_144 = arith.constant dense<0.000000e+00> : vector<8x1024xf32>
    %291 = tpu.matmul %289, %290, %cst_144 {dimension_numbers = #tpu.dot_dimension_numbers<[1], [0], [0], [1], [0, 0, 1, 1], [], []>} : vector<8x256xbf16>, vector<256x1024xbf16>, vector<8x1024xf32> -> vector<8x1024xf32>
    %292 = vector.extract_strided_slice %291 {offsets = [0, 0], sizes = [8, 512], strides = [1, 1]} : vector<8x1024xf32> to vector<8x512xf32>
    %293 = arith.addf %284, %292 : vector<8x512xf32>
    %294 = vector.extract_strided_slice %291 {offsets = [0, 512], sizes = [8, 512], strides = [1, 1]} : vector<8x1024xf32> to vector<8x512xf32>
    %295 = arith.addf %287, %294 : vector<8x512xf32>
    %296 = vector.extract_strided_slice %293 {offsets = [0, 0], sizes = [8, 128], strides = [1, 1]} : vector<8x512xf32> to vector<8x128xf32>
    %cst_145 = arith.constant 5.000000e-01 : f32
    %297 = vector.broadcast %cst_145 : f32 to vector<8x128xf32>
    %298 = arith.mulf %297, %296 : vector<8x128xf32>
    %299 = math.tanh %298 : vector<8x128xf32>
    %cst_146 = arith.constant 5.000000e-01 : f32
    %300 = vector.broadcast %cst_146 : f32 to vector<8x128xf32>
    %301 = arith.mulf %300, %299 : vector<8x128xf32>
    %cst_147 = arith.constant 5.000000e-01 : f32
    %302 = vector.broadcast %cst_147 : f32 to vector<8x128xf32>
    %303 = arith.addf %301, %302 : vector<8x128xf32>
    %304 = vector.extract_strided_slice %293 {offsets = [0, 128], sizes = [8, 128], strides = [1, 1]} : vector<8x512xf32> to vector<8x128xf32>
    %cst_148 = arith.constant 5.000000e-01 : f32
    %305 = vector.broadcast %cst_148 : f32 to vector<8x128xf32>
    %306 = arith.mulf %305, %304 : vector<8x128xf32>
    %307 = math.tanh %306 : vector<8x128xf32>
    %cst_149 = arith.constant 5.000000e-01 : f32
    %308 = vector.broadcast %cst_149 : f32 to vector<8x128xf32>
    %309 = arith.mulf %308, %307 : vector<8x128xf32>
    %cst_150 = arith.constant 5.000000e-01 : f32
    %310 = vector.broadcast %cst_150 : f32 to vector<8x128xf32>
    %311 = arith.addf %309, %310 : vector<8x128xf32>
    %312 = vector.extract_strided_slice %293 {offsets = [0, 256], sizes = [8, 128], strides = [1, 1]} : vector<8x512xf32> to vector<8x128xf32>
    %313 = math.tanh %312 : vector<8x128xf32>
    %314 = vector.extract_strided_slice %293 {offsets = [0, 384], sizes = [8, 128], strides = [1, 1]} : vector<8x512xf32> to vector<8x128xf32>
    %cst_151 = arith.constant 5.000000e-01 : f32
    %315 = vector.broadcast %cst_151 : f32 to vector<8x128xf32>
    %316 = arith.mulf %315, %314 : vector<8x128xf32>
    %317 = math.tanh %316 : vector<8x128xf32>
    %cst_152 = arith.constant 5.000000e-01 : f32
    %318 = vector.broadcast %cst_152 : f32 to vector<8x128xf32>
    %319 = arith.mulf %318, %317 : vector<8x128xf32>
    %cst_153 = arith.constant 5.000000e-01 : f32
    %320 = vector.broadcast %cst_153 : f32 to vector<8x128xf32>
    %321 = arith.addf %319, %320 : vector<8x128xf32>
    %322 = arith.mulf %311, %235 : vector<8x128xf32>
    %323 = arith.mulf %303, %313 : vector<8x128xf32>
    %324 = arith.addf %322, %323 : vector<8x128xf32>
    %325 = math.tanh %324 : vector<8x128xf32>
    %326 = arith.mulf %321, %325 : vector<8x128xf32>
    %327 = vector.extract_strided_slice %295 {offsets = [0, 0], sizes = [8, 128], strides = [1, 1]} : vector<8x512xf32> to vector<8x128xf32>
    %cst_154 = arith.constant 5.000000e-01 : f32
    %328 = vector.broadcast %cst_154 : f32 to vector<8x128xf32>
    %329 = arith.mulf %328, %327 : vector<8x128xf32>
    %330 = math.tanh %329 : vector<8x128xf32>
    %cst_155 = arith.constant 5.000000e-01 : f32
    %331 = vector.broadcast %cst_155 : f32 to vector<8x128xf32>
    %332 = arith.mulf %331, %330 : vector<8x128xf32>
    %cst_156 = arith.constant 5.000000e-01 : f32
    %333 = vector.broadcast %cst_156 : f32 to vector<8x128xf32>
    %334 = arith.addf %332, %333 : vector<8x128xf32>
    %335 = vector.extract_strided_slice %295 {offsets = [0, 128], sizes = [8, 128], strides = [1, 1]} : vector<8x512xf32> to vector<8x128xf32>
    %cst_157 = arith.constant 5.000000e-01 : f32
    %336 = vector.broadcast %cst_157 : f32 to vector<8x128xf32>
    %337 = arith.mulf %336, %335 : vector<8x128xf32>
    %338 = math.tanh %337 : vector<8x128xf32>
    %cst_158 = arith.constant 5.000000e-01 : f32
    %339 = vector.broadcast %cst_158 : f32 to vector<8x128xf32>
    %340 = arith.mulf %339, %338 : vector<8x128xf32>
    %cst_159 = arith.constant 5.000000e-01 : f32
    %341 = vector.broadcast %cst_159 : f32 to vector<8x128xf32>
    %342 = arith.addf %340, %341 : vector<8x128xf32>
    %343 = vector.extract_strided_slice %295 {offsets = [0, 256], sizes = [8, 128], strides = [1, 1]} : vector<8x512xf32> to vector<8x128xf32>
    %344 = math.tanh %343 : vector<8x128xf32>
    %345 = vector.extract_strided_slice %295 {offsets = [0, 384], sizes = [8, 128], strides = [1, 1]} : vector<8x512xf32> to vector<8x128xf32>
    %cst_160 = arith.constant 5.000000e-01 : f32
    %346 = vector.broadcast %cst_160 : f32 to vector<8x128xf32>
    %347 = arith.mulf %346, %345 : vector<8x128xf32>
    %348 = math.tanh %347 : vector<8x128xf32>
    %cst_161 = arith.constant 5.000000e-01 : f32
    %349 = vector.broadcast %cst_161 : f32 to vector<8x128xf32>
    %350 = arith.mulf %349, %348 : vector<8x128xf32>
    %cst_162 = arith.constant 5.000000e-01 : f32
    %351 = vector.broadcast %cst_162 : f32 to vector<8x128xf32>
    %352 = arith.addf %350, %351 : vector<8x128xf32>
    %353 = arith.mulf %342, %266 : vector<8x128xf32>
    %354 = arith.mulf %334, %344 : vector<8x128xf32>
    %355 = arith.addf %353, %354 : vector<8x128xf32>
    %356 = math.tanh %355 : vector<8x128xf32>
    %357 = arith.mulf %352, %356 : vector<8x128xf32>
    %c0_163 = arith.constant 0 : index
    %c0_164 = arith.constant 0 : index
    %358 = vector.load %arg11[%c0_163, %c0_164] : memref<8x512xf32, #tpu.memory_space<vmem>>, vector<8x128xf32>
    %359 = arith.addf %358, %326 : vector<8x128xf32>
    %c0_165 = arith.constant 0 : index
    %c0_166 = arith.constant 0 : index
    %360 = vector.load %arg11[%c0_165, %c0_166] : memref<8x512xf32, #tpu.memory_space<vmem>>, vector<8x128xf32>
    tpu.vector_store %arg11[%c0_165, %c0_166], %359 {strides = array<i32>} : memref<8x512xf32, #tpu.memory_space<vmem>>, vector<8x128xf32>,
    %c0_167 = arith.constant 0 : index
    %c128_168 = arith.constant 128 : index
    %361 = vector.load %arg11[%c0_167, %c128_168] : memref<8x512xf32, #tpu.memory_space<vmem>>, vector<8x128xf32>
    %362 = arith.addf %361, %357 : vector<8x128xf32>
    %c0_169 = arith.constant 0 : index
    %c128_170 = arith.constant 128 : index
    %363 = vector.load %arg11[%c0_169, %c128_170] : memref<8x512xf32, #tpu.memory_space<vmem>>, vector<8x128xf32>
    tpu.vector_store %arg11[%c0_169, %c128_170], %362 {strides = array<i32>} : memref<8x512xf32, #tpu.memory_space<vmem>>, vector<8x128xf32>,
    %c0_171 = arith.constant 0 : index
    %c256_172 = arith.constant 256 : index
    %364 = vector.load %arg11[%c0_171, %c256_172] : memref<8x512xf32, #tpu.memory_space<vmem>>, vector<8x128xf32>
    %365 = arith.maximumf %364, %326 : vector<8x128xf32>
    %c0_173 = arith.constant 0 : index
    %c256_174 = arith.constant 256 : index
    %366 = vector.load %arg11[%c0_173, %c256_174] : memref<8x512xf32, #tpu.memory_space<vmem>>, vector<8x128xf32>
    tpu.vector_store %arg11[%c0_173, %c256_174], %365 {strides = array<i32>} : memref<8x512xf32, #tpu.memory_space<vmem>>, vector<8x128xf32>,
    %c0_175 = arith.constant 0 : index
    %c384_176 = arith.constant 384 : index
    %367 = vector.load %arg11[%c0_175, %c384_176] : memref<8x512xf32, #tpu.memory_space<vmem>>, vector<8x128xf32>
    %368 = arith.maximumf %367, %357 : vector<8x128xf32>
    %c0_177 = arith.constant 0 : index
    %c384_178 = arith.constant 384 : index
    %369 = vector.load %arg11[%c0_177, %c384_178] : memref<8x512xf32, #tpu.memory_space<vmem>>, vector<8x128xf32>
    tpu.vector_store %arg11[%c0_177, %c384_178], %368 {strides = array<i32>} : memref<8x512xf32, #tpu.memory_space<vmem>>, vector<8x128xf32>,
    %c4_i32 = arith.constant 4 : i32
    %c7_i32_179 = arith.constant 7 : i32
    %370 = arith.subi %c7_i32_179, %c4_i32 : i32
    %371 = arith.index_cast %c4_i32 : i32 to index
    %c0_180 = arith.constant 0 : index
    %c0_181 = arith.constant 0 : index
    %372 = vector.load %arg10[%371, %c0_180, %c0_181] : memref<8x8x1024xf32, #tpu.memory_space<vmem>>, vector<1x8x512xf32>
    %373 = vector.shape_cast %372 : vector<1x8x512xf32> to vector<8x512xf32>
    %374 = arith.index_cast %370 : i32 to index
    %c0_182 = arith.constant 0 : index
    %c512_183 = arith.constant 512 : index
    %375 = vector.load %arg10[%374, %c0_182, %c512_183] : memref<8x8x1024xf32, #tpu.memory_space<vmem>>, vector<1x8x512xf32>
    %376 = vector.shape_cast %375 : vector<1x8x512xf32> to vector<8x512xf32>
    %377 = tpu.concatenate %326, %357 in 1 : vector<8x128xf32>, vector<8x128xf32> -> vector<8x256xf32>
    %378 = arith.truncf %377 : vector<8x256xf32> to vector<8x256xbf16>
    %c0_184 = arith.constant 0 : index
    %c0_185 = arith.constant 0 : index
    %379 = vector.load %arg4[%c0_184, %c0_185] : memref<256x1024xbf16, #tpu.memory_space<vmem>>, vector<256x1024xbf16>
    %cst_186 = arith.constant dense<0.000000e+00> : vector<8x1024xf32>
    %380 = tpu.matmul %378, %379, %cst_186 {dimension_numbers = #tpu.dot_dimension_numbers<[1], [0], [0], [1], [0, 0, 1, 1], [], []>} : vector<8x256xbf16>, vector<256x1024xbf16>, vector<8x1024xf32> -> vector<8x1024xf32>
    %381 = vector.extract_strided_slice %380 {offsets = [0, 0], sizes = [8, 512], strides = [1, 1]} : vector<8x1024xf32> to vector<8x512xf32>
    %382 = arith.addf %373, %381 : vector<8x512xf32>
    %383 = vector.extract_strided_slice %380 {offsets = [0, 512], sizes = [8, 512], strides = [1, 1]} : vector<8x1024xf32> to vector<8x512xf32>
    %384 = arith.addf %376, %383 : vector<8x512xf32>
    %385 = vector.extract_strided_slice %382 {offsets = [0, 0], sizes = [8, 128], strides = [1, 1]} : vector<8x512xf32> to vector<8x128xf32>
    %cst_187 = arith.constant 5.000000e-01 : f32
    %386 = vector.broadcast %cst_187 : f32 to vector<8x128xf32>
    %387 = arith.mulf %386, %385 : vector<8x128xf32>
    %388 = math.tanh %387 : vector<8x128xf32>
    %cst_188 = arith.constant 5.000000e-01 : f32
    %389 = vector.broadcast %cst_188 : f32 to vector<8x128xf32>
    %390 = arith.mulf %389, %388 : vector<8x128xf32>
    %cst_189 = arith.constant 5.000000e-01 : f32
    %391 = vector.broadcast %cst_189 : f32 to vector<8x128xf32>
    %392 = arith.addf %390, %391 : vector<8x128xf32>
    %393 = vector.extract_strided_slice %382 {offsets = [0, 128], sizes = [8, 128], strides = [1, 1]} : vector<8x512xf32> to vector<8x128xf32>
    %cst_190 = arith.constant 5.000000e-01 : f32
    %394 = vector.broadcast %cst_190 : f32 to vector<8x128xf32>
    %395 = arith.mulf %394, %393 : vector<8x128xf32>
    %396 = math.tanh %395 : vector<8x128xf32>
    %cst_191 = arith.constant 5.000000e-01 : f32
    %397 = vector.broadcast %cst_191 : f32 to vector<8x128xf32>
    %398 = arith.mulf %397, %396 : vector<8x128xf32>
    %cst_192 = arith.constant 5.000000e-01 : f32
    %399 = vector.broadcast %cst_192 : f32 to vector<8x128xf32>
    %400 = arith.addf %398, %399 : vector<8x128xf32>
    %401 = vector.extract_strided_slice %382 {offsets = [0, 256], sizes = [8, 128], strides = [1, 1]} : vector<8x512xf32> to vector<8x128xf32>
    %402 = math.tanh %401 : vector<8x128xf32>
    %403 = vector.extract_strided_slice %382 {offsets = [0, 384], sizes = [8, 128], strides = [1, 1]} : vector<8x512xf32> to vector<8x128xf32>
    %cst_193 = arith.constant 5.000000e-01 : f32
    %404 = vector.broadcast %cst_193 : f32 to vector<8x128xf32>
    %405 = arith.mulf %404, %403 : vector<8x128xf32>
    %406 = math.tanh %405 : vector<8x128xf32>
    %cst_194 = arith.constant 5.000000e-01 : f32
    %407 = vector.broadcast %cst_194 : f32 to vector<8x128xf32>
    %408 = arith.mulf %407, %406 : vector<8x128xf32>
    %cst_195 = arith.constant 5.000000e-01 : f32
    %409 = vector.broadcast %cst_195 : f32 to vector<8x128xf32>
    %410 = arith.addf %408, %409 : vector<8x128xf32>
    %411 = arith.mulf %400, %324 : vector<8x128xf32>
    %412 = arith.mulf %392, %402 : vector<8x128xf32>
    %413 = arith.addf %411, %412 : vector<8x128xf32>
    %414 = math.tanh %413 : vector<8x128xf32>
    %415 = arith.mulf %410, %414 : vector<8x128xf32>
    %416 = vector.extract_strided_slice %384 {offsets = [0, 0], sizes = [8, 128], strides = [1, 1]} : vector<8x512xf32> to vector<8x128xf32>
    %cst_196 = arith.constant 5.000000e-01 : f32
    %417 = vector.broadcast %cst_196 : f32 to vector<8x128xf32>
    %418 = arith.mulf %417, %416 : vector<8x128xf32>
    %419 = math.tanh %418 : vector<8x128xf32>
    %cst_197 = arith.constant 5.000000e-01 : f32
    %420 = vector.broadcast %cst_197 : f32 to vector<8x128xf32>
    %421 = arith.mulf %420, %419 : vector<8x128xf32>
    %cst_198 = arith.constant 5.000000e-01 : f32
    %422 = vector.broadcast %cst_198 : f32 to vector<8x128xf32>
    %423 = arith.addf %421, %422 : vector<8x128xf32>
    %424 = vector.extract_strided_slice %384 {offsets = [0, 128], sizes = [8, 128], strides = [1, 1]} : vector<8x512xf32> to vector<8x128xf32>
    %cst_199 = arith.constant 5.000000e-01 : f32
    %425 = vector.broadcast %cst_199 : f32 to vector<8x128xf32>
    %426 = arith.mulf %425, %424 : vector<8x128xf32>
    %427 = math.tanh %426 : vector<8x128xf32>
    %cst_200 = arith.constant 5.000000e-01 : f32
    %428 = vector.broadcast %cst_200 : f32 to vector<8x128xf32>
    %429 = arith.mulf %428, %427 : vector<8x128xf32>
    %cst_201 = arith.constant 5.000000e-01 : f32
    %430 = vector.broadcast %cst_201 : f32 to vector<8x128xf32>
    %431 = arith.addf %429, %430 : vector<8x128xf32>
    %432 = vector.extract_strided_slice %384 {offsets = [0, 256], sizes = [8, 128], strides = [1, 1]} : vector<8x512xf32> to vector<8x128xf32>
    %433 = math.tanh %432 : vector<8x128xf32>
    %434 = vector.extract_strided_slice %384 {offsets = [0, 384], sizes = [8, 128], strides = [1, 1]} : vector<8x512xf32> to vector<8x128xf32>
    %cst_202 = arith.constant 5.000000e-01 : f32
    %435 = vector.broadcast %cst_202 : f32 to vector<8x128xf32>
    %436 = arith.mulf %435, %434 : vector<8x128xf32>
    %437 = math.tanh %436 : vector<8x128xf32>
    %cst_203 = arith.constant 5.000000e-01 : f32
    %438 = vector.broadcast %cst_203 : f32 to vector<8x128xf32>
    %439 = arith.mulf %438, %437 : vector<8x128xf32>
    %cst_204 = arith.constant 5.000000e-01 : f32
    %440 = vector.broadcast %cst_204 : f32 to vector<8x128xf32>
    %441 = arith.addf %439, %440 : vector<8x128xf32>
    %442 = arith.mulf %431, %355 : vector<8x128xf32>
    %443 = arith.mulf %423, %433 : vector<8x128xf32>
    %444 = arith.addf %442, %443 : vector<8x128xf32>
    %445 = math.tanh %444 : vector<8x128xf32>
    %446 = arith.mulf %441, %445 : vector<8x128xf32>
    %c0_205 = arith.constant 0 : index
    %c0_206 = arith.constant 0 : index
    %447 = vector.load %arg11[%c0_205, %c0_206] : memref<8x512xf32, #tpu.memory_space<vmem>>, vector<8x128xf32>
    %448 = arith.addf %447, %415 : vector<8x128xf32>
    %c0_207 = arith.constant 0 : index
    %c0_208 = arith.constant 0 : index
    %449 = vector.load %arg11[%c0_207, %c0_208] : memref<8x512xf32, #tpu.memory_space<vmem>>, vector<8x128xf32>
    tpu.vector_store %arg11[%c0_207, %c0_208], %448 {strides = array<i32>} : memref<8x512xf32, #tpu.memory_space<vmem>>, vector<8x128xf32>,
    %c0_209 = arith.constant 0 : index
    %c128_210 = arith.constant 128 : index
    %450 = vector.load %arg11[%c0_209, %c128_210] : memref<8x512xf32, #tpu.memory_space<vmem>>, vector<8x128xf32>
    %451 = arith.addf %450, %446 : vector<8x128xf32>
    %c0_211 = arith.constant 0 : index
    %c128_212 = arith.constant 128 : index
    %452 = vector.load %arg11[%c0_211, %c128_212] : memref<8x512xf32, #tpu.memory_space<vmem>>, vector<8x128xf32>
    tpu.vector_store %arg11[%c0_211, %c128_212], %451 {strides = array<i32>} : memref<8x512xf32, #tpu.memory_space<vmem>>, vector<8x128xf32>,
    %c0_213 = arith.constant 0 : index
    %c256_214 = arith.constant 256 : index
    %453 = vector.load %arg11[%c0_213, %c256_214] : memref<8x512xf32, #tpu.memory_space<vmem>>, vector<8x128xf32>
    %454 = arith.maximumf %453, %415 : vector<8x128xf32>
    %c0_215 = arith.constant 0 : index
    %c256_216 = arith.constant 256 : index
    %455 = vector.load %arg11[%c0_215, %c256_216] : memref<8x512xf32, #tpu.memory_space<vmem>>, vector<8x128xf32>
    tpu.vector_store %arg11[%c0_215, %c256_216], %454 {strides = array<i32>} : memref<8x512xf32, #tpu.memory_space<vmem>>, vector<8x128xf32>,
    %c0_217 = arith.constant 0 : index
    %c384_218 = arith.constant 384 : index
    %456 = vector.load %arg11[%c0_217, %c384_218] : memref<8x512xf32, #tpu.memory_space<vmem>>, vector<8x128xf32>
    %457 = arith.maximumf %456, %446 : vector<8x128xf32>
    %c0_219 = arith.constant 0 : index
    %c384_220 = arith.constant 384 : index
    %458 = vector.load %arg11[%c0_219, %c384_220] : memref<8x512xf32, #tpu.memory_space<vmem>>, vector<8x128xf32>
    tpu.vector_store %arg11[%c0_219, %c384_220], %457 {strides = array<i32>} : memref<8x512xf32, #tpu.memory_space<vmem>>, vector<8x128xf32>,
    %c5_i32 = arith.constant 5 : i32
    %c7_i32_221 = arith.constant 7 : i32
    %459 = arith.subi %c7_i32_221, %c5_i32 : i32
    %460 = arith.index_cast %c5_i32 : i32 to index
    %c0_222 = arith.constant 0 : index
    %c0_223 = arith.constant 0 : index
    %461 = vector.load %arg10[%460, %c0_222, %c0_223] : memref<8x8x1024xf32, #tpu.memory_space<vmem>>, vector<1x8x512xf32>
    %462 = vector.shape_cast %461 : vector<1x8x512xf32> to vector<8x512xf32>
    %463 = arith.index_cast %459 : i32 to index
    %c0_224 = arith.constant 0 : index
    %c512_225 = arith.constant 512 : index
    %464 = vector.load %arg10[%463, %c0_224, %c512_225] : memref<8x8x1024xf32, #tpu.memory_space<vmem>>, vector<1x8x512xf32>
    %465 = vector.shape_cast %464 : vector<1x8x512xf32> to vector<8x512xf32>
    %466 = tpu.concatenate %415, %446 in 1 : vector<8x128xf32>, vector<8x128xf32> -> vector<8x256xf32>
    %467 = arith.truncf %466 : vector<8x256xf32> to vector<8x256xbf16>
    %c0_226 = arith.constant 0 : index
    %c0_227 = arith.constant 0 : index
    %468 = vector.load %arg4[%c0_226, %c0_227] : memref<256x1024xbf16, #tpu.memory_space<vmem>>, vector<256x1024xbf16>
    %cst_228 = arith.constant dense<0.000000e+00> : vector<8x1024xf32>
    %469 = tpu.matmul %467, %468, %cst_228 {dimension_numbers = #tpu.dot_dimension_numbers<[1], [0], [0], [1], [0, 0, 1, 1], [], []>} : vector<8x256xbf16>, vector<256x1024xbf16>, vector<8x1024xf32> -> vector<8x1024xf32>
    %470 = vector.extract_strided_slice %469 {offsets = [0, 0], sizes = [8, 512], strides = [1, 1]} : vector<8x1024xf32> to vector<8x512xf32>
    %471 = arith.addf %462, %470 : vector<8x512xf32>
    %472 = vector.extract_strided_slice %469 {offsets = [0, 512], sizes = [8, 512], strides = [1, 1]} : vector<8x1024xf32> to vector<8x512xf32>
    %473 = arith.addf %465, %472 : vector<8x512xf32>
    %474 = vector.extract_strided_slice %471 {offsets = [0, 0], sizes = [8, 128], strides = [1, 1]} : vector<8x512xf32> to vector<8x128xf32>
    %cst_229 = arith.constant 5.000000e-01 : f32
    %475 = vector.broadcast %cst_229 : f32 to vector<8x128xf32>
    %476 = arith.mulf %475, %474 : vector<8x128xf32>
    %477 = math.tanh %476 : vector<8x128xf32>
    %cst_230 = arith.constant 5.000000e-01 : f32
    %478 = vector.broadcast %cst_230 : f32 to vector<8x128xf32>
    %479 = arith.mulf %478, %477 : vector<8x128xf32>
    %cst_231 = arith.constant 5.000000e-01 : f32
    %480 = vector.broadcast %cst_231 : f32 to vector<8x128xf32>
    %481 = arith.addf %479, %480 : vector<8x128xf32>
    %482 = vector.extract_strided_slice %471 {offsets = [0, 128], sizes = [8, 128], strides = [1, 1]} : vector<8x512xf32> to vector<8x128xf32>
    %cst_232 = arith.constant 5.000000e-01 : f32
    %483 = vector.broadcast %cst_232 : f32 to vector<8x128xf32>
    %484 = arith.mulf %483, %482 : vector<8x128xf32>
    %485 = math.tanh %484 : vector<8x128xf32>
    %cst_233 = arith.constant 5.000000e-01 : f32
    %486 = vector.broadcast %cst_233 : f32 to vector<8x128xf32>
    %487 = arith.mulf %486, %485 : vector<8x128xf32>
    %cst_234 = arith.constant 5.000000e-01 : f32
    %488 = vector.broadcast %cst_234 : f32 to vector<8x128xf32>
    %489 = arith.addf %487, %488 : vector<8x128xf32>
    %490 = vector.extract_strided_slice %471 {offsets = [0, 256], sizes = [8, 128], strides = [1, 1]} : vector<8x512xf32> to vector<8x128xf32>
    %491 = math.tanh %490 : vector<8x128xf32>
    %492 = vector.extract_strided_slice %471 {offsets = [0, 384], sizes = [8, 128], strides = [1, 1]} : vector<8x512xf32> to vector<8x128xf32>
    %cst_235 = arith.constant 5.000000e-01 : f32
    %493 = vector.broadcast %cst_235 : f32 to vector<8x128xf32>
    %494 = arith.mulf %493, %492 : vector<8x128xf32>
    %495 = math.tanh %494 : vector<8x128xf32>
    %cst_236 = arith.constant 5.000000e-01 : f32
    %496 = vector.broadcast %cst_236 : f32 to vector<8x128xf32>
    %497 = arith.mulf %496, %495 : vector<8x128xf32>
    %cst_237 = arith.constant 5.000000e-01 : f32
    %498 = vector.broadcast %cst_237 : f32 to vector<8x128xf32>
    %499 = arith.addf %497, %498 : vector<8x128xf32>
    %500 = arith.mulf %489, %413 : vector<8x128xf32>
    %501 = arith.mulf %481, %491 : vector<8x128xf32>
    %502 = arith.addf %500, %501 : vector<8x128xf32>
    %503 = math.tanh %502 : vector<8x128xf32>
    %504 = arith.mulf %499, %503 : vector<8x128xf32>
    %505 = vector.extract_strided_slice %473 {offsets = [0, 0], sizes = [8, 128], strides = [1, 1]} : vector<8x512xf32> to vector<8x128xf32>
    %cst_238 = arith.constant 5.000000e-01 : f32
    %506 = vector.broadcast %cst_238 : f32 to vector<8x128xf32>
    %507 = arith.mulf %506, %505 : vector<8x128xf32>
    %508 = math.tanh %507 : vector<8x128xf32>
    %cst_239 = arith.constant 5.000000e-01 : f32
    %509 = vector.broadcast %cst_239 : f32 to vector<8x128xf32>
    %510 = arith.mulf %509, %508 : vector<8x128xf32>
    %cst_240 = arith.constant 5.000000e-01 : f32
    %511 = vector.broadcast %cst_240 : f32 to vector<8x128xf32>
    %512 = arith.addf %510, %511 : vector<8x128xf32>
    %513 = vector.extract_strided_slice %473 {offsets = [0, 128], sizes = [8, 128], strides = [1, 1]} : vector<8x512xf32> to vector<8x128xf32>
    %cst_241 = arith.constant 5.000000e-01 : f32
    %514 = vector.broadcast %cst_241 : f32 to vector<8x128xf32>
    %515 = arith.mulf %514, %513 : vector<8x128xf32>
    %516 = math.tanh %515 : vector<8x128xf32>
    %cst_242 = arith.constant 5.000000e-01 : f32
    %517 = vector.broadcast %cst_242 : f32 to vector<8x128xf32>
    %518 = arith.mulf %517, %516 : vector<8x128xf32>
    %cst_243 = arith.constant 5.000000e-01 : f32
    %519 = vector.broadcast %cst_243 : f32 to vector<8x128xf32>
    %520 = arith.addf %518, %519 : vector<8x128xf32>
    %521 = vector.extract_strided_slice %473 {offsets = [0, 256], sizes = [8, 128], strides = [1, 1]} : vector<8x512xf32> to vector<8x128xf32>
    %522 = math.tanh %521 : vector<8x128xf32>
    %523 = vector.extract_strided_slice %473 {offsets = [0, 384], sizes = [8, 128], strides = [1, 1]} : vector<8x512xf32> to vector<8x128xf32>
    %cst_244 = arith.constant 5.000000e-01 : f32
    %524 = vector.broadcast %cst_244 : f32 to vector<8x128xf32>
    %525 = arith.mulf %524, %523 : vector<8x128xf32>
    %526 = math.tanh %525 : vector<8x128xf32>
    %cst_245 = arith.constant 5.000000e-01 : f32
    %527 = vector.broadcast %cst_245 : f32 to vector<8x128xf32>
    %528 = arith.mulf %527, %526 : vector<8x128xf32>
    %cst_246 = arith.constant 5.000000e-01 : f32
    %529 = vector.broadcast %cst_246 : f32 to vector<8x128xf32>
    %530 = arith.addf %528, %529 : vector<8x128xf32>
    %531 = arith.mulf %520, %444 : vector<8x128xf32>
    %532 = arith.mulf %512, %522 : vector<8x128xf32>
    %533 = arith.addf %531, %532 : vector<8x128xf32>
    %534 = math.tanh %533 : vector<8x128xf32>
    %535 = arith.mulf %530, %534 : vector<8x128xf32>
    %c0_247 = arith.constant 0 : index
    %c0_248 = arith.constant 0 : index
    %536 = vector.load %arg11[%c0_247, %c0_248] : memref<8x512xf32, #tpu.memory_space<vmem>>, vector<8x128xf32>
    %537 = arith.addf %536, %504 : vector<8x128xf32>
    %c0_249 = arith.constant 0 : index
    %c0_250 = arith.constant 0 : index
    %538 = vector.load %arg11[%c0_249, %c0_250] : memref<8x512xf32, #tpu.memory_space<vmem>>, vector<8x128xf32>
    tpu.vector_store %arg11[%c0_249, %c0_250], %537 {strides = array<i32>} : memref<8x512xf32, #tpu.memory_space<vmem>>, vector<8x128xf32>,
    %c0_251 = arith.constant 0 : index
    %c128_252 = arith.constant 128 : index
    %539 = vector.load %arg11[%c0_251, %c128_252] : memref<8x512xf32, #tpu.memory_space<vmem>>, vector<8x128xf32>
    %540 = arith.addf %539, %535 : vector<8x128xf32>
    %c0_253 = arith.constant 0 : index
    %c128_254 = arith.constant 128 : index
    %541 = vector.load %arg11[%c0_253, %c128_254] : memref<8x512xf32, #tpu.memory_space<vmem>>, vector<8x128xf32>
    tpu.vector_store %arg11[%c0_253, %c128_254], %540 {strides = array<i32>} : memref<8x512xf32, #tpu.memory_space<vmem>>, vector<8x128xf32>,
    %c0_255 = arith.constant 0 : index
    %c256_256 = arith.constant 256 : index
    %542 = vector.load %arg11[%c0_255, %c256_256] : memref<8x512xf32, #tpu.memory_space<vmem>>, vector<8x128xf32>
    %543 = arith.maximumf %542, %504 : vector<8x128xf32>
    %c0_257 = arith.constant 0 : index
    %c256_258 = arith.constant 256 : index
    %544 = vector.load %arg11[%c0_257, %c256_258] : memref<8x512xf32, #tpu.memory_space<vmem>>, vector<8x128xf32>
    tpu.vector_store %arg11[%c0_257, %c256_258], %543 {strides = array<i32>} : memref<8x512xf32, #tpu.memory_space<vmem>>, vector<8x128xf32>,
    %c0_259 = arith.constant 0 : index
    %c384_260 = arith.constant 384 : index
    %545 = vector.load %arg11[%c0_259, %c384_260] : memref<8x512xf32, #tpu.memory_space<vmem>>, vector<8x128xf32>
    %546 = arith.maximumf %545, %535 : vector<8x128xf32>
    %c0_261 = arith.constant 0 : index
    %c384_262 = arith.constant 384 : index
    %547 = vector.load %arg11[%c0_261, %c384_262] : memref<8x512xf32, #tpu.memory_space<vmem>>, vector<8x128xf32>
    tpu.vector_store %arg11[%c0_261, %c384_262], %546 {strides = array<i32>} : memref<8x512xf32, #tpu.memory_space<vmem>>, vector<8x128xf32>,
    %c6_i32 = arith.constant 6 : i32
    %c7_i32_263 = arith.constant 7 : i32
    %548 = arith.subi %c7_i32_263, %c6_i32 : i32
    %549 = arith.index_cast %c6_i32 : i32 to index
    %c0_264 = arith.constant 0 : index
    %c0_265 = arith.constant 0 : index
    %550 = vector.load %arg10[%549, %c0_264, %c0_265] : memref<8x8x1024xf32, #tpu.memory_space<vmem>>, vector<1x8x512xf32>
    %551 = vector.shape_cast %550 : vector<1x8x512xf32> to vector<8x512xf32>
    %552 = arith.index_cast %548 : i32 to index
    %c0_266 = arith.constant 0 : index
    %c512_267 = arith.constant 512 : index
    %553 = vector.load %arg10[%552, %c0_266, %c512_267] : memref<8x8x1024xf32, #tpu.memory_space<vmem>>, vector<1x8x512xf32>
    %554 = vector.shape_cast %553 : vector<1x8x512xf32> to vector<8x512xf32>
    %555 = tpu.concatenate %504, %535 in 1 : vector<8x128xf32>, vector<8x128xf32> -> vector<8x256xf32>
    %556 = arith.truncf %555 : vector<8x256xf32> to vector<8x256xbf16>
    %c0_268 = arith.constant 0 : index
    %c0_269 = arith.constant 0 : index
    %557 = vector.load %arg4[%c0_268, %c0_269] : memref<256x1024xbf16, #tpu.memory_space<vmem>>, vector<256x1024xbf16>
    %cst_270 = arith.constant dense<0.000000e+00> : vector<8x1024xf32>
    %558 = tpu.matmul %556, %557, %cst_270 {dimension_numbers = #tpu.dot_dimension_numbers<[1], [0], [0], [1], [0, 0, 1, 1], [], []>} : vector<8x256xbf16>, vector<256x1024xbf16>, vector<8x1024xf32> -> vector<8x1024xf32>
    %559 = vector.extract_strided_slice %558 {offsets = [0, 0], sizes = [8, 512], strides = [1, 1]} : vector<8x1024xf32> to vector<8x512xf32>
    %560 = arith.addf %551, %559 : vector<8x512xf32>
    %561 = vector.extract_strided_slice %558 {offsets = [0, 512], sizes = [8, 512], strides = [1, 1]} : vector<8x1024xf32> to vector<8x512xf32>
    %562 = arith.addf %554, %561 : vector<8x512xf32>
    %563 = vector.extract_strided_slice %560 {offsets = [0, 0], sizes = [8, 128], strides = [1, 1]} : vector<8x512xf32> to vector<8x128xf32>
    %cst_271 = arith.constant 5.000000e-01 : f32
    %564 = vector.broadcast %cst_271 : f32 to vector<8x128xf32>
    %565 = arith.mulf %564, %563 : vector<8x128xf32>
    %566 = math.tanh %565 : vector<8x128xf32>
    %cst_272 = arith.constant 5.000000e-01 : f32
    %567 = vector.broadcast %cst_272 : f32 to vector<8x128xf32>
    %568 = arith.mulf %567, %566 : vector<8x128xf32>
    %cst_273 = arith.constant 5.000000e-01 : f32
    %569 = vector.broadcast %cst_273 : f32 to vector<8x128xf32>
    %570 = arith.addf %568, %569 : vector<8x128xf32>
    %571 = vector.extract_strided_slice %560 {offsets = [0, 128], sizes = [8, 128], strides = [1, 1]} : vector<8x512xf32> to vector<8x128xf32>
    %cst_274 = arith.constant 5.000000e-01 : f32
    %572 = vector.broadcast %cst_274 : f32 to vector<8x128xf32>
    %573 = arith.mulf %572, %571 : vector<8x128xf32>
    %574 = math.tanh %573 : vector<8x128xf32>
    %cst_275 = arith.constant 5.000000e-01 : f32
    %575 = vector.broadcast %cst_275 : f32 to vector<8x128xf32>
    %576 = arith.mulf %575, %574 : vector<8x128xf32>
    %cst_276 = arith.constant 5.000000e-01 : f32
    %577 = vector.broadcast %cst_276 : f32 to vector<8x128xf32>
    %578 = arith.addf %576, %577 : vector<8x128xf32>
    %579 = vector.extract_strided_slice %560 {offsets = [0, 256], sizes = [8, 128], strides = [1, 1]} : vector<8x512xf32> to vector<8x128xf32>
    %580 = math.tanh %579 : vector<8x128xf32>
    %581 = vector.extract_strided_slice %560 {offsets = [0, 384], sizes = [8, 128], strides = [1, 1]} : vector<8x512xf32> to vector<8x128xf32>
    %cst_277 = arith.constant 5.000000e-01 : f32
    %582 = vector.broadcast %cst_277 : f32 to vector<8x128xf32>
    %583 = arith.mulf %582, %581 : vector<8x128xf32>
    %584 = math.tanh %583 : vector<8x128xf32>
    %cst_278 = arith.constant 5.000000e-01 : f32
    %585 = vector.broadcast %cst_278 : f32 to vector<8x128xf32>
    %586 = arith.mulf %585, %584 : vector<8x128xf32>
    %cst_279 = arith.constant 5.000000e-01 : f32
    %587 = vector.broadcast %cst_279 : f32 to vector<8x128xf32>
    %588 = arith.addf %586, %587 : vector<8x128xf32>
    %589 = arith.mulf %578, %502 : vector<8x128xf32>
    %590 = arith.mulf %570, %580 : vector<8x128xf32>
    %591 = arith.addf %589, %590 : vector<8x128xf32>
    %592 = math.tanh %591 : vector<8x128xf32>
    %593 = arith.mulf %588, %592 : vector<8x128xf32>
    %594 = vector.extract_strided_slice %562 {offsets = [0, 0], sizes = [8, 128], strides = [1, 1]} : vector<8x512xf32> to vector<8x128xf32>
    %cst_280 = arith.constant 5.000000e-01 : f32
    %595 = vector.broadcast %cst_280 : f32 to vector<8x128xf32>
    %596 = arith.mulf %595, %594 : vector<8x128xf32>
    %597 = math.tanh %596 : vector<8x128xf32>
    %cst_281 = arith.constant 5.000000e-01 : f32
    %598 = vector.broadcast %cst_281 : f32 to vector<8x128xf32>
    %599 = arith.mulf %598, %597 : vector<8x128xf32>
    %cst_282 = arith.constant 5.000000e-01 : f32
    %600 = vector.broadcast %cst_282 : f32 to vector<8x128xf32>
    %601 = arith.addf %599, %600 : vector<8x128xf32>
    %602 = vector.extract_strided_slice %562 {offsets = [0, 128], sizes = [8, 128], strides = [1, 1]} : vector<8x512xf32> to vector<8x128xf32>
    %cst_283 = arith.constant 5.000000e-01 : f32
    %603 = vector.broadcast %cst_283 : f32 to vector<8x128xf32>
    %604 = arith.mulf %603, %602 : vector<8x128xf32>
    %605 = math.tanh %604 : vector<8x128xf32>
    %cst_284 = arith.constant 5.000000e-01 : f32
    %606 = vector.broadcast %cst_284 : f32 to vector<8x128xf32>
    %607 = arith.mulf %606, %605 : vector<8x128xf32>
    %cst_285 = arith.constant 5.000000e-01 : f32
    %608 = vector.broadcast %cst_285 : f32 to vector<8x128xf32>
    %609 = arith.addf %607, %608 : vector<8x128xf32>
    %610 = vector.extract_strided_slice %562 {offsets = [0, 256], sizes = [8, 128], strides = [1, 1]} : vector<8x512xf32> to vector<8x128xf32>
    %611 = math.tanh %610 : vector<8x128xf32>
    %612 = vector.extract_strided_slice %562 {offsets = [0, 384], sizes = [8, 128], strides = [1, 1]} : vector<8x512xf32> to vector<8x128xf32>
    %cst_286 = arith.constant 5.000000e-01 : f32
    %613 = vector.broadcast %cst_286 : f32 to vector<8x128xf32>
    %614 = arith.mulf %613, %612 : vector<8x128xf32>
    %615 = math.tanh %614 : vector<8x128xf32>
    %cst_287 = arith.constant 5.000000e-01 : f32
    %616 = vector.broadcast %cst_287 : f32 to vector<8x128xf32>
    %617 = arith.mulf %616, %615 : vector<8x128xf32>
    %cst_288 = arith.constant 5.000000e-01 : f32
    %618 = vector.broadcast %cst_288 : f32 to vector<8x128xf32>
    %619 = arith.addf %617, %618 : vector<8x128xf32>
    %620 = arith.mulf %609, %533 : vector<8x128xf32>
    %621 = arith.mulf %601, %611 : vector<8x128xf32>
    %622 = arith.addf %620, %621 : vector<8x128xf32>
    %623 = math.tanh %622 : vector<8x128xf32>
    %624 = arith.mulf %619, %623 : vector<8x128xf32>
    %c0_289 = arith.constant 0 : index
    %c0_290 = arith.constant 0 : index
    %625 = vector.load %arg11[%c0_289, %c0_290] : memref<8x512xf32, #tpu.memory_space<vmem>>, vector<8x128xf32>
    %626 = arith.addf %625, %593 : vector<8x128xf32>
    %c0_291 = arith.constant 0 : index
    %c0_292 = arith.constant 0 : index
    %627 = vector.load %arg11[%c0_291, %c0_292] : memref<8x512xf32, #tpu.memory_space<vmem>>, vector<8x128xf32>
    tpu.vector_store %arg11[%c0_291, %c0_292], %626 {strides = array<i32>} : memref<8x512xf32, #tpu.memory_space<vmem>>, vector<8x128xf32>,
    %c0_293 = arith.constant 0 : index
    %c128_294 = arith.constant 128 : index
    %628 = vector.load %arg11[%c0_293, %c128_294] : memref<8x512xf32, #tpu.memory_space<vmem>>, vector<8x128xf32>
    %629 = arith.addf %628, %624 : vector<8x128xf32>
    %c0_295 = arith.constant 0 : index
    %c128_296 = arith.constant 128 : index
    %630 = vector.load %arg11[%c0_295, %c128_296] : memref<8x512xf32, #tpu.memory_space<vmem>>, vector<8x128xf32>
    tpu.vector_store %arg11[%c0_295, %c128_296], %629 {strides = array<i32>} : memref<8x512xf32, #tpu.memory_space<vmem>>, vector<8x128xf32>,
    %c0_297 = arith.constant 0 : index
    %c256_298 = arith.constant 256 : index
    %631 = vector.load %arg11[%c0_297, %c256_298] : memref<8x512xf32, #tpu.memory_space<vmem>>, vector<8x128xf32>
    %632 = arith.maximumf %631, %593 : vector<8x128xf32>
    %c0_299 = arith.constant 0 : index
    %c256_300 = arith.constant 256 : index
    %633 = vector.load %arg11[%c0_299, %c256_300] : memref<8x512xf32, #tpu.memory_space<vmem>>, vector<8x128xf32>
    tpu.vector_store %arg11[%c0_299, %c256_300], %632 {strides = array<i32>} : memref<8x512xf32, #tpu.memory_space<vmem>>, vector<8x128xf32>,
    %c0_301 = arith.constant 0 : index
    %c384_302 = arith.constant 384 : index
    %634 = vector.load %arg11[%c0_301, %c384_302] : memref<8x512xf32, #tpu.memory_space<vmem>>, vector<8x128xf32>
    %635 = arith.maximumf %634, %624 : vector<8x128xf32>
    %c0_303 = arith.constant 0 : index
    %c384_304 = arith.constant 384 : index
    %636 = vector.load %arg11[%c0_303, %c384_304] : memref<8x512xf32, #tpu.memory_space<vmem>>, vector<8x128xf32>
    tpu.vector_store %arg11[%c0_303, %c384_304], %635 {strides = array<i32>} : memref<8x512xf32, #tpu.memory_space<vmem>>, vector<8x128xf32>,
    %c7_i32_305 = arith.constant 7 : i32
    %c7_i32_306 = arith.constant 7 : i32
    %637 = arith.subi %c7_i32_306, %c7_i32_305 : i32
    %638 = arith.index_cast %c7_i32_305 : i32 to index
    %c0_307 = arith.constant 0 : index
    %c0_308 = arith.constant 0 : index
    %639 = vector.load %arg10[%638, %c0_307, %c0_308] : memref<8x8x1024xf32, #tpu.memory_space<vmem>>, vector<1x8x512xf32>
    %640 = vector.shape_cast %639 : vector<1x8x512xf32> to vector<8x512xf32>
    %641 = arith.index_cast %637 : i32 to index
    %c0_309 = arith.constant 0 : index
    %c512_310 = arith.constant 512 : index
    %642 = vector.load %arg10[%641, %c0_309, %c512_310] : memref<8x8x1024xf32, #tpu.memory_space<vmem>>, vector<1x8x512xf32>
    %643 = vector.shape_cast %642 : vector<1x8x512xf32> to vector<8x512xf32>
    %644 = tpu.concatenate %593, %624 in 1 : vector<8x128xf32>, vector<8x128xf32> -> vector<8x256xf32>
    %645 = arith.truncf %644 : vector<8x256xf32> to vector<8x256xbf16>
    %c0_311 = arith.constant 0 : index
    %c0_312 = arith.constant 0 : index
    %646 = vector.load %arg4[%c0_311, %c0_312] : memref<256x1024xbf16, #tpu.memory_space<vmem>>, vector<256x1024xbf16>
    %cst_313 = arith.constant dense<0.000000e+00> : vector<8x1024xf32>
    %647 = tpu.matmul %645, %646, %cst_313 {dimension_numbers = #tpu.dot_dimension_numbers<[1], [0], [0], [1], [0, 0, 1, 1], [], []>} : vector<8x256xbf16>, vector<256x1024xbf16>, vector<8x1024xf32> -> vector<8x1024xf32>
    %648 = vector.extract_strided_slice %647 {offsets = [0, 0], sizes = [8, 512], strides = [1, 1]} : vector<8x1024xf32> to vector<8x512xf32>
    %649 = arith.addf %640, %648 : vector<8x512xf32>
    %650 = vector.extract_strided_slice %647 {offsets = [0, 512], sizes = [8, 512], strides = [1, 1]} : vector<8x1024xf32> to vector<8x512xf32>
    %651 = arith.addf %643, %650 : vector<8x512xf32>
    %652 = vector.extract_strided_slice %649 {offsets = [0, 0], sizes = [8, 128], strides = [1, 1]} : vector<8x512xf32> to vector<8x128xf32>
    %cst_314 = arith.constant 5.000000e-01 : f32
    %653 = vector.broadcast %cst_314 : f32 to vector<8x128xf32>
    %654 = arith.mulf %653, %652 : vector<8x128xf32>
    %655 = math.tanh %654 : vector<8x128xf32>
    %cst_315 = arith.constant 5.000000e-01 : f32
    %656 = vector.broadcast %cst_315 : f32 to vector<8x128xf32>
    %657 = arith.mulf %656, %655 : vector<8x128xf32>
    %cst_316 = arith.constant 5.000000e-01 : f32
    %658 = vector.broadcast %cst_316 : f32 to vector<8x128xf32>
    %659 = arith.addf %657, %658 : vector<8x128xf32>
    %660 = vector.extract_strided_slice %649 {offsets = [0, 128], sizes = [8, 128], strides = [1, 1]} : vector<8x512xf32> to vector<8x128xf32>
    %cst_317 = arith.constant 5.000000e-01 : f32
    %661 = vector.broadcast %cst_317 : f32 to vector<8x128xf32>
    %662 = arith.mulf %661, %660 : vector<8x128xf32>
    %663 = math.tanh %662 : vector<8x128xf32>
    %cst_318 = arith.constant 5.000000e-01 : f32
    %664 = vector.broadcast %cst_318 : f32 to vector<8x128xf32>
    %665 = arith.mulf %664, %663 : vector<8x128xf32>
    %cst_319 = arith.constant 5.000000e-01 : f32
    %666 = vector.broadcast %cst_319 : f32 to vector<8x128xf32>
    %667 = arith.addf %665, %666 : vector<8x128xf32>
    %668 = vector.extract_strided_slice %649 {offsets = [0, 256], sizes = [8, 128], strides = [1, 1]} : vector<8x512xf32> to vector<8x128xf32>
    %669 = math.tanh %668 : vector<8x128xf32>
    %670 = vector.extract_strided_slice %649 {offsets = [0, 384], sizes = [8, 128], strides = [1, 1]} : vector<8x512xf32> to vector<8x128xf32>
    %cst_320 = arith.constant 5.000000e-01 : f32
    %671 = vector.broadcast %cst_320 : f32 to vector<8x128xf32>
    %672 = arith.mulf %671, %670 : vector<8x128xf32>
    %673 = math.tanh %672 : vector<8x128xf32>
    %cst_321 = arith.constant 5.000000e-01 : f32
    %674 = vector.broadcast %cst_321 : f32 to vector<8x128xf32>
    %675 = arith.mulf %674, %673 : vector<8x128xf32>
    %cst_322 = arith.constant 5.000000e-01 : f32
    %676 = vector.broadcast %cst_322 : f32 to vector<8x128xf32>
    %677 = arith.addf %675, %676 : vector<8x128xf32>
    %678 = arith.mulf %667, %591 : vector<8x128xf32>
    %679 = arith.mulf %659, %669 : vector<8x128xf32>
    %680 = arith.addf %678, %679 : vector<8x128xf32>
    %681 = math.tanh %680 : vector<8x128xf32>
    %682 = arith.mulf %677, %681 : vector<8x128xf32>
    %683 = vector.extract_strided_slice %651 {offsets = [0, 0], sizes = [8, 128], strides = [1, 1]} : vector<8x512xf32> to vector<8x128xf32>
    %cst_323 = arith.constant 5.000000e-01 : f32
    %684 = vector.broadcast %cst_323 : f32 to vector<8x128xf32>
    %685 = arith.mulf %684, %683 : vector<8x128xf32>
    %686 = math.tanh %685 : vector<8x128xf32>
    %cst_324 = arith.constant 5.000000e-01 : f32
    %687 = vector.broadcast %cst_324 : f32 to vector<8x128xf32>
    %688 = arith.mulf %687, %686 : vector<8x128xf32>
    %cst_325 = arith.constant 5.000000e-01 : f32
    %689 = vector.broadcast %cst_325 : f32 to vector<8x128xf32>
    %690 = arith.addf %688, %689 : vector<8x128xf32>
    %691 = vector.extract_strided_slice %651 {offsets = [0, 128], sizes = [8, 128], strides = [1, 1]} : vector<8x512xf32> to vector<8x128xf32>
    %cst_326 = arith.constant 5.000000e-01 : f32
    %692 = vector.broadcast %cst_326 : f32 to vector<8x128xf32>
    %693 = arith.mulf %692, %691 : vector<8x128xf32>
    %694 = math.tanh %693 : vector<8x128xf32>
    %cst_327 = arith.constant 5.000000e-01 : f32
    %695 = vector.broadcast %cst_327 : f32 to vector<8x128xf32>
    %696 = arith.mulf %695, %694 : vector<8x128xf32>
    %cst_328 = arith.constant 5.000000e-01 : f32
    %697 = vector.broadcast %cst_328 : f32 to vector<8x128xf32>
    %698 = arith.addf %696, %697 : vector<8x128xf32>
    %699 = vector.extract_strided_slice %651 {offsets = [0, 256], sizes = [8, 128], strides = [1, 1]} : vector<8x512xf32> to vector<8x128xf32>
    %700 = math.tanh %699 : vector<8x128xf32>
    %701 = vector.extract_strided_slice %651 {offsets = [0, 384], sizes = [8, 128], strides = [1, 1]} : vector<8x512xf32> to vector<8x128xf32>
    %cst_329 = arith.constant 5.000000e-01 : f32
    %702 = vector.broadcast %cst_329 : f32 to vector<8x128xf32>
    %703 = arith.mulf %702, %701 : vector<8x128xf32>
    %704 = math.tanh %703 : vector<8x128xf32>
    %cst_330 = arith.constant 5.000000e-01 : f32
    %705 = vector.broadcast %cst_330 : f32 to vector<8x128xf32>
    %706 = arith.mulf %705, %704 : vector<8x128xf32>
    %cst_331 = arith.constant 5.000000e-01 : f32
    %707 = vector.broadcast %cst_331 : f32 to vector<8x128xf32>
    %708 = arith.addf %706, %707 : vector<8x128xf32>
    %709 = arith.mulf %698, %622 : vector<8x128xf32>
    %710 = arith.mulf %690, %700 : vector<8x128xf32>
    %711 = arith.addf %709, %710 : vector<8x128xf32>
    %712 = math.tanh %711 : vector<8x128xf32>
    %713 = arith.mulf %708, %712 : vector<8x128xf32>
    %c0_332 = arith.constant 0 : index
    %c0_333 = arith.constant 0 : index
    %714 = vector.load %arg11[%c0_332, %c0_333] : memref<8x512xf32, #tpu.memory_space<vmem>>, vector<8x128xf32>
    %715 = arith.addf %714, %682 : vector<8x128xf32>
    %c0_334 = arith.constant 0 : index
    %c0_335 = arith.constant 0 : index
    %716 = vector.load %arg11[%c0_334, %c0_335] : memref<8x512xf32, #tpu.memory_space<vmem>>, vector<8x128xf32>
    tpu.vector_store %arg11[%c0_334, %c0_335], %715 {strides = array<i32>} : memref<8x512xf32, #tpu.memory_space<vmem>>, vector<8x128xf32>,
    %c0_336 = arith.constant 0 : index
    %c128_337 = arith.constant 128 : index
    %717 = vector.load %arg11[%c0_336, %c128_337] : memref<8x512xf32, #tpu.memory_space<vmem>>, vector<8x128xf32>
    %718 = arith.addf %717, %713 : vector<8x128xf32>
    %c0_338 = arith.constant 0 : index
    %c128_339 = arith.constant 128 : index
    %719 = vector.load %arg11[%c0_338, %c128_339] : memref<8x512xf32, #tpu.memory_space<vmem>>, vector<8x128xf32>
    tpu.vector_store %arg11[%c0_338, %c128_339], %718 {strides = array<i32>} : memref<8x512xf32, #tpu.memory_space<vmem>>, vector<8x128xf32>,
    %c0_340 = arith.constant 0 : index
    %c256_341 = arith.constant 256 : index
    %720 = vector.load %arg11[%c0_340, %c256_341] : memref<8x512xf32, #tpu.memory_space<vmem>>, vector<8x128xf32>
    %721 = arith.maximumf %720, %682 : vector<8x128xf32>
    %c0_342 = arith.constant 0 : index
    %c256_343 = arith.constant 256 : index
    %722 = vector.load %arg11[%c0_342, %c256_343] : memref<8x512xf32, #tpu.memory_space<vmem>>, vector<8x128xf32>
    tpu.vector_store %arg11[%c0_342, %c256_343], %721 {strides = array<i32>} : memref<8x512xf32, #tpu.memory_space<vmem>>, vector<8x128xf32>,
    %c0_344 = arith.constant 0 : index
    %c384_345 = arith.constant 384 : index
    %723 = vector.load %arg11[%c0_344, %c384_345] : memref<8x512xf32, #tpu.memory_space<vmem>>, vector<8x128xf32>
    %724 = arith.maximumf %723, %713 : vector<8x128xf32>
    %c0_346 = arith.constant 0 : index
    %c384_347 = arith.constant 384 : index
    %725 = vector.load %arg11[%c0_346, %c384_347] : memref<8x512xf32, #tpu.memory_space<vmem>>, vector<8x128xf32>
    tpu.vector_store %arg11[%c0_346, %c384_347], %724 {strides = array<i32>} : memref<8x512xf32, #tpu.memory_space<vmem>>, vector<8x128xf32>,
    %c8_i32 = arith.constant 8 : i32
    %c0_348 = arith.constant 0 : index
    %c0_349 = arith.constant 0 : index
    %726 = vector.load %arg11[%c0_348, %c0_349] : memref<8x512xf32, #tpu.memory_space<vmem>>, vector<8x256xf32>
    %cst_350 = arith.constant 1.250000e-01 : f32
    %727 = vector.broadcast %cst_350 : f32 to vector<8x256xf32>
    %728 = arith.mulf %726, %727 : vector<8x256xf32>
    %c0_351 = arith.constant 0 : index
    %c0_352 = arith.constant 0 : index
    %729 = vector.load %arg11[%c0_351, %c0_352] : memref<8x512xf32, #tpu.memory_space<vmem>>, vector<8x256xf32>
    tpu.vector_store %arg11[%c0_351, %c0_352], %728 {strides = array<i32>} : memref<8x512xf32, #tpu.memory_space<vmem>>, vector<8x256xf32>,
    %c0_353 = arith.constant 0 : index
    %c0_354 = arith.constant 0 : index
    %730 = vector.load %arg11[%c0_353, %c0_354] : memref<8x512xf32, #tpu.memory_space<vmem>>, vector<8x512xf32>
    %c0_355 = arith.constant 0 : index
    %c0_356 = arith.constant 0 : index
    %731 = vector.load %arg5[%c0_355, %c0_356] : memref<512x128xf32, #tpu.memory_space<vmem>>, vector<512x128xf32>
    %cst_357 = arith.constant dense<0.000000e+00> : vector<8x128xf32>
    %732 = tpu.matmul %730, %731, %cst_357 {dimension_numbers = #tpu.dot_dimension_numbers<[1], [0], [0], [1], [0, 0, 1, 1], [], []>} : vector<8x512xf32>, vector<512x128xf32>, vector<8x128xf32> -> vector<8x128xf32>
    %c0_358 = arith.constant 0 : index
    %c0_359 = arith.constant 0 : index
    %733 = vector.load %arg6[%c0_358, %c0_359] : memref<1x128xf32, #tpu.memory_space<vmem>>, vector<1x128xf32>
    %734 = vector.broadcast %733 : vector<1x128xf32> to vector<8x128xf32>
    %735 = arith.addf %732, %734 : vector<8x128xf32>
    %cst_360 = arith.constant 0.000000e+00 : f32
    %736 = vector.broadcast %cst_360 : f32 to vector<8x128xf32>
    %737 = arith.maximumf %735, %736 : vector<8x128xf32>
    %c0_361 = arith.constant 0 : index
    %c0_362 = arith.constant 0 : index
    %738 = vector.load %arg7[%c0_361, %c0_362] : memref<128x128xf32, #tpu.memory_space<vmem>>, vector<128x128xf32>
    %cst_363 = arith.constant dense<0.000000e+00> : vector<8x128xf32>
    %739 = tpu.matmul %737, %738, %cst_363 {dimension_numbers = #tpu.dot_dimension_numbers<[1], [0], [0], [1], [0, 0, 1, 1], [], []>} : vector<8x128xf32>, vector<128x128xf32>, vector<8x128xf32> -> vector<8x128xf32>
    %c0_364 = arith.constant 0 : index
    %c0_365 = arith.constant 0 : index
    %740 = vector.load %arg8[%c0_364, %c0_365] : memref<1x128xf32, #tpu.memory_space<vmem>>, vector<1x128xf32>
    %741 = vector.broadcast %740 : vector<1x128xf32> to vector<8x128xf32>
    %742 = arith.addf %739, %741 : vector<8x128xf32>
    %c0_366 = arith.constant 0 : index
    %c0_367 = arith.constant 0 : index
    %743 = vector.load %arg9[%c0_366, %c0_367] : memref<8x128xf32, #tpu.memory_space<vmem>>, vector<8x128xf32>
    tpu.vector_store %arg9[%c0_366, %c0_367], %742 {strides = array<i32>} : memref<8x128xf32, #tpu.memory_space<vmem>>, vector<8x128xf32>,
    return
  }
  func.func @transform_0(%arg0: i32) -> (i32, i32, i32) {
    %c0_i32 = arith.constant 0 : i32
    %c0_i32_0 = arith.constant 0 : i32
    %c0_i32_1 = arith.constant 0 : i32
    return %c0_i32, %arg0, %c0_i32_0 : i32, i32, i32
  }
  func.func @transform_1(%arg0: i32) -> (i32, i32) {
    %c0_i32 = arith.constant 0 : i32
    %c0_i32_0 = arith.constant 0 : i32
    %c0_i32_1 = arith.constant 0 : i32
    return %c0_i32, %c0_i32_0 : i32, i32
  }
  func.func @transform_2(%arg0: i32) -> (i32, i32) {
    %c0_i32 = arith.constant 0 : i32
    %c0_i32_0 = arith.constant 0 : i32
    %c0_i32_1 = arith.constant 0 : i32
    return %c0_i32, %c0_i32_0 : i32, i32
  }
  func.func @transform_3(%arg0: i32) -> (i32, i32) {
    %c0_i32 = arith.constant 0 : i32
    %c0_i32_0 = arith.constant 0 : i32
    %c0_i32_1 = arith.constant 0 : i32
    return %c0_i32, %c0_i32_0 : i32, i32
  }
  func.func @transform_4(%arg0: i32) -> (i32, i32) {
    %c0_i32 = arith.constant 0 : i32
    %c0_i32_0 = arith.constant 0 : i32
    %c0_i32_1 = arith.constant 0 : i32
    return %c0_i32, %c0_i32_0 : i32, i32
  }
  func.func @transform_5(%arg0: i32) -> (i32, i32) {
    %c0_i32 = arith.constant 0 : i32
    %c0_i32_0 = arith.constant 0 : i32
    %c0_i32_1 = arith.constant 0 : i32
    return %c0_i32, %c0_i32_0 : i32, i32
  }
  func.func @transform_6(%arg0: i32) -> (i32, i32) {
    %c0_i32 = arith.constant 0 : i32
    %c0_i32_0 = arith.constant 0 : i32
    %c0_i32_1 = arith.constant 0 : i32
    return %c0_i32, %c0_i32_0 : i32, i32
  }
  func.func @transform_7(%arg0: i32) -> (i32, i32) {
    %c0_i32 = arith.constant 0 : i32
    %c0_i32_0 = arith.constant 0 : i32
    %c0_i32_1 = arith.constant 0 : i32
    return %c0_i32, %c0_i32_0 : i32, i32
  }
  func.func @transform_8(%arg0: i32) -> (i32, i32) {
    %c0_i32 = arith.constant 0 : i32
    %c0_i32_0 = arith.constant 0 : i32
    return %arg0, %c0_i32 : i32, i32
  }
}

</mosaic_0001>

<llo_original>
// kernel: bilstm_forward.1
$region0: #{bilstm_forward.1}
  #allocation0 [shape = 'u32[]', space=smem, size = 0x4, offset = 0x4, fixed_abs, tag = 'smem constant byte address 0x4 - core index']
  #allocation1 [shape = 'u32[72,128]{1,0:T(1,128)}', space=vmem, size = 0x9000, scoped, tag = 'internal scratch']
  #allocation2 [shape = 'f32[8,8,1024]{2,1,0:T(8,128)}', space=vmem, size = 0x40000, scoped, tag = 'scratch operand']
  #allocation3 [shape = 'f32[8,512]{1,0:T(8,128)}', space=vmem, size = 0x4000, scoped, tag = 'scratch operand']
  %s0 = inlined_call_operand.vmem [shape: bf16[8,8,300], index: 0, kind: input, shape index: {}]
  %s1 = inlined_call_operand.vmem [shape: bf16[300,1024], index: 1, kind: input, shape index: {}]
  %s2 = inlined_call_operand.vmem [shape: f32[1,1024], index: 2, kind: input, shape index: {}]
  %s3 = inlined_call_operand.vmem [shape: bf16[256,1024], index: 3, kind: input, shape index: {}]
  %s4 = inlined_call_operand.vmem [shape: f32[512,128], index: 4, kind: input, shape index: {}]
  %s5 = inlined_call_operand.vmem [shape: f32[1,128], index: 5, kind: input, shape index: {}]
  %s6 = inlined_call_operand.vmem [shape: f32[128,128], index: 6, kind: input, shape index: {}]
  %s7 = inlined_call_operand.vmem [shape: f32[1,128], index: 7, kind: input, shape index: {}]
  %s8 = inlined_call_operand.vmem [shape: f32[8,128], index: 8, kind: output, shape index: {}]
  %s9 = sld [smem:[#allocation0]]
  $region42: #{bilstm_forward.1} parent=0
    _
  %s11 = ssub.s32 1, %s9
  %s12 = scalar_select 0, %s11, %s9
  // Predicated region
  $region2: #{bilstm_forward.1} parent=0 // pred_check
    _
  $region3: #{bilstm_forward.1} parent=0 // pred_check_branch
    %14 = sbr.rel (0) target = $region5
  $region4: #{bilstm_forward.1} parent=0 // pred_region
    _
  $region5: #{bilstm_forward.1} parent=0 // pred_fallthru
    _
  // Predicated region
  $region6: #{bilstm_forward.1} parent=0 // pred_check
    _
  $region7: #{bilstm_forward.1} parent=0 // pred_check_branch
    %16 = sbr.rel (0) target = $region9
  $region8: #{bilstm_forward.1} parent=0 // pred_region
    _
  $region9: #{bilstm_forward.1} parent=0 // pred_fallthru
    _
  // Predicated region
  $region10: #{bilstm_forward.1} parent=0 // pred_check
    _
  $region11: #{bilstm_forward.1} parent=0 // pred_check_branch
    %18 = sbr.rel (0) target = $region13
  $region12: #{bilstm_forward.1} parent=0 // pred_region
    _
  $region13: #{bilstm_forward.1} parent=0 // pred_fallthru
    _
  // Predicated region
  $region14: #{bilstm_forward.1} parent=0 // pred_check
    _
  $region15: #{bilstm_forward.1} parent=0 // pred_check_branch
    %20 = sbr.rel (0) target = $region17
  $region16: #{bilstm_forward.1} parent=0 // pred_region
    _
  $region17: #{bilstm_forward.1} parent=0 // pred_fallthru
    _
  // Predicated region
  $region18: #{bilstm_forward.1} parent=0 // pred_check
    _
  $region19: #{bilstm_forward.1} parent=0 // pred_check_branch
    %22 = sbr.rel (0) target = $region21
  $region20: #{bilstm_forward.1} parent=0 // pred_region
    _
  $region21: #{bilstm_forward.1} parent=0 // pred_fallthru
    _
  // Predicated region
  $region22: #{bilstm_forward.1} parent=0 // pred_check
    _
  $region23: #{bilstm_forward.1} parent=0 // pred_check_branch
    %24 = sbr.rel (0) target = $region25
  $region24: #{bilstm_forward.1} parent=0 // pred_region
    _
  $region25: #{bilstm_forward.1} parent=0 // pred_fallthru
    _
  // Predicated region
  $region26: #{bilstm_forward.1} parent=0 // pred_check
    _
  $region27: #{bilstm_forward.1} parent=0 // pred_check_branch
    %26 = sbr.rel (0) target = $region29
  $region28: #{bilstm_forward.1} parent=0 // pred_region
    _
  $region29: #{bilstm_forward.1} parent=0 // pred_fallthru
    _
  // Predicated region
  $region30: #{bilstm_forward.1} parent=0 // pred_check
    _
  $region31: #{bilstm_forward.1} parent=0 // pred_check_branch
    %28 = sbr.rel (0) target = $region33
  $region32: #{bilstm_forward.1} parent=0 // pred_region
    _
  $region33: #{bilstm_forward.1} parent=0 // pred_fallthru
    _
  %v30 = vld [vmem:[%s0] sm:$0xff]
  %v31 = vld [vmem:[%s0 + $0x8] sm:$0xf]
  %v32 = vld [vmem:[%s0 + $0xc] sm:$0xff]
  %v33 = vld [vmem:[%s0 + $0x14] sm:$0xf]
  %v34 = vld [vmem:[%s0 + $0x18] sm:$0xff]
  %v35 = vld [vmem:[%s0 + $0x20] sm:$0xf]
  %v36 = vld [vmem:[%s0 + $0x24] sm:$0xff]
  %v37 = vld [vmem:[%s0 + $0x2c] sm:$0xf]
  %v38 = vld [vmem:[%s0 + $0x30] sm:$0xff]
  %v39 = vld [vmem:[%s0 + $0x38] sm:$0xf]
  %v40 = vld [vmem:[%s0 + $0x3c] sm:$0xff]
  %v41 = vld [vmem:[%s0 + $0x44] sm:$0xf]
  %v42 = vld [vmem:[%s0 + $0x48] sm:$0xff]
  %v43 = vld [vmem:[%s0 + $0x50] sm:$0xf]
  %v44 = vld [vmem:[%s0 + $0x54] sm:$0xff]
  %v45 = vld [vmem:[%s0 + $0x5c] sm:$0xf]
  %v46 = vld [vmem:[%s1] sm:$0xff]
  %v47 = vld [vmem:[%s1 + $0x8] sm:$0xff]
  %v48 = vld [vmem:[%s1 + $0x10] sm:$0xff]
  %v49 = vld [vmem:[%s1 + $0x18] sm:$0xff]
  %v50 = vld [vmem:[%s1 + $0x20] sm:$0xff]
  %v51 = vld [vmem:[%s1 + $0x28] sm:$0xff]
  %v52 = vld [vmem:[%s1 + $0x30] sm:$0xff]
  %v53 = vld [vmem:[%s1 + $0x38] sm:$0xff]
  %v54 = vld [vmem:[%s1 + $0x40] sm:$0xff]
  %v55 = vld [vmem:[%s1 + $0x48] sm:$0xff]
  %v56 = vld [vmem:[%s1 + $0x50] sm:$0xff]
  %v57 = vld [vmem:[%s1 + $0x58] sm:$0xff]
  %v58 = vld [vmem:[%s1 + $0x60] sm:$0xff]
  %v59 = vld [vmem:[%s1 + $0x68] sm:$0xff]
  %v60 = vld [vmem:[%s1 + $0x70] sm:$0xff]
  %v61 = vld [vmem:[%s1 + $0x78] sm:$0xff]
  %v62 = vld [vmem:[%s1 + $0x80] sm:$0xff]
  %v63 = vld [vmem:[%s1 + $0x88] sm:$0xff]
  %v64 = vld [vmem:[%s1 + $0x90] sm:$0xff]
  %v65 = vld [vmem:[%s1 + $0x98] sm:$0xff]
  %v66 = vld [vmem:[%s1 + $0xa0] sm:$0xff]
  %v67 = vld [vmem:[%s1 + $0xa8] sm:$0xff]
  %v68 = vld [vmem:[%s1 + $0xb0] sm:$0xff]
  %v69 = vld [vmem:[%s1 + $0xb8] sm:$0xff]
  %v70 = vld [vmem:[%s1 + $0xc0] sm:$0xff]
  %v71 = vld [vmem:[%s1 + $0xc8] sm:$0xff]
  %v72 = vld [vmem:[%s1 + $0xd0] sm:$0xff]
  %v73 = vld [vmem:[%s1 + $0xd8] sm:$0xff]
  %v74 = vld [vmem:[%s1 + $0xe0] sm:$0xff]
  %v75 = vld [vmem:[%s1 + $0xe8] sm:$0xff]
  %v76 = vld [vmem:[%s1 + $0xf0] sm:$0xff]
  %v77 = vld [vmem:[%s1 + $0xf8] sm:$0xff]
  %v78 = vld [vmem:[%s1 + $0x100] sm:$0xff]
  %v79 = vld [vmem:[%s1 + $0x108] sm:$0xff]
  %v80 = vld [vmem:[%s1 + $0x110] sm:$0xff]
  %v81 = vld [vmem:[%s1 + $0x118] sm:$0xff]
  %v82 = vld [vmem:[%s1 + $0x120] sm:$0xff]
  %v83 = vld [vmem:[%s1 + $0x128] sm:$0xff]
  %v84 = vld [vmem:[%s1 + $0x130] sm:$0xff]
  %v85 = vld [vmem:[%s1 + $0x138] sm:$0xff]
  %v86 = vld [vmem:[%s1 + $0x140] sm:$0xff]
  %v87 = vld [vmem:[%s1 + $0x148] sm:$0xff]
  %v88 = vld [vmem:[%s1 + $0x150] sm:$0xff]
  %v89 = vld [vmem:[%s1 + $0x158] sm:$0xff]
  %v90 = vld [vmem:[%s1 + $0x160] sm:$0xff]
  %v91 = vld [vmem:[%s1 + $0x168] sm:$0xff]
  %v92 = vld [vmem:[%s1 + $0x170] sm:$0xff]
  %v93 = vld [vmem:[%s1 + $0x178] sm:$0xff]
  %v94 = vld [vmem:[%s1 + $0x180] sm:$0xff]
  %v95 = vld [vmem:[%s1 + $0x188] sm:$0xff]
  %v96 = vld [vmem:[%s1 + $0x190] sm:$0xff]
  %v97 = vld [vmem:[%s1 + $0x198] sm:$0xff]
  %v98 = vld [vmem:[%s1 + $0x1a0] sm:$0xff]
  %v99 = vld [vmem:[%s1 + $0x1a8] sm:$0xff]
  %v100 = vld [vmem:[%s1 + $0x1b0] sm:$0xff]
  %v101 = vld [vmem:[%s1 + $0x1b8] sm:$0xff]
  %v102 = vld [vmem:[%s1 + $0x1c0] sm:$0xff]
  %v103 = vld [vmem:[%s1 + $0x1c8] sm:$0xff]
  %v104 = vld [vmem:[%s1 + $0x1d0] sm:$0xff]
  %v105 = vld [vmem:[%s1 + $0x1d8] sm:$0xff]
  %v106 = vld [vmem:[%s1 + $0x1e0] sm:$0xff]
  %v107 = vld [vmem:[%s1 + $0x1e8] sm:$0xff]
  %v108 = vld [vmem:[%s1 + $0x1f0] sm:$0xff]
  %v109 = vld [vmem:[%s1 + $0x1f8] sm:$0xff]
  %v110 = vld [vmem:[%s1 + $0x200] sm:$0xff]
  %v111 = vld [vmem:[%s1 + $0x208] sm:$0xff]
  %v112 = vld [vmem:[%s1 + $0x210] sm:$0xff]
  %v113 = vld [vmem:[%s1 + $0x218] sm:$0xff]
  %v114 = vld [vmem:[%s1 + $0x220] sm:$0xff]
  %v115 = vld [vmem:[%s1 + $0x228] sm:$0xff]
  %v116 = vld [vmem:[%s1 + $0x230] sm:$0xff]
  %v117 = vld [vmem:[%s1 + $0x238] sm:$0xff]
  %v118 = vld [vmem:[%s1 + $0x240] sm:$0xff]
  %v119 = vld [vmem:[%s1 + $0x248] sm:$0xff]
  %v120 = vld [vmem:[%s1 + $0x250] sm:$0xff]
  %v121 = vld [vmem:[%s1 + $0x258] sm:$0xff]
  %v122 = vld [vmem:[%s1 + $0x260] sm:$0xff]
  %v123 = vld [vmem:[%s1 + $0x268] sm:$0xff]
  %v124 = vld [vmem:[%s1 + $0x270] sm:$0xff]
  %v125 = vld [vmem:[%s1 + $0x278] sm:$0xff]
  %v126 = vld [vmem:[%s1 + $0x280] sm:$0xff]
  %v127 = vld [vmem:[%s1 + $0x288] sm:$0xff]
  %v128 = vld [vmem:[%s1 + $0x290] sm:$0xff]
  %v129 = vld [vmem:[%s1 + $0x298] sm:$0xff]
  %v130 = vld [vmem:[%s1 + $0x2a0] sm:$0xff]
  %v131 = vld [vmem:[%s1 + $0x2a8] sm:$0xff]
  %v132 = vld [vmem:[%s1 + $0x2b0] sm:$0xff]
  %v133 = vld [vmem:[%s1 + $0x2b8] sm:$0xff]
  %v134 = vld [vmem:[%s1 + $0x2c0] sm:$0xff]
  %v135 = vld [vmem:[%s1 + $0x2c8] sm:$0xff]
  %v136 = vld [vmem:[%s1 + $0x2d0] sm:$0xff]
  %v137 = vld [vmem:[%s1 + $0x2d8] sm:$0xff]
  %v138 = vld [vmem:[%s1 + $0x2e0] sm:$0xff]
  %v139 = vld [vmem:[%s1 + $0x2e8] sm:$0xff]
  %v140 = vld [vmem:[%s1 + $0x2f0] sm:$0xff]
  %v141 = vld [vmem:[%s1 + $0x2f8] sm:$0xff]
  %v142 = vld [vmem:[%s1 + $0x300] sm:$0xff]
  %v143 = vld [vmem:[%s1 + $0x308] sm:$0xff]
  %v144 = vld [vmem:[%s1 + $0x310] sm:$0xff]
  %v145 = vld [vmem:[%s1 + $0x318] sm:$0xff]
  %v146 = vld [vmem:[%s1 + $0x320] sm:$0xff]
  %v147 = vld [vmem:[%s1 + $0x328] sm:$0xff]
  %v148 = vld [vmem:[%s1 + $0x330] sm:$0xff]
  %v149 = vld [vmem:[%s1 + $0x338] sm:$0xff]
  %v150 = vld [vmem:[%s1 + $0x340] sm:$0xff]
  %v151 = vld [vmem:[%s1 + $0x348] sm:$0xff]
  %v152 = vld [vmem:[%s1 + $0x350] sm:$0xff]
  %v153 = vld [vmem:[%s1 + $0x358] sm:$0xff]
  %v154 = vld [vmem:[%s1 + $0x360] sm:$0xff]
  %v155 = vld [vmem:[%s1 + $0x368] sm:$0xff]
  %v156 = vld [vmem:[%s1 + $0x370] sm:$0xff]
  %v157 = vld [vmem:[%s1 + $0x378] sm:$0xff]
  %v158 = vld [vmem:[%s1 + $0x380] sm:$0xff]
  %v159 = vld [vmem:[%s1 + $0x388] sm:$0xff]
  %v160 = vld [vmem:[%s1 + $0x390] sm:$0xff]
  %v161 = vld [vmem:[%s1 + $0x398] sm:$0xff]
  %v162 = vld [vmem:[%s1 + $0x3a0] sm:$0xff]
  %v163 = vld [vmem:[%s1 + $0x3a8] sm:$0xff]
  %v164 = vld [vmem:[%s1 + $0x3b0] sm:$0xff]
  %v165 = vld [vmem:[%s1 + $0x3b8] sm:$0xff]
  %v166 = vld [vmem:[%s1 + $0x3c0] sm:$0xff]
  %v167 = vld [vmem:[%s1 + $0x3c8] sm:$0xff]
  %v168 = vld [vmem:[%s1 + $0x3d0] sm:$0xff]
  %v169 = vld [vmem:[%s1 + $0x3d8] sm:$0xff]
  %v170 = vld [vmem:[%s1 + $0x3e0] sm:$0xff]
  %v171 = vld [vmem:[%s1 + $0x3e8] sm:$0xff]
  %v172 = vld [vmem:[%s1 + $0x3f0] sm:$0xff]
  %v173 = vld [vmem:[%s1 + $0x3f8] sm:$0xff]
  %v174 = vld [vmem:[%s1 + $0x400] sm:$0xff]
  %v175 = vld [vmem:[%s1 + $0x408] sm:$0xff]
  %v176 = vld [vmem:[%s1 + $0x410] sm:$0xff]
  %v177 = vld [vmem:[%s1 + $0x418] sm:$0xff]
  %v178 = vld [vmem:[%s1 + $0x420] sm:$0xff]
  %v179 = vld [vmem:[%s1 + $0x428] sm:$0xff]
  %v180 = vld [vmem:[%s1 + $0x430] sm:$0xff]
  %v181 = vld [vmem:[%s1 + $0x438] sm:$0xff]
  %v182 = vld [vmem:[%s1 + $0x440] sm:$0xff]
  %v183 = vld [vmem:[%s1 + $0x448] sm:$0xff]
  %v184 = vld [vmem:[%s1 + $0x450] sm:$0xff]
  %v185 = vld [vmem:[%s1 + $0x458] sm:$0xff]
  %v186 = vld [vmem:[%s1 + $0x460] sm:$0xff]
  %v187 = vld [vmem:[%s1 + $0x468] sm:$0xff]
  %v188 = vld [vmem:[%s1 + $0x470] sm:$0xff]
  %v189 = vld [vmem:[%s1 + $0x478] sm:$0xff]
  %v190 = vld [vmem:[%s1 + $0x480] sm:$0xff]
  %v191 = vld [vmem:[%s1 + $0x488] sm:$0xff]
  %v192 = vld [vmem:[%s1 + $0x490] sm:$0xff]
  %v193 = vld [vmem:[%s1 + $0x498] sm:$0xff]
  %v194 = vld [vmem:[%s1 + $0x4a0] sm:$0x33]
  %v195 = vld [vmem:[%s1 + $0x4a8] sm:$0x33]
  %v196 = vld [vmem:[%s1 + $0x4b0] sm:$0x33]
  %v197 = vld [vmem:[%s1 + $0x4b8] sm:$0x33]
  %v198 = vld [vmem:[%s2] sm:$0xff]
  %v200 = vperm.slane %v198, 0
  %v201 = vperm.slane %v198, 1
  %v202 = vperm.slane %v198, 2
  %v203 = vperm.slane %v198, 3
  %v204 = vperm.slane %v198, 4
  %v205 = vperm.slane %v198, 5
  %v206 = vperm.slane %v198, 6
  %v207 = vperm.slane %v198, 7
  %v232 = vunpack.c.l.b16 %v30
  %v233 = vunpack.c.h.b16 %v30
  %v234 = vunpack.c.l.b16 %v31
  %v235 = vunpack.c.l.b16 %v32
  %v236 = vunpack.c.h.b16 %v32
  %v237 = vunpack.c.l.b16 %v33
  %v238 = vunpack.c.l.b16 %v34
  %v239 = vunpack.c.h.b16 %v34
  %v240 = vunpack.c.l.b16 %v35
  %v241 = vunpack.c.l.b16 %v36
  %v242 = vunpack.c.h.b16 %v36
  %v243 = vunpack.c.l.b16 %v37
  %v244 = vunpack.c.l.b16 %v38
  %v245 = vunpack.c.h.b16 %v38
  %v246 = vunpack.c.l.b16 %v39
  %v247 = vunpack.c.l.b16 %v40
  %v248 = vunpack.c.h.b16 %v40
  %v249 = vunpack.c.l.b16 %v41
  %v250 = vunpack.c.l.b16 %v42
  %v251 = vunpack.c.h.b16 %v42
  %v252 = vunpack.c.l.b16 %v43
  %v253 = vunpack.c.l.b16 %v44
  %v254 = vunpack.c.h.b16 %v44
  %v255 = vunpack.c.l.b16 %v45
  %v256 = vpack.c.b16 %v235, %v232
  %v257 = vpack.c.b16 %v236, %v233
  %v258 = vpack.c.b16 %v237, %v234
  %v259 = vpack.c.b16 %v241, %v238
  %v260 = vpack.c.b16 %v242, %v239
  %v261 = vpack.c.b16 %v243, %v240
  %v262 = vpack.c.b16 %v247, %v244
  %v263 = vpack.c.b16 %v248, %v245
  %v264 = vpack.c.b16 %v249, %v246
  %v265 = vpack.c.b16 %v253, %v250
  %v266 = vpack.c.b16 %v254, %v251
  %v267 = vpack.c.b16 %v255, %v252
  %v428 = vunpack.c.l.b16 %v46
  %v429 = vunpack.c.h.b16 %v46
  %v430 = vunpack.c.l.b16 %v47
  %v431 = vunpack.c.h.b16 %v47
  %v432 = vunpack.c.l.b16 %v48
  %v433 = vunpack.c.h.b16 %v48
  %v434 = vunpack.c.l.b16 %v49
  %v435 = vunpack.c.h.b16 %v49
  %v436 = vunpack.c.l.b16 %v50
  %v437 = vunpack.c.h.b16 %v50
  %v438 = vunpack.c.l.b16 %v51
  %v439 = vunpack.c.h.b16 %v51
  %v440 = vunpack.c.l.b16 %v52
  %v441 = vunpack.c.h.b16 %v52
  %v442 = vunpack.c.l.b16 %v53
  %v443 = vunpack.c.h.b16 %v53
  %v444 = vunpack.c.l.b16 %v54
  %v445 = vunpack.c.h.b16 %v54
  %v446 = vunpack.c.l.b16 %v55
  %v447 = vunpack.c.h.b16 %v55
  %v448 = vunpack.c.l.b16 %v56
  %v449 = vunpack.c.h.b16 %v56
  %v450 = vunpack.c.l.b16 %v57
  %v451 = vunpack.c.h.b16 %v57
  %v452 = vunpack.c.l.b16 %v58
  %v453 = vunpack.c.h.b16 %v58
  %v454 = vunpack.c.l.b16 %v59
  %v455 = vunpack.c.h.b16 %v59
  %v456 = vunpack.c.l.b16 %v60
  %v457 = vunpack.c.h.b16 %v60
  %v458 = vunpack.c.l.b16 %v61
  %v459 = vunpack.c.h.b16 %v61
  %v460 = vunpack.c.l.b16 %v62
  %v461 = vunpack.c.h.b16 %v62
  %v462 = vunpack.c.l.b16 %v63
  %v463 = vunpack.c.h.b16 %v63
  %v464 = vunpack.c.l.b16 %v64
  %v465 = vunpack.c.h.b16 %v64
  %v466 = vunpack.c.l.b16 %v65
  %v467 = vunpack.c.h.b16 %v65
  %v468 = vunpack.c.l.b16 %v66
  %v469 = vunpack.c.h.b16 %v66
  %v470 = vunpack.c.l.b16 %v67
  %v471 = vunpack.c.h.b16 %v67
  %v472 = vunpack.c.l.b16 %v68
  %v473 = vunpack.c.h.b16 %v68
  %v474 = vunpack.c.l.b16 %v69
  %v475 = vunpack.c.h.b16 %v69
  %v476 = vunpack.c.l.b16 %v70
  %v477 = vunpack.c.h.b16 %v70
  %v478 = vunpack.c.l.b16 %v71
  %v479 = vunpack.c.h.b16 %v71
  %v480 = vunpack.c.l.b16 %v72
  %v481 = vunpack.c.h.b16 %v72
  %v482 = vunpack.c.l.b16 %v73
  %v483 = vunpack.c.h.b16 %v73
  %v484 = vunpack.c.l.b16 %v74
  %v485 = vunpack.c.h.b16 %v74
  %v486 = vunpack.c.l.b16 %v75
  %v487 = vunpack.c.h.b16 %v75
  %v488 = vunpack.c.l.b16 %v76
  %v489 = vunpack.c.h.b16 %v76
  %v490 = vunpack.c.l.b16 %v77
  %v491 = vunpack.c.h.b16 %v77
  %v492 = vunpack.c.l.b16 %v78
  %v493 = vunpack.c.h.b16 %v78
  %v494 = vunpack.c.l.b16 %v79
  %v495 = vunpack.c.h.b16 %v79
  %v496 = vunpack.c.l.b16 %v80
  %v497 = vunpack.c.h.b16 %v80
  %v498 = vunpack.c.l.b16 %v81
  %v499 = vunpack.c.h.b16 %v81
  %v500 = vunpack.c.l.b16 %v82
  %v501 = vunpack.c.h.b16 %v82
  %v502 = vunpack.c.l.b16 %v83
  %v503 = vunpack.c.h.b16 %v83
  %v504 = vunpack.c.l.b16 %v84
  %v505 = vunpack.c.h.b16 %v84
  %v506 = vunpack.c.l.b16 %v85
  %v507 = vunpack.c.h.b16 %v85
  %v508 = vunpack.c.l.b16 %v86
  %v509 = vunpack.c.h.b16 %v86
  %v510 = vunpack.c.l.b16 %v87
  %v511 = vunpack.c.h.b16 %v87
  %v512 = vunpack.c.l.b16 %v88
  %v513 = vunpack.c.h.b16 %v88
  %v514 = vunpack.c.l.b16 %v89
  %v515 = vunpack.c.h.b16 %v89
  %v516 = vunpack.c.l.b16 %v90
  %v517 = vunpack.c.h.b16 %v90
  %v518 = vunpack.c.l.b16 %v91
  %v519 = vunpack.c.h.b16 %v91
  %v520 = vunpack.c.l.b16 %v92
  %v521 = vunpack.c.h.b16 %v92
  %v522 = vunpack.c.l.b16 %v93
  %v523 = vunpack.c.h.b16 %v93
  %v524 = vunpack.c.l.b16 %v94
  %v525 = vunpack.c.h.b16 %v94
  %v526 = vunpack.c.l.b16 %v95
  %v527 = vunpack.c.h.b16 %v95
  %v528 = vunpack.c.l.b16 %v96
  %v529 = vunpack.c.h.b16 %v96
  %v530 = vunpack.c.l.b16 %v97
  %v531 = vunpack.c.h.b16 %v97
  %v532 = vunpack.c.l.b16 %v98
  %v533 = vunpack.c.h.b16 %v98
  %v534 = vunpack.c.l.b16 %v99
  %v535 = vunpack.c.h.b16 %v99
  %v536 = vunpack.c.l.b16 %v100
  %v537 = vunpack.c.h.b16 %v100
  %v538 = vunpack.c.l.b16 %v101
  %v539 = vunpack.c.h.b16 %v101
  %v540 = vunpack.c.l.b16 %v102
  %v541 = vunpack.c.h.b16 %v102
  %v542 = vunpack.c.l.b16 %v103
  %v543 = vunpack.c.h.b16 %v103
  %v544 = vunpack.c.l.b16 %v104
  %v545 = vunpack.c.h.b16 %v104
  %v546 = vunpack.c.l.b16 %v105
  %v547 = vunpack.c.h.b16 %v105
  %v548 = vunpack.c.l.b16 %v106
  %v549 = vunpack.c.h.b16 %v106
  %v550 = vunpack.c.l.b16 %v107
  %v551 = vunpack.c.h.b16 %v107
  %v552 = vunpack.c.l.b16 %v108
  %v553 = vunpack.c.h.b16 %v108
  %v554 = vunpack.c.l.b16 %v109
  %v555 = vunpack.c.h.b16 %v109
  %v556 = vunpack.c.l.b16 %v110
  %v557 = vunpack.c.h.b16 %v110
  %v558 = vunpack.c.l.b16 %v111
  %v559 = vunpack.c.h.b16 %v111
  %v560 = vunpack.c.l.b16 %v112
  %v561 = vunpack.c.h.b16 %v112
  %v562 = vunpack.c.l.b16 %v113
  %v563 = vunpack.c.h.b16 %v113
  %v564 = vunpack.c.l.b16 %v114
  %v565 = vunpack.c.h.b16 %v114
  %v566 = vunpack.c.l.b16 %v115
  %v567 = vunpack.c.h.b16 %v115
  %v568 = vunpack.c.l.b16 %v116
  %v569 = vunpack.c.h.b16 %v116
  %v570 = vunpack.c.l.b16 %v117
  %v571 = vunpack.c.h.b16 %v117
  %v572 = vunpack.c.l.b16 %v118
  %v573 = vunpack.c.h.b16 %v118
  %v574 = vunpack.c.l.b16 %v119
  %v575 = vunpack.c.h.b16 %v119
  %v576 = vunpack.c.l.b16 %v120
  %v577 = vunpack.c.h.b16 %v120
  %v578 = vunpack.c.l.b16 %v121
  %v579 = vunpack.c.h.b16 %v121
  %v580 = vunpack.c.l.b16 %v122
  %v581 = vunpack.c.h.b16 %v122
  %v582 = vunpack.c.l.b16 %v123
  %v583 = vunpack.c.h.b16 %v123
  %v584 = vunpack.c.l.b16 %v124
  %v585 = vunpack.c.h.b16 %v124
  %v586 = vunpack.c.l.b16 %v125
  %v587 = vunpack.c.h.b16 %v125
  %v588 = vunpack.c.l.b16 %v126
  %v589 = vunpack.c.h.b16 %v126
  %v590 = vunpack.c.l.b16 %v127
  %v591 = vunpack.c.h.b16 %v127
  %v592 = vunpack.c.l.b16 %v128
  %v593 = vunpack.c.h.b16 %v128
  %v594 = vunpack.c.l.b16 %v129
  %v595 = vunpack.c.h.b16 %v129
  %v596 = vunpack.c.l.b16 %v130
  %v597 = vunpack.c.h.b16 %v130
  %v598 = vunpack.c.l.b16 %v131
  %v599 = vunpack.c.h.b16 %v131
  %v600 = vunpack.c.l.b16 %v132
  %v601 = vunpack.c.h.b16 %v132
  %v602 = vunpack.c.l.b16 %v133
  %v603 = vunpack.c.h.b16 %v133
  %v604 = vunpack.c.l.b16 %v134
  %v605 = vunpack.c.h.b16 %v134
  %v606 = vunpack.c.l.b16 %v135
  %v607 = vunpack.c.h.b16 %v135
  %v608 = vunpack.c.l.b16 %v136
  %v609 = vunpack.c.h.b16 %v136
  %v610 = vunpack.c.l.b16 %v137
  %v611 = vunpack.c.h.b16 %v137
  %v612 = vunpack.c.l.b16 %v138
  %v613 = vunpack.c.h.b16 %v138
  %v614 = vunpack.c.l.b16 %v139
  %v615 = vunpack.c.h.b16 %v139
  %v616 = vunpack.c.l.b16 %v140
  %v617 = vunpack.c.h.b16 %v140
  %v618 = vunpack.c.l.b16 %v141
  %v619 = vunpack.c.h.b16 %v141
  %v620 = vunpack.c.l.b16 %v142
  %v621 = vunpack.c.h.b16 %v142
  %v622 = vunpack.c.l.b16 %v143
  %v623 = vunpack.c.h.b16 %v143
  %v624 = vunpack.c.l.b16 %v144
  %v625 = vunpack.c.h.b16 %v144
  %v626 = vunpack.c.l.b16 %v145
  %v627 = vunpack.c.h.b16 %v145
  %v628 = vunpack.c.l.b16 %v146
  %v629 = vunpack.c.h.b16 %v146
  %v630 = vunpack.c.l.b16 %v147
  %v631 = vunpack.c.h.b16 %v147
  %v632 = vunpack.c.l.b16 %v148
  %v633 = vunpack.c.h.b16 %v148
  %v634 = vunpack.c.l.b16 %v149
  %v635 = vunpack.c.h.b16 %v149
  %v636 = vunpack.c.l.b16 %v150
  %v637 = vunpack.c.h.b16 %v150
  %v638 = vunpack.c.l.b16 %v151
  %v639 = vunpack.c.h.b16 %v151
  %v640 = vunpack.c.l.b16 %v152
  %v641 = vunpack.c.h.b16 %v152
  %v642 = vunpack.c.l.b16 %v153
  %v643 = vunpack.c.h.b16 %v153
  %v644 = vunpack.c.l.b16 %v154
  %v645 = vunpack.c.h.b16 %v154
  %v646 = vunpack.c.l.b16 %v155
  %v647 = vunpack.c.h.b16 %v155
  %v648 = vunpack.c.l.b16 %v156
  %v649 = vunpack.c.h.b16 %v156
  %v650 = vunpack.c.l.b16 %v157
  %v651 = vunpack.c.h.b16 %v157
  %v652 = vunpack.c.l.b16 %v158
  %v653 = vunpack.c.h.b16 %v158
  %v654 = vunpack.c.l.b16 %v159
  %v655 = vunpack.c.h.b16 %v159
  %v656 = vunpack.c.l.b16 %v160
  %v657 = vunpack.c.h.b16 %v160
  %v658 = vunpack.c.l.b16 %v161
  %v659 = vunpack.c.h.b16 %v161
  %v660 = vunpack.c.l.b16 %v162
  %v661 = vunpack.c.h.b16 %v162
  %v662 = vunpack.c.l.b16 %v163
  %v663 = vunpack.c.h.b16 %v163
  %v664 = vunpack.c.l.b16 %v164
  %v665 = vunpack.c.h.b16 %v164
  %v666 = vunpack.c.l.b16 %v165
  %v667 = vunpack.c.h.b16 %v165
  %v668 = vunpack.c.l.b16 %v166
  %v669 = vunpack.c.h.b16 %v166
  %v670 = vunpack.c.l.b16 %v167
  %v671 = vunpack.c.h.b16 %v167
  %v672 = vunpack.c.l.b16 %v168
  %v673 = vunpack.c.h.b16 %v168
  %v674 = vunpack.c.l.b16 %v169
  %v675 = vunpack.c.h.b16 %v169
  %v676 = vunpack.c.l.b16 %v170
  %v677 = vunpack.c.h.b16 %v170
  %v678 = vunpack.c.l.b16 %v171
  %v679 = vunpack.c.h.b16 %v171
  %v680 = vunpack.c.l.b16 %v172
  %v681 = vunpack.c.h.b16 %v172
  %v682 = vunpack.c.l.b16 %v173
  %v683 = vunpack.c.h.b16 %v173
  %v684 = vunpack.c.l.b16 %v174
  %v685 = vunpack.c.h.b16 %v174
  %v686 = vunpack.c.l.b16 %v175
  %v687 = vunpack.c.h.b16 %v175
  %v688 = vunpack.c.l.b16 %v176
  %v689 = vunpack.c.h.b16 %v176
  %v690 = vunpack.c.l.b16 %v177
  %v691 = vunpack.c.h.b16 %v177
  %v692 = vunpack.c.l.b16 %v178
  %v693 = vunpack.c.h.b16 %v178
  %v694 = vunpack.c.l.b16 %v179
  %v695 = vunpack.c.h.b16 %v179
  %v696 = vunpack.c.l.b16 %v180
  %v697 = vunpack.c.h.b16 %v180
  %v698 = vunpack.c.l.b16 %v181
  %v699 = vunpack.c.h.b16 %v181
  %v700 = vunpack.c.l.b16 %v182
  %v701 = vunpack.c.h.b16 %v182
  %v702 = vunpack.c.l.b16 %v183
  %v703 = vunpack.c.h.b16 %v183
  %v704 = vunpack.c.l.b16 %v184
  %v705 = vunpack.c.h.b16 %v184
  %v706 = vunpack.c.l.b16 %v185
  %v707 = vunpack.c.h.b16 %v185
  %v708 = vunpack.c.l.b16 %v186
  %v709 = vunpack.c.h.b16 %v186
  %v710 = vunpack.c.l.b16 %v187
  %v711 = vunpack.c.h.b16 %v187
  %v712 = vunpack.c.l.b16 %v188
  %v713 = vunpack.c.h.b16 %v188
  %v714 = vunpack.c.l.b16 %v189
  %v715 = vunpack.c.h.b16 %v189
  %v716 = vunpack.c.l.b16 %v190
  %v717 = vunpack.c.h.b16 %v190
  %v718 = vunpack.c.l.b16 %v191
  %v719 = vunpack.c.h.b16 %v191
  %v720 = vunpack.c.l.b16 %v192
  %v721 = vunpack.c.h.b16 %v192
  %v722 = vunpack.c.l.b16 %v193
  %v723 = vunpack.c.h.b16 %v193
  %v724 = vunpack.c.l.b16 %v194
  %v725 = vunpack.c.h.b16 %v194
  %v726 = vunpack.c.l.b16 %v195
  %v727 = vunpack.c.h.b16 %v195
  %v728 = vunpack.c.l.b16 %v196
  %v729 = vunpack.c.h.b16 %v196
  %v730 = vunpack.c.l.b16 %v197
  %v731 = vunpack.c.h.b16 %v197
  %v732 = vpack.c.b16 %v436, %v428
  %v733 = vpack.c.b16 %v437, %v429
  %v734 = vpack.c.b16 %v438, %v430
  %v735 = vpack.c.b16 %v439, %v431
  %v736 = vpack.c.b16 %v440, %v432
  %v737 = vpack.c.b16 %v441, %v433
  %v738 = vpack.c.b16 %v442, %v434
  %v739 = vpack.c.b16 %v443, %v435
  %v740 = vpack.c.b16 %v452, %v444
  %v741 = vpack.c.b16 %v453, %v445
  %v742 = vpack.c.b16 %v454, %v446
  %v743 = vpack.c.b16 %v455, %v447
  %v744 = vpack.c.b16 %v456, %v448
  %v745 = vpack.c.b16 %v457, %v449
  %v746 = vpack.c.b16 %v458, %v450
  %v747 = vpack.c.b16 %v459, %v451
  %v748 = vpack.c.b16 %v468, %v460
  %v749 = vpack.c.b16 %v469, %v461
  %v750 = vpack.c.b16 %v470, %v462
  %v751 = vpack.c.b16 %v471, %v463
  %v752 = vpack.c.b16 %v472, %v464
  %v753 = vpack.c.b16 %v473, %v465
  %v754 = vpack.c.b16 %v474, %v466
  %v755 = vpack.c.b16 %v475, %v467
  %v756 = vpack.c.b16 %v484, %v476
  %v757 = vpack.c.b16 %v485, %v477
  %v758 = vpack.c.b16 %v486, %v478
  %v759 = vpack.c.b16 %v487, %v479
  %v760 = vpack.c.b16 %v488, %v480
  %v761 = vpack.c.b16 %v489, %v481
  %v762 = vpack.c.b16 %v490, %v482
  %v763 = vpack.c.b16 %v491, %v483
  %v764 = vpack.c.b16 %v500, %v492
  %v765 = vpack.c.b16 %v501, %v493
  %v766 = vpack.c.b16 %v502, %v494
  %v767 = vpack.c.b16 %v503, %v495
  %v768 = vpack.c.b16 %v504, %v496
  %v769 = vpack.c.b16 %v505, %v497
  %v770 = vpack.c.b16 %v506, %v498
  %v771 = vpack.c.b16 %v507, %v499
  %v772 = vpack.c.b16 %v516, %v508
  %v773 = vpack.c.b16 %v517, %v509
  %v774 = vpack.c.b16 %v518, %v510
  %v775 = vpack.c.b16 %v519, %v511
  %v776 = vpack.c.b16 %v520, %v512
  %v777 = vpack.c.b16 %v521, %v513
  %v778 = vpack.c.b16 %v522, %v514
  %v779 = vpack.c.b16 %v523, %v515
  %v780 = vpack.c.b16 %v532, %v524
  %v781 = vpack.c.b16 %v533, %v525
  %v782 = vpack.c.b16 %v534, %v526
  %v783 = vpack.c.b16 %v535, %v527
  %v784 = vpack.c.b16 %v536, %v528
  %v785 = vpack.c.b16 %v537, %v529
  %v786 = vpack.c.b16 %v538, %v530
  %v787 = vpack.c.b16 %v539, %v531
  %v788 = vpack.c.b16 %v548, %v540
  %v789 = vpack.c.b16 %v549, %v541
  %v790 = vpack.c.b16 %v550, %v542
  %v791 = vpack.c.b16 %v551, %v543
  %v792 = vpack.c.b16 %v552, %v544
  %v793 = vpack.c.b16 %v553, %v545
  %v794 = vpack.c.b16 %v554, %v546
  %v795 = vpack.c.b16 %v555, %v547
  %v796 = vpack.c.b16 %v564, %v556
  %v797 = vpack.c.b16 %v565, %v557
  %v798 = vpack.c.b16 %v566, %v558
  %v799 = vpack.c.b16 %v567, %v559
  %v800 = vpack.c.b16 %v568, %v560
  %v801 = vpack.c.b16 %v569, %v561
  %v802 = vpack.c.b16 %v570, %v562
  %v803 = vpack.c.b16 %v571, %v563
  %v804 = vpack.c.b16 %v580, %v572
  %v805 = vpack.c.b16 %v581, %v573
  %v806 = vpack.c.b16 %v582, %v574
  %v807 = vpack.c.b16 %v583, %v575
  %v808 = vpack.c.b16 %v584, %v576
  %v809 = vpack.c.b16 %v585, %v577
  %v810 = vpack.c.b16 %v586, %v578
  %v811 = vpack.c.b16 %v587, %v579
  %v812 = vpack.c.b16 %v596, %v588
  %v813 = vpack.c.b16 %v597, %v589
  %v814 = vpack.c.b16 %v598, %v590
  %v815 = vpack.c.b16 %v599, %v591
  %v816 = vpack.c.b16 %v600, %v592
  %v817 = vpack.c.b16 %v601, %v593
  %v818 = vpack.c.b16 %v602, %v594
  %v819 = vpack.c.b16 %v603, %v595
  %v820 = vpack.c.b16 %v612, %v604
  %v821 = vpack.c.b16 %v613, %v605
  %v822 = vpack.c.b16 %v614, %v606
  %v823 = vpack.c.b16 %v615, %v607
  %v824 = vpack.c.b16 %v616, %v608
  %v825 = vpack.c.b16 %v617, %v609
  %v826 = vpack.c.b16 %v618, %v610
  %v827 = vpack.c.b16 %v619, %v611
  %v828 = vpack.c.b16 %v628, %v620
  %v829 = vpack.c.b16 %v629, %v621
  %v830 = vpack.c.b16 %v630, %v622
  %v831 = vpack.c.b16 %v631, %v623
  %v832 = vpack.c.b16 %v632, %v624
  %v833 = vpack.c.b16 %v633, %v625
  %v834 = vpack.c.b16 %v634, %v626
  %v835 = vpack.c.b16 %v635, %v627
  %v836 = vpack.c.b16 %v644, %v636
  %v837 = vpack.c.b16 %v645, %v637
  %v838 = vpack.c.b16 %v646, %v638
  %v839 = vpack.c.b16 %v647, %v639
  %v840 = vpack.c.b16 %v648, %v640
  %v841 = vpack.c.b16 %v649, %v641
  %v842 = vpack.c.b16 %v650, %v642
  %v843 = vpack.c.b16 %v651, %v643
  %v844 = vpack.c.b16 %v660, %v652
  %v845 = vpack.c.b16 %v661, %v653
  %v846 = vpack.c.b16 %v662, %v654
  %v847 = vpack.c.b16 %v663, %v655
  %v848 = vpack.c.b16 %v664, %v656
  %v849 = vpack.c.b16 %v665, %v657
  %v850 = vpack.c.b16 %v666, %v658
  %v851 = vpack.c.b16 %v667, %v659
  %v852 = vpack.c.b16 %v676, %v668
  %v853 = vpack.c.b16 %v677, %v669
  %v854 = vpack.c.b16 %v678, %v670
  %v855 = vpack.c.b16 %v679, %v671
  %v856 = vpack.c.b16 %v680, %v672
  %v857 = vpack.c.b16 %v681, %v673
  %v858 = vpack.c.b16 %v682, %v674
  %v859 = vpack.c.b16 %v683, %v675
  %v860 = vpack.c.b16 %v692, %v684
  %v861 = vpack.c.b16 %v693, %v685
  %v862 = vpack.c.b16 %v694, %v686
  %v863 = vpack.c.b16 %v695, %v687
  %v864 = vpack.c.b16 %v696, %v688
  %v865 = vpack.c.b16 %v697, %v689
  %v866 = vpack.c.b16 %v698, %v690
  %v867 = vpack.c.b16 %v699, %v691
  %v868 = vpack.c.b16 %v708, %v700
  %v869 = vpack.c.b16 %v709, %v701
  %v870 = vpack.c.b16 %v710, %v702
  %v871 = vpack.c.b16 %v711, %v703
  %v872 = vpack.c.b16 %v712, %v704
  %v873 = vpack.c.b16 %v713, %v705
  %v874 = vpack.c.b16 %v714, %v706
  %v875 = vpack.c.b16 %v715, %v707
  %v876 = vpack.c.b16 %v724, %v716
  %v877 = vpack.c.b16 %v725, %v717
  %v878 = vpack.c.b16 %v726, %v718
  %v879 = vpack.c.b16 %v727, %v719
  %v880 = vpack.c.b16 %v728, %v720
  %v881 = vpack.c.b16 %v729, %v721
  %v882 = vpack.c.b16 %v730, %v722
  %v883 = vpack.c.b16 %v731, %v723
  %vm1028 = vcmask 359424
  %v1030 = vsel %vm1028, %v258, 0
  %v1033 = vsel %vm1028, %v261, 0
  %v1036 = vsel %vm1028, %v264, 0
  %v1039 = vsel %vm1028, %v267, 0
  %vm1041 = vcmask 1045504
  %v1043 = vsel %vm1041, %v876, 0
  %v1046 = vsel %vm1041, %v877, 0
  %v1049 = vsel %vm1041, %v878, 0
  %v1052 = vsel %vm1041, %v879, 0
  %v1055 = vsel %vm1041, %v880, 0
  %v1058 = vsel %vm1041, %v881, 0
  %v1061 = vsel %vm1041, %v882, 0
  %v1064 = vsel %vm1041, %v883, 0
  %1066 = vmatpush.bf16.msra.mxu0 %v788
  %1067 = vmatpush.bf16.msra.mxu0 %v780
  %1068 = vmatpush.bf16.msra.mxu0 %v772
  %1069 = vmatpush.bf16.msra.mxu0 %v764
  %1070 = vmatpush.bf16.msra.mxu0 %v756
  %1071 = vmatpush.bf16.msra.mxu0 %v748
  %1072 = vmatpush.bf16.msra.mxu0 %v740
  %1073 = vmatpush.bf16.msra.mxu0 %v732
  %1074 = vmatmul.bf16.gmra.mxu0 %v256
  %v1075 = vpop.f32.mrf.mxu0
  %v1076 = vadd.f32 %v200, %v1075
  %v1077 = vpop.f32.mrf.mxu0
  %v1078 = vadd.f32 %v200, %v1077
  %1079 = vmatmul.bf16.gmra.mxu0 %v259
  %v1080 = vpop.f32.mrf.mxu0
  %v1081 = vadd.f32 %v200, %v1080
  %v1082 = vpop.f32.mrf.mxu0
  %v1083 = vadd.f32 %v200, %v1082
  %1084 = vmatmul.bf16.gmra.mxu0 %v262
  %v1085 = vpop.f32.mrf.mxu0
  %v1086 = vadd.f32 %v200, %v1085
  %v1087 = vpop.f32.mrf.mxu0
  %v1088 = vadd.f32 %v200, %v1087
  %1089 = vmatmul.bf16.gmra.mxu0 %v265
  %v1090 = vpop.f32.mrf.mxu0
  %v1091 = vadd.f32 %v200, %v1090
  %v1092 = vpop.f32.mrf.mxu0
  %v1093 = vadd.f32 %v200, %v1092
  %1094 = vdwg.mxu0
  %1095 = vmatpush.bf16.msra.mxu0 %v852
  %1096 = vmatpush.bf16.msra.mxu0 %v844
  %1097 = vmatpush.bf16.msra.mxu0 %v836
  %1098 = vmatpush.bf16.msra.mxu0 %v828
  %1099 = vmatpush.bf16.msra.mxu0 %v820
  %1100 = vmatpush.bf16.msra.mxu0 %v812
  %1101 = vmatpush.bf16.msra.mxu0 %v804
  %1102 = vmatpush.bf16.msra.mxu0 %v796
  %1103 = vmatmul.bf16.gmra.mxu0 %v257
  %v1104 = vpop.f32.mrf.mxu0
  %v1105 = vadd.f32 %v1076, %v1104
  %v1106 = vpop.f32.mrf.mxu0
  %v1107 = vadd.f32 %v1078, %v1106
  %1108 = vmatmul.bf16.gmra.mxu0 %v260
  %v1109 = vpop.f32.mrf.mxu0
  %v1110 = vadd.f32 %v1081, %v1109
  %v1111 = vpop.f32.mrf.mxu0
  %v1112 = vadd.f32 %v1083, %v1111
  %1113 = vmatmul.bf16.gmra.mxu0 %v263
  %v1114 = vpop.f32.mrf.mxu0
  %v1115 = vadd.f32 %v1086, %v1114
  %v1116 = vpop.f32.mrf.mxu0
  %v1117 = vadd.f32 %v1088, %v1116
  %1118 = vmatmul.bf16.gmra.mxu0 %v266
  %v1119 = vpop.f32.mrf.mxu0
  %v1120 = vadd.f32 %v1091, %v1119
  %v1121 = vpop.f32.mrf.mxu0
  %v1122 = vadd.f32 %v1093, %v1121
  %1123 = vdwg.mxu0
  %1124 = vmatpush.bf16.msra.mxu0 0
  %1125 = vmatpush.bf16.msra.mxu0 0
  %1126 = vmatpush.bf16.msra.mxu0 0
  %1127 = vmatpush.bf16.msra.mxu0 0
  %1128 = vmatpush.bf16.msra.mxu0 0
  %1129 = vmatpush.bf16.msra.mxu0 %v1043
  %1130 = vmatpush.bf16.msra.mxu0 %v868
  %1131 = vmatpush.bf16.msra.mxu0 %v860
  %1132 = vmatmul.bf16.gmra.mxu0 %v1030
  %v1133 = vpop.f32.mrf.mxu0
  %v1134 = vadd.f32 %v1105, %v1133
  %v1135 = vpop.f32.mrf.mxu0
  %v1136 = vadd.f32 %v1107, %v1135
  %1137 = vmatmul.bf16.gmra.mxu0 %v1033
  %v1138 = vpop.f32.mrf.mxu0
  %v1139 = vadd.f32 %v1110, %v1138
  %v1140 = vpop.f32.mrf.mxu0
  %v1141 = vadd.f32 %v1112, %v1140
  %1142 = vmatmul.bf16.gmra.mxu0 %v1036
  %v1143 = vpop.f32.mrf.mxu0
  %v1144 = vadd.f32 %v1115, %v1143
  %v1145 = vpop.f32.mrf.mxu0
  %v1146 = vadd.f32 %v1117, %v1145
  %1147 = vmatmul.bf16.gmra.mxu0 %v1039
  %v1148 = vpop.f32.mrf.mxu0
  %v1149 = vadd.f32 %v1120, %v1148
  %v1150 = vpop.f32.mrf.mxu0
  %v1151 = vadd.f32 %v1122, %v1150
  %1152 = vdwg.mxu0
  %1153 = vmatpush.bf16.msra.mxu0 %v789
  %1154 = vmatpush.bf16.msra.mxu0 %v781
  %1155 = vmatpush.bf16.msra.mxu0 %v773
  %1156 = vmatpush.bf16.msra.mxu0 %v765
  %1157 = vmatpush.bf16.msra.mxu0 %v757
  %1158 = vmatpush.bf16.msra.mxu0 %v749
  %1159 = vmatpush.bf16.msra.mxu0 %v741
  %1160 = vmatpush.bf16.msra.mxu0 %v733
  %1161 = vmatmul.bf16.gmra.mxu0 %v256
  %v1162 = vpop.f32.mrf.mxu0
  %v1163 = vadd.f32 %v201, %v1162
  %v1164 = vpop.f32.mrf.mxu0
  %v1165 = vadd.f32 %v201, %v1164
  %1166 = vmatmul.bf16.gmra.mxu0 %v259
  %v1167 = vpop.f32.mrf.mxu0
  %v1168 = vadd.f32 %v201, %v1167
  %v1169 = vpop.f32.mrf.mxu0
  %v1170 = vadd.f32 %v201, %v1169
  %1171 = vmatmul.bf16.gmra.mxu0 %v262
  %v1172 = vpop.f32.mrf.mxu0
  %v1173 = vadd.f32 %v201, %v1172
  %v1174 = vpop.f32.mrf.mxu0
  %v1175 = vadd.f32 %v201, %v1174
  %1176 = vmatmul.bf16.gmra.mxu0 %v265
  %v1177 = vpop.f32.mrf.mxu0
  %v1178 = vadd.f32 %v201, %v1177
  %v1179 = vpop.f32.mrf.mxu0
  %v1180 = vadd.f32 %v201, %v1179
  %1181 = vdwg.mxu0
  %1182 = vmatpush.bf16.msra.mxu0 %v853
  %1183 = vmatpush.bf16.msra.mxu0 %v845
  %1184 = vmatpush.bf16.msra.mxu0 %v837
  %1185 = vmatpush.bf16.msra.mxu0 %v829
  %1186 = vmatpush.bf16.msra.mxu0 %v821
  %1187 = vmatpush.bf16.msra.mxu0 %v813
  %1188 = vmatpush.bf16.msra.mxu0 %v805
  %1189 = vmatpush.bf16.msra.mxu0 %v797
  %1190 = vmatmul.bf16.gmra.mxu0 %v257
  %v1191 = vpop.f32.mrf.mxu0
  %v1192 = vadd.f32 %v1163, %v1191
  %v1193 = vpop.f32.mrf.mxu0
  %v1194 = vadd.f32 %v1165, %v1193
  %1195 = vmatmul.bf16.gmra.mxu0 %v260
  %v1196 = vpop.f32.mrf.mxu0
  %v1197 = vadd.f32 %v1168, %v1196
  %v1198 = vpop.f32.mrf.mxu0
  %v1199 = vadd.f32 %v1170, %v1198
  %1200 = vmatmul.bf16.gmra.mxu0 %v263
  %v1201 = vpop.f32.mrf.mxu0
  %v1202 = vadd.f32 %v1173, %v1201
  %v1203 = vpop.f32.mrf.mxu0
  %v1204 = vadd.f32 %v1175, %v1203
  %1205 = vmatmul.bf16.gmra.mxu0 %v266
  %v1206 = vpop.f32.mrf.mxu0
  %v1207 = vadd.f32 %v1178, %v1206
  %v1208 = vpop.f32.mrf.mxu0
  %v1209 = vadd.f32 %v1180, %v1208
  %1210 = vdwg.mxu0
  %1211 = vmatpush.bf16.msra.mxu0 0
  %1212 = vmatpush.bf16.msra.mxu0 0
  %1213 = vmatpush.bf16.msra.mxu0 0
  %1214 = vmatpush.bf16.msra.mxu0 0
  %1215 = vmatpush.bf16.msra.mxu0 0
  %1216 = vmatpush.bf16.msra.mxu0 %v1046
  %1217 = vmatpush.bf16.msra.mxu0 %v869
  %1218 = vmatpush.bf16.msra.mxu0 %v861
  %1219 = vmatmul.bf16.gmra.mxu0 %v1030
  %v1220 = vpop.f32.mrf.mxu0
  %v1221 = vadd.f32 %v1192, %v1220
  %v1222 = vpop.f32.mrf.mxu0
  %v1223 = vadd.f32 %v1194, %v1222
  %1224 = vmatmul.bf16.gmra.mxu0 %v1033
  %v1225 = vpop.f32.mrf.mxu0
  %v1226 = vadd.f32 %v1197, %v1225
  %v1227 = vpop.f32.mrf.mxu0
  %v1228 = vadd.f32 %v1199, %v1227
  %1229 = vmatmul.bf16.gmra.mxu0 %v1036
  %v1230 = vpop.f32.mrf.mxu0
  %v1231 = vadd.f32 %v1202, %v1230
  %v1232 = vpop.f32.mrf.mxu0
  %v1233 = vadd.f32 %v1204, %v1232
  %1234 = vmatmul.bf16.gmra.mxu0 %v1039
  %v1235 = vpop.f32.mrf.mxu0
  %v1236 = vadd.f32 %v1207, %v1235
  %v1237 = vpop.f32.mrf.mxu0
  %v1238 = vadd.f32 %v1209, %v1237
  %1239 = vdwg.mxu0
  %1240 = vmatpush.bf16.msra.mxu0 %v790
  %1241 = vmatpush.bf16.msra.mxu0 %v782
  %1242 = vmatpush.bf16.msra.mxu0 %v774
  %1243 = vmatpush.bf16.msra.mxu0 %v766
  %1244 = vmatpush.bf16.msra.mxu0 %v758
  %1245 = vmatpush.bf16.msra.mxu0 %v750
  %1246 = vmatpush.bf16.msra.mxu0 %v742
  %1247 = vmatpush.bf16.msra.mxu0 %v734
  %1248 = vmatmul.bf16.gmra.mxu0 %v256
  %v1249 = vpop.f32.mrf.mxu0
  %v1250 = vadd.f32 %v202, %v1249
  %v1251 = vpop.f32.mrf.mxu0
  %v1252 = vadd.f32 %v202, %v1251
  %1253 = vmatmul.bf16.gmra.mxu0 %v259
  %v1254 = vpop.f32.mrf.mxu0
  %v1255 = vadd.f32 %v202, %v1254
  %v1256 = vpop.f32.mrf.mxu0
  %v1257 = vadd.f32 %v202, %v1256
  %1258 = vmatmul.bf16.gmra.mxu0 %v262
  %v1259 = vpop.f32.mrf.mxu0
  %v1260 = vadd.f32 %v202, %v1259
  %v1261 = vpop.f32.mrf.mxu0
  %v1262 = vadd.f32 %v202, %v1261
  %1263 = vmatmul.bf16.gmra.mxu0 %v265
  %v1264 = vpop.f32.mrf.mxu0
  %v1265 = vadd.f32 %v202, %v1264
  %v1266 = vpop.f32.mrf.mxu0
  %v1267 = vadd.f32 %v202, %v1266
  %1268 = vdwg.mxu0
  %1269 = vmatpush.bf16.msra.mxu0 %v854
  %1270 = vmatpush.bf16.msra.mxu0 %v846
  %1271 = vmatpush.bf16.msra.mxu0 %v838
  %1272 = vmatpush.bf16.msra.mxu0 %v830
  %1273 = vmatpush.bf16.msra.mxu0 %v822
  %1274 = vmatpush.bf16.msra.mxu0 %v814
  %1275 = vmatpush.bf16.msra.mxu0 %v806
  %1276 = vmatpush.bf16.msra.mxu0 %v798
  %1277 = vmatmul.bf16.gmra.mxu0 %v257
  %v1278 = vpop.f32.mrf.mxu0
  %v1279 = vadd.f32 %v1250, %v1278
  %v1280 = vpop.f32.mrf.mxu0
  %v1281 = vadd.f32 %v1252, %v1280
  %1282 = vmatmul.bf16.gmra.mxu0 %v260
  %v1283 = vpop.f32.mrf.mxu0
  %v1284 = vadd.f32 %v1255, %v1283
  %v1285 = vpop.f32.mrf.mxu0
  %v1286 = vadd.f32 %v1257, %v1285
  %1287 = vmatmul.bf16.gmra.mxu0 %v263
  %v1288 = vpop.f32.mrf.mxu0
  %v1289 = vadd.f32 %v1260, %v1288
  %v1290 = vpop.f32.mrf.mxu0
  %v1291 = vadd.f32 %v1262, %v1290
  %1292 = vmatmul.bf16.gmra.mxu0 %v266
  %v1293 = vpop.f32.mrf.mxu0
  %v1294 = vadd.f32 %v1265, %v1293
  %v1295 = vpop.f32.mrf.mxu0
  %v1296 = vadd.f32 %v1267, %v1295
  %1297 = vdwg.mxu0
  %1298 = vmatpush.bf16.msra.mxu0 0
  %1299 = vmatpush.bf16.msra.mxu0 0
  %1300 = vmatpush.bf16.msra.mxu0 0
  %1301 = vmatpush.bf16.msra.mxu0 0
  %1302 = vmatpush.bf16.msra.mxu0 0
  %1303 = vmatpush.bf16.msra.mxu0 %v1049
  %1304 = vmatpush.bf16.msra.mxu0 %v870
  %1305 = vmatpush.bf16.msra.mxu0 %v862
  %1306 = vmatmul.bf16.gmra.mxu0 %v1030
  %v1307 = vpop.f32.mrf.mxu0
  %v1308 = vadd.f32 %v1279, %v1307
  %v1309 = vpop.f32.mrf.mxu0
  %v1310 = vadd.f32 %v1281, %v1309
  %1311 = vmatmul.bf16.gmra.mxu0 %v1033
  %v1312 = vpop.f32.mrf.mxu0
  %v1313 = vadd.f32 %v1284, %v1312
  %v1314 = vpop.f32.mrf.mxu0
  %v1315 = vadd.f32 %v1286, %v1314
  %1316 = vmatmul.bf16.gmra.mxu0 %v1036
  %v1317 = vpop.f32.mrf.mxu0
  %v1318 = vadd.f32 %v1289, %v1317
  %v1319 = vpop.f32.mrf.mxu0
  %v1320 = vadd.f32 %v1291, %v1319
  %1321 = vmatmul.bf16.gmra.mxu0 %v1039
  %v1322 = vpop.f32.mrf.mxu0
  %v1323 = vadd.f32 %v1294, %v1322
  %v1324 = vpop.f32.mrf.mxu0
  %v1325 = vadd.f32 %v1296, %v1324
  %1326 = vdwg.mxu0
  %1327 = vmatpush.bf16.msra.mxu0 %v791
  %1328 = vmatpush.bf16.msra.mxu0 %v783
  %1329 = vmatpush.bf16.msra.mxu0 %v775
  %1330 = vmatpush.bf16.msra.mxu0 %v767
  %1331 = vmatpush.bf16.msra.mxu0 %v759
  %1332 = vmatpush.bf16.msra.mxu0 %v751
  %1333 = vmatpush.bf16.msra.mxu0 %v743
  %1334 = vmatpush.bf16.msra.mxu0 %v735
  %1335 = vmatmul.bf16.gmra.mxu0 %v256
  %v1336 = vpop.f32.mrf.mxu0
  %v1337 = vadd.f32 %v203, %v1336
  %v1338 = vpop.f32.mrf.mxu0
  %v1339 = vadd.f32 %v203, %v1338
  %1340 = vmatmul.bf16.gmra.mxu0 %v259
  %v1341 = vpop.f32.mrf.mxu0
  %v1342 = vadd.f32 %v203, %v1341
  %v1343 = vpop.f32.mrf.mxu0
  %v1344 = vadd.f32 %v203, %v1343
  %1345 = vmatmul.bf16.gmra.mxu0 %v262
  %v1346 = vpop.f32.mrf.mxu0
  %v1347 = vadd.f32 %v203, %v1346
  %v1348 = vpop.f32.mrf.mxu0
  %v1349 = vadd.f32 %v203, %v1348
  %1350 = vmatmul.bf16.gmra.mxu0 %v265
  %v1351 = vpop.f32.mrf.mxu0
  %v1352 = vadd.f32 %v203, %v1351
  %v1353 = vpop.f32.mrf.mxu0
  %v1354 = vadd.f32 %v203, %v1353
  %1355 = vdwg.mxu0
  %1356 = vmatpush.bf16.msra.mxu0 %v855
  %1357 = vmatpush.bf16.msra.mxu0 %v847
  %1358 = vmatpush.bf16.msra.mxu0 %v839
  %1359 = vmatpush.bf16.msra.mxu0 %v831
  %1360 = vmatpush.bf16.msra.mxu0 %v823
  %1361 = vmatpush.bf16.msra.mxu0 %v815
  %1362 = vmatpush.bf16.msra.mxu0 %v807
  %1363 = vmatpush.bf16.msra.mxu0 %v799
  %1364 = vmatmul.bf16.gmra.mxu0 %v257
  %v1365 = vpop.f32.mrf.mxu0
  %v1366 = vadd.f32 %v1337, %v1365
  %v1367 = vpop.f32.mrf.mxu0
  %v1368 = vadd.f32 %v1339, %v1367
  %1369 = vmatmul.bf16.gmra.mxu0 %v260
  %v1370 = vpop.f32.mrf.mxu0
  %v1371 = vadd.f32 %v1342, %v1370
  %v1372 = vpop.f32.mrf.mxu0
  %v1373 = vadd.f32 %v1344, %v1372
  %1374 = vmatmul.bf16.gmra.mxu0 %v263
  %v1375 = vpop.f32.mrf.mxu0
  %v1376 = vadd.f32 %v1347, %v1375
  %v1377 = vpop.f32.mrf.mxu0
  %v1378 = vadd.f32 %v1349, %v1377
  %1379 = vmatmul.bf16.gmra.mxu0 %v266
  %v1380 = vpop.f32.mrf.mxu0
  %v1381 = vadd.f32 %v1352, %v1380
  %v1382 = vpop.f32.mrf.mxu0
  %v1383 = vadd.f32 %v1354, %v1382
  %1384 = vdwg.mxu0
  %1385 = vmatpush.bf16.msra.mxu0 0
  %1386 = vmatpush.bf16.msra.mxu0 0
  %1387 = vmatpush.bf16.msra.mxu0 0
  %1388 = vmatpush.bf16.msra.mxu0 0
  %1389 = vmatpush.bf16.msra.mxu0 0
  %1390 = vmatpush.bf16.msra.mxu0 %v1052
  %1391 = vmatpush.bf16.msra.mxu0 %v871
  %1392 = vmatpush.bf16.msra.mxu0 %v863
  %1393 = vmatmul.bf16.gmra.mxu0 %v1030
  %v1394 = vpop.f32.mrf.mxu0
  %v1395 = vadd.f32 %v1366, %v1394
  %v1396 = vpop.f32.mrf.mxu0
  %v1397 = vadd.f32 %v1368, %v1396
  %1398 = vmatmul.bf16.gmra.mxu0 %v1033
  %v1399 = vpop.f32.mrf.mxu0
  %v1400 = vadd.f32 %v1371, %v1399
  %v1401 = vpop.f32.mrf.mxu0
  %v1402 = vadd.f32 %v1373, %v1401
  %1403 = vmatmul.bf16.gmra.mxu0 %v1036
  %v1404 = vpop.f32.mrf.mxu0
  %v1405 = vadd.f32 %v1376, %v1404
  %v1406 = vpop.f32.mrf.mxu0
  %v1407 = vadd.f32 %v1378, %v1406
  %1408 = vmatmul.bf16.gmra.mxu0 %v1039
  %v1409 = vpop.f32.mrf.mxu0
  %v1410 = vadd.f32 %v1381, %v1409
  %v1411 = vpop.f32.mrf.mxu0
  %v1412 = vadd.f32 %v1383, %v1411
  %1413 = vdwg.mxu0
  %1414 = vmatpush.bf16.msra.mxu0 %v792
  %1415 = vmatpush.bf16.msra.mxu0 %v784
  %1416 = vmatpush.bf16.msra.mxu0 %v776
  %1417 = vmatpush.bf16.msra.mxu0 %v768
  %1418 = vmatpush.bf16.msra.mxu0 %v760
  %1419 = vmatpush.bf16.msra.mxu0 %v752
  %1420 = vmatpush.bf16.msra.mxu0 %v744
  %1421 = vmatpush.bf16.msra.mxu0 %v736
  %1422 = vmatmul.bf16.gmra.mxu0 %v256
  %v1423 = vpop.f32.mrf.mxu0
  %v1424 = vadd.f32 %v204, %v1423
  %v1425 = vpop.f32.mrf.mxu0
  %v1426 = vadd.f32 %v204, %v1425
  %1427 = vmatmul.bf16.gmra.mxu0 %v259
  %v1428 = vpop.f32.mrf.mxu0
  %v1429 = vadd.f32 %v204, %v1428
  %v1430 = vpop.f32.mrf.mxu0
  %v1431 = vadd.f32 %v204, %v1430
  %1432 = vmatmul.bf16.gmra.mxu0 %v262
  %v1433 = vpop.f32.mrf.mxu0
  %v1434 = vadd.f32 %v204, %v1433
  %v1435 = vpop.f32.mrf.mxu0
  %v1436 = vadd.f32 %v204, %v1435
  %1437 = vmatmul.bf16.gmra.mxu0 %v265
  %v1438 = vpop.f32.mrf.mxu0
  %v1439 = vadd.f32 %v204, %v1438
  %v1440 = vpop.f32.mrf.mxu0
  %v1441 = vadd.f32 %v204, %v1440
  %1442 = vdwg.mxu0
  %1443 = vmatpush.bf16.msra.mxu0 %v856
  %1444 = vmatpush.bf16.msra.mxu0 %v848
  %1445 = vmatpush.bf16.msra.mxu0 %v840
  %1446 = vmatpush.bf16.msra.mxu0 %v832
  %1447 = vmatpush.bf16.msra.mxu0 %v824
  %1448 = vmatpush.bf16.msra.mxu0 %v816
  %1449 = vmatpush.bf16.msra.mxu0 %v808
  %1450 = vmatpush.bf16.msra.mxu0 %v800
  %1451 = vmatmul.bf16.gmra.mxu0 %v257
  %v1452 = vpop.f32.mrf.mxu0
  %v1453 = vadd.f32 %v1424, %v1452
  %v1454 = vpop.f32.mrf.mxu0
  %v1455 = vadd.f32 %v1426, %v1454
  %1456 = vmatmul.bf16.gmra.mxu0 %v260
  %v1457 = vpop.f32.mrf.mxu0
  %v1458 = vadd.f32 %v1429, %v1457
  %v1459 = vpop.f32.mrf.mxu0
  %v1460 = vadd.f32 %v1431, %v1459
  %1461 = vmatmul.bf16.gmra.mxu0 %v263
  %v1462 = vpop.f32.mrf.mxu0
  %v1463 = vadd.f32 %v1434, %v1462
  %v1464 = vpop.f32.mrf.mxu0
  %v1465 = vadd.f32 %v1436, %v1464
  %1466 = vmatmul.bf16.gmra.mxu0 %v266
  %v1467 = vpop.f32.mrf.mxu0
  %v1468 = vadd.f32 %v1439, %v1467
  %v1469 = vpop.f32.mrf.mxu0
  %v1470 = vadd.f32 %v1441, %v1469
  %1471 = vdwg.mxu0
  %1472 = vmatpush.bf16.msra.mxu0 0
  %1473 = vmatpush.bf16.msra.mxu0 0
  %1474 = vmatpush.bf16.msra.mxu0 0
  %1475 = vmatpush.bf16.msra.mxu0 0
  %1476 = vmatpush.bf16.msra.mxu0 0
  %1477 = vmatpush.bf16.msra.mxu0 %v1055
  %1478 = vmatpush.bf16.msra.mxu0 %v872
  %1479 = vmatpush.bf16.msra.mxu0 %v864
  %1480 = vmatmul.bf16.gmra.mxu0 %v1030
  %v1481 = vpop.f32.mrf.mxu0
  %v1482 = vadd.f32 %v1453, %v1481
  %v1483 = vpop.f32.mrf.mxu0
  %v1484 = vadd.f32 %v1455, %v1483
  %1485 = vmatmul.bf16.gmra.mxu0 %v1033
  %v1486 = vpop.f32.mrf.mxu0
  %v1487 = vadd.f32 %v1458, %v1486
  %v1488 = vpop.f32.mrf.mxu0
  %v1489 = vadd.f32 %v1460, %v1488
  %1490 = vmatmul.bf16.gmra.mxu0 %v1036
  %v1491 = vpop.f32.mrf.mxu0
  %v1492 = vadd.f32 %v1463, %v1491
  %v1493 = vpop.f32.mrf.mxu0
  %v1494 = vadd.f32 %v1465, %v1493
  %1495 = vmatmul.bf16.gmra.mxu0 %v1039
  %v1496 = vpop.f32.mrf.mxu0
  %v1497 = vadd.f32 %v1468, %v1496
  %v1498 = vpop.f32.mrf.mxu0
  %v1499 = vadd.f32 %v1470, %v1498
  %1500 = vdwg.mxu0
  %1501 = vmatpush.bf16.msra.mxu0 %v793
  %1502 = vmatpush.bf16.msra.mxu0 %v785
  %1503 = vmatpush.bf16.msra.mxu0 %v777
  %1504 = vmatpush.bf16.msra.mxu0 %v769
  %1505 = vmatpush.bf16.msra.mxu0 %v761
  %1506 = vmatpush.bf16.msra.mxu0 %v753
  %1507 = vmatpush.bf16.msra.mxu0 %v745
  %1508 = vmatpush.bf16.msra.mxu0 %v737
  %1509 = vmatmul.bf16.gmra.mxu0 %v256
  %v1510 = vpop.f32.mrf.mxu0
  %v1511 = vadd.f32 %v205, %v1510
  %v1512 = vpop.f32.mrf.mxu0
  %v1513 = vadd.f32 %v205, %v1512
  %1514 = vmatmul.bf16.gmra.mxu0 %v259
  %v1515 = vpop.f32.mrf.mxu0
  %v1516 = vadd.f32 %v205, %v1515
  %v1517 = vpop.f32.mrf.mxu0
  %v1518 = vadd.f32 %v205, %v1517
  %1519 = vmatmul.bf16.gmra.mxu0 %v262
  %v1520 = vpop.f32.mrf.mxu0
  %v1521 = vadd.f32 %v205, %v1520
  %v1522 = vpop.f32.mrf.mxu0
  %v1523 = vadd.f32 %v205, %v1522
  %1524 = vmatmul.bf16.gmra.mxu0 %v265
  %v1525 = vpop.f32.mrf.mxu0
  %v1526 = vadd.f32 %v205, %v1525
  %v1527 = vpop.f32.mrf.mxu0
  %v1528 = vadd.f32 %v205, %v1527
  %1529 = vdwg.mxu0
  %1530 = vmatpush.bf16.msra.mxu0 %v857
  %1531 = vmatpush.bf16.msra.mxu0 %v849
  %1532 = vmatpush.bf16.msra.mxu0 %v841
  %1533 = vmatpush.bf16.msra.mxu0 %v833
  %1534 = vmatpush.bf16.msra.mxu0 %v825
  %1535 = vmatpush.bf16.msra.mxu0 %v817
  %1536 = vmatpush.bf16.msra.mxu0 %v809
  %1537 = vmatpush.bf16.msra.mxu0 %v801
  %1538 = vmatmul.bf16.gmra.mxu0 %v257
  %v1539 = vpop.f32.mrf.mxu0
  %v1540 = vadd.f32 %v1511, %v1539
  %v1541 = vpop.f32.mrf.mxu0
  %v1542 = vadd.f32 %v1513, %v1541
  %1543 = vmatmul.bf16.gmra.mxu0 %v260
  %v1544 = vpop.f32.mrf.mxu0
  %v1545 = vadd.f32 %v1516, %v1544
  %v1546 = vpop.f32.mrf.mxu0
  %v1547 = vadd.f32 %v1518, %v1546
  %1548 = vmatmul.bf16.gmra.mxu0 %v263
  %v1549 = vpop.f32.mrf.mxu0
  %v1550 = vadd.f32 %v1521, %v1549
  %v1551 = vpop.f32.mrf.mxu0
  %v1552 = vadd.f32 %v1523, %v1551
  %1553 = vmatmul.bf16.gmra.mxu0 %v266
  %v1554 = vpop.f32.mrf.mxu0
  %v1555 = vadd.f32 %v1526, %v1554
  %v1556 = vpop.f32.mrf.mxu0
  %v1557 = vadd.f32 %v1528, %v1556
  %1558 = vdwg.mxu0
  %1559 = vmatpush.bf16.msra.mxu0 0
  %1560 = vmatpush.bf16.msra.mxu0 0
  %1561 = vmatpush.bf16.msra.mxu0 0
  %1562 = vmatpush.bf16.msra.mxu0 0
  %1563 = vmatpush.bf16.msra.mxu0 0
  %1564 = vmatpush.bf16.msra.mxu0 %v1058
  %1565 = vmatpush.bf16.msra.mxu0 %v873
  %1566 = vmatpush.bf16.msra.mxu0 %v865
  %1567 = vmatmul.bf16.gmra.mxu0 %v1030
  %v1568 = vpop.f32.mrf.mxu0
  %v1569 = vadd.f32 %v1540, %v1568
  %v1570 = vpop.f32.mrf.mxu0
  %v1571 = vadd.f32 %v1542, %v1570
  %1572 = vmatmul.bf16.gmra.mxu0 %v1033
  %v1573 = vpop.f32.mrf.mxu0
  %v1574 = vadd.f32 %v1545, %v1573
  %v1575 = vpop.f32.mrf.mxu0
  %v1576 = vadd.f32 %v1547, %v1575
  %1577 = vmatmul.bf16.gmra.mxu0 %v1036
  %v1578 = vpop.f32.mrf.mxu0
  %v1579 = vadd.f32 %v1550, %v1578
  %v1580 = vpop.f32.mrf.mxu0
  %v1581 = vadd.f32 %v1552, %v1580
  %1582 = vmatmul.bf16.gmra.mxu0 %v1039
  %v1583 = vpop.f32.mrf.mxu0
  %v1584 = vadd.f32 %v1555, %v1583
  %v1585 = vpop.f32.mrf.mxu0
  %v1586 = vadd.f32 %v1557, %v1585
  %1587 = vdwg.mxu0
  %1588 = vmatpush.bf16.msra.mxu0 %v794
  %1589 = vmatpush.bf16.msra.mxu0 %v786
  %1590 = vmatpush.bf16.msra.mxu0 %v778
  %1591 = vmatpush.bf16.msra.mxu0 %v770
  %1592 = vmatpush.bf16.msra.mxu0 %v762
  %1593 = vmatpush.bf16.msra.mxu0 %v754
  %1594 = vmatpush.bf16.msra.mxu0 %v746
  %1595 = vmatpush.bf16.msra.mxu0 %v738
  %1596 = vmatmul.bf16.gmra.mxu0 %v256
  %v1597 = vpop.f32.mrf.mxu0
  %v1598 = vadd.f32 %v206, %v1597
  %v1599 = vpop.f32.mrf.mxu0
  %v1600 = vadd.f32 %v206, %v1599
  %1601 = vmatmul.bf16.gmra.mxu0 %v259
  %v1602 = vpop.f32.mrf.mxu0
  %v1603 = vadd.f32 %v206, %v1602
  %v1604 = vpop.f32.mrf.mxu0
  %v1605 = vadd.f32 %v206, %v1604
  %1606 = vmatmul.bf16.gmra.mxu0 %v262
  %v1607 = vpop.f32.mrf.mxu0
  %v1608 = vadd.f32 %v206, %v1607
  %v1609 = vpop.f32.mrf.mxu0
  %v1610 = vadd.f32 %v206, %v1609
  %1611 = vmatmul.bf16.gmra.mxu0 %v265
  %v1612 = vpop.f32.mrf.mxu0
  %v1613 = vadd.f32 %v206, %v1612
  %v1614 = vpop.f32.mrf.mxu0
  %v1615 = vadd.f32 %v206, %v1614
  %1616 = vdwg.mxu0
  %1617 = vmatpush.bf16.msra.mxu0 %v858
  %1618 = vmatpush.bf16.msra.mxu0 %v850
  %1619 = vmatpush.bf16.msra.mxu0 %v842
  %1620 = vmatpush.bf16.msra.mxu0 %v834
  %1621 = vmatpush.bf16.msra.mxu0 %v826
  %1622 = vmatpush.bf16.msra.mxu0 %v818
  %1623 = vmatpush.bf16.msra.mxu0 %v810
  %1624 = vmatpush.bf16.msra.mxu0 %v802
  %1625 = vmatmul.bf16.gmra.mxu0 %v257
  %v1626 = vpop.f32.mrf.mxu0
  %v1627 = vadd.f32 %v1598, %v1626
  %v1628 = vpop.f32.mrf.mxu0
  %v1629 = vadd.f32 %v1600, %v1628
  %1630 = vmatmul.bf16.gmra.mxu0 %v260
  %v1631 = vpop.f32.mrf.mxu0
  %v1632 = vadd.f32 %v1603, %v1631
  %v1633 = vpop.f32.mrf.mxu0
  %v1634 = vadd.f32 %v1605, %v1633
  %1635 = vmatmul.bf16.gmra.mxu0 %v263
  %v1636 = vpop.f32.mrf.mxu0
  %v1637 = vadd.f32 %v1608, %v1636
  %v1638 = vpop.f32.mrf.mxu0
  %v1639 = vadd.f32 %v1610, %v1638
  %1640 = vmatmul.bf16.gmra.mxu0 %v266
  %v1641 = vpop.f32.mrf.mxu0
  %v1642 = vadd.f32 %v1613, %v1641
  %v1643 = vpop.f32.mrf.mxu0
  %v1644 = vadd.f32 %v1615, %v1643
  %1645 = vdwg.mxu0
  %1646 = vmatpush.bf16.msra.mxu0 0
  %1647 = vmatpush.bf16.msra.mxu0 0
  %1648 = vmatpush.bf16.msra.mxu0 0
  %1649 = vmatpush.bf16.msra.mxu0 0
  %1650 = vmatpush.bf16.msra.mxu0 0
  %1651 = vmatpush.bf16.msra.mxu0 %v1061
  %1652 = vmatpush.bf16.msra.mxu0 %v874
  %1653 = vmatpush.bf16.msra.mxu0 %v866
  %1654 = vmatmul.bf16.gmra.mxu0 %v1030
  %v1655 = vpop.f32.mrf.mxu0
  %v1656 = vadd.f32 %v1627, %v1655
  %v1657 = vpop.f32.mrf.mxu0
  %v1658 = vadd.f32 %v1629, %v1657
  %1659 = vmatmul.bf16.gmra.mxu0 %v1033
  %v1660 = vpop.f32.mrf.mxu0
  %v1661 = vadd.f32 %v1632, %v1660
  %v1662 = vpop.f32.mrf.mxu0
  %v1663 = vadd.f32 %v1634, %v1662
  %1664 = vmatmul.bf16.gmra.mxu0 %v1036
  %v1665 = vpop.f32.mrf.mxu0
  %v1666 = vadd.f32 %v1637, %v1665
  %v1667 = vpop.f32.mrf.mxu0
  %v1668 = vadd.f32 %v1639, %v1667
  %1669 = vmatmul.bf16.gmra.mxu0 %v1039
  %v1670 = vpop.f32.mrf.mxu0
  %v1671 = vadd.f32 %v1642, %v1670
  %v1672 = vpop.f32.mrf.mxu0
  %v1673 = vadd.f32 %v1644, %v1672
  %1674 = vdwg.mxu0
  %1675 = vmatpush.bf16.msra.mxu0 %v795
  %1676 = vmatpush.bf16.msra.mxu0 %v787
  %1677 = vmatpush.bf16.msra.mxu0 %v779
  %1678 = vmatpush.bf16.msra.mxu0 %v771
  %1679 = vmatpush.bf16.msra.mxu0 %v763
  %1680 = vmatpush.bf16.msra.mxu0 %v755
  %1681 = vmatpush.bf16.msra.mxu0 %v747
  %1682 = vmatpush.bf16.msra.mxu0 %v739
  %1683 = vmatmul.bf16.gmra.mxu0 %v256
  %v1684 = vpop.f32.mrf.mxu0
  %v1685 = vadd.f32 %v207, %v1684
  %v1686 = vpop.f32.mrf.mxu0
  %v1687 = vadd.f32 %v207, %v1686
  %1688 = vmatmul.bf16.gmra.mxu0 %v259
  %v1689 = vpop.f32.mrf.mxu0
  %v1690 = vadd.f32 %v207, %v1689
  %v1691 = vpop.f32.mrf.mxu0
  %v1692 = vadd.f32 %v207, %v1691
  %1693 = vmatmul.bf16.gmra.mxu0 %v262
  %v1694 = vpop.f32.mrf.mxu0
  %v1695 = vadd.f32 %v207, %v1694
  %v1696 = vpop.f32.mrf.mxu0
  %v1697 = vadd.f32 %v207, %v1696
  %1698 = vmatmul.bf16.gmra.mxu0 %v265
  %v1699 = vpop.f32.mrf.mxu0
  %v1700 = vadd.f32 %v207, %v1699
  %v1701 = vpop.f32.mrf.mxu0
  %v1702 = vadd.f32 %v207, %v1701
  %1703 = vdwg.mxu0
  %1704 = vmatpush.bf16.msra.mxu0 %v859
  %1705 = vmatpush.bf16.msra.mxu0 %v851
  %1706 = vmatpush.bf16.msra.mxu0 %v843
  %1707 = vmatpush.bf16.msra.mxu0 %v835
  %1708 = vmatpush.bf16.msra.mxu0 %v827
  %1709 = vmatpush.bf16.msra.mxu0 %v819
  %1710 = vmatpush.bf16.msra.mxu0 %v811
  %1711 = vmatpush.bf16.msra.mxu0 %v803
  %1712 = vmatmul.bf16.gmra.mxu0 %v257
  %v1713 = vpop.f32.mrf.mxu0
  %v1714 = vadd.f32 %v1685, %v1713
  %v1715 = vpop.f32.mrf.mxu0
  %v1716 = vadd.f32 %v1687, %v1715
  %1717 = vmatmul.bf16.gmra.mxu0 %v260
  %v1718 = vpop.f32.mrf.mxu0
  %v1719 = vadd.f32 %v1690, %v1718
  %v1720 = vpop.f32.mrf.mxu0
  %v1721 = vadd.f32 %v1692, %v1720
  %1722 = vmatmul.bf16.gmra.mxu0 %v263
  %v1723 = vpop.f32.mrf.mxu0
  %v1724 = vadd.f32 %v1695, %v1723
  %v1725 = vpop.f32.mrf.mxu0
  %v1726 = vadd.f32 %v1697, %v1725
  %1727 = vmatmul.bf16.gmra.mxu0 %v266
  %v1728 = vpop.f32.mrf.mxu0
  %v1729 = vadd.f32 %v1700, %v1728
  %v1730 = vpop.f32.mrf.mxu0
  %v1731 = vadd.f32 %v1702, %v1730
  %1732 = vdwg.mxu0
  %1733 = vmatpush.bf16.msra.mxu0 0
  %1734 = vmatpush.bf16.msra.mxu0 0
  %1735 = vmatpush.bf16.msra.mxu0 0
  %1736 = vmatpush.bf16.msra.mxu0 0
  %1737 = vmatpush.bf16.msra.mxu0 0
  %1738 = vmatpush.bf16.msra.mxu0 %v1064
  %1739 = vmatpush.bf16.msra.mxu0 %v875
  %1740 = vmatpush.bf16.msra.mxu0 %v867
  %1741 = vmatmul.bf16.gmra.mxu0 %v1030
  %v1742 = vpop.f32.mrf.mxu0
  %v1743 = vadd.f32 %v1714, %v1742
  %v1744 = vpop.f32.mrf.mxu0
  %v1745 = vadd.f32 %v1716, %v1744
  %1746 = vmatmul.bf16.gmra.mxu0 %v1033
  %v1747 = vpop.f32.mrf.mxu0
  %v1748 = vadd.f32 %v1719, %v1747
  %v1749 = vpop.f32.mrf.mxu0
  %v1750 = vadd.f32 %v1721, %v1749
  %1751 = vmatmul.bf16.gmra.mxu0 %v1036
  %v1752 = vpop.f32.mrf.mxu0
  %v1753 = vadd.f32 %v1724, %v1752
  %v1754 = vpop.f32.mrf.mxu0
  %v1755 = vadd.f32 %v1726, %v1754
  %1756 = vmatmul.bf16.gmra.mxu0 %v1039
  %v1757 = vpop.f32.mrf.mxu0
  %v1758 = vadd.f32 %v1729, %v1757
  %v1759 = vpop.f32.mrf.mxu0
  %v1760 = vadd.f32 %v1731, %v1759
  %1761 = vdwg.mxu0
  %1762 = vst [vmem:[#allocation2] sm:$0xff] %v1134
  %1763 = vst [vmem:[#allocation2 + $0x8] sm:$0xff] %v1221
  %1764 = vst [vmem:[#allocation2 + $0x10] sm:$0xff] %v1308
  %1765 = vst [vmem:[#allocation2 + $0x18] sm:$0xff] %v1395
  %1766 = vst [vmem:[#allocation2 + $0x20] sm:$0xff] %v1482
  %1767 = vst [vmem:[#allocation2 + $0x28] sm:$0xff] %v1569
  %1768 = vst [vmem:[#allocation2 + $0x30] sm:$0xff] %v1656
  %1769 = vst [vmem:[#allocation2 + $0x38] sm:$0xff] %v1743
  %1770 = vst [vmem:[#allocation2 + $0x40] sm:$0xff] %v1136
  %1771 = vst [vmem:[#allocation2 + $0x48] sm:$0xff] %v1223
  %1772 = vst [vmem:[#allocation2 + $0x50] sm:$0xff] %v1310
  %1773 = vst [vmem:[#allocation2 + $0x58] sm:$0xff] %v1397
  %1774 = vst [vmem:[#allocation2 + $0x60] sm:$0xff] %v1484
  %1775 = vst [vmem:[#allocation2 + $0x68] sm:$0xff] %v1571
  %1776 = vst [vmem:[#allocation2 + $0x70] sm:$0xff] %v1658
  %1777 = vst [vmem:[#allocation2 + $0x78] sm:$0xff] %v1745
  %1778 = vst [vmem:[#allocation2 + $0x80] sm:$0xff] %v1139
  %1779 = vst [vmem:[#allocation2 + $0x88] sm:$0xff] %v1226
  %1780 = vst [vmem:[#allocation2 + $0x90] sm:$0xff] %v1313
  %1781 = vst [vmem:[#allocation2 + $0x98] sm:$0xff] %v1400
  %1782 = vst [vmem:[#allocation2 + $0xa0] sm:$0xff] %v1487
  %1783 = vst [vmem:[#allocation2 + $0xa8] sm:$0xff] %v1574
  %1784 = vst [vmem:[#allocation2 + $0xb0] sm:$0xff] %v1661
  %1785 = vst [vmem:[#allocation2 + $0xb8] sm:$0xff] %v1748
  %1786 = vst [vmem:[#allocation2 + $0xc0] sm:$0xff] %v1141
  %1787 = vst [vmem:[#allocation2 + $0xc8] sm:$0xff] %v1228
  %1788 = vst [vmem:[#allocation2 + $0xd0] sm:$0xff] %v1315
  %1789 = vst [vmem:[#allocation2 + $0xd8] sm:$0xff] %v1402
  %1790 = vst [vmem:[#allocation2 + $0xe0] sm:$0xff] %v1489
  %1791 = vst [vmem:[#allocation2 + $0xe8] sm:$0xff] %v1576
  %1792 = vst [vmem:[#allocation2 + $0xf0] sm:$0xff] %v1663
  %1793 = vst [vmem:[#allocation2 + $0xf8] sm:$0xff] %v1750
  %1794 = vst [vmem:[#allocation2 + $0x100] sm:$0xff] %v1144
  %1795 = vst [vmem:[#allocation2 + $0x108] sm:$0xff] %v1231
  %1796 = vst [vmem:[#allocation2 + $0x110] sm:$0xff] %v1318
  %1797 = vst [vmem:[#allocation2 + $0x118] sm:$0xff] %v1405
  %1798 = vst [vmem:[#allocation2 + $0x120] sm:$0xff] %v1492
  %1799 = vst [vmem:[#allocation2 + $0x128] sm:$0xff] %v1579
  %1800 = vst [vmem:[#allocation2 + $0x130] sm:$0xff] %v1666
  %1801 = vst [vmem:[#allocation2 + $0x138] sm:$0xff] %v1753
  %1802 = vst [vmem:[#allocation2 + $0x140] sm:$0xff] %v1146
  %1803 = vst [vmem:[#allocation2 + $0x148] sm:$0xff] %v1233
  %1804 = vst [vmem:[#allocation2 + $0x150] sm:$0xff] %v1320
  %1805 = vst [vmem:[#allocation2 + $0x158] sm:$0xff] %v1407
  %1806 = vst [vmem:[#allocation2 + $0x160] sm:$0xff] %v1494
  %1807 = vst [vmem:[#allocation2 + $0x168] sm:$0xff] %v1581
  %1808 = vst [vmem:[#allocation2 + $0x170] sm:$0xff] %v1668
  %1809 = vst [vmem:[#allocation2 + $0x178] sm:$0xff] %v1755
  %1810 = vst [vmem:[#allocation2 + $0x180] sm:$0xff] %v1149
  %1811 = vst [vmem:[#allocation2 + $0x188] sm:$0xff] %v1236
  %1812 = vst [vmem:[#allocation2 + $0x190] sm:$0xff] %v1323
  %1813 = vst [vmem:[#allocation2 + $0x198] sm:$0xff] %v1410
  %1814 = vst [vmem:[#allocation2 + $0x1a0] sm:$0xff] %v1497
  %1815 = vst [vmem:[#allocation2 + $0x1a8] sm:$0xff] %v1584
  %1816 = vst [vmem:[#allocation2 + $0x1b0] sm:$0xff] %v1671
  %1817 = vst [vmem:[#allocation2 + $0x1b8] sm:$0xff] %v1758
  %1818 = vst [vmem:[#allocation2 + $0x1c0] sm:$0xff] %v1151
  %1819 = vst [vmem:[#allocation2 + $0x1c8] sm:$0xff] %v1238
  %1820 = vst [vmem:[#allocation2 + $0x1d0] sm:$0xff] %v1325
  %1821 = vst [vmem:[#allocation2 + $0x1d8] sm:$0xff] %v1412
  %1822 = vst [vmem:[#allocation2 + $0x1e0] sm:$0xff] %v1499
  %1823 = vst [vmem:[#allocation2 + $0x1e8] sm:$0xff] %v1586
  %1824 = vst [vmem:[#allocation2 + $0x1f0] sm:$0xff] %v1673
  %1825 = vst [vmem:[#allocation2 + $0x1f8] sm:$0xff] %v1760
  %1826 = vst [vmem:[#allocation3] sm:$0xff] 0.0
  %1827 = vst [vmem:[#allocation3 + $0x8] sm:$0xff] 0.0
  %1828 = vst [vmem:[#allocation3 + $0x10] sm:$0xff] -inf
  %1829 = vst [vmem:[#allocation3 + $0x18] sm:$0xff] -inf
  %v1830 = vld [vmem:[#allocation2] sm:$0xff]
  %v1831 = vld [vmem:[#allocation2 + $0x8] sm:$0xff]
  %v1832 = vld [vmem:[#allocation2 + $0x10] sm:$0xff]
  %v1833 = vld [vmem:[#allocation2 + $0x18] sm:$0xff]
  %s1834 = scalar_lea.vmem [#allocation2], 448
  %v1835 = vld [vmem:[%s1834 + $0x20] sm:$0xff]
  %v1836 = vld [vmem:[%s1834 + $0x28] sm:$0xff]
  %v1837 = vld [vmem:[%s1834 + $0x30] sm:$0xff]
  %v1838 = vld [vmem:[%s1834 + $0x38] sm:$0xff]
  %v1839 = vpack.c.bf16 0.0, 0.0
  %v1840 = vld [vmem:[%s3] sm:$0xff]
  %v1841 = vld [vmem:[%s3 + $0x8] sm:$0xff]
  %v1842 = vld [vmem:[%s3 + $0x10] sm:$0xff]
  %v1843 = vld [vmem:[%s3 + $0x18] sm:$0xff]
  %v1844 = vld [vmem:[%s3 + $0x20] sm:$0xff]
  %v1845 = vld [vmem:[%s3 + $0x28] sm:$0xff]
  %v1846 = vld [vmem:[%s3 + $0x30] sm:$0xff]
  %v1847 = vld [vmem:[%s3 + $0x38] sm:$0xff]
  %v1848 = vld [vmem:[%s3 + $0x40] sm:$0xff]
  %v1849 = vld [vmem:[%s3 + $0x48] sm:$0xff]
  %v1850 = vld [vmem:[%s3 + $0x50] sm:$0xff]
  %v1851 = vld [vmem:[%s3 + $0x58] sm:$0xff]
  %v1852 = vld [vmem:[%s3 + $0x60] sm:$0xff]
  %v1853 = vld [vmem:[%s3 + $0x68] sm:$0xff]
  %v1854 = vld [vmem:[%s3 + $0x70] sm:$0xff]
  %v1855 = vld [vmem:[%s3 + $0x78] sm:$0xff]
  %v1856 = vld [vmem:[%s3 + $0x80] sm:$0xff]
  %v1857 = vld [vmem:[%s3 + $0x88] sm:$0xff]
  %v1858 = vld [vmem:[%s3 + $0x90] sm:$0xff]
  %v1859 = vld [vmem:[%s3 + $0x98] sm:$0xff]
  %v1860 = vld [vmem:[%s3 + $0xa0] sm:$0xff]
  %v1861 = vld [vmem:[%s3 + $0xa8] sm:$0xff]
  %v1862 = vld [vmem:[%s3 + $0xb0] sm:$0xff]
  %v1863 = vld [vmem:[%s3 + $0xb8] sm:$0xff]
  %v1864 = vld [vmem:[%s3 + $0xc0] sm:$0xff]
  %v1865 = vld [vmem:[%s3 + $0xc8] sm:$0xff]
  %v1866 = vld [vmem:[%s3 + $0xd0] sm:$0xff]
  %v1867 = vld [vmem:[%s3 + $0xd8] sm:$0xff]
  %v1868 = vld [vmem:[%s3 + $0xe0] sm:$0xff]
  %v1869 = vld [vmem:[%s3 + $0xe8] sm:$0xff]
  %v1870 = vld [vmem:[%s3 + $0xf0] sm:$0xff]
  %v1871 = vld [vmem:[%s3 + $0xf8] sm:$0xff]
  %v1872 = vld [vmem:[%s3 + $0x100] sm:$0xff]
  %v1873 = vld [vmem:[%s3 + $0x108] sm:$0xff]
  %v1874 = vld [vmem:[%s3 + $0x110] sm:$0xff]
  %v1875 = vld [vmem:[%s3 + $0x118] sm:$0xff]
  %v1876 = vld [vmem:[%s3 + $0x120] sm:$0xff]
  %v1877 = vld [vmem:[%s3 + $0x128] sm:$0xff]
  %v1878 = vld [vmem:[%s3 + $0x130] sm:$0xff]
  %v1879 = vld [vmem:[%s3 + $0x138] sm:$0xff]
  %v1880 = vld [vmem:[%s3 + $0x140] sm:$0xff]
  %v1881 = vld [vmem:[%s3 + $0x148] sm:$0xff]
  %v1882 = vld [vmem:[%s3 + $0x150] sm:$0xff]
  %v1883 = vld [vmem:[%s3 + $0x158] sm:$0xff]
  %v1884 = vld [vmem:[%s3 + $0x160] sm:$0xff]
  %v1885 = vld [vmem:[%s3 + $0x168] sm:$0xff]
  %v1886 = vld [vmem:[%s3 + $0x170] sm:$0xff]
  %v1887 = vld [vmem:[%s3 + $0x178] sm:$0xff]
  %v1888 = vld [vmem:[%s3 + $0x180] sm:$0xff]
  %v1889 = vld [vmem:[%s3 + $0x188] sm:$0xff]
  %v1890 = vld [vmem:[%s3 + $0x190] sm:$0xff]
  %v1891 = vld [vmem:[%s3 + $0x198] sm:$0xff]
  %v1892 = vld [vmem:[%s3 + $0x1a0] sm:$0xff]
  %v1893 = vld [vmem:[%s3 + $0x1a8] sm:$0xff]
  %v1894 = vld [vmem:[%s3 + $0x1b0] sm:$0xff]
  %v1895 = vld [vmem:[%s3 + $0x1b8] sm:$0xff]
  %v1896 = vld [vmem:[%s3 + $0x1c0] sm:$0xff]
  %v1897 = vld [vmem:[%s3 + $0x1c8] sm:$0xff]
  %v1898 = vld [vmem:[%s3 + $0x1d0] sm:$0xff]
  %v1899 = vld [vmem:[%s3 + $0x1d8] sm:$0xff]
  %v1900 = vld [vmem:[%s3 + $0x1e0] sm:$0xff]
  %v1901 = vld [vmem:[%s3 + $0x1e8] sm:$0xff]
  %v1902 = vld [vmem:[%s3 + $0x1f0] sm:$0xff]
  %v1903 = vld [vmem:[%s3 + $0x1f8] sm:$0xff]
  %v1904 = vld [vmem:[%s3 + $0x200] sm:$0xff]
  %v1905 = vld [vmem:[%s3 + $0x208] sm:$0xff]
  %v1906 = vld [vmem:[%s3 + $0x210] sm:$0xff]
  %v1907 = vld [vmem:[%s3 + $0x218] sm:$0xff]
  %v1908 = vld [vmem:[%s3 + $0x220] sm:$0xff]
  %v1909 = vld [vmem:[%s3 + $0x228] sm:$0xff]
  %v1910 = vld [vmem:[%s3 + $0x230] sm:$0xff]
  %v1911 = vld [vmem:[%s3 + $0x238] sm:$0xff]
  %v1912 = vld [vmem:[%s3 + $0x240] sm:$0xff]
  %v1913 = vld [vmem:[%s3 + $0x248] sm:$0xff]
  %v1914 = vld [vmem:[%s3 + $0x250] sm:$0xff]
  %v1915 = vld [vmem:[%s3 + $0x258] sm:$0xff]
  %v1916 = vld [vmem:[%s3 + $0x260] sm:$0xff]
  %v1917 = vld [vmem:[%s3 + $0x268] sm:$0xff]
  %v1918 = vld [vmem:[%s3 + $0x270] sm:$0xff]
  %v1919 = vld [vmem:[%s3 + $0x278] sm:$0xff]
  %v1920 = vld [vmem:[%s3 + $0x280] sm:$0xff]
  %v1921 = vld [vmem:[%s3 + $0x288] sm:$0xff]
  %v1922 = vld [vmem:[%s3 + $0x290] sm:$0xff]
  %v1923 = vld [vmem:[%s3 + $0x298] sm:$0xff]
  %v1924 = vld [vmem:[%s3 + $0x2a0] sm:$0xff]
  %v1925 = vld [vmem:[%s3 + $0x2a8] sm:$0xff]
  %v1926 = vld [vmem:[%s3 + $0x2b0] sm:$0xff]
  %v1927 = vld [vmem:[%s3 + $0x2b8] sm:$0xff]
  %v1928 = vld [vmem:[%s3 + $0x2c0] sm:$0xff]
  %v1929 = vld [vmem:[%s3 + $0x2c8] sm:$0xff]
  %v1930 = vld [vmem:[%s3 + $0x2d0] sm:$0xff]
  %v1931 = vld [vmem:[%s3 + $0x2d8] sm:$0xff]
  %v1932 = vld [vmem:[%s3 + $0x2e0] sm:$0xff]
  %v1933 = vld [vmem:[%s3 + $0x2e8] sm:$0xff]
  %v1934 = vld [vmem:[%s3 + $0x2f0] sm:$0xff]
  %v1935 = vld [vmem:[%s3 + $0x2f8] sm:$0xff]
  %v1936 = vld [vmem:[%s3 + $0x300] sm:$0xff]
  %v1937 = vld [vmem:[%s3 + $0x308] sm:$0xff]
  %v1938 = vld [vmem:[%s3 + $0x310] sm:$0xff]
  %v1939 = vld [vmem:[%s3 + $0x318] sm:$0xff]
  %v1940 = vld [vmem:[%s3 + $0x320] sm:$0xff]
  %v1941 = vld [vmem:[%s3 + $0x328] sm:$0xff]
  %v1942 = vld [vmem:[%s3 + $0x330] sm:$0xff]
  %v1943 = vld [vmem:[%s3 + $0x338] sm:$0xff]
  %v1944 = vld [vmem:[%s3 + $0x340] sm:$0xff]
  %v1945 = vld [vmem:[%s3 + $0x348] sm:$0xff]
  %v1946 = vld [vmem:[%s3 + $0x350] sm:$0xff]
  %v1947 = vld [vmem:[%s3 + $0x358] sm:$0xff]
  %v1948 = vld [vmem:[%s3 + $0x360] sm:$0xff]
  %v1949 = vld [vmem:[%s3 + $0x368] sm:$0xff]
  %v1950 = vld [vmem:[%s3 + $0x370] sm:$0xff]
  %v1951 = vld [vmem:[%s3 + $0x378] sm:$0xff]
  %v1952 = vld [vmem:[%s3 + $0x380] sm:$0xff]
  %v1953 = vld [vmem:[%s3 + $0x388] sm:$0xff]
  %v1954 = vld [vmem:[%s3 + $0x390] sm:$0xff]
  %v1955 = vld [vmem:[%s3 + $0x398] sm:$0xff]
  %v1956 = vld [vmem:[%s3 + $0x3a0] sm:$0xff]
  %v1957 = vld [vmem:[%s3 + $0x3a8] sm:$0xff]
  %v1958 = vld [vmem:[%s3 + $0x3b0] sm:$0xff]
  %v1959 = vld [vmem:[%s3 + $0x3b8] sm:$0xff]
  %v1960 = vld [vmem:[%s3 + $0x3c0] sm:$0xff]
  %v1961 = vld [vmem:[%s3 + $0x3c8] sm:$0xff]
  %v1962 = vld [vmem:[%s3 + $0x3d0] sm:$0xff]
  %v1963 = vld [vmem:[%s3 + $0x3d8] sm:$0xff]
  %v1964 = vld [vmem:[%s3 + $0x3e0] sm:$0xff]
  %v1965 = vld [vmem:[%s3 + $0x3e8] sm:$0xff]
  %v1966 = vld [vmem:[%s3 + $0x3f0] sm:$0xff]
  %v1967 = vld [vmem:[%s3 + $0x3f8] sm:$0xff]
  %v2096 = vunpack.c.l.b16 %v1840
  %v2097 = vunpack.c.h.b16 %v1840
  %v2098 = vunpack.c.l.b16 %v1841
  %v2099 = vunpack.c.h.b16 %v1841
  %v2100 = vunpack.c.l.b16 %v1842
  %v2101 = vunpack.c.h.b16 %v1842
  %v2102 = vunpack.c.l.b16 %v1843
  %v2103 = vunpack.c.h.b16 %v1843
  %v2104 = vunpack.c.l.b16 %v1844
  %v2105 = vunpack.c.h.b16 %v1844
  %v2106 = vunpack.c.l.b16 %v1845
  %v2107 = vunpack.c.h.b16 %v1845
  %v2108 = vunpack.c.l.b16 %v1846
  %v2109 = vunpack.c.h.b16 %v1846
  %v2110 = vunpack.c.l.b16 %v1847
  %v2111 = vunpack.c.h.b16 %v1847
  %v2112 = vunpack.c.l.b16 %v1848
  %v2113 = vunpack.c.h.b16 %v1848
  %v2114 = vunpack.c.l.b16 %v1849
  %v2115 = vunpack.c.h.b16 %v1849
  %v2116 = vunpack.c.l.b16 %v1850
  %v2117 = vunpack.c.h.b16 %v1850
  %v2118 = vunpack.c.l.b16 %v1851
  %v2119 = vunpack.c.h.b16 %v1851
  %v2120 = vunpack.c.l.b16 %v1852
  %v2121 = vunpack.c.h.b16 %v1852
  %v2122 = vunpack.c.l.b16 %v1853
  %v2123 = vunpack.c.h.b16 %v1853
  %v2124 = vunpack.c.l.b16 %v1854
  %v2125 = vunpack.c.h.b16 %v1854
  %v2126 = vunpack.c.l.b16 %v1855
  %v2127 = vunpack.c.h.b16 %v1855
  %v2128 = vunpack.c.l.b16 %v1856
  %v2129 = vunpack.c.h.b16 %v1856
  %v2130 = vunpack.c.l.b16 %v1857
  %v2131 = vunpack.c.h.b16 %v1857
  %v2132 = vunpack.c.l.b16 %v1858
  %v2133 = vunpack.c.h.b16 %v1858
  %v2134 = vunpack.c.l.b16 %v1859
  %v2135 = vunpack.c.h.b16 %v1859
  %v2136 = vunpack.c.l.b16 %v1860
  %v2137 = vunpack.c.h.b16 %v1860
  %v2138 = vunpack.c.l.b16 %v1861
  %v2139 = vunpack.c.h.b16 %v1861
  %v2140 = vunpack.c.l.b16 %v1862
  %v2141 = vunpack.c.h.b16 %v1862
  %v2142 = vunpack.c.l.b16 %v1863
  %v2143 = vunpack.c.h.b16 %v1863
  %v2144 = vunpack.c.l.b16 %v1864
  %v2145 = vunpack.c.h.b16 %v1864
  %v2146 = vunpack.c.l.b16 %v1865
  %v2147 = vunpack.c.h.b16 %v1865
  %v2148 = vunpack.c.l.b16 %v1866
  %v2149 = vunpack.c.h.b16 %v1866
  %v2150 = vunpack.c.l.b16 %v1867
  %v2151 = vunpack.c.h.b16 %v1867
  %v2152 = vunpack.c.l.b16 %v1868
  %v2153 = vunpack.c.h.b16 %v1868
  %v2154 = vunpack.c.l.b16 %v1869
  %v2155 = vunpack.c.h.b16 %v1869
  %v2156 = vunpack.c.l.b16 %v1870
  %v2157 = vunpack.c.h.b16 %v1870
  %v2158 = vunpack.c.l.b16 %v1871
  %v2159 = vunpack.c.h.b16 %v1871
  %v2160 = vunpack.c.l.b16 %v1872
  %v2161 = vunpack.c.h.b16 %v1872
  %v2162 = vunpack.c.l.b16 %v1873
  %v2163 = vunpack.c.h.b16 %v1873
  %v2164 = vunpack.c.l.b16 %v1874
  %v2165 = vunpack.c.h.b16 %v1874
  %v2166 = vunpack.c.l.b16 %v1875
  %v2167 = vunpack.c.h.b16 %v1875
  %v2168 = vunpack.c.l.b16 %v1876
  %v2169 = vunpack.c.h.b16 %v1876
  %v2170 = vunpack.c.l.b16 %v1877
  %v2171 = vunpack.c.h.b16 %v1877
  %v2172 = vunpack.c.l.b16 %v1878
  %v2173 = vunpack.c.h.b16 %v1878
  %v2174 = vunpack.c.l.b16 %v1879
  %v2175 = vunpack.c.h.b16 %v1879
  %v2176 = vunpack.c.l.b16 %v1880
  %v2177 = vunpack.c.h.b16 %v1880
  %v2178 = vunpack.c.l.b16 %v1881
  %v2179 = vunpack.c.h.b16 %v1881
  %v2180 = vunpack.c.l.b16 %v1882
  %v2181 = vunpack.c.h.b16 %v1882
  %v2182 = vunpack.c.l.b16 %v1883
  %v2183 = vunpack.c.h.b16 %v1883
  %v2184 = vunpack.c.l.b16 %v1884
  %v2185 = vunpack.c.h.b16 %v1884
  %v2186 = vunpack.c.l.b16 %v1885
  %v2187 = vunpack.c.h.b16 %v1885
  %v2188 = vunpack.c.l.b16 %v1886
  %v2189 = vunpack.c.h.b16 %v1886
  %v2190 = vunpack.c.l.b16 %v1887
  %v2191 = vunpack.c.h.b16 %v1887
  %v2192 = vunpack.c.l.b16 %v1888
  %v2193 = vunpack.c.h.b16 %v1888
  %v2194 = vunpack.c.l.b16 %v1889
  %v2195 = vunpack.c.h.b16 %v1889
  %v2196 = vunpack.c.l.b16 %v1890
  %v2197 = vunpack.c.h.b16 %v1890
  %v2198 = vunpack.c.l.b16 %v1891
  %v2199 = vunpack.c.h.b16 %v1891
  %v2200 = vunpack.c.l.b16 %v1892
  %v2201 = vunpack.c.h.b16 %v1892
  %v2202 = vunpack.c.l.b16 %v1893
  %v2203 = vunpack.c.h.b16 %v1893
  %v2204 = vunpack.c.l.b16 %v1894
  %v2205 = vunpack.c.h.b16 %v1894
  %v2206 = vunpack.c.l.b16 %v1895
  %v2207 = vunpack.c.h.b16 %v1895
  %v2208 = vunpack.c.l.b16 %v1896
  %v2209 = vunpack.c.h.b16 %v1896
  %v2210 = vunpack.c.l.b16 %v1897
  %v2211 = vunpack.c.h.b16 %v1897
  %v2212 = vunpack.c.l.b16 %v1898
  %v2213 = vunpack.c.h.b16 %v1898
  %v2214 = vunpack.c.l.b16 %v1899
  %v2215 = vunpack.c.h.b16 %v1899
  %v2216 = vunpack.c.l.b16 %v1900
  %v2217 = vunpack.c.h.b16 %v1900
  %v2218 = vunpack.c.l.b16 %v1901
  %v2219 = vunpack.c.h.b16 %v1901
  %v2220 = vunpack.c.l.b16 %v1902
  %v2221 = vunpack.c.h.b16 %v1902
  %v2222 = vunpack.c.l.b16 %v1903
  %v2223 = vunpack.c.h.b16 %v1903
  %v2224 = vunpack.c.l.b16 %v1904
  %v2225 = vunpack.c.h.b16 %v1904
  %v2226 = vunpack.c.l.b16 %v1905
  %v2227 = vunpack.c.h.b16 %v1905
  %v2228 = vunpack.c.l.b16 %v1906
  %v2229 = vunpack.c.h.b16 %v1906
  %v2230 = vunpack.c.l.b16 %v1907
  %v2231 = vunpack.c.h.b16 %v1907
  %v2232 = vunpack.c.l.b16 %v1908
  %v2233 = vunpack.c.h.b16 %v1908
  %v2234 = vunpack.c.l.b16 %v1909
  %v2235 = vunpack.c.h.b16 %v1909
  %v2236 = vunpack.c.l.b16 %v1910
  %v2237 = vunpack.c.h.b16 %v1910
  %v2238 = vunpack.c.l.b16 %v1911
  %v2239 = vunpack.c.h.b16 %v1911
  %v2240 = vunpack.c.l.b16 %v1912
  %v2241 = vunpack.c.h.b16 %v1912
  %v2242 = vunpack.c.l.b16 %v1913
  %v2243 = vunpack.c.h.b16 %v1913
  %v2244 = vunpack.c.l.b16 %v1914
  %v2245 = vunpack.c.h.b16 %v1914
  %v2246 = vunpack.c.l.b16 %v1915
  %v2247 = vunpack.c.h.b16 %v1915
  %v2248 = vunpack.c.l.b16 %v1916
  %v2249 = vunpack.c.h.b16 %v1916
  %v2250 = vunpack.c.l.b16 %v1917
  %v2251 = vunpack.c.h.b16 %v1917
  %v2252 = vunpack.c.l.b16 %v1918
  %v2253 = vunpack.c.h.b16 %v1918
  %v2254 = vunpack.c.l.b16 %v1919
  %v2255 = vunpack.c.h.b16 %v1919
  %v2256 = vunpack.c.l.b16 %v1920
  %v2257 = vunpack.c.h.b16 %v1920
  %v2258 = vunpack.c.l.b16 %v1921
  %v2259 = vunpack.c.h.b16 %v1921
  %v2260 = vunpack.c.l.b16 %v1922
  %v2261 = vunpack.c.h.b16 %v1922
  %v2262 = vunpack.c.l.b16 %v1923
  %v2263 = vunpack.c.h.b16 %v1923
  %v2264 = vunpack.c.l.b16 %v1924
  %v2265 = vunpack.c.h.b16 %v1924
  %v2266 = vunpack.c.l.b16 %v1925
  %v2267 = vunpack.c.h.b16 %v1925
  %v2268 = vunpack.c.l.b16 %v1926
  %v2269 = vunpack.c.h.b16 %v1926
  %v2270 = vunpack.c.l.b16 %v1927
  %v2271 = vunpack.c.h.b16 %v1927
  %v2272 = vunpack.c.l.b16 %v1928
  %v2273 = vunpack.c.h.b16 %v1928
  %v2274 = vunpack.c.l.b16 %v1929
  %v2275 = vunpack.c.h.b16 %v1929
  %v2276 = vunpack.c.l.b16 %v1930
  %v2277 = vunpack.c.h.b16 %v1930
  %v2278 = vunpack.c.l.b16 %v1931
  %v2279 = vunpack.c.h.b16 %v1931
  %v2280 = vunpack.c.l.b16 %v1932
  %v2281 = vunpack.c.h.b16 %v1932
  %v2282 = vunpack.c.l.b16 %v1933
  %v2283 = vunpack.c.h.b16 %v1933
  %v2284 = vunpack.c.l.b16 %v1934
  %v2285 = vunpack.c.h.b16 %v1934
  %v2286 = vunpack.c.l.b16 %v1935
  %v2287 = vunpack.c.h.b16 %v1935
  %v2288 = vunpack.c.l.b16 %v1936
  %v2289 = vunpack.c.h.b16 %v1936
  %v2290 = vunpack.c.l.b16 %v1937
  %v2291 = vunpack.c.h.b16 %v1937
  %v2292 = vunpack.c.l.b16 %v1938
  %v2293 = vunpack.c.h.b16 %v1938
  %v2294 = vunpack.c.l.b16 %v1939
  %v2295 = vunpack.c.h.b16 %v1939
  %v2296 = vunpack.c.l.b16 %v1940
  %v2297 = vunpack.c.h.b16 %v1940
  %v2298 = vunpack.c.l.b16 %v1941
  %v2299 = vunpack.c.h.b16 %v1941
  %v2300 = vunpack.c.l.b16 %v1942
  %v2301 = vunpack.c.h.b16 %v1942
  %v2302 = vunpack.c.l.b16 %v1943
  %v2303 = vunpack.c.h.b16 %v1943
  %v2304 = vunpack.c.l.b16 %v1944
  %v2305 = vunpack.c.h.b16 %v1944
  %v2306 = vunpack.c.l.b16 %v1945
  %v2307 = vunpack.c.h.b16 %v1945
  %v2308 = vunpack.c.l.b16 %v1946
  %v2309 = vunpack.c.h.b16 %v1946
  %v2310 = vunpack.c.l.b16 %v1947
  %v2311 = vunpack.c.h.b16 %v1947
  %v2312 = vunpack.c.l.b16 %v1948
  %v2313 = vunpack.c.h.b16 %v1948
  %v2314 = vunpack.c.l.b16 %v1949
  %v2315 = vunpack.c.h.b16 %v1949
  %v2316 = vunpack.c.l.b16 %v1950
  %v2317 = vunpack.c.h.b16 %v1950
  %v2318 = vunpack.c.l.b16 %v1951
  %v2319 = vunpack.c.h.b16 %v1951
  %v2320 = vunpack.c.l.b16 %v1952
  %v2321 = vunpack.c.h.b16 %v1952
  %v2322 = vunpack.c.l.b16 %v1953
  %v2323 = vunpack.c.h.b16 %v1953
  %v2324 = vunpack.c.l.b16 %v1954
  %v2325 = vunpack.c.h.b16 %v1954
  %v2326 = vunpack.c.l.b16 %v1955
  %v2327 = vunpack.c.h.b16 %v1955
  %v2328 = vunpack.c.l.b16 %v1956
  %v2329 = vunpack.c.h.b16 %v1956
  %v2330 = vunpack.c.l.b16 %v1957
  %v2331 = vunpack.c.h.b16 %v1957
  %v2332 = vunpack.c.l.b16 %v1958
  %v2333 = vunpack.c.h.b16 %v1958
  %v2334 = vunpack.c.l.b16 %v1959
  %v2335 = vunpack.c.h.b16 %v1959
  %v2336 = vunpack.c.l.b16 %v1960
  %v2337 = vunpack.c.h.b16 %v1960
  %v2338 = vunpack.c.l.b16 %v1961
  %v2339 = vunpack.c.h.b16 %v1961
  %v2340 = vunpack.c.l.b16 %v1962
  %v2341 = vunpack.c.h.b16 %v1962
  %v2342 = vunpack.c.l.b16 %v1963
  %v2343 = vunpack.c.h.b16 %v1963
  %v2344 = vunpack.c.l.b16 %v1964
  %v2345 = vunpack.c.h.b16 %v1964
  %v2346 = vunpack.c.l.b16 %v1965
  %v2347 = vunpack.c.h.b16 %v1965
  %v2348 = vunpack.c.l.b16 %v1966
  %v2349 = vunpack.c.h.b16 %v1966
  %v2350 = vunpack.c.l.b16 %v1967
  %v2351 = vunpack.c.h.b16 %v1967
  %v2352 = vpack.c.b16 %v2104, %v2096
  %v2353 = vpack.c.b16 %v2105, %v2097
  %v2354 = vpack.c.b16 %v2106, %v2098
  %v2355 = vpack.c.b16 %v2107, %v2099
  %v2356 = vpack.c.b16 %v2108, %v2100
  %v2357 = vpack.c.b16 %v2109, %v2101
  %v2358 = vpack.c.b16 %v2110, %v2102
  %v2359 = vpack.c.b16 %v2111, %v2103
  %v2360 = vpack.c.b16 %v2120, %v2112
  %v2361 = vpack.c.b16 %v2121, %v2113
  %v2362 = vpack.c.b16 %v2122, %v2114
  %v2363 = vpack.c.b16 %v2123, %v2115
  %v2364 = vpack.c.b16 %v2124, %v2116
  %v2365 = vpack.c.b16 %v2125, %v2117
  %v2366 = vpack.c.b16 %v2126, %v2118
  %v2367 = vpack.c.b16 %v2127, %v2119
  %v2368 = vpack.c.b16 %v2136, %v2128
  %v2369 = vpack.c.b16 %v2137, %v2129
  %v2370 = vpack.c.b16 %v2138, %v2130
  %v2371 = vpack.c.b16 %v2139, %v2131
  %v2372 = vpack.c.b16 %v2140, %v2132
  %v2373 = vpack.c.b16 %v2141, %v2133
  %v2374 = vpack.c.b16 %v2142, %v2134
  %v2375 = vpack.c.b16 %v2143, %v2135
  %v2376 = vpack.c.b16 %v2152, %v2144
  %v2377 = vpack.c.b16 %v2153, %v2145
  %v2378 = vpack.c.b16 %v2154, %v2146
  %v2379 = vpack.c.b16 %v2155, %v2147
  %v2380 = vpack.c.b16 %v2156, %v2148
  %v2381 = vpack.c.b16 %v2157, %v2149
  %v2382 = vpack.c.b16 %v2158, %v2150
  %v2383 = vpack.c.b16 %v2159, %v2151
  %v2384 = vpack.c.b16 %v2168, %v2160
  %v2385 = vpack.c.b16 %v2169, %v2161
  %v2386 = vpack.c.b16 %v2170, %v2162
  %v2387 = vpack.c.b16 %v2171, %v2163
  %v2388 = vpack.c.b16 %v2172, %v2164
  %v2389 = vpack.c.b16 %v2173, %v2165
  %v2390 = vpack.c.b16 %v2174, %v2166
  %v2391 = vpack.c.b16 %v2175, %v2167
  %v2392 = vpack.c.b16 %v2184, %v2176
  %v2393 = vpack.c.b16 %v2185, %v2177
  %v2394 = vpack.c.b16 %v2186, %v2178
  %v2395 = vpack.c.b16 %v2187, %v2179
  %v2396 = vpack.c.b16 %v2188, %v2180
  %v2397 = vpack.c.b16 %v2189, %v2181
  %v2398 = vpack.c.b16 %v2190, %v2182
  %v2399 = vpack.c.b16 %v2191, %v2183
  %v2400 = vpack.c.b16 %v2200, %v2192
  %v2401 = vpack.c.b16 %v2201, %v2193
  %v2402 = vpack.c.b16 %v2202, %v2194
  %v2403 = vpack.c.b16 %v2203, %v2195
  %v2404 = vpack.c.b16 %v2204, %v2196
  %v2405 = vpack.c.b16 %v2205, %v2197
  %v2406 = vpack.c.b16 %v2206, %v2198
  %v2407 = vpack.c.b16 %v2207, %v2199
  %v2408 = vpack.c.b16 %v2216, %v2208
  %v2409 = vpack.c.b16 %v2217, %v2209
  %v2410 = vpack.c.b16 %v2218, %v2210
  %v2411 = vpack.c.b16 %v2219, %v2211
  %v2412 = vpack.c.b16 %v2220, %v2212
  %v2413 = vpack.c.b16 %v2221, %v2213
  %v2414 = vpack.c.b16 %v2222, %v2214
  %v2415 = vpack.c.b16 %v2223, %v2215
  %v2416 = vpack.c.b16 %v2232, %v2224
  %v2417 = vpack.c.b16 %v2233, %v2225
  %v2418 = vpack.c.b16 %v2234, %v2226
  %v2419 = vpack.c.b16 %v2235, %v2227
  %v2420 = vpack.c.b16 %v2236, %v2228
  %v2421 = vpack.c.b16 %v2237, %v2229
  %v2422 = vpack.c.b16 %v2238, %v2230
  %v2423 = vpack.c.b16 %v2239, %v2231
  %v2424 = vpack.c.b16 %v2248, %v2240
  %v2425 = vpack.c.b16 %v2249, %v2241
  %v2426 = vpack.c.b16 %v2250, %v2242
  %v2427 = vpack.c.b16 %v2251, %v2243
  %v2428 = vpack.c.b16 %v2252, %v2244
  %v2429 = vpack.c.b16 %v2253, %v2245
  %v2430 = vpack.c.b16 %v2254, %v2246
  %v2431 = vpack.c.b16 %v2255, %v2247
  %v2432 = vpack.c.b16 %v2264, %v2256
  %v2433 = vpack.c.b16 %v2265, %v2257
  %v2434 = vpack.c.b16 %v2266, %v2258
  %v2435 = vpack.c.b16 %v2267, %v2259
  %v2436 = vpack.c.b16 %v2268, %v2260
  %v2437 = vpack.c.b16 %v2269, %v2261
  %v2438 = vpack.c.b16 %v2270, %v2262
  %v2439 = vpack.c.b16 %v2271, %v2263
  %v2440 = vpack.c.b16 %v2280, %v2272
  %v2441 = vpack.c.b16 %v2281, %v2273
  %v2442 = vpack.c.b16 %v2282, %v2274
  %v2443 = vpack.c.b16 %v2283, %v2275
  %v2444 = vpack.c.b16 %v2284, %v2276
  %v2445 = vpack.c.b16 %v2285, %v2277
  %v2446 = vpack.c.b16 %v2286, %v2278
  %v2447 = vpack.c.b16 %v2287, %v2279
  %v2448 = vpack.c.b16 %v2296, %v2288
  %v2449 = vpack.c.b16 %v2297, %v2289
  %v2450 = vpack.c.b16 %v2298, %v2290
  %v2451 = vpack.c.b16 %v2299, %v2291
  %v2452 = vpack.c.b16 %v2300, %v2292
  %v2453 = vpack.c.b16 %v2301, %v2293
  %v2454 = vpack.c.b16 %v2302, %v2294
  %v2455 = vpack.c.b16 %v2303, %v2295
  %v2456 = vpack.c.b16 %v2312, %v2304
  %v2457 = vpack.c.b16 %v2313, %v2305
  %v2458 = vpack.c.b16 %v2314, %v2306
  %v2459 = vpack.c.b16 %v2315, %v2307
  %v2460 = vpack.c.b16 %v2316, %v2308
  %v2461 = vpack.c.b16 %v2317, %v2309
  %v2462 = vpack.c.b16 %v2318, %v2310
  %v2463 = vpack.c.b16 %v2319, %v2311
  %v2464 = vpack.c.b16 %v2328, %v2320
  %v2465 = vpack.c.b16 %v2329, %v2321
  %v2466 = vpack.c.b16 %v2330, %v2322
  %v2467 = vpack.c.b16 %v2331, %v2323
  %v2468 = vpack.c.b16 %v2332, %v2324
  %v2469 = vpack.c.b16 %v2333, %v2325
  %v2470 = vpack.c.b16 %v2334, %v2326
  %v2471 = vpack.c.b16 %v2335, %v2327
  %v2472 = vpack.c.b16 %v2344, %v2336
  %v2473 = vpack.c.b16 %v2345, %v2337
  %v2474 = vpack.c.b16 %v2346, %v2338
  %v2475 = vpack.c.b16 %v2347, %v2339
  %v2476 = vpack.c.b16 %v2348, %v2340
  %v2477 = vpack.c.b16 %v2349, %v2341
  %v2478 = vpack.c.b16 %v2350, %v2342
  %v2479 = vpack.c.b16 %v2351, %v2343
  %2608 = vmatpush.bf16.msra.mxu0 %v2408
  %2609 = vmatpush.bf16.msra.mxu0 %v2400
  %2610 = vmatpush.bf16.msra.mxu0 %v2392
  %2611 = vmatpush.bf16.msra.mxu0 %v2384
  %2612 = vmatpush.bf16.msra.mxu0 %v2376
  %2613 = vmatpush.bf16.msra.mxu0 %v2368
  %2614 = vmatpush.bf16.msra.mxu0 %v2360
  %2615 = vmatpush.bf16.msra.mxu0 %v2352
  %2616 = vmatmul.bf16.gmra.mxu0 %v1839
  %v2617 = vpop.f32.mrf.mxu0
  %v2618 = vadd.f32 0.0, %v2617
  %v2619 = vpop.f32.mrf.mxu0
  %2620 = vdwg.mxu0
  %2621 = vmatpush.bf16.msra.mxu0 %v2472
  %2622 = vmatpush.bf16.msra.mxu0 %v2464
  %2623 = vmatpush.bf16.msra.mxu0 %v2456
  %2624 = vmatpush.bf16.msra.mxu0 %v2448
  %2625 = vmatpush.bf16.msra.mxu0 %v2440
  %2626 = vmatpush.bf16.msra.mxu0 %v2432
  %2627 = vmatpush.bf16.msra.mxu0 %v2424
  %2628 = vmatpush.bf16.msra.mxu0 %v2416
  %2629 = vmatmul.bf16.gmra.mxu0 %v1839
  %v2630 = vpop.f32.mrf.mxu0
  %v2631 = vadd.f32 %v2618, %v2630
  %v2632 = vpop.f32.mrf.mxu0
  %2633 = vdwg.mxu0
  %2634 = vmatpush.bf16.msra.mxu0 %v2409
  %2635 = vmatpush.bf16.msra.mxu0 %v2401
  %2636 = vmatpush.bf16.msra.mxu0 %v2393
  %2637 = vmatpush.bf16.msra.mxu0 %v2385
  %2638 = vmatpush.bf16.msra.mxu0 %v2377
  %2639 = vmatpush.bf16.msra.mxu0 %v2369
  %2640 = vmatpush.bf16.msra.mxu0 %v2361
  %2641 = vmatpush.bf16.msra.mxu0 %v2353
  %2642 = vmatmul.bf16.gmra.mxu0 %v1839
  %v2643 = vpop.f32.mrf.mxu0
  %v2644 = vadd.f32 0.0, %v2643
  %v2645 = vpop.f32.mrf.mxu0
  %2646 = vdwg.mxu0
  %2647 = vmatpush.bf16.msra.mxu0 %v2473
  %2648 = vmatpush.bf16.msra.mxu0 %v2465
  %2649 = vmatpush.bf16.msra.mxu0 %v2457
  %2650 = vmatpush.bf16.msra.mxu0 %v2449
  %2651 = vmatpush.bf16.msra.mxu0 %v2441
  %2652 = vmatpush.bf16.msra.mxu0 %v2433
  %2653 = vmatpush.bf16.msra.mxu0 %v2425
  %2654 = vmatpush.bf16.msra.mxu0 %v2417
  %2655 = vmatmul.bf16.gmra.mxu0 %v1839
  %v2656 = vpop.f32.mrf.mxu0
  %v2657 = vadd.f32 %v2644, %v2656
  %v2658 = vpop.f32.mrf.mxu0
  %2659 = vdwg.mxu0
  %2660 = vmatpush.bf16.msra.mxu0 %v2410
  %2661 = vmatpush.bf16.msra.mxu0 %v2402
  %2662 = vmatpush.bf16.msra.mxu0 %v2394
  %2663 = vmatpush.bf16.msra.mxu0 %v2386
  %2664 = vmatpush.bf16.msra.mxu0 %v2378
  %2665 = vmatpush.bf16.msra.mxu0 %v2370
  %2666 = vmatpush.bf16.msra.mxu0 %v2362
  %2667 = vmatpush.bf16.msra.mxu0 %v2354
  %2668 = vmatmul.bf16.gmra.mxu0 %v1839
  %v2669 = vpop.f32.mrf.mxu0
  %v2670 = vadd.f32 0.0, %v2669
  %v2671 = vpop.f32.mrf.mxu0
  %2672 = vdwg.mxu0
  %2673 = vmatpush.bf16.msra.mxu0 %v2474
  %2674 = vmatpush.bf16.msra.mxu0 %v2466
  %2675 = vmatpush.bf16.msra.mxu0 %v2458
  %2676 = vmatpush.bf16.msra.mxu0 %v2450
  %2677 = vmatpush.bf16.msra.mxu0 %v2442
  %2678 = vmatpush.bf16.msra.mxu0 %v2434
  %2679 = vmatpush.bf16.msra.mxu0 %v2426
  %2680 = vmatpush.bf16.msra.mxu0 %v2418
  %2681 = vmatmul.bf16.gmra.mxu0 %v1839
  %v2682 = vpop.f32.mrf.mxu0
  %v2683 = vadd.f32 %v2670, %v2682
  %v2684 = vpop.f32.mrf.mxu0
  %2685 = vdwg.mxu0
  %2686 = vmatpush.bf16.msra.mxu0 %v2411
  %2687 = vmatpush.bf16.msra.mxu0 %v2403
  %2688 = vmatpush.bf16.msra.mxu0 %v2395
  %2689 = vmatpush.bf16.msra.mxu0 %v2387
  %2690 = vmatpush.bf16.msra.mxu0 %v2379
  %2691 = vmatpush.bf16.msra.mxu0 %v2371
  %2692 = vmatpush.bf16.msra.mxu0 %v2363
  %2693 = vmatpush.bf16.msra.mxu0 %v2355
  %2694 = vmatmul.bf16.gmra.mxu0 %v1839
  %v2695 = vpop.f32.mrf.mxu0
  %v2696 = vadd.f32 0.0, %v2695
  %v2697 = vpop.f32.mrf.mxu0
  %2698 = vdwg.mxu0
  %2699 = vmatpush.bf16.msra.mxu0 %v2475
  %2700 = vmatpush.bf16.msra.mxu0 %v2467
  %2701 = vmatpush.bf16.msra.mxu0 %v2459
  %2702 = vmatpush.bf16.msra.mxu0 %v2451
  %2703 = vmatpush.bf16.msra.mxu0 %v2443
  %2704 = vmatpush.bf16.msra.mxu0 %v2435
  %2705 = vmatpush.bf16.msra.mxu0 %v2427
  %2706 = vmatpush.bf16.msra.mxu0 %v2419
  %2707 = vmatmul.bf16.gmra.mxu0 %v1839
  %v2708 = vpop.f32.mrf.mxu0
  %v2709 = vadd.f32 %v2696, %v2708
  %v2710 = vpop.f32.mrf.mxu0
  %2711 = vdwg.mxu0
  %2712 = vmatpush.bf16.msra.mxu0 %v2412
  %2713 = vmatpush.bf16.msra.mxu0 %v2404
  %2714 = vmatpush.bf16.msra.mxu0 %v2396
  %2715 = vmatpush.bf16.msra.mxu0 %v2388
  %2716 = vmatpush.bf16.msra.mxu0 %v2380
  %2717 = vmatpush.bf16.msra.mxu0 %v2372
  %2718 = vmatpush.bf16.msra.mxu0 %v2364
  %2719 = vmatpush.bf16.msra.mxu0 %v2356
  %2720 = vmatmul.bf16.gmra.mxu0 %v1839
  %v2721 = vpop.f32.mrf.mxu0
  %v2722 = vadd.f32 0.0, %v2721
  %v2723 = vpop.f32.mrf.mxu0
  %2724 = vdwg.mxu0
  %2725 = vmatpush.bf16.msra.mxu0 %v2476
  %2726 = vmatpush.bf16.msra.mxu0 %v2468
  %2727 = vmatpush.bf16.msra.mxu0 %v2460
  %2728 = vmatpush.bf16.msra.mxu0 %v2452
  %2729 = vmatpush.bf16.msra.mxu0 %v2444
  %2730 = vmatpush.bf16.msra.mxu0 %v2436
  %2731 = vmatpush.bf16.msra.mxu0 %v2428
  %2732 = vmatpush.bf16.msra.mxu0 %v2420
  %2733 = vmatmul.bf16.gmra.mxu0 %v1839
  %v2734 = vpop.f32.mrf.mxu0
  %v2735 = vadd.f32 %v2722, %v2734
  %v2736 = vpop.f32.mrf.mxu0
  %2737 = vdwg.mxu0
  %2738 = vmatpush.bf16.msra.mxu0 %v2413
  %2739 = vmatpush.bf16.msra.mxu0 %v2405
  %2740 = vmatpush.bf16.msra.mxu0 %v2397
  %2741 = vmatpush.bf16.msra.mxu0 %v2389
  %2742 = vmatpush.bf16.msra.mxu0 %v2381
  %2743 = vmatpush.bf16.msra.mxu0 %v2373
  %2744 = vmatpush.bf16.msra.mxu0 %v2365
  %2745 = vmatpush.bf16.msra.mxu0 %v2357
  %2746 = vmatmul.bf16.gmra.mxu0 %v1839
  %v2747 = vpop.f32.mrf.mxu0
  %v2748 = vadd.f32 0.0, %v2747
  %v2749 = vpop.f32.mrf.mxu0
  %2750 = vdwg.mxu0
  %2751 = vmatpush.bf16.msra.mxu0 %v2477
  %2752 = vmatpush.bf16.msra.mxu0 %v2469
  %2753 = vmatpush.bf16.msra.mxu0 %v2461
  %2754 = vmatpush.bf16.msra.mxu0 %v2453
  %2755 = vmatpush.bf16.msra.mxu0 %v2445
  %2756 = vmatpush.bf16.msra.mxu0 %v2437
  %2757 = vmatpush.bf16.msra.mxu0 %v2429
  %2758 = vmatpush.bf16.msra.mxu0 %v2421
  %2759 = vmatmul.bf16.gmra.mxu0 %v1839
  %v2760 = vpop.f32.mrf.mxu0
  %v2761 = vadd.f32 %v2748, %v2760
  %v2762 = vpop.f32.mrf.mxu0
  %2763 = vdwg.mxu0
  %2764 = vmatpush.bf16.msra.mxu0 %v2414
  %2765 = vmatpush.bf16.msra.mxu0 %v2406
  %2766 = vmatpush.bf16.msra.mxu0 %v2398
  %2767 = vmatpush.bf16.msra.mxu0 %v2390
  %2768 = vmatpush.bf16.msra.mxu0 %v2382
  %2769 = vmatpush.bf16.msra.mxu0 %v2374
  %2770 = vmatpush.bf16.msra.mxu0 %v2366
  %2771 = vmatpush.bf16.msra.mxu0 %v2358
  %2772 = vmatmul.bf16.gmra.mxu0 %v1839
  %v2773 = vpop.f32.mrf.mxu0
  %v2774 = vadd.f32 0.0, %v2773
  %v2775 = vpop.f32.mrf.mxu0
  %2776 = vdwg.mxu0
  %2777 = vmatpush.bf16.msra.mxu0 %v2478
  %2778 = vmatpush.bf16.msra.mxu0 %v2470
  %2779 = vmatpush.bf16.msra.mxu0 %v2462
  %2780 = vmatpush.bf16.msra.mxu0 %v2454
  %2781 = vmatpush.bf16.msra.mxu0 %v2446
  %2782 = vmatpush.bf16.msra.mxu0 %v2438
  %2783 = vmatpush.bf16.msra.mxu0 %v2430
  %2784 = vmatpush.bf16.msra.mxu0 %v2422
  %2785 = vmatmul.bf16.gmra.mxu0 %v1839
  %v2786 = vpop.f32.mrf.mxu0
  %v2787 = vadd.f32 %v2774, %v2786
  %v2788 = vpop.f32.mrf.mxu0
  %2789 = vdwg.mxu0
  %2790 = vmatpush.bf16.msra.mxu0 %v2415
  %2791 = vmatpush.bf16.msra.mxu0 %v2407
  %2792 = vmatpush.bf16.msra.mxu0 %v2399
  %2793 = vmatpush.bf16.msra.mxu0 %v2391
  %2794 = vmatpush.bf16.msra.mxu0 %v2383
  %2795 = vmatpush.bf16.msra.mxu0 %v2375
  %2796 = vmatpush.bf16.msra.mxu0 %v2367
  %2797 = vmatpush.bf16.msra.mxu0 %v2359
  %2798 = vmatmul.bf16.gmra.mxu0 %v1839
  %v2799 = vpop.f32.mrf.mxu0
  %v2800 = vadd.f32 0.0, %v2799
  %v2801 = vpop.f32.mrf.mxu0
  %2802 = vdwg.mxu0
  %2803 = vmatpush.bf16.msra.mxu0 %v2479
  %2804 = vmatpush.bf16.msra.mxu0 %v2471
  %2805 = vmatpush.bf16.msra.mxu0 %v2463
  %2806 = vmatpush.bf16.msra.mxu0 %v2455
  %2807 = vmatpush.bf16.msra.mxu0 %v2447
  %2808 = vmatpush.bf16.msra.mxu0 %v2439
  %2809 = vmatpush.bf16.msra.mxu0 %v2431
  %2810 = vmatpush.bf16.msra.mxu0 %v2423
  %2811 = vmatmul.bf16.gmra.mxu0 %v1839
  %v2812 = vpop.f32.mrf.mxu0
  %v2813 = vadd.f32 %v2800, %v2812
  %v2814 = vpop.f32.mrf.mxu0
  %2815 = vdwg.mxu0
  %v2816 = vadd.f32 %v1830, %v2631
  %v2817 = vadd.f32 %v1831, %v2657
  %v2818 = vadd.f32 %v1832, %v2683
  %v2819 = vadd.f32 %v1833, %v2709
  %v2820 = vadd.f32 %v1835, %v2735
  %v2821 = vadd.f32 %v1836, %v2761
  %v2822 = vadd.f32 %v1837, %v2787
  %v2823 = vadd.f32 %v1838, %v2813
  %v2824 = vmul.f32 %v2816, 0.5
  %v2825 = vtanh.pop %v2824
  %v2826 = vmul.f32 %v2825, 0.5
  %v2827 = vadd.f32 %v2826, 0.5
  %v2828 = vmul.f32 %v2817, 0.5
  %v2829 = vtanh.pop %v2828
  %v2830 = vmul.f32 %v2829, 0.5
  %v2831 = vadd.f32 %v2830, 0.5
  %v2832 = vtanh.pop %v2818
  %v2833 = vmul.f32 %v2819, 0.5
  %v2834 = vtanh.pop %v2833
  %v2835 = vmul.f32 %v2834, 0.5
  %v2836 = vadd.f32 %v2835, 0.5
  %v2837 = vmul.f32 %v2831, 0.0
  %v2838 = vmul.f32 %v2827, %v2832
  %v2839 = vadd.f32 %v2837, %v2838
  %v2840 = vtanh.pop %v2839
  %v2841 = vmul.f32 %v2836, %v2840
  %v2842 = vmul.f32 %v2820, 0.5
  %v2843 = vtanh.pop %v2842
  %v2844 = vmul.f32 %v2843, 0.5
  %v2845 = vadd.f32 %v2844, 0.5
  %v2846 = vmul.f32 %v2821, 0.5
  %v2847 = vtanh.pop %v2846
  %v2848 = vmul.f32 %v2847, 0.5
  %v2849 = vadd.f32 %v2848, 0.5
  %v2850 = vtanh.pop %v2822
  %v2851 = vmul.f32 %v2823, 0.5
  %v2852 = vtanh.pop %v2851
  %v2853 = vmul.f32 %v2852, 0.5
  %v2854 = vadd.f32 %v2853, 0.5
  %v2855 = vmul.f32 %v2849, 0.0
  %v2856 = vmul.f32 %v2845, %v2850
  %v2857 = vadd.f32 %v2855, %v2856
  %v2858 = vtanh.pop %v2857
  %v2859 = vmul.f32 %v2854, %v2858
  %v2860 = vld [vmem:[#allocation3] sm:$0xff]
  %v2861 = vadd.f32 %v2860, %v2841
  %2862 = vst [vmem:[#allocation3] sm:$0xff] %v2861
  %v2863 = vld [vmem:[#allocation3 + $0x8] sm:$0xff]
  %v2864 = vadd.f32 %v2863, %v2859
  %2865 = vst [vmem:[#allocation3 + $0x8] sm:$0xff] %v2864
  %v2866 = vld [vmem:[#allocation3 + $0x10] sm:$0xff]
  %v2867 = vmax.f32 %v2866, %v2841
  %2868 = vst [vmem:[#allocation3 + $0x10] sm:$0xff] %v2867
  %v2869 = vld [vmem:[#allocation3 + $0x18] sm:$0xff]
  %v2870 = vmax.f32 %v2869, %v2859
  %2871 = vst [vmem:[#allocation3 + $0x18] sm:$0xff] %v2870
  %s2872 = scalar_lea.vmem [#allocation2], 64
  %v2873 = vld [vmem:[%s2872] sm:$0xff]
  %v2874 = vld [vmem:[%s2872 + $0x8] sm:$0xff]
  %v2875 = vld [vmem:[%s2872 + $0x10] sm:$0xff]
  %v2876 = vld [vmem:[%s2872 + $0x18] sm:$0xff]
  %s2877 = scalar_lea.vmem [#allocation2], 384
  %v2878 = vld [vmem:[%s2877 + $0x20] sm:$0xff]
  %v2879 = vld [vmem:[%s2877 + $0x28] sm:$0xff]
  %v2880 = vld [vmem:[%s2877 + $0x30] sm:$0xff]
  %v2881 = vld [vmem:[%s2877 + $0x38] sm:$0xff]
  %v2882 = vpack.c.bf16 %v2841, %v2841
  %v2883 = vpack.c.bf16 %v2859, %v2859
  %v2884 = vld [vmem:[%s3] sm:$0xff]
  %v2885 = vld [vmem:[%s3 + $0x8] sm:$0xff]
  %v2886 = vld [vmem:[%s3 + $0x10] sm:$0xff]
  %v2887 = vld [vmem:[%s3 + $0x18] sm:$0xff]
  %v2888 = vld [vmem:[%s3 + $0x20] sm:$0xff]
  %v2889 = vld [vmem:[%s3 + $0x28] sm:$0xff]
  %v2890 = vld [vmem:[%s3 + $0x30] sm:$0xff]
  %v2891 = vld [vmem:[%s3 + $0x38] sm:$0xff]
  %v2892 = vld [vmem:[%s3 + $0x40] sm:$0xff]
  %v2893 = vld [vmem:[%s3 + $0x48] sm:$0xff]
  %v2894 = vld [vmem:[%s3 + $0x50] sm:$0xff]
  %v2895 = vld [vmem:[%s3 + $0x58] sm:$0xff]
  %v2896 = vld [vmem:[%s3 + $0x60] sm:$0xff]
  %v2897 = vld [vmem:[%s3 + $0x68] sm:$0xff]
  %v2898 = vld [vmem:[%s3 + $0x70] sm:$0xff]
  %v2899 = vld [vmem:[%s3 + $0x78] sm:$0xff]
  %v2900 = vld [vmem:[%s3 + $0x80] sm:$0xff]
  %v2901 = vld [vmem:[%s3 + $0x88] sm:$0xff]
  %v2902 = vld [vmem:[%s3 + $0x90] sm:$0xff]
  %v2903 = vld [vmem:[%s3 + $0x98] sm:$0xff]
  %v2904 = vld [vmem:[%s3 + $0xa0] sm:$0xff]
  %v2905 = vld [vmem:[%s3 + $0xa8] sm:$0xff]
  %v2906 = vld [vmem:[%s3 + $0xb0] sm:$0xff]
  %v2907 = vld [vmem:[%s3 + $0xb8] sm:$0xff]
  %v2908 = vld [vmem:[%s3 + $0xc0] sm:$0xff]
  %v2909 = vld [vmem:[%s3 + $0xc8] sm:$0xff]
  %v2910 = vld [vmem:[%s3 + $0xd0] sm:$0xff]
  %v2911 = vld [vmem:[%s3 + $0xd8] sm:$0xff]
  %v2912 = vld [vmem:[%s3 + $0xe0] sm:$0xff]
  %v2913 = vld [vmem:[%s3 + $0xe8] sm:$0xff]
  %v2914 = vld [vmem:[%s3 + $0xf0] sm:$0xff]
  %v2915 = vld [vmem:[%s3 + $0xf8] sm:$0xff]
  %v2916 = vld [vmem:[%s3 + $0x100] sm:$0xff]
  %v2917 = vld [vmem:[%s3 + $0x108] sm:$0xff]
  %v2918 = vld [vmem:[%s3 + $0x110] sm:$0xff]
  %v2919 = vld [vmem:[%s3 + $0x118] sm:$0xff]
  %v2920 = vld [vmem:[%s3 + $0x120] sm:$0xff]
  %v2921 = vld [vmem:[%s3 + $0x128] sm:$0xff]
  %v2922 = vld [vmem:[%s3 + $0x130] sm:$0xff]
  %v2923 = vld [vmem:[%s3 + $0x138] sm:$0xff]
  %v2924 = vld [vmem:[%s3 + $0x140] sm:$0xff]
  %v2925 = vld [vmem:[%s3 + $0x148] sm:$0xff]
  %v2926 = vld [vmem:[%s3 + $0x150] sm:$0xff]
  %v2927 = vld [vmem:[%s3 + $0x158] sm:$0xff]
  %v2928 = vld [vmem:[%s3 + $0x160] sm:$0xff]
  %v2929 = vld [vmem:[%s3 + $0x168] sm:$0xff]
  %v2930 = vld [vmem:[%s3 + $0x170] sm:$0xff]
  %v2931 = vld [vmem:[%s3 + $0x178] sm:$0xff]
  %v2932 = vld [vmem:[%s3 + $0x180] sm:$0xff]
  %v2933 = vld [vmem:[%s3 + $0x188] sm:$0xff]
  %v2934 = vld [vmem:[%s3 + $0x190] sm:$0xff]
  %v2935 = vld [vmem:[%s3 + $0x198] sm:$0xff]
  %v2936 = vld [vmem:[%s3 + $0x1a0] sm:$0xff]
  %v2937 = vld [vmem:[%s3 + $0x1a8] sm:$0xff]
  %v2938 = vld [vmem:[%s3 + $0x1b0] sm:$0xff]
  %v2939 = vld [vmem:[%s3 + $0x1b8] sm:$0xff]
  %v2940 = vld [vmem:[%s3 + $0x1c0] sm:$0xff]
  %v2941 = vld [vmem:[%s3 + $0x1c8] sm:$0xff]
  %v2942 = vld [vmem:[%s3 + $0x1d0] sm:$0xff]
  %v2943 = vld [vmem:[%s3 + $0x1d8] sm:$0xff]
  %v2944 = vld [vmem:[%s3 + $0x1e0] sm:$0xff]
  %v2945 = vld [vmem:[%s3 + $0x1e8] sm:$0xff]
  %v2946 = vld [vmem:[%s3 + $0x1f0] sm:$0xff]
  %v2947 = vld [vmem:[%s3 + $0x1f8] sm:$0xff]
  %v2948 = vld [vmem:[%s3 + $0x200] sm:$0xff]
  %v2949 = vld [vmem:[%s3 + $0x208] sm:$0xff]
  %v2950 = vld [vmem:[%s3 + $0x210] sm:$0xff]
  %v2951 = vld [vmem:[%s3 + $0x218] sm:$0xff]
  %v2952 = vld [vmem:[%s3 + $0x220] sm:$0xff]
  %v2953 = vld [vmem:[%s3 + $0x228] sm:$0xff]
  %v2954 = vld [vmem:[%s3 + $0x230] sm:$0xff]
  %v2955 = vld [vmem:[%s3 + $0x238] sm:$0xff]
  %v2956 = vld [vmem:[%s3 + $0x240] sm:$0xff]
  %v2957 = vld [vmem:[%s3 + $0x248] sm:$0xff]
  %v2958 = vld [vmem:[%s3 + $0x250] sm:$0xff]
  %v2959 = vld [vmem:[%s3 + $0x258] sm:$0xff]
  %v2960 = vld [vmem:[%s3 + $0x260] sm:$0xff]
  %v2961 = vld [vmem:[%s3 + $0x268] sm:$0xff]
  %v2962 = vld [vmem:[%s3 + $0x270] sm:$0xff]
  %v2963 = vld [vmem:[%s3 + $0x278] sm:$0xff]
  %v2964 = vld [vmem:[%s3 + $0x280] sm:$0xff]
  %v2965 = vld [vmem:[%s3 + $0x288] sm:$0xff]
  %v2966 = vld [vmem:[%s3 + $0x290] sm:$0xff]
  %v2967 = vld [vmem:[%s3 + $0x298] sm:$0xff]
  %v2968 = vld [vmem:[%s3 + $0x2a0] sm:$0xff]
  %v2969 = vld [vmem:[%s3 + $0x2a8] sm:$0xff]
  %v2970 = vld [vmem:[%s3 + $0x2b0] sm:$0xff]
  %v2971 = vld [vmem:[%s3 + $0x2b8] sm:$0xff]
  %v2972 = vld [vmem:[%s3 + $0x2c0] sm:$0xff]
  %v2973 = vld [vmem:[%s3 + $0x2c8] sm:$0xff]
  %v2974 = vld [vmem:[%s3 + $0x2d0] sm:$0xff]
  %v2975 = vld [vmem:[%s3 + $0x2d8] sm:$0xff]
  %v2976 = vld [vmem:[%s3 + $0x2e0] sm:$0xff]
  %v2977 = vld [vmem:[%s3 + $0x2e8] sm:$0xff]
  %v2978 = vld [vmem:[%s3 + $0x2f0] sm:$0xff]
  %v2979 = vld [vmem:[%s3 + $0x2f8] sm:$0xff]
  %v2980 = vld [vmem:[%s3 + $0x300] sm:$0xff]
  %v2981 = vld [vmem:[%s3 + $0x308] sm:$0xff]
  %v2982 = vld [vmem:[%s3 + $0x310] sm:$0xff]
  %v2983 = vld [vmem:[%s3 + $0x318] sm:$0xff]
  %v2984 = vld [vmem:[%s3 + $0x320] sm:$0xff]
  %v2985 = vld [vmem:[%s3 + $0x328] sm:$0xff]
  %v2986 = vld [vmem:[%s3 + $0x330] sm:$0xff]
  %v2987 = vld [vmem:[%s3 + $0x338] sm:$0xff]
  %v2988 = vld [vmem:[%s3 + $0x340] sm:$0xff]
  %v2989 = vld [vmem:[%s3 + $0x348] sm:$0xff]
  %v2990 = vld [vmem:[%s3 + $0x350] sm:$0xff]
  %v2991 = vld [vmem:[%s3 + $0x358] sm:$0xff]
  %v2992 = vld [vmem:[%s3 + $0x360] sm:$0xff]
  %v2993 = vld [vmem:[%s3 + $0x368] sm:$0xff]
  %v2994 = vld [vmem:[%s3 + $0x370] sm:$0xff]
  %v2995 = vld [vmem:[%s3 + $0x378] sm:$0xff]
  %v2996 = vld [vmem:[%s3 + $0x380] sm:$0xff]
  %v2997 = vld [vmem:[%s3 + $0x388] sm:$0xff]
  %v2998 = vld [vmem:[%s3 + $0x390] sm:$0xff]
  %v2999 = vld [vmem:[%s3 + $0x398] sm:$0xff]
  %v3000 = vld [vmem:[%s3 + $0x3a0] sm:$0xff]
  %v3001 = vld [vmem:[%s3 + $0x3a8] sm:$0xff]
  %v3002 = vld [vmem:[%s3 + $0x3b0] sm:$0xff]
  %v3003 = vld [vmem:[%s3 + $0x3b8] sm:$0xff]
  %v3004 = vld [vmem:[%s3 + $0x3c0] sm:$0xff]
  %v3005 = vld [vmem:[%s3 + $0x3c8] sm:$0xff]
  %v3006 = vld [vmem:[%s3 + $0x3d0] sm:$0xff]
  %v3007 = vld [vmem:[%s3 + $0x3d8] sm:$0xff]
  %v3008 = vld [vmem:[%s3 + $0x3e0] sm:$0xff]
  %v3009 = vld [vmem:[%s3 + $0x3e8] sm:$0xff]
  %v3010 = vld [vmem:[%s3 + $0x3f0] sm:$0xff]
  %v3011 = vld [vmem:[%s3 + $0x3f8] sm:$0xff]
  %v3140 = vunpack.c.l.b16 %v2884
  %v3141 = vunpack.c.h.b16 %v2884
  %v3142 = vunpack.c.l.b16 %v2885
  %v3143 = vunpack.c.h.b16 %v2885
  %v3144 = vunpack.c.l.b16 %v2886
  %v3145 = vunpack.c.h.b16 %v2886
  %v3146 = vunpack.c.l.b16 %v2887
  %v3147 = vunpack.c.h.b16 %v2887
  %v3148 = vunpack.c.l.b16 %v2888
  %v3149 = vunpack.c.h.b16 %v2888
  %v3150 = vunpack.c.l.b16 %v2889
  %v3151 = vunpack.c.h.b16 %v2889
  %v3152 = vunpack.c.l.b16 %v2890
  %v3153 = vunpack.c.h.b16 %v2890
  %v3154 = vunpack.c.l.b16 %v2891
  %v3155 = vunpack.c.h.b16 %v2891
  %v3156 = vunpack.c.l.b16 %v2892
  %v3157 = vunpack.c.h.b16 %v2892
  %v3158 = vunpack.c.l.b16 %v2893
  %v3159 = vunpack.c.h.b16 %v2893
  %v3160 = vunpack.c.l.b16 %v2894
  %v3161 = vunpack.c.h.b16 %v2894
  %v3162 = vunpack.c.l.b16 %v2895
  %v3163 = vunpack.c.h.b16 %v2895
  %v3164 = vunpack.c.l.b16 %v2896
  %v3165 = vunpack.c.h.b16 %v2896
  %v3166 = vunpack.c.l.b16 %v2897
  %v3167 = vunpack.c.h.b16 %v2897
  %v3168 = vunpack.c.l.b16 %v2898
  %v3169 = vunpack.c.h.b16 %v2898
  %v3170 = vunpack.c.l.b16 %v2899
  %v3171 = vunpack.c.h.b16 %v2899
  %v3172 = vunpack.c.l.b16 %v2900
  %v3173 = vunpack.c.h.b16 %v2900
  %v3174 = vunpack.c.l.b16 %v2901
  %v3175 = vunpack.c.h.b16 %v2901
  %v3176 = vunpack.c.l.b16 %v2902
  %v3177 = vunpack.c.h.b16 %v2902
  %v3178 = vunpack.c.l.b16 %v2903
  %v3179 = vunpack.c.h.b16 %v2903
  %v3180 = vunpack.c.l.b16 %v2904
  %v3181 = vunpack.c.h.b16 %v2904
  %v3182 = vunpack.c.l.b16 %v2905
  %v3183 = vunpack.c.h.b16 %v2905
  %v3184 = vunpack.c.l.b16 %v2906
  %v3185 = vunpack.c.h.b16 %v2906
  %v3186 = vunpack.c.l.b16 %v2907
  %v3187 = vunpack.c.h.b16 %v2907
  %v3188 = vunpack.c.l.b16 %v2908
  %v3189 = vunpack.c.h.b16 %v2908
  %v3190 = vunpack.c.l.b16 %v2909
  %v3191 = vunpack.c.h.b16 %v2909
  %v3192 = vunpack.c.l.b16 %v2910
  %v3193 = vunpack.c.h.b16 %v2910
  %v3194 = vunpack.c.l.b16 %v2911
  %v3195 = vunpack.c.h.b16 %v2911
  %v3196 = vunpack.c.l.b16 %v2912
  %v3197 = vunpack.c.h.b16 %v2912
  %v3198 = vunpack.c.l.b16 %v2913
  %v3199 = vunpack.c.h.b16 %v2913
  %v3200 = vunpack.c.l.b16 %v2914
  %v3201 = vunpack.c.h.b16 %v2914
  %v3202 = vunpack.c.l.b16 %v2915
  %v3203 = vunpack.c.h.b16 %v2915
  %v3204 = vunpack.c.l.b16 %v2916
  %v3205 = vunpack.c.h.b16 %v2916
  %v3206 = vunpack.c.l.b16 %v2917
  %v3207 = vunpack.c.h.b16 %v2917
  %v3208 = vunpack.c.l.b16 %v2918
  %v3209 = vunpack.c.h.b16 %v2918
  %v3210 = vunpack.c.l.b16 %v2919
  %v3211 = vunpack.c.h.b16 %v2919
  %v3212 = vunpack.c.l.b16 %v2920
  %v3213 = vunpack.c.h.b16 %v2920
  %v3214 = vunpack.c.l.b16 %v2921
  %v3215 = vunpack.c.h.b16 %v2921
  %v3216 = vunpack.c.l.b16 %v2922
  %v3217 = vunpack.c.h.b16 %v2922
  %v3218 = vunpack.c.l.b16 %v2923
  %v3219 = vunpack.c.h.b16 %v2923
  %v3220 = vunpack.c.l.b16 %v2924
  %v3221 = vunpack.c.h.b16 %v2924
  %v3222 = vunpack.c.l.b16 %v2925
  %v3223 = vunpack.c.h.b16 %v2925
  %v3224 = vunpack.c.l.b16 %v2926
  %v3225 = vunpack.c.h.b16 %v2926
  %v3226 = vunpack.c.l.b16 %v2927
  %v3227 = vunpack.c.h.b16 %v2927
  %v3228 = vunpack.c.l.b16 %v2928
  %v3229 = vunpack.c.h.b16 %v2928
  %v3230 = vunpack.c.l.b16 %v2929
  %v3231 = vunpack.c.h.b16 %v2929
  %v3232 = vunpack.c.l.b16 %v2930
  %v3233 = vunpack.c.h.b16 %v2930
  %v3234 = vunpack.c.l.b16 %v2931
  %v3235 = vunpack.c.h.b16 %v2931
  %v3236 = vunpack.c.l.b16 %v2932
  %v3237 = vunpack.c.h.b16 %v2932
  %v3238 = vunpack.c.l.b16 %v2933
  %v3239 = vunpack.c.h.b16 %v2933
  %v3240 = vunpack.c.l.b16 %v2934
  %v3241 = vunpack.c.h.b16 %v2934
  %v3242 = vunpack.c.l.b16 %v2935
  %v3243 = vunpack.c.h.b16 %v2935
  %v3244 = vunpack.c.l.b16 %v2936
  %v3245 = vunpack.c.h.b16 %v2936
  %v3246 = vunpack.c.l.b16 %v2937
  %v3247 = vunpack.c.h.b16 %v2937
  %v3248 = vunpack.c.l.b16 %v2938
  %v3249 = vunpack.c.h.b16 %v2938
  %v3250 = vunpack.c.l.b16 %v2939
  %v3251 = vunpack.c.h.b16 %v2939
  %v3252 = vunpack.c.l.b16 %v2940
  %v3253 = vunpack.c.h.b16 %v2940
  %v3254 = vunpack.c.l.b16 %v2941
  %v3255 = vunpack.c.h.b16 %v2941
  %v3256 = vunpack.c.l.b16 %v2942
  %v3257 = vunpack.c.h.b16 %v2942
  %v3258 = vunpack.c.l.b16 %v2943
  %v3259 = vunpack.c.h.b16 %v2943
  %v3260 = vunpack.c.l.b16 %v2944
  %v3261 = vunpack.c.h.b16 %v2944
  %v3262 = vunpack.c.l.b16 %v2945
  %v3263 = vunpack.c.h.b16 %v2945
  %v3264 = vunpack.c.l.b16 %v2946
  %v3265 = vunpack.c.h.b16 %v2946
  %v3266 = vunpack.c.l.b16 %v2947
  %v3267 = vunpack.c.h.b16 %v2947
  %v3268 = vunpack.c.l.b16 %v2948
  %v3269 = vunpack.c.h.b16 %v2948
  %v3270 = vunpack.c.l.b16 %v2949
  %v3271 = vunpack.c.h.b16 %v2949
  %v3272 = vunpack.c.l.b16 %v2950
  %v3273 = vunpack.c.h.b16 %v2950
  %v3274 = vunpack.c.l.b16 %v2951
  %v3275 = vunpack.c.h.b16 %v2951
  %v3276 = vunpack.c.l.b16 %v2952
  %v3277 = vunpack.c.h.b16 %v2952
  %v3278 = vunpack.c.l.b16 %v2953
  %v3279 = vunpack.c.h.b16 %v2953
  %v3280 = vunpack.c.l.b16 %v2954
  %v3281 = vunpack.c.h.b16 %v2954
  %v3282 = vunpack.c.l.b16 %v2955
  %v3283 = vunpack.c.h.b16 %v2955
  %v3284 = vunpack.c.l.b16 %v2956
  %v3285 = vunpack.c.h.b16 %v2956
  %v3286 = vunpack.c.l.b16 %v2957
  %v3287 = vunpack.c.h.b16 %v2957
  %v3288 = vunpack.c.l.b16 %v2958
  %v3289 = vunpack.c.h.b16 %v2958
  %v3290 = vunpack.c.l.b16 %v2959
  %v3291 = vunpack.c.h.b16 %v2959
  %v3292 = vunpack.c.l.b16 %v2960
  %v3293 = vunpack.c.h.b16 %v2960
  %v3294 = vunpack.c.l.b16 %v2961
  %v3295 = vunpack.c.h.b16 %v2961
  %v3296 = vunpack.c.l.b16 %v2962
  %v3297 = vunpack.c.h.b16 %v2962
  %v3298 = vunpack.c.l.b16 %v2963
  %v3299 = vunpack.c.h.b16 %v2963
  %v3300 = vunpack.c.l.b16 %v2964
  %v3301 = vunpack.c.h.b16 %v2964
  %v3302 = vunpack.c.l.b16 %v2965
  %v3303 = vunpack.c.h.b16 %v2965
  %v3304 = vunpack.c.l.b16 %v2966
  %v3305 = vunpack.c.h.b16 %v2966
  %v3306 = vunpack.c.l.b16 %v2967
  %v3307 = vunpack.c.h.b16 %v2967
  %v3308 = vunpack.c.l.b16 %v2968
  %v3309 = vunpack.c.h.b16 %v2968
  %v3310 = vunpack.c.l.b16 %v2969
  %v3311 = vunpack.c.h.b16 %v2969
  %v3312 = vunpack.c.l.b16 %v2970
  %v3313 = vunpack.c.h.b16 %v2970
  %v3314 = vunpack.c.l.b16 %v2971
  %v3315 = vunpack.c.h.b16 %v2971
  %v3316 = vunpack.c.l.b16 %v2972
  %v3317 = vunpack.c.h.b16 %v2972
  %v3318 = vunpack.c.l.b16 %v2973
  %v3319 = vunpack.c.h.b16 %v2973
  %v3320 = vunpack.c.l.b16 %v2974
  %v3321 = vunpack.c.h.b16 %v2974
  %v3322 = vunpack.c.l.b16 %v2975
  %v3323 = vunpack.c.h.b16 %v2975
  %v3324 = vunpack.c.l.b16 %v2976
  %v3325 = vunpack.c.h.b16 %v2976
  %v3326 = vunpack.c.l.b16 %v2977
  %v3327 = vunpack.c.h.b16 %v2977
  %v3328 = vunpack.c.l.b16 %v2978
  %v3329 = vunpack.c.h.b16 %v2978
  %v3330 = vunpack.c.l.b16 %v2979
  %v3331 = vunpack.c.h.b16 %v2979
  %v3332 = vunpack.c.l.b16 %v2980
  %v3333 = vunpack.c.h.b16 %v2980
  %v3334 = vunpack.c.l.b16 %v2981
  %v3335 = vunpack.c.h.b16 %v2981
  %v3336 = vunpack.c.l.b16 %v2982
  %v3337 = vunpack.c.h.b16 %v2982
  %v3338 = vunpack.c.l.b16 %v2983
  %v3339 = vunpack.c.h.b16 %v2983
  %v3340 = vunpack.c.l.b16 %v2984
  %v3341 = vunpack.c.h.b16 %v2984
  %v3342 = vunpack.c.l.b16 %v2985
  %v3343 = vunpack.c.h.b16 %v2985
  %v3344 = vunpack.c.l.b16 %v2986
  %v3345 = vunpack.c.h.b16 %v2986
  %v3346 = vunpack.c.l.b16 %v2987
  %v3347 = vunpack.c.h.b16 %v2987
  %v3348 = vunpack.c.l.b16 %v2988
  %v3349 = vunpack.c.h.b16 %v2988
  %v3350 = vunpack.c.l.b16 %v2989
  %v3351 = vunpack.c.h.b16 %v2989
  %v3352 = vunpack.c.l.b16 %v2990
  %v3353 = vunpack.c.h.b16 %v2990
  %v3354 = vunpack.c.l.b16 %v2991
  %v3355 = vunpack.c.h.b16 %v2991
  %v3356 = vunpack.c.l.b16 %v2992
  %v3357 = vunpack.c.h.b16 %v2992
  %v3358 = vunpack.c.l.b16 %v2993
  %v3359 = vunpack.c.h.b16 %v2993
  %v3360 = vunpack.c.l.b16 %v2994
  %v3361 = vunpack.c.h.b16 %v2994
  %v3362 = vunpack.c.l.b16 %v2995
  %v3363 = vunpack.c.h.b16 %v2995
  %v3364 = vunpack.c.l.b16 %v2996
  %v3365 = vunpack.c.h.b16 %v2996
  %v3366 = vunpack.c.l.b16 %v2997
  %v3367 = vunpack.c.h.b16 %v2997
  %v3368 = vunpack.c.l.b16 %v2998
  %v3369 = vunpack.c.h.b16 %v2998
  %v3370 = vunpack.c.l.b16 %v2999
  %v3371 = vunpack.c.h.b16 %v2999
  %v3372 = vunpack.c.l.b16 %v3000
  %v3373 = vunpack.c.h.b16 %v3000
  %v3374 = vunpack.c.l.b16 %v3001
  %v3375 = vunpack.c.h.b16 %v3001
  %v3376 = vunpack.c.l.b16 %v3002
  %v3377 = vunpack.c.h.b16 %v3002
  %v3378 = vunpack.c.l.b16 %v3003
  %v3379 = vunpack.c.h.b16 %v3003
  %v3380 = vunpack.c.l.b16 %v3004
  %v3381 = vunpack.c.h.b16 %v3004
  %v3382 = vunpack.c.l.b16 %v3005
  %v3383 = vunpack.c.h.b16 %v3005
  %v3384 = vunpack.c.l.b16 %v3006
  %v3385 = vunpack.c.h.b16 %v3006
  %v3386 = vunpack.c.l.b16 %v3007
  %v3387 = vunpack.c.h.b16 %v3007
  %v3388 = vunpack.c.l.b16 %v3008
  %v3389 = vunpack.c.h.b16 %v3008
  %v3390 = vunpack.c.l.b16 %v3009
  %v3391 = vunpack.c.h.b16 %v3009
  %v3392 = vunpack.c.l.b16 %v3010
  %v3393 = vunpack.c.h.b16 %v3010
  %v3394 = vunpack.c.l.b16 %v3011
  %v3395 = vunpack.c.h.b16 %v3011
  %v3396 = vpack.c.b16 %v3148, %v3140
  %v3397 = vpack.c.b16 %v3149, %v3141
  %v3398 = vpack.c.b16 %v3150, %v3142
  %v3399 = vpack.c.b16 %v3151, %v3143
  %v3400 = vpack.c.b16 %v3152, %v3144
  %v3401 = vpack.c.b16 %v3153, %v3145
  %v3402 = vpack.c.b16 %v3154, %v3146
  %v3403 = vpack.c.b16 %v3155, %v3147
  %v3404 = vpack.c.b16 %v3164, %v3156
  %v3405 = vpack.c.b16 %v3165, %v3157
  %v3406 = vpack.c.b16 %v3166, %v3158
  %v3407 = vpack.c.b16 %v3167, %v3159
  %v3408 = vpack.c.b16 %v3168, %v3160
  %v3409 = vpack.c.b16 %v3169, %v3161
  %v3410 = vpack.c.b16 %v3170, %v3162
  %v3411 = vpack.c.b16 %v3171, %v3163
  %v3412 = vpack.c.b16 %v3180, %v3172
  %v3413 = vpack.c.b16 %v3181, %v3173
  %v3414 = vpack.c.b16 %v3182, %v3174
  %v3415 = vpack.c.b16 %v3183, %v3175
  %v3416 = vpack.c.b16 %v3184, %v3176
  %v3417 = vpack.c.b16 %v3185, %v3177
  %v3418 = vpack.c.b16 %v3186, %v3178
  %v3419 = vpack.c.b16 %v3187, %v3179
  %v3420 = vpack.c.b16 %v3196, %v3188
  %v3421 = vpack.c.b16 %v3197, %v3189
  %v3422 = vpack.c.b16 %v3198, %v3190
  %v3423 = vpack.c.b16 %v3199, %v3191
  %v3424 = vpack.c.b16 %v3200, %v3192
  %v3425 = vpack.c.b16 %v3201, %v3193
  %v3426 = vpack.c.b16 %v3202, %v3194
  %v3427 = vpack.c.b16 %v3203, %v3195
  %v3428 = vpack.c.b16 %v3212, %v3204
  %v3429 = vpack.c.b16 %v3213, %v3205
  %v3430 = vpack.c.b16 %v3214, %v3206
  %v3431 = vpack.c.b16 %v3215, %v3207
  %v3432 = vpack.c.b16 %v3216, %v3208
  %v3433 = vpack.c.b16 %v3217, %v3209
  %v3434 = vpack.c.b16 %v3218, %v3210
  %v3435 = vpack.c.b16 %v3219, %v3211
  %v3436 = vpack.c.b16 %v3228, %v3220
  %v3437 = vpack.c.b16 %v3229, %v3221
  %v3438 = vpack.c.b16 %v3230, %v3222
  %v3439 = vpack.c.b16 %v3231, %v3223
  %v3440 = vpack.c.b16 %v3232, %v3224
  %v3441 = vpack.c.b16 %v3233, %v3225
  %v3442 = vpack.c.b16 %v3234, %v3226
  %v3443 = vpack.c.b16 %v3235, %v3227
  %v3444 = vpack.c.b16 %v3244, %v3236
  %v3445 = vpack.c.b16 %v3245, %v3237
  %v3446 = vpack.c.b16 %v3246, %v3238
  %v3447 = vpack.c.b16 %v3247, %v3239
  %v3448 = vpack.c.b16 %v3248, %v3240
  %v3449 = vpack.c.b16 %v3249, %v3241
  %v3450 = vpack.c.b16 %v3250, %v3242
  %v3451 = vpack.c.b16 %v3251, %v3243
  %v3452 = vpack.c.b16 %v3260, %v3252
  %v3453 = vpack.c.b16 %v3261, %v3253
  %v3454 = vpack.c.b16 %v3262, %v3254
  %v3455 = vpack.c.b16 %v3263, %v3255
  %v3456 = vpack.c.b16 %v3264, %v3256
  %v3457 = vpack.c.b16 %v3265, %v3257
  %v3458 = vpack.c.b16 %v3266, %v3258
  %v3459 = vpack.c.b16 %v3267, %v3259
  %v3460 = vpack.c.b16 %v3276, %v3268
  %v3461 = vpack.c.b16 %v3277, %v3269
  %v3462 = vpack.c.b16 %v3278, %v3270
  %v3463 = vpack.c.b16 %v3279, %v3271
  %v3464 = vpack.c.b16 %v3280, %v3272
  %v3465 = vpack.c.b16 %v3281, %v3273
  %v3466 = vpack.c.b16 %v3282, %v3274
  %v3467 = vpack.c.b16 %v3283, %v3275
  %v3468 = vpack.c.b16 %v3292, %v3284
  %v3469 = vpack.c.b16 %v3293, %v3285
  %v3470 = vpack.c.b16 %v3294, %v3286
  %v3471 = vpack.c.b16 %v3295, %v3287
  %v3472 = vpack.c.b16 %v3296, %v3288
  %v3473 = vpack.c.b16 %v3297, %v3289
  %v3474 = vpack.c.b16 %v3298, %v3290
  %v3475 = vpack.c.b16 %v3299, %v3291
  %v3476 = vpack.c.b16 %v3308, %v3300
  %v3477 = vpack.c.b16 %v3309, %v3301
  %v3478 = vpack.c.b16 %v3310, %v3302
  %v3479 = vpack.c.b16 %v3311, %v3303
  %v3480 = vpack.c.b16 %v3312, %v3304
  %v3481 = vpack.c.b16 %v3313, %v3305
  %v3482 = vpack.c.b16 %v3314, %v3306
  %v3483 = vpack.c.b16 %v3315, %v3307
  %v3484 = vpack.c.b16 %v3324, %v3316
  %v3485 = vpack.c.b16 %v3325, %v3317
  %v3486 = vpack.c.b16 %v3326, %v3318
  %v3487 = vpack.c.b16 %v3327, %v3319
  %v3488 = vpack.c.b16 %v3328, %v3320
  %v3489 = vpack.c.b16 %v3329, %v3321
  %v3490 = vpack.c.b16 %v3330, %v3322
  %v3491 = vpack.c.b16 %v3331, %v3323
  %v3492 = vpack.c.b16 %v3340, %v3332
  %v3493 = vpack.c.b16 %v3341, %v3333
  %v3494 = vpack.c.b16 %v3342, %v3334
  %v3495 = vpack.c.b16 %v3343, %v3335
  %v3496 = vpack.c.b16 %v3344, %v3336
  %v3497 = vpack.c.b16 %v3345, %v3337
  %v3498 = vpack.c.b16 %v3346, %v3338
  %v3499 = vpack.c.b16 %v3347, %v3339
  %v3500 = vpack.c.b16 %v3356, %v3348
  %v3501 = vpack.c.b16 %v3357, %v3349
  %v3502 = vpack.c.b16 %v3358, %v3350
  %v3503 = vpack.c.b16 %v3359, %v3351
  %v3504 = vpack.c.b16 %v3360, %v3352
  %v3505 = vpack.c.b16 %v3361, %v3353
  %v3506 = vpack.c.b16 %v3362, %v3354
  %v3507 = vpack.c.b16 %v3363, %v3355
  %v3508 = vpack.c.b16 %v3372, %v3364
  %v3509 = vpack.c.b16 %v3373, %v3365
  %v3510 = vpack.c.b16 %v3374, %v3366
  %v3511 = vpack.c.b16 %v3375, %v3367
  %v3512 = vpack.c.b16 %v3376, %v3368
  %v3513 = vpack.c.b16 %v3377, %v3369
  %v3514 = vpack.c.b16 %v3378, %v3370
  %v3515 = vpack.c.b16 %v3379, %v3371
  %v3516 = vpack.c.b16 %v3388, %v3380
  %v3517 = vpack.c.b16 %v3389, %v3381
  %v3518 = vpack.c.b16 %v3390, %v3382
  %v3519 = vpack.c.b16 %v3391, %v3383
  %v3520 = vpack.c.b16 %v3392, %v3384
  %v3521 = vpack.c.b16 %v3393, %v3385
  %v3522 = vpack.c.b16 %v3394, %v3386
  %v3523 = vpack.c.b16 %v3395, %v3387
  %3652 = vmatpush.bf16.msra.mxu0 %v3452
  %3653 = vmatpush.bf16.msra.mxu0 %v3444
  %3654 = vmatpush.bf16.msra.mxu0 %v3436
  %3655 = vmatpush.bf16.msra.mxu0 %v3428
  %3656 = vmatpush.bf16.msra.mxu0 %v3420
  %3657 = vmatpush.bf16.msra.mxu0 %v3412
  %3658 = vmatpush.bf16.msra.mxu0 %v3404
  %3659 = vmatpush.bf16.msra.mxu0 %v3396
  %3660 = vmatmul.bf16.gmra.mxu0 %v2882
  %v3661 = vpop.f32.mrf.mxu0
  %v3662 = vadd.f32 0.0, %v3661
  %v3663 = vpop.f32.mrf.mxu0
  %3664 = vdwg.mxu0
  %3665 = vmatpush.bf16.msra.mxu0 %v3516
  %3666 = vmatpush.bf16.msra.mxu0 %v3508
  %3667 = vmatpush.bf16.msra.mxu0 %v3500
  %3668 = vmatpush.bf16.msra.mxu0 %v3492
  %3669 = vmatpush.bf16.msra.mxu0 %v3484
  %3670 = vmatpush.bf16.msra.mxu0 %v3476
  %3671 = vmatpush.bf16.msra.mxu0 %v3468
  %3672 = vmatpush.bf16.msra.mxu0 %v3460
  %3673 = vmatmul.bf16.gmra.mxu0 %v2883
  %v3674 = vpop.f32.mrf.mxu0
  %v3675 = vadd.f32 %v3662, %v3674
  %v3676 = vpop.f32.mrf.mxu0
  %3677 = vdwg.mxu0
  %3678 = vmatpush.bf16.msra.mxu0 %v3453
  %3679 = vmatpush.bf16.msra.mxu0 %v3445
  %3680 = vmatpush.bf16.msra.mxu0 %v3437
  %3681 = vmatpush.bf16.msra.mxu0 %v3429
  %3682 = vmatpush.bf16.msra.mxu0 %v3421
  %3683 = vmatpush.bf16.msra.mxu0 %v3413
  %3684 = vmatpush.bf16.msra.mxu0 %v3405
  %3685 = vmatpush.bf16.msra.mxu0 %v3397
  %3686 = vmatmul.bf16.gmra.mxu0 %v2882
  %v3687 = vpop.f32.mrf.mxu0
  %v3688 = vadd.f32 0.0, %v3687
  %v3689 = vpop.f32.mrf.mxu0
  %3690 = vdwg.mxu0
  %3691 = vmatpush.bf16.msra.mxu0 %v3517
  %3692 = vmatpush.bf16.msra.mxu0 %v3509
  %3693 = vmatpush.bf16.msra.mxu0 %v3501
  %3694 = vmatpush.bf16.msra.mxu0 %v3493
  %3695 = vmatpush.bf16.msra.mxu0 %v3485
  %3696 = vmatpush.bf16.msra.mxu0 %v3477
  %3697 = vmatpush.bf16.msra.mxu0 %v3469
  %3698 = vmatpush.bf16.msra.mxu0 %v3461
  %3699 = vmatmul.bf16.gmra.mxu0 %v2883
  %v3700 = vpop.f32.mrf.mxu0
  %v3701 = vadd.f32 %v3688, %v3700
  %v3702 = vpop.f32.mrf.mxu0
  %3703 = vdwg.mxu0
  %3704 = vmatpush.bf16.msra.mxu0 %v3454
  %3705 = vmatpush.bf16.msra.mxu0 %v3446
  %3706 = vmatpush.bf16.msra.mxu0 %v3438
  %3707 = vmatpush.bf16.msra.mxu0 %v3430
  %3708 = vmatpush.bf16.msra.mxu0 %v3422
  %3709 = vmatpush.bf16.msra.mxu0 %v3414
  %3710 = vmatpush.bf16.msra.mxu0 %v3406
  %3711 = vmatpush.bf16.msra.mxu0 %v3398
  %3712 = vmatmul.bf16.gmra.mxu0 %v2882
  %v3713 = vpop.f32.mrf.mxu0
  %v3714 = vadd.f32 0.0, %v3713
  %v3715 = vpop.f32.mrf.mxu0
  %3716 = vdwg.mxu0
  %3717 = vmatpush.bf16.msra.mxu0 %v3518
  %3718 = vmatpush.bf16.msra.mxu0 %v3510
  %3719 = vmatpush.bf16.msra.mxu0 %v3502
  %3720 = vmatpush.bf16.msra.mxu0 %v3494
  %3721 = vmatpush.bf16.msra.mxu0 %v3486
  %3722 = vmatpush.bf16.msra.mxu0 %v3478
  %3723 = vmatpush.bf16.msra.mxu0 %v3470
  %3724 = vmatpush.bf16.msra.mxu0 %v3462
  %3725 = vmatmul.bf16.gmra.mxu0 %v2883
  %v3726 = vpop.f32.mrf.mxu0
  %v3727 = vadd.f32 %v3714, %v3726
  %v3728 = vpop.f32.mrf.mxu0
  %3729 = vdwg.mxu0
  %3730 = vmatpush.bf16.msra.mxu0 %v3455
  %3731 = vmatpush.bf16.msra.mxu0 %v3447
  %3732 = vmatpush.bf16.msra.mxu0 %v3439
  %3733 = vmatpush.bf16.msra.mxu0 %v3431
  %3734 = vmatpush.bf16.msra.mxu0 %v3423
  %3735 = vmatpush.bf16.msra.mxu0 %v3415
  %3736 = vmatpush.bf16.msra.mxu0 %v3407
  %3737 = vmatpush.bf16.msra.mxu0 %v3399
  %3738 = vmatmul.bf16.gmra.mxu0 %v2882
  %v3739 = vpop.f32.mrf.mxu0
  %v3740 = vadd.f32 0.0, %v3739
  %v3741 = vpop.f32.mrf.mxu0
  %3742 = vdwg.mxu0
  %3743 = vmatpush.bf16.msra.mxu0 %v3519
  %3744 = vmatpush.bf16.msra.mxu0 %v3511
  %3745 = vmatpush.bf16.msra.mxu0 %v3503
  %3746 = vmatpush.bf16.msra.mxu0 %v3495
  %3747 = vmatpush.bf16.msra.mxu0 %v3487
  %3748 = vmatpush.bf16.msra.mxu0 %v3479
  %3749 = vmatpush.bf16.msra.mxu0 %v3471
  %3750 = vmatpush.bf16.msra.mxu0 %v3463
  %3751 = vmatmul.bf16.gmra.mxu0 %v2883
  %v3752 = vpop.f32.mrf.mxu0
  %v3753 = vadd.f32 %v3740, %v3752
  %v3754 = vpop.f32.mrf.mxu0
  %3755 = vdwg.mxu0
  %3756 = vmatpush.bf16.msra.mxu0 %v3456
  %3757 = vmatpush.bf16.msra.mxu0 %v3448
  %3758 = vmatpush.bf16.msra.mxu0 %v3440
  %3759 = vmatpush.bf16.msra.mxu0 %v3432
  %3760 = vmatpush.bf16.msra.mxu0 %v3424
  %3761 = vmatpush.bf16.msra.mxu0 %v3416
  %3762 = vmatpush.bf16.msra.mxu0 %v3408
  %3763 = vmatpush.bf16.msra.mxu0 %v3400
  %3764 = vmatmul.bf16.gmra.mxu0 %v2882
  %v3765 = vpop.f32.mrf.mxu0
  %v3766 = vadd.f32 0.0, %v3765
  %v3767 = vpop.f32.mrf.mxu0
  %3768 = vdwg.mxu0
  %3769 = vmatpush.bf16.msra.mxu0 %v3520
  %3770 = vmatpush.bf16.msra.mxu0 %v3512
  %3771 = vmatpush.bf16.msra.mxu0 %v3504
  %3772 = vmatpush.bf16.msra.mxu0 %v3496
  %3773 = vmatpush.bf16.msra.mxu0 %v3488
  %3774 = vmatpush.bf16.msra.mxu0 %v3480
  %3775 = vmatpush.bf16.msra.mxu0 %v3472
  %3776 = vmatpush.bf16.msra.mxu0 %v3464
  %3777 = vmatmul.bf16.gmra.mxu0 %v2883
  %v3778 = vpop.f32.mrf.mxu0
  %v3779 = vadd.f32 %v3766, %v3778
  %v3780 = vpop.f32.mrf.mxu0
  %3781 = vdwg.mxu0
  %3782 = vmatpush.bf16.msra.mxu0 %v3457
  %3783 = vmatpush.bf16.msra.mxu0 %v3449
  %3784 = vmatpush.bf16.msra.mxu0 %v3441
  %3785 = vmatpush.bf16.msra.mxu0 %v3433
  %3786 = vmatpush.bf16.msra.mxu0 %v3425
  %3787 = vmatpush.bf16.msra.mxu0 %v3417
  %3788 = vmatpush.bf16.msra.mxu0 %v3409
  %3789 = vmatpush.bf16.msra.mxu0 %v3401
  %3790 = vmatmul.bf16.gmra.mxu0 %v2882
  %v3791 = vpop.f32.mrf.mxu0
  %v3792 = vadd.f32 0.0, %v3791
  %v3793 = vpop.f32.mrf.mxu0
  %3794 = vdwg.mxu0
  %3795 = vmatpush.bf16.msra.mxu0 %v3521
  %3796 = vmatpush.bf16.msra.mxu0 %v3513
  %3797 = vmatpush.bf16.msra.mxu0 %v3505
  %3798 = vmatpush.bf16.msra.mxu0 %v3497
  %3799 = vmatpush.bf16.msra.mxu0 %v3489
  %3800 = vmatpush.bf16.msra.mxu0 %v3481
  %3801 = vmatpush.bf16.msra.mxu0 %v3473
  %3802 = vmatpush.bf16.msra.mxu0 %v3465
  %3803 = vmatmul.bf16.gmra.mxu0 %v2883
  %v3804 = vpop.f32.mrf.mxu0
  %v3805 = vadd.f32 %v3792, %v3804
  %v3806 = vpop.f32.mrf.mxu0
  %3807 = vdwg.mxu0
  %3808 = vmatpush.bf16.msra.mxu0 %v3458
  %3809 = vmatpush.bf16.msra.mxu0 %v3450
  %3810 = vmatpush.bf16.msra.mxu0 %v3442
  %3811 = vmatpush.bf16.msra.mxu0 %v3434
  %3812 = vmatpush.bf16.msra.mxu0 %v3426
  %3813 = vmatpush.bf16.msra.mxu0 %v3418
  %3814 = vmatpush.bf16.msra.mxu0 %v3410
  %3815 = vmatpush.bf16.msra.mxu0 %v3402
  %3816 = vmatmul.bf16.gmra.mxu0 %v2882
  %v3817 = vpop.f32.mrf.mxu0
  %v3818 = vadd.f32 0.0, %v3817
  %v3819 = vpop.f32.mrf.mxu0
  %3820 = vdwg.mxu0
  %3821 = vmatpush.bf16.msra.mxu0 %v3522
  %3822 = vmatpush.bf16.msra.mxu0 %v3514
  %3823 = vmatpush.bf16.msra.mxu0 %v3506
  %3824 = vmatpush.bf16.msra.mxu0 %v3498
  %3825 = vmatpush.bf16.msra.mxu0 %v3490
  %3826 = vmatpush.bf16.msra.mxu0 %v3482
  %3827 = vmatpush.bf16.msra.mxu0 %v3474
  %3828 = vmatpush.bf16.msra.mxu0 %v3466
  %3829 = vmatmul.bf16.gmra.mxu0 %v2883
  %v3830 = vpop.f32.mrf.mxu0
  %v3831 = vadd.f32 %v3818, %v3830
  %v3832 = vpop.f32.mrf.mxu0
  %3833 = vdwg.mxu0
  %3834 = vmatpush.bf16.msra.mxu0 %v3459
  %3835 = vmatpush.bf16.msra.mxu0 %v3451
  %3836 = vmatpush.bf16.msra.mxu0 %v3443
  %3837 = vmatpush.bf16.msra.mxu0 %v3435
  %3838 = vmatpush.bf16.msra.mxu0 %v3427
  %3839 = vmatpush.bf16.msra.mxu0 %v3419
  %3840 = vmatpush.bf16.msra.mxu0 %v3411
  %3841 = vmatpush.bf16.msra.mxu0 %v3403
  %3842 = vmatmul.bf16.gmra.mxu0 %v2882
  %v3843 = vpop.f32.mrf.mxu0
  %v3844 = vadd.f32 0.0, %v3843
  %v3845 = vpop.f32.mrf.mxu0
  %3846 = vdwg.mxu0
  %3847 = vmatpush.bf16.msra.mxu0 %v3523
  %3848 = vmatpush.bf16.msra.mxu0 %v3515
  %3849 = vmatpush.bf16.msra.mxu0 %v3507
  %3850 = vmatpush.bf16.msra.mxu0 %v3499
  %3851 = vmatpush.bf16.msra.mxu0 %v3491
  %3852 = vmatpush.bf16.msra.mxu0 %v3483
  %3853 = vmatpush.bf16.msra.mxu0 %v3475
  %3854 = vmatpush.bf16.msra.mxu0 %v3467
  %3855 = vmatmul.bf16.gmra.mxu0 %v2883
  %v3856 = vpop.f32.mrf.mxu0
  %v3857 = vadd.f32 %v3844, %v3856
  %v3858 = vpop.f32.mrf.mxu0
  %3859 = vdwg.mxu0
  %v3860 = vadd.f32 %v2873, %v3675
  %v3861 = vadd.f32 %v2874, %v3701
  %v3862 = vadd.f32 %v2875, %v3727
  %v3863 = vadd.f32 %v2876, %v3753
  %v3864 = vadd.f32 %v2878, %v3779
  %v3865 = vadd.f32 %v2879, %v3805
  %v3866 = vadd.f32 %v2880, %v3831
  %v3867 = vadd.f32 %v2881, %v3857
  %v3868 = vmul.f32 %v3860, 0.5
  %v3869 = vtanh.pop %v3868
  %v3870 = vmul.f32 %v3869, 0.5
  %v3871 = vadd.f32 %v3870, 0.5
  %v3872 = vmul.f32 %v3861, 0.5
  %v3873 = vtanh.pop %v3872
  %v3874 = vmul.f32 %v3873, 0.5
  %v3875 = vadd.f32 %v3874, 0.5
  %v3876 = vtanh.pop %v3862
  %v3877 = vmul.f32 %v3863, 0.5
  %v3878 = vtanh.pop %v3877
  %v3879 = vmul.f32 %v3878, 0.5
  %v3880 = vadd.f32 %v3879, 0.5
  %v3881 = vmul.f32 %v3875, %v2839
  %v3882 = vmul.f32 %v3871, %v3876
  %v3883 = vadd.f32 %v3881, %v3882
  %v3884 = vtanh.pop %v3883
  %v3885 = vmul.f32 %v3880, %v3884
  %v3886 = vmul.f32 %v3864, 0.5
  %v3887 = vtanh.pop %v3886
  %v3888 = vmul.f32 %v3887, 0.5
  %v3889 = vadd.f32 %v3888, 0.5
  %v3890 = vmul.f32 %v3865, 0.5
  %v3891 = vtanh.pop %v3890
  %v3892 = vmul.f32 %v3891, 0.5
  %v3893 = vadd.f32 %v3892, 0.5
  %v3894 = vtanh.pop %v3866
  %v3895 = vmul.f32 %v3867, 0.5
  %v3896 = vtanh.pop %v3895
  %v3897 = vmul.f32 %v3896, 0.5
  %v3898 = vadd.f32 %v3897, 0.5
  %v3899 = vmul.f32 %v3893, %v2857
  %v3900 = vmul.f32 %v3889, %v3894
  %v3901 = vadd.f32 %v3899, %v3900
  %v3902 = vtanh.pop %v3901
  %v3903 = vmul.f32 %v3898, %v3902
  %v3904 = vld [vmem:[#allocation3] sm:$0xff]
  %v3905 = vadd.f32 %v3904, %v3885
  %3906 = vst [vmem:[#allocation3] sm:$0xff] %v3905
  %v3907 = vld [vmem:[#allocation3 + $0x8] sm:$0xff]
  %v3908 = vadd.f32 %v3907, %v3903
  %3909 = vst [vmem:[#allocation3 + $0x8] sm:$0xff] %v3908
  %v3910 = vld [vmem:[#allocation3 + $0x10] sm:$0xff]
  %v3911 = vmax.f32 %v3910, %v3885
  %3912 = vst [vmem:[#allocation3 + $0x10] sm:$0xff] %v3911
  %v3913 = vld [vmem:[#allocation3 + $0x18] sm:$0xff]
  %v3914 = vmax.f32 %v3913, %v3903
  %3915 = vst [vmem:[#allocation3 + $0x18] sm:$0xff] %v3914
  %s3916 = scalar_lea.vmem [#allocation2], 128
  %v3917 = vld [vmem:[%s3916] sm:$0xff]
  %v3918 = vld [vmem:[%s3916 + $0x8] sm:$0xff]
  %v3919 = vld [vmem:[%s3916 + $0x10] sm:$0xff]
  %v3920 = vld [vmem:[%s3916 + $0x18] sm:$0xff]
  %s3921 = scalar_lea.vmem [#allocation2], 320
  %v3922 = vld [vmem:[%s3921 + $0x20] sm:$0xff]
  %v3923 = vld [vmem:[%s3921 + $0x28] sm:$0xff]
  %v3924 = vld [vmem:[%s3921 + $0x30] sm:$0xff]
  %v3925 = vld [vmem:[%s3921 + $0x38] sm:$0xff]
  %v3926 = vpack.c.bf16 %v3885, %v3885
  %v3927 = vpack.c.bf16 %v3903, %v3903
  %v3928 = vld [vmem:[%s3] sm:$0xff]
  %v3929 = vld [vmem:[%s3 + $0x8] sm:$0xff]
  %v3930 = vld [vmem:[%s3 + $0x10] sm:$0xff]
  %v3931 = vld [vmem:[%s3 + $0x18] sm:$0xff]
  %v3932 = vld [vmem:[%s3 + $0x20] sm:$0xff]
  %v3933 = vld [vmem:[%s3 + $0x28] sm:$0xff]
  %v3934 = vld [vmem:[%s3 + $0x30] sm:$0xff]
  %v3935 = vld [vmem:[%s3 + $0x38] sm:$0xff]
  %v3936 = vld [vmem:[%s3 + $0x40] sm:$0xff]
  %v3937 = vld [vmem:[%s3 + $0x48] sm:$0xff]
  %v3938 = vld [vmem:[%s3 + $0x50] sm:$0xff]
  %v3939 = vld [vmem:[%s3 + $0x58] sm:$0xff]
  %v3940 = vld [vmem:[%s3 + $0x60] sm:$0xff]
  %v3941 = vld [vmem:[%s3 + $0x68] sm:$0xff]
  %v3942 = vld [vmem:[%s3 + $0x70] sm:$0xff]
  %v3943 = vld [vmem:[%s3 + $0x78] sm:$0xff]
  %v3944 = vld [vmem:[%s3 + $0x80] sm:$0xff]
  %v3945 = vld [vmem:[%s3 + $0x88] sm:$0xff]
  %v3946 = vld [vmem:[%s3 + $0x90] sm:$0xff]
  %v3947 = vld [vmem:[%s3 + $0x98] sm:$0xff]
  %v3948 = vld [vmem:[%s3 + $0xa0] sm:$0xff]
  %v3949 = vld [vmem:[%s3 + $0xa8] sm:$0xff]
  %v3950 = vld [vmem:[%s3 + $0xb0] sm:$0xff]
  %v3951 = vld [vmem:[%s3 + $0xb8] sm:$0xff]
  %v3952 = vld [vmem:[%s3 + $0xc0] sm:$0xff]
  %v3953 = vld [vmem:[%s3 + $0xc8] sm:$0xff]
  %v3954 = vld [vmem:[%s3 + $0xd0] sm:$0xff]
  %v3955 = vld [vmem:[%s3 + $0xd8] sm:$0xff]
  %v3956 = vld [vmem:[%s3 + $0xe0] sm:$0xff]
  %v3957 = vld [vmem:[%s3 + $0xe8] sm:$0xff]
  %v3958 = vld [vmem:[%s3 + $0xf0] sm:$0xff]
  %v3959 = vld [vmem:[%s3 + $0xf8] sm:$0xff]
  %v3960 = vld [vmem:[%s3 + $0x100] sm:$0xff]
  %v3961 = vld [vmem:[%s3 + $0x108] sm:$0xff]
  %v3962 = vld [vmem:[%s3 + $0x110] sm:$0xff]
  %v3963 = vld [vmem:[%s3 + $0x118] sm:$0xff]
  %v3964 = vld [vmem:[%s3 + $0x120] sm:$0xff]
  %v3965 = vld [vmem:[%s3 + $0x128] sm:$0xff]
  %v3966 = vld [vmem:[%s3 + $0x130] sm:$0xff]
  %v3967 = vld [vmem:[%s3 + $0x138] sm:$0xff]
  %v3968 = vld [vmem:[%s3 + $0x140] sm:$0xff]
  %v3969 = vld [vmem:[%s3 + $0x148] sm:$0xff]
  %v3970 = vld [vmem:[%s3 + $0x150] sm:$0xff]
  %v3971 = vld [vmem:[%s3 + $0x158] sm:$0xff]
  %v3972 = vld [vmem:[%s3 + $0x160] sm:$0xff]
  %v3973 = vld [vmem:[%s3 + $0x168] sm:$0xff]
  %v3974 = vld [vmem:[%s3 + $0x170] sm:$0xff]
  %v3975 = vld [vmem:[%s3 + $0x178] sm:$0xff]
  %v3976 = vld [vmem:[%s3 + $0x180] sm:$0xff]
  %v3977 = vld [vmem:[%s3 + $0x188] sm:$0xff]
  %v3978 = vld [vmem:[%s3 + $0x190] sm:$0xff]
  %v3979 = vld [vmem:[%s3 + $0x198] sm:$0xff]
  %v3980 = vld [vmem:[%s3 + $0x1a0] sm:$0xff]
  %v3981 = vld [vmem:[%s3 + $0x1a8] sm:$0xff]
  %v3982 = vld [vmem:[%s3 + $0x1b0] sm:$0xff]
  %v3983 = vld [vmem:[%s3 + $0x1b8] sm:$0xff]
  %v3984 = vld [vmem:[%s3 + $0x1c0] sm:$0xff]
  %v3985 = vld [vmem:[%s3 + $0x1c8] sm:$0xff]
  %v3986 = vld [vmem:[%s3 + $0x1d0] sm:$0xff]
  %v3987 = vld [vmem:[%s3 + $0x1d8] sm:$0xff]
  %v3988 = vld [vmem:[%s3 + $0x1e0] sm:$0xff]
  %v3989 = vld [vmem:[%s3 + $0x1e8] sm:$0xff]
  %v3990 = vld [vmem:[%s3 + $0x1f0] sm:$0xff]
  %v3991 = vld [vmem:[%s3 + $0x1f8] sm:$0xff]
  %v3992 = vld [vmem:[%s3 + $0x200] sm:$0xff]
  %v3993 = vld [vmem:[%s3 + $0x208] sm:$0xff]
  %v3994 = vld [vmem:[%s3 + $0x210] sm:$0xff]
  %v3995 = vld [vmem:[%s3 + $0x218] sm:$0xff]
  %v3996 = vld [vmem:[%s3 + $0x220] sm:$0xff]
  %v3997 = vld [vmem:[%s3 + $0x228] sm:$0xff]
  %v3998 = vld [vmem:[%s3 + $0x230] sm:$0xff]
  %v3999 = vld [vmem:[%s3 + $0x238] sm:$0xff]
  %v4000 = vld [vmem:[%s3 + $0x240] sm:$0xff]
  %v4001 = vld [vmem:[%s3 + $0x248] sm:$0xff]
  %v4002 = vld [vmem:[%s3 + $0x250] sm:$0xff]
  %v4003 = vld [vmem:[%s3 + $0x258] sm:$0xff]
  %v4004 = vld [vmem:[%s3 + $0x260] sm:$0xff]
  %v4005 = vld [vmem:[%s3 + $0x268] sm:$0xff]
  %v4006 = vld [vmem:[%s3 + $0x270] sm:$0xff]
  %v4007 = vld [vmem:[%s3 + $0x278] sm:$0xff]
  %v4008 = vld [vmem:[%s3 + $0x280] sm:$0xff]
  %v4009 = vld [vmem:[%s3 + $0x288] sm:$0xff]
  %v4010 = vld [vmem:[%s3 + $0x290] sm:$0xff]
  %v4011 = vld [vmem:[%s3 + $0x298] sm:$0xff]
  %v4012 = vld [vmem:[%s3 + $0x2a0] sm:$0xff]
  %v4013 = vld [vmem:[%s3 + $0x2a8] sm:$0xff]
  %v4014 = vld [vmem:[%s3 + $0x2b0] sm:$0xff]
  %v4015 = vld [vmem:[%s3 + $0x2b8] sm:$0xff]
  %v4016 = vld [vmem:[%s3 + $0x2c0] sm:$0xff]
  %v4017 = vld [vmem:[%s3 + $0x2c8] sm:$0xff]
  %v4018 = vld [vmem:[%s3 + $0x2d0] sm:$0xff]
  %v4019 = vld [vmem:[%s3 + $0x2d8] sm:$0xff]
  %v4020 = vld [vmem:[%s3 + $0x2e0] sm:$0xff]
  %v4021 = vld [vmem:[%s3 + $0x2e8] sm:$0xff]
  %v4022 = vld [vmem:[%s3 + $0x2f0] sm:$0xff]
  %v4023 = vld [vmem:[%s3 + $0x2f8] sm:$0xff]
  %v4024 = vld [vmem:[%s3 + $0x300] sm:$0xff]
  %v4025 = vld [vmem:[%s3 + $0x308] sm:$0xff]
  %v4026 = vld [vmem:[%s3 + $0x310] sm:$0xff]
  %v4027 = vld [vmem:[%s3 + $0x318] sm:$0xff]
  %v4028 = vld [vmem:[%s3 + $0x320] sm:$0xff]
  %v4029 = vld [vmem:[%s3 + $0x328] sm:$0xff]
  %v4030 = vld [vmem:[%s3 + $0x330] sm:$0xff]
  %v4031 = vld [vmem:[%s3 + $0x338] sm:$0xff]
  %v4032 = vld [vmem:[%s3 + $0x340] sm:$0xff]
  %v4033 = vld [vmem:[%s3 + $0x348] sm:$0xff]
  %v4034 = vld [vmem:[%s3 + $0x350] sm:$0xff]
  %v4035 = vld [vmem:[%s3 + $0x358] sm:$0xff]
  %v4036 = vld [vmem:[%s3 + $0x360] sm:$0xff]
  %v4037 = vld [vmem:[%s3 + $0x368] sm:$0xff]
  %v4038 = vld [vmem:[%s3 + $0x370] sm:$0xff]
  %v4039 = vld [vmem:[%s3 + $0x378] sm:$0xff]
  %v4040 = vld [vmem:[%s3 + $0x380] sm:$0xff]
  %v4041 = vld [vmem:[%s3 + $0x388] sm:$0xff]
  %v4042 = vld [vmem:[%s3 + $0x390] sm:$0xff]
  %v4043 = vld [vmem:[%s3 + $0x398] sm:$0xff]
  %v4044 = vld [vmem:[%s3 + $0x3a0] sm:$0xff]
  %v4045 = vld [vmem:[%s3 + $0x3a8] sm:$0xff]
  %v4046 = vld [vmem:[%s3 + $0x3b0] sm:$0xff]
  %v4047 = vld [vmem:[%s3 + $0x3b8] sm:$0xff]
  %v4048 = vld [vmem:[%s3 + $0x3c0] sm:$0xff]
  %v4049 = vld [vmem:[%s3 + $0x3c8] sm:$0xff]
  %v4050 = vld [vmem:[%s3 + $0x3d0] sm:$0xff]
  %v4051 = vld [vmem:[%s3 + $0x3d8] sm:$0xff]
  %v4052 = vld [vmem:[%s3 + $0x3e0] sm:$0xff]
  %v4053 = vld [vmem:[%s3 + $0x3e8] sm:$0xff]
  %v4054 = vld [vmem:[%s3 + $0x3f0] sm:$0xff]
  %v4055 = vld [vmem:[%s3 + $0x3f8] sm:$0xff]
  %v4184 = vunpack.c.l.b16 %v3928
  %v4185 = vunpack.c.h.b16 %v3928
  %v4186 = vunpack.c.l.b16 %v3929
  %v4187 = vunpack.c.h.b16 %v3929
  %v4188 = vunpack.c.l.b16 %v3930
  %v4189 = vunpack.c.h.b16 %v3930
  %v4190 = vunpack.c.l.b16 %v3931
  %v4191 = vunpack.c.h.b16 %v3931
  %v4192 = vunpack.c.l.b16 %v3932
  %v4193 = vunpack.c.h.b16 %v3932
  %v4194 = vunpack.c.l.b16 %v3933
  %v4195 = vunpack.c.h.b16 %v3933
  %v4196 = vunpack.c.l.b16 %v3934
  %v4197 = vunpack.c.h.b16 %v3934
  %v4198 = vunpack.c.l.b16 %v3935
  %v4199 = vunpack.c.h.b16 %v3935
  %v4200 = vunpack.c.l.b16 %v3936
  %v4201 = vunpack.c.h.b16 %v3936
  %v4202 = vunpack.c.l.b16 %v3937
  %v4203 = vunpack.c.h.b16 %v3937
  %v4204 = vunpack.c.l.b16 %v3938
  %v4205 = vunpack.c.h.b16 %v3938
  %v4206 = vunpack.c.l.b16 %v3939
  %v4207 = vunpack.c.h.b16 %v3939
  %v4208 = vunpack.c.l.b16 %v3940
  %v4209 = vunpack.c.h.b16 %v3940
  %v4210 = vunpack.c.l.b16 %v3941
  %v4211 = vunpack.c.h.b16 %v3941
  %v4212 = vunpack.c.l.b16 %v3942
  %v4213 = vunpack.c.h.b16 %v3942
  %v4214 = vunpack.c.l.b16 %v3943
  %v4215 = vunpack.c.h.b16 %v3943
  %v4216 = vunpack.c.l.b16 %v3944
  %v4217 = vunpack.c.h.b16 %v3944
  %v4218 = vunpack.c.l.b16 %v3945
  %v4219 = vunpack.c.h.b16 %v3945
  %v4220 = vunpack.c.l.b16 %v3946
  %v4221 = vunpack.c.h.b16 %v3946
  %v4222 = vunpack.c.l.b16 %v3947
  %v4223 = vunpack.c.h.b16 %v3947
  %v4224 = vunpack.c.l.b16 %v3948
  %v4225 = vunpack.c.h.b16 %v3948
  %v4226 = vunpack.c.l.b16 %v3949
  %v4227 = vunpack.c.h.b16 %v3949
  %v4228 = vunpack.c.l.b16 %v3950
  %v4229 = vunpack.c.h.b16 %v3950
  %v4230 = vunpack.c.l.b16 %v3951
  %v4231 = vunpack.c.h.b16 %v3951
  %v4232 = vunpack.c.l.b16 %v3952
  %v4233 = vunpack.c.h.b16 %v3952
  %v4234 = vunpack.c.l.b16 %v3953
  %v4235 = vunpack.c.h.b16 %v3953
  %v4236 = vunpack.c.l.b16 %v3954
  %v4237 = vunpack.c.h.b16 %v3954
  %v4238 = vunpack.c.l.b16 %v3955
  %v4239 = vunpack.c.h.b16 %v3955
  %v4240 = vunpack.c.l.b16 %v3956
  %v4241 = vunpack.c.h.b16 %v3956
  %v4242 = vunpack.c.l.b16 %v3957
  %v4243 = vunpack.c.h.b16 %v3957
  %v4244 = vunpack.c.l.b16 %v3958
  %v4245 = vunpack.c.h.b16 %v3958
  %v4246 = vunpack.c.l.b16 %v3959
  %v4247 = vunpack.c.h.b16 %v3959
  %v4248 = vunpack.c.l.b16 %v3960
  %v4249 = vunpack.c.h.b16 %v3960
  %v4250 = vunpack.c.l.b16 %v3961
  %v4251 = vunpack.c.h.b16 %v3961
  %v4252 = vunpack.c.l.b16 %v3962
  %v4253 = vunpack.c.h.b16 %v3962
  %v4254 = vunpack.c.l.b16 %v3963
  %v4255 = vunpack.c.h.b16 %v3963
  %v4256 = vunpack.c.l.b16 %v3964
  %v4257 = vunpack.c.h.b16 %v3964
  %v4258 = vunpack.c.l.b16 %v3965
  %v4259 = vunpack.c.h.b16 %v3965
  %v4260 = vunpack.c.l.b16 %v3966
  %v4261 = vunpack.c.h.b16 %v3966
  %v4262 = vunpack.c.l.b16 %v3967
  %v4263 = vunpack.c.h.b16 %v3967
  %v4264 = vunpack.c.l.b16 %v3968
  %v4265 = vunpack.c.h.b16 %v3968
  %v4266 = vunpack.c.l.b16 %v3969
  %v4267 = vunpack.c.h.b16 %v3969
  %v4268 = vunpack.c.l.b16 %v3970
  %v4269 = vunpack.c.h.b16 %v3970
  %v4270 = vunpack.c.l.b16 %v3971
  %v4271 = vunpack.c.h.b16 %v3971
  %v4272 = vunpack.c.l.b16 %v3972
  %v4273 = vunpack.c.h.b16 %v3972
  %v4274 = vunpack.c.l.b16 %v3973
  %v4275 = vunpack.c.h.b16 %v3973
  %v4276 = vunpack.c.l.b16 %v3974
  %v4277 = vunpack.c.h.b16 %v3974
  %v4278 = vunpack.c.l.b16 %v3975
  %v4279 = vunpack.c.h.b16 %v3975
  %v4280 = vunpack.c.l.b16 %v3976
  %v4281 = vunpack.c.h.b16 %v3976
  %v4282 = vunpack.c.l.b16 %v3977
  %v4283 = vunpack.c.h.b16 %v3977
  %v4284 = vunpack.c.l.b16 %v3978
  %v4285 = vunpack.c.h.b16 %v3978
  %v4286 = vunpack.c.l.b16 %v3979
  %v4287 = vunpack.c.h.b16 %v3979
  %v4288 = vunpack.c.l.b16 %v3980
  %v4289 = vunpack.c.h.b16 %v3980
  %v4290 = vunpack.c.l.b16 %v3981
  %v4291 = vunpack.c.h.b16 %v3981
  %v4292 = vunpack.c.l.b16 %v3982
  %v4293 = vunpack.c.h.b16 %v3982
  %v4294 = vunpack.c.l.b16 %v3983
  %v4295 = vunpack.c.h.b16 %v3983
  %v4296 = vunpack.c.l.b16 %v3984
  %v4297 = vunpack.c.h.b16 %v3984
  %v4298 = vunpack.c.l.b16 %v3985
  %v4299 = vunpack.c.h.b16 %v3985
  %v4300 = vunpack.c.l.b16 %v3986
  %v4301 = vunpack.c.h.b16 %v3986
  %v4302 = vunpack.c.l.b16 %v3987
  %v4303 = vunpack.c.h.b16 %v3987
  %v4304 = vunpack.c.l.b16 %v3988
  %v4305 = vunpack.c.h.b16 %v3988
  %v4306 = vunpack.c.l.b16 %v3989
  %v4307 = vunpack.c.h.b16 %v3989
  %v4308 = vunpack.c.l.b16 %v3990
  %v4309 = vunpack.c.h.b16 %v3990
  %v4310 = vunpack.c.l.b16 %v3991
  %v4311 = vunpack.c.h.b16 %v3991
  %v4312 = vunpack.c.l.b16 %v3992
  %v4313 = vunpack.c.h.b16 %v3992
  %v4314 = vunpack.c.l.b16 %v3993
  %v4315 = vunpack.c.h.b16 %v3993
  %v4316 = vunpack.c.l.b16 %v3994
  %v4317 = vunpack.c.h.b16 %v3994
  %v4318 = vunpack.c.l.b16 %v3995
  %v4319 = vunpack.c.h.b16 %v3995
  %v4320 = vunpack.c.l.b16 %v3996
  %v4321 = vunpack.c.h.b16 %v3996
  %v4322 = vunpack.c.l.b16 %v3997
  %v4323 = vunpack.c.h.b16 %v3997
  %v4324 = vunpack.c.l.b16 %v3998
  %v4325 = vunpack.c.h.b16 %v3998
  %v4326 = vunpack.c.l.b16 %v3999
  %v4327 = vunpack.c.h.b16 %v3999
  %v4328 = vunpack.c.l.b16 %v4000
  %v4329 = vunpack.c.h.b16 %v4000
  %v4330 = vunpack.c.l.b16 %v4001
  %v4331 = vunpack.c.h.b16 %v4001
  %v4332 = vunpack.c.l.b16 %v4002
  %v4333 = vunpack.c.h.b16 %v4002
  %v4334 = vunpack.c.l.b16 %v4003
  %v4335 = vunpack.c.h.b16 %v4003
  %v4336 = vunpack.c.l.b16 %v4004
  %v4337 = vunpack.c.h.b16 %v4004
  %v4338 = vunpack.c.l.b16 %v4005
  %v4339 = vunpack.c.h.b16 %v4005
  %v4340 = vunpack.c.l.b16 %v4006
  %v4341 = vunpack.c.h.b16 %v4006
  %v4342 = vunpack.c.l.b16 %v4007
  %v4343 = vunpack.c.h.b16 %v4007
  %v4344 = vunpack.c.l.b16 %v4008
  %v4345 = vunpack.c.h.b16 %v4008
  %v4346 = vunpack.c.l.b16 %v4009
  %v4347 = vunpack.c.h.b16 %v4009
  %v4348 = vunpack.c.l.b16 %v4010
  %v4349 = vunpack.c.h.b16 %v4010
  %v4350 = vunpack.c.l.b16 %v4011
  %v4351 = vunpack.c.h.b16 %v4011
  %v4352 = vunpack.c.l.b16 %v4012
  %v4353 = vunpack.c.h.b16 %v4012
  %v4354 = vunpack.c.l.b16 %v4013
  %v4355 = vunpack.c.h.b16 %v4013
  %v4356 = vunpack.c.l.b16 %v4014
  %v4357 = vunpack.c.h.b16 %v4014
  %v4358 = vunpack.c.l.b16 %v4015
  %v4359 = vunpack.c.h.b16 %v4015
  %v4360 = vunpack.c.l.b16 %v4016
  %v4361 = vunpack.c.h.b16 %v4016
  %v4362 = vunpack.c.l.b16 %v4017
  %v4363 = vunpack.c.h.b16 %v4017
  %v4364 = vunpack.c.l.b16 %v4018
  %v4365 = vunpack.c.h.b16 %v4018
  %v4366 = vunpack.c.l.b16 %v4019
  %v4367 = vunpack.c.h.b16 %v4019
  %v4368 = vunpack.c.l.b16 %v4020
  %v4369 = vunpack.c.h.b16 %v4020
  %v4370 = vunpack.c.l.b16 %v4021
  %v4371 = vunpack.c.h.b16 %v4021
  %v4372 = vunpack.c.l.b16 %v4022
  %v4373 = vunpack.c.h.b16 %v4022
  %v4374 = vunpack.c.l.b16 %v4023
  %v4375 = vunpack.c.h.b16 %v4023
  %v4376 = vunpack.c.l.b16 %v4024
  %v4377 = vunpack.c.h.b16 %v4024
  %v4378 = vunpack.c.l.b16 %v4025
  %v4379 = vunpack.c.h.b16 %v4025
  %v4380 = vunpack.c.l.b16 %v4026
  %v4381 = vunpack.c.h.b16 %v4026
  %v4382 = vunpack.c.l.b16 %v4027
  %v4383 = vunpack.c.h.b16 %v4027
  %v4384 = vunpack.c.l.b16 %v4028
  %v4385 = vunpack.c.h.b16 %v4028
  %v4386 = vunpack.c.l.b16 %v4029
  %v4387 = vunpack.c.h.b16 %v4029
  %v4388 = vunpack.c.l.b16 %v4030
  %v4389 = vunpack.c.h.b16 %v4030
  %v4390 = vunpack.c.l.b16 %v4031
  %v4391 = vunpack.c.h.b16 %v4031
  %v4392 = vunpack.c.l.b16 %v4032
  %v4393 = vunpack.c.h.b16 %v4032
  %v4394 = vunpack.c.l.b16 %v4033
  %v4395 = vunpack.c.h.b16 %v4033
  %v4396 = vunpack.c.l.b16 %v4034
  %v4397 = vunpack.c.h.b16 %v4034
  %v4398 = vunpack.c.l.b16 %v4035
  %v4399 = vunpack.c.h.b16 %v4035
  %v4400 = vunpack.c.l.b16 %v4036
  %v4401 = vunpack.c.h.b16 %v4036
  %v4402 = vunpack.c.l.b16 %v4037
  %v4403 = vunpack.c.h.b16 %v4037
  %v4404 = vunpack.c.l.b16 %v4038
  %v4405 = vunpack.c.h.b16 %v4038
  %v4406 = vunpack.c.l.b16 %v4039
  %v4407 = vunpack.c.h.b16 %v4039
  %v4408 = vunpack.c.l.b16 %v4040
  %v4409 = vunpack.c.h.b16 %v4040
  %v4410 = vunpack.c.l.b16 %v4041
  %v4411 = vunpack.c.h.b16 %v4041
  %v4412 = vunpack.c.l.b16 %v4042
  %v4413 = vunpack.c.h.b16 %v4042
  %v4414 = vunpack.c.l.b16 %v4043
  %v4415 = vunpack.c.h.b16 %v4043
  %v4416 = vunpack.c.l.b16 %v4044
  %v4417 = vunpack.c.h.b16 %v4044
  %v4418 = vunpack.c.l.b16 %v4045
  %v4419 = vunpack.c.h.b16 %v4045
  %v4420 = vunpack.c.l.b16 %v4046
  %v4421 = vunpack.c.h.b16 %v4046
  %v4422 = vunpack.c.l.b16 %v4047
  %v4423 = vunpack.c.h.b16 %v4047
  %v4424 = vunpack.c.l.b16 %v4048
  %v4425 = vunpack.c.h.b16 %v4048
  %v4426 = vunpack.c.l.b16 %v4049
  %v4427 = vunpack.c.h.b16 %v4049
  %v4428 = vunpack.c.l.b16 %v4050
  %v4429 = vunpack.c.h.b16 %v4050
  %v4430 = vunpack.c.l.b16 %v4051
  %v4431 = vunpack.c.h.b16 %v4051
  %v4432 = vunpack.c.l.b16 %v4052
  %v4433 = vunpack.c.h.b16 %v4052
  %v4434 = vunpack.c.l.b16 %v4053
  %v4435 = vunpack.c.h.b16 %v4053
  %v4436 = vunpack.c.l.b16 %v4054
  %v4437 = vunpack.c.h.b16 %v4054
  %v4438 = vunpack.c.l.b16 %v4055
  %v4439 = vunpack.c.h.b16 %v4055
  %v4440 = vpack.c.b16 %v4192, %v4184
  %v4441 = vpack.c.b16 %v4193, %v4185
  %v4442 = vpack.c.b16 %v4194, %v4186
  %v4443 = vpack.c.b16 %v4195, %v4187
  %v4444 = vpack.c.b16 %v4196, %v4188
  %v4445 = vpack.c.b16 %v4197, %v4189
  %v4446 = vpack.c.b16 %v4198, %v4190
  %v4447 = vpack.c.b16 %v4199, %v4191
  %v4448 = vpack.c.b16 %v4208, %v4200
  %v4449 = vpack.c.b16 %v4209, %v4201
  %v4450 = vpack.c.b16 %v4210, %v4202
  %v4451 = vpack.c.b16 %v4211, %v4203
  %v4452 = vpack.c.b16 %v4212, %v4204
  %v4453 = vpack.c.b16 %v4213, %v4205
  %v4454 = vpack.c.b16 %v4214, %v4206
  %v4455 = vpack.c.b16 %v4215, %v4207
  %v4456 = vpack.c.b16 %v4224, %v4216
  %v4457 = vpack.c.b16 %v4225, %v4217
  %v4458 = vpack.c.b16 %v4226, %v4218
  %v4459 = vpack.c.b16 %v4227, %v4219
  %v4460 = vpack.c.b16 %v4228, %v4220
  %v4461 = vpack.c.b16 %v4229, %v4221
  %v4462 = vpack.c.b16 %v4230, %v4222
  %v4463 = vpack.c.b16 %v4231, %v4223
  %v4464 = vpack.c.b16 %v4240, %v4232
  %v4465 = vpack.c.b16 %v4241, %v4233
  %v4466 = vpack.c.b16 %v4242, %v4234
  %v4467 = vpack.c.b16 %v4243, %v4235
  %v4468 = vpack.c.b16 %v4244, %v4236
  %v4469 = vpack.c.b16 %v4245, %v4237
  %v4470 = vpack.c.b16 %v4246, %v4238
  %v4471 = vpack.c.b16 %v4247, %v4239
  %v4472 = vpack.c.b16 %v4256, %v4248
  %v4473 = vpack.c.b16 %v4257, %v4249
  %v4474 = vpack.c.b16 %v4258, %v4250
  %v4475 = vpack.c.b16 %v4259, %v4251
  %v4476 = vpack.c.b16 %v4260, %v4252
  %v4477 = vpack.c.b16 %v4261, %v4253
  %v4478 = vpack.c.b16 %v4262, %v4254
  %v4479 = vpack.c.b16 %v4263, %v4255
  %v4480 = vpack.c.b16 %v4272, %v4264
  %v4481 = vpack.c.b16 %v4273, %v4265
  %v4482 = vpack.c.b16 %v4274, %v4266
  %v4483 = vpack.c.b16 %v4275, %v4267
  %v4484 = vpack.c.b16 %v4276, %v4268
  %v4485 = vpack.c.b16 %v4277, %v4269
  %v4486 = vpack.c.b16 %v4278, %v4270
  %v4487 = vpack.c.b16 %v4279, %v4271
  %v4488 = vpack.c.b16 %v4288, %v4280
  %v4489 = vpack.c.b16 %v4289, %v4281
  %v4490 = vpack.c.b16 %v4290, %v4282
  %v4491 = vpack.c.b16 %v4291, %v4283
  %v4492 = vpack.c.b16 %v4292, %v4284
  %v4493 = vpack.c.b16 %v4293, %v4285
  %v4494 = vpack.c.b16 %v4294, %v4286
  %v4495 = vpack.c.b16 %v4295, %v4287
  %v4496 = vpack.c.b16 %v4304, %v4296
  %v4497 = vpack.c.b16 %v4305, %v4297
  %v4498 = vpack.c.b16 %v4306, %v4298
  %v4499 = vpack.c.b16 %v4307, %v4299
  %v4500 = vpack.c.b16 %v4308, %v4300
  %v4501 = vpack.c.b16 %v4309, %v4301
  %v4502 = vpack.c.b16 %v4310, %v4302
  %v4503 = vpack.c.b16 %v4311, %v4303
  %v4504 = vpack.c.b16 %v4320, %v4312
  %v4505 = vpack.c.b16 %v4321, %v4313
  %v4506 = vpack.c.b16 %v4322, %v4314
  %v4507 = vpack.c.b16 %v4323, %v4315
  %v4508 = vpack.c.b16 %v4324, %v4316
  %v4509 = vpack.c.b16 %v4325, %v4317
  %v4510 = vpack.c.b16 %v4326, %v4318
  %v4511 = vpack.c.b16 %v4327, %v4319
  %v4512 = vpack.c.b16 %v4336, %v4328
  %v4513 = vpack.c.b16 %v4337, %v4329
  %v4514 = vpack.c.b16 %v4338, %v4330
  %v4515 = vpack.c.b16 %v4339, %v4331
  %v4516 = vpack.c.b16 %v4340, %v4332
  %v4517 = vpack.c.b16 %v4341, %v4333
  %v4518 = vpack.c.b16 %v4342, %v4334
  %v4519 = vpack.c.b16 %v4343, %v4335
  %v4520 = vpack.c.b16 %v4352, %v4344
  %v4521 = vpack.c.b16 %v4353, %v4345
  %v4522 = vpack.c.b16 %v4354, %v4346
  %v4523 = vpack.c.b16 %v4355, %v4347
  %v4524 = vpack.c.b16 %v4356, %v4348
  %v4525 = vpack.c.b16 %v4357, %v4349
  %v4526 = vpack.c.b16 %v4358, %v4350
  %v4527 = vpack.c.b16 %v4359, %v4351
  %v4528 = vpack.c.b16 %v4368, %v4360
  %v4529 = vpack.c.b16 %v4369, %v4361
  %v4530 = vpack.c.b16 %v4370, %v4362
  %v4531 = vpack.c.b16 %v4371, %v4363
  %v4532 = vpack.c.b16 %v4372, %v4364
  %v4533 = vpack.c.b16 %v4373, %v4365
  %v4534 = vpack.c.b16 %v4374, %v4366
  %v4535 = vpack.c.b16 %v4375, %v4367
  %v4536 = vpack.c.b16 %v4384, %v4376
  %v4537 = vpack.c.b16 %v4385, %v4377
  %v4538 = vpack.c.b16 %v4386, %v4378
  %v4539 = vpack.c.b16 %v4387, %v4379
  %v4540 = vpack.c.b16 %v4388, %v4380
  %v4541 = vpack.c.b16 %v4389, %v4381
  %v4542 = vpack.c.b16 %v4390, %v4382
  %v4543 = vpack.c.b16 %v4391, %v4383
  %v4544 = vpack.c.b16 %v4400, %v4392
  %v4545 = vpack.c.b16 %v4401, %v4393
  %v4546 = vpack.c.b16 %v4402, %v4394
  %v4547 = vpack.c.b16 %v4403, %v4395
  %v4548 = vpack.c.b16 %v4404, %v4396
  %v4549 = vpack.c.b16 %v4405, %v4397
  %v4550 = vpack.c.b16 %v4406, %v4398
  %v4551 = vpack.c.b16 %v4407, %v4399
  %v4552 = vpack.c.b16 %v4416, %v4408
  %v4553 = vpack.c.b16 %v4417, %v4409
  %v4554 = vpack.c.b16 %v4418, %v4410
  %v4555 = vpack.c.b16 %v4419, %v4411
  %v4556 = vpack.c.b16 %v4420, %v4412
  %v4557 = vpack.c.b16 %v4421, %v4413
  %v4558 = vpack.c.b16 %v4422, %v4414
  %v4559 = vpack.c.b16 %v4423, %v4415
  %v4560 = vpack.c.b16 %v4432, %v4424
  %v4561 = vpack.c.b16 %v4433, %v4425
  %v4562 = vpack.c.b16 %v4434, %v4426
  %v4563 = vpack.c.b16 %v4435, %v4427
  %v4564 = vpack.c.b16 %v4436, %v4428
  %v4565 = vpack.c.b16 %v4437, %v4429
  %v4566 = vpack.c.b16 %v4438, %v4430
  %v4567 = vpack.c.b16 %v4439, %v4431
  %4696 = vmatpush.bf16.msra.mxu0 %v4496
  %4697 = vmatpush.bf16.msra.mxu0 %v4488
  %4698 = vmatpush.bf16.msra.mxu0 %v4480
  %4699 = vmatpush.bf16.msra.mxu0 %v4472
  %4700 = vmatpush.bf16.msra.mxu0 %v4464
  %4701 = vmatpush.bf16.msra.mxu0 %v4456
  %4702 = vmatpush.bf16.msra.mxu0 %v4448
  %4703 = vmatpush.bf16.msra.mxu0 %v4440
  %4704 = vmatmul.bf16.gmra.mxu0 %v3926
  %v4705 = vpop.f32.mrf.mxu0
  %v4706 = vadd.f32 0.0, %v4705
  %v4707 = vpop.f32.mrf.mxu0
  %4708 = vdwg.mxu0
  %4709 = vmatpush.bf16.msra.mxu0 %v4560
  %4710 = vmatpush.bf16.msra.mxu0 %v4552
  %4711 = vmatpush.bf16.msra.mxu0 %v4544
  %4712 = vmatpush.bf16.msra.mxu0 %v4536
  %4713 = vmatpush.bf16.msra.mxu0 %v4528
  %4714 = vmatpush.bf16.msra.mxu0 %v4520
  %4715 = vmatpush.bf16.msra.mxu0 %v4512
  %4716 = vmatpush.bf16.msra.mxu0 %v4504
  %4717 = vmatmul.bf16.gmra.mxu0 %v3927
  %v4718 = vpop.f32.mrf.mxu0
  %v4719 = vadd.f32 %v4706, %v4718
  %v4720 = vpop.f32.mrf.mxu0
  %4721 = vdwg.mxu0
  %4722 = vmatpush.bf16.msra.mxu0 %v4497
  %4723 = vmatpush.bf16.msra.mxu0 %v4489
  %4724 = vmatpush.bf16.msra.mxu0 %v4481
  %4725 = vmatpush.bf16.msra.mxu0 %v4473
  %4726 = vmatpush.bf16.msra.mxu0 %v4465
  %4727 = vmatpush.bf16.msra.mxu0 %v4457
  %4728 = vmatpush.bf16.msra.mxu0 %v4449
  %4729 = vmatpush.bf16.msra.mxu0 %v4441
  %4730 = vmatmul.bf16.gmra.mxu0 %v3926
  %v4731 = vpop.f32.mrf.mxu0
  %v4732 = vadd.f32 0.0, %v4731
  %v4733 = vpop.f32.mrf.mxu0
  %4734 = vdwg.mxu0
  %4735 = vmatpush.bf16.msra.mxu0 %v4561
  %4736 = vmatpush.bf16.msra.mxu0 %v4553
  %4737 = vmatpush.bf16.msra.mxu0 %v4545
  %4738 = vmatpush.bf16.msra.mxu0 %v4537
  %4739 = vmatpush.bf16.msra.mxu0 %v4529
  %4740 = vmatpush.bf16.msra.mxu0 %v4521
  %4741 = vmatpush.bf16.msra.mxu0 %v4513
  %4742 = vmatpush.bf16.msra.mxu0 %v4505
  %4743 = vmatmul.bf16.gmra.mxu0 %v3927
  %v4744 = vpop.f32.mrf.mxu0
  %v4745 = vadd.f32 %v4732, %v4744
  %v4746 = vpop.f32.mrf.mxu0
  %4747 = vdwg.mxu0
  %4748 = vmatpush.bf16.msra.mxu0 %v4498
  %4749 = vmatpush.bf16.msra.mxu0 %v4490
  %4750 = vmatpush.bf16.msra.mxu0 %v4482
  %4751 = vmatpush.bf16.msra.mxu0 %v4474
  %4752 = vmatpush.bf16.msra.mxu0 %v4466
  %4753 = vmatpush.bf16.msra.mxu0 %v4458
  %4754 = vmatpush.bf16.msra.mxu0 %v4450
  %4755 = vmatpush.bf16.msra.mxu0 %v4442
  %4756 = vmatmul.bf16.gmra.mxu0 %v3926
  %v4757 = vpop.f32.mrf.mxu0
  %v4758 = vadd.f32 0.0, %v4757
  %v4759 = vpop.f32.mrf.mxu0
  %4760 = vdwg.mxu0
  %4761 = vmatpush.bf16.msra.mxu0 %v4562
  %4762 = vmatpush.bf16.msra.mxu0 %v4554
  %4763 = vmatpush.bf16.msra.mxu0 %v4546
  %4764 = vmatpush.bf16.msra.mxu0 %v4538
  %4765 = vmatpush.bf16.msra.mxu0 %v4530
  %4766 = vmatpush.bf16.msra.mxu0 %v4522
  %4767 = vmatpush.bf16.msra.mxu0 %v4514
  %4768 = vmatpush.bf16.msra.mxu0 %v4506
  %4769 = vmatmul.bf16.gmra.mxu0 %v3927
  %v4770 = vpop.f32.mrf.mxu0
  %v4771 = vadd.f32 %v4758, %v4770
  %v4772 = vpop.f32.mrf.mxu0
  %4773 = vdwg.mxu0
  %4774 = vmatpush.bf16.msra.mxu0 %v4499
  %4775 = vmatpush.bf16.msra.mxu0 %v4491
  %4776 = vmatpush.bf16.msra.mxu0 %v4483
  %4777 = vmatpush.bf16.msra.mxu0 %v4475
  %4778 = vmatpush.bf16.msra.mxu0 %v4467
  %4779 = vmatpush.bf16.msra.mxu0 %v4459
  %4780 = vmatpush.bf16.msra.mxu0 %v4451
  %4781 = vmatpush.bf16.msra.mxu0 %v4443
  %4782 = vmatmul.bf16.gmra.mxu0 %v3926
  %v4783 = vpop.f32.mrf.mxu0
  %v4784 = vadd.f32 0.0, %v4783
  %v4785 = vpop.f32.mrf.mxu0
  %4786 = vdwg.mxu0
  %4787 = vmatpush.bf16.msra.mxu0 %v4563
  %4788 = vmatpush.bf16.msra.mxu0 %v4555
  %4789 = vmatpush.bf16.msra.mxu0 %v4547
  %4790 = vmatpush.bf16.msra.mxu0 %v4539
  %4791 = vmatpush.bf16.msra.mxu0 %v4531
  %4792 = vmatpush.bf16.msra.mxu0 %v4523
  %4793 = vmatpush.bf16.msra.mxu0 %v4515
  %4794 = vmatpush.bf16.msra.mxu0 %v4507
  %4795 = vmatmul.bf16.gmra.mxu0 %v3927
  %v4796 = vpop.f32.mrf.mxu0
  %v4797 = vadd.f32 %v4784, %v4796
  %v4798 = vpop.f32.mrf.mxu0
  %4799 = vdwg.mxu0
  %4800 = vmatpush.bf16.msra.mxu0 %v4500
  %4801 = vmatpush.bf16.msra.mxu0 %v4492
  %4802 = vmatpush.bf16.msra.mxu0 %v4484
  %4803 = vmatpush.bf16.msra.mxu0 %v4476
  %4804 = vmatpush.bf16.msra.mxu0 %v4468
  %4805 = vmatpush.bf16.msra.mxu0 %v4460
  %4806 = vmatpush.bf16.msra.mxu0 %v4452
  %4807 = vmatpush.bf16.msra.mxu0 %v4444
  %4808 = vmatmul.bf16.gmra.mxu0 %v3926
  %v4809 = vpop.f32.mrf.mxu0
  %v4810 = vadd.f32 0.0, %v4809
  %v4811 = vpop.f32.mrf.mxu0
  %4812 = vdwg.mxu0
  %4813 = vmatpush.bf16.msra.mxu0 %v4564
  %4814 = vmatpush.bf16.msra.mxu0 %v4556
  %4815 = vmatpush.bf16.msra.mxu0 %v4548
  %4816 = vmatpush.bf16.msra.mxu0 %v4540
  %4817 = vmatpush.bf16.msra.mxu0 %v4532
  %4818 = vmatpush.bf16.msra.mxu0 %v4524
  %4819 = vmatpush.bf16.msra.mxu0 %v4516
  %4820 = vmatpush.bf16.msra.mxu0 %v4508
  %4821 = vmatmul.bf16.gmra.mxu0 %v3927
  %v4822 = vpop.f32.mrf.mxu0
  %v4823 = vadd.f32 %v4810, %v4822
  %v4824 = vpop.f32.mrf.mxu0
  %4825 = vdwg.mxu0
  %4826 = vmatpush.bf16.msra.mxu0 %v4501
  %4827 = vmatpush.bf16.msra.mxu0 %v4493
  %4828 = vmatpush.bf16.msra.mxu0 %v4485
  %4829 = vmatpush.bf16.msra.mxu0 %v4477
  %4830 = vmatpush.bf16.msra.mxu0 %v4469
  %4831 = vmatpush.bf16.msra.mxu0 %v4461
  %4832 = vmatpush.bf16.msra.mxu0 %v4453
  %4833 = vmatpush.bf16.msra.mxu0 %v4445
  %4834 = vmatmul.bf16.gmra.mxu0 %v3926
  %v4835 = vpop.f32.mrf.mxu0
  %v4836 = vadd.f32 0.0, %v4835
  %v4837 = vpop.f32.mrf.mxu0
  %4838 = vdwg.mxu0
  %4839 = vmatpush.bf16.msra.mxu0 %v4565
  %4840 = vmatpush.bf16.msra.mxu0 %v4557
  %4841 = vmatpush.bf16.msra.mxu0 %v4549
  %4842 = vmatpush.bf16.msra.mxu0 %v4541
  %4843 = vmatpush.bf16.msra.mxu0 %v4533
  %4844 = vmatpush.bf16.msra.mxu0 %v4525
  %4845 = vmatpush.bf16.msra.mxu0 %v4517
  %4846 = vmatpush.bf16.msra.mxu0 %v4509
  %4847 = vmatmul.bf16.gmra.mxu0 %v3927
  %v4848 = vpop.f32.mrf.mxu0
  %v4849 = vadd.f32 %v4836, %v4848
  %v4850 = vpop.f32.mrf.mxu0
  %4851 = vdwg.mxu0
  %4852 = vmatpush.bf16.msra.mxu0 %v4502
  %4853 = vmatpush.bf16.msra.mxu0 %v4494
  %4854 = vmatpush.bf16.msra.mxu0 %v4486
  %4855 = vmatpush.bf16.msra.mxu0 %v4478
  %4856 = vmatpush.bf16.msra.mxu0 %v4470
  %4857 = vmatpush.bf16.msra.mxu0 %v4462
  %4858 = vmatpush.bf16.msra.mxu0 %v4454
  %4859 = vmatpush.bf16.msra.mxu0 %v4446
  %4860 = vmatmul.bf16.gmra.mxu0 %v3926
  %v4861 = vpop.f32.mrf.mxu0
  %v4862 = vadd.f32 0.0, %v4861
  %v4863 = vpop.f32.mrf.mxu0
  %4864 = vdwg.mxu0
  %4865 = vmatpush.bf16.msra.mxu0 %v4566
  %4866 = vmatpush.bf16.msra.mxu0 %v4558
  %4867 = vmatpush.bf16.msra.mxu0 %v4550
  %4868 = vmatpush.bf16.msra.mxu0 %v4542
  %4869 = vmatpush.bf16.msra.mxu0 %v4534
  %4870 = vmatpush.bf16.msra.mxu0 %v4526
  %4871 = vmatpush.bf16.msra.mxu0 %v4518
  %4872 = vmatpush.bf16.msra.mxu0 %v4510
  %4873 = vmatmul.bf16.gmra.mxu0 %v3927
  %v4874 = vpop.f32.mrf.mxu0
  %v4875 = vadd.f32 %v4862, %v4874
  %v4876 = vpop.f32.mrf.mxu0
  %4877 = vdwg.mxu0
  %4878 = vmatpush.bf16.msra.mxu0 %v4503
  %4879 = vmatpush.bf16.msra.mxu0 %v4495
  %4880 = vmatpush.bf16.msra.mxu0 %v4487
  %4881 = vmatpush.bf16.msra.mxu0 %v4479
  %4882 = vmatpush.bf16.msra.mxu0 %v4471
  %4883 = vmatpush.bf16.msra.mxu0 %v4463
  %4884 = vmatpush.bf16.msra.mxu0 %v4455
  %4885 = vmatpush.bf16.msra.mxu0 %v4447
  %4886 = vmatmul.bf16.gmra.mxu0 %v3926
  %v4887 = vpop.f32.mrf.mxu0
  %v4888 = vadd.f32 0.0, %v4887
  %v4889 = vpop.f32.mrf.mxu0
  %4890 = vdwg.mxu0
  %4891 = vmatpush.bf16.msra.mxu0 %v4567
  %4892 = vmatpush.bf16.msra.mxu0 %v4559
  %4893 = vmatpush.bf16.msra.mxu0 %v4551
  %4894 = vmatpush.bf16.msra.mxu0 %v4543
  %4895 = vmatpush.bf16.msra.mxu0 %v4535
  %4896 = vmatpush.bf16.msra.mxu0 %v4527
  %4897 = vmatpush.bf16.msra.mxu0 %v4519
  %4898 = vmatpush.bf16.msra.mxu0 %v4511
  %4899 = vmatmul.bf16.gmra.mxu0 %v3927
  %v4900 = vpop.f32.mrf.mxu0
  %v4901 = vadd.f32 %v4888, %v4900
  %v4902 = vpop.f32.mrf.mxu0
  %4903 = vdwg.mxu0
  %v4904 = vadd.f32 %v3917, %v4719
  %v4905 = vadd.f32 %v3918, %v4745
  %v4906 = vadd.f32 %v3919, %v4771
  %v4907 = vadd.f32 %v3920, %v4797
  %v4908 = vadd.f32 %v3922, %v4823
  %v4909 = vadd.f32 %v3923, %v4849
  %v4910 = vadd.f32 %v3924, %v4875
  %v4911 = vadd.f32 %v3925, %v4901
  %v4912 = vmul.f32 %v4904, 0.5
  %v4913 = vtanh.pop %v4912
  %v4914 = vmul.f32 %v4913, 0.5
  %v4915 = vadd.f32 %v4914, 0.5
  %v4916 = vmul.f32 %v4905, 0.5
  %v4917 = vtanh.pop %v4916
  %v4918 = vmul.f32 %v4917, 0.5
  %v4919 = vadd.f32 %v4918, 0.5
  %v4920 = vtanh.pop %v4906
  %v4921 = vmul.f32 %v4907, 0.5
  %v4922 = vtanh.pop %v4921
  %v4923 = vmul.f32 %v4922, 0.5
  %v4924 = vadd.f32 %v4923, 0.5
  %v4925 = vmul.f32 %v4919, %v3883
  %v4926 = vmul.f32 %v4915, %v4920
  %v4927 = vadd.f32 %v4925, %v4926
  %v4928 = vtanh.pop %v4927
  %v4929 = vmul.f32 %v4924, %v4928
  %v4930 = vmul.f32 %v4908, 0.5
  %v4931 = vtanh.pop %v4930
  %v4932 = vmul.f32 %v4931, 0.5
  %v4933 = vadd.f32 %v4932, 0.5
  %v4934 = vmul.f32 %v4909, 0.5
  %v4935 = vtanh.pop %v4934
  %v4936 = vmul.f32 %v4935, 0.5
  %v4937 = vadd.f32 %v4936, 0.5
  %v4938 = vtanh.pop %v4910
  %v4939 = vmul.f32 %v4911, 0.5
  %v4940 = vtanh.pop %v4939
  %v4941 = vmul.f32 %v4940, 0.5
  %v4942 = vadd.f32 %v4941, 0.5
  %v4943 = vmul.f32 %v4937, %v3901
  %v4944 = vmul.f32 %v4933, %v4938
  %v4945 = vadd.f32 %v4943, %v4944
  %v4946 = vtanh.pop %v4945
  %v4947 = vmul.f32 %v4942, %v4946
  %v4948 = vld [vmem:[#allocation3] sm:$0xff]
  %v4949 = vadd.f32 %v4948, %v4929
  %4950 = vst [vmem:[#allocation3] sm:$0xff] %v4949
  %v4951 = vld [vmem:[#allocation3 + $0x8] sm:$0xff]
  %v4952 = vadd.f32 %v4951, %v4947
  %4953 = vst [vmem:[#allocation3 + $0x8] sm:$0xff] %v4952
  %v4954 = vld [vmem:[#allocation3 + $0x10] sm:$0xff]
  %v4955 = vmax.f32 %v4954, %v4929
  %4956 = vst [vmem:[#allocation3 + $0x10] sm:$0xff] %v4955
  %v4957 = vld [vmem:[#allocation3 + $0x18] sm:$0xff]
  %v4958 = vmax.f32 %v4957, %v4947
  %4959 = vst [vmem:[#allocation3 + $0x18] sm:$0xff] %v4958
  %s4960 = scalar_lea.vmem [#allocation2], 192
  %v4961 = vld [vmem:[%s4960] sm:$0xff]
  %v4962 = vld [vmem:[%s4960 + $0x8] sm:$0xff]
  %v4963 = vld [vmem:[%s4960 + $0x10] sm:$0xff]
  %v4964 = vld [vmem:[%s4960 + $0x18] sm:$0xff]
  %s4965 = scalar_lea.vmem [#allocation2], 256
  %v4966 = vld [vmem:[%s4965 + $0x20] sm:$0xff]
  %v4967 = vld [vmem:[%s4965 + $0x28] sm:$0xff]
  %v4968 = vld [vmem:[%s4965 + $0x30] sm:$0xff]
  %v4969 = vld [vmem:[%s4965 + $0x38] sm:$0xff]
  %v4970 = vpack.c.bf16 %v4929, %v4929
  %v4971 = vpack.c.bf16 %v4947, %v4947
  %v4972 = vld [vmem:[%s3] sm:$0xff]
  %v4973 = vld [vmem:[%s3 + $0x8] sm:$0xff]
  %v4974 = vld [vmem:[%s3 + $0x10] sm:$0xff]
  %v4975 = vld [vmem:[%s3 + $0x18] sm:$0xff]
  %v4976 = vld [vmem:[%s3 + $0x20] sm:$0xff]
  %v4977 = vld [vmem:[%s3 + $0x28] sm:$0xff]
  %v4978 = vld [vmem:[%s3 + $0x30] sm:$0xff]
  %v4979 = vld [vmem:[%s3 + $0x38] sm:$0xff]
  %v4980 = vld [vmem:[%s3 + $0x40] sm:$0xff]
  %v4981 = vld [vmem:[%s3 + $0x48] sm:$0xff]
  %v4982 = vld [vmem:[%s3 + $0x50] sm:$0xff]
  %v4983 = vld [vmem:[%s3 + $0x58] sm:$0xff]
  %v4984 = vld [vmem:[%s3 + $0x60] sm:$0xff]
  %v4985 = vld [vmem:[%s3 + $0x68] sm:$0xff]
  %v4986 = vld [vmem:[%s3 + $0x70] sm:$0xff]
  %v4987 = vld [vmem:[%s3 + $0x78] sm:$0xff]
  %v4988 = vld [vmem:[%s3 + $0x80] sm:$0xff]
  %v4989 = vld [vmem:[%s3 + $0x88] sm:$0xff]
  %v4990 = vld [vmem:[%s3 + $0x90] sm:$0xff]
  %v4991 = vld [vmem:[%s3 + $0x98] sm:$0xff]
  %v4992 = vld [vmem:[%s3 + $0xa0] sm:$0xff]
  %v4993 = vld [vmem:[%s3 + $0xa8] sm:$0xff]
  %v4994 = vld [vmem:[%s3 + $0xb0] sm:$0xff]
  %v4995 = vld [vmem:[%s3 + $0xb8] sm:$0xff]
  %v4996 = vld [vmem:[%s3 + $0xc0] sm:$0xff]
  %v4997 = vld [vmem:[%s3 + $0xc8] sm:$0xff]
  %v4998 = vld [vmem:[%s3 + $0xd0] sm:$0xff]
  %v4999 = vld [vmem:[%s3 + $0xd8] sm:$0xff]
  %v5000 = vld [vmem:[%s3 + $0xe0] sm:$0xff]
  %v5001 = vld [vmem:[%s3 + $0xe8] sm:$0xff]
  %v5002 = vld [vmem:[%s3 + $0xf0] sm:$0xff]
  %v5003 = vld [vmem:[%s3 + $0xf8] sm:$0xff]
  %v5004 = vld [vmem:[%s3 + $0x100] sm:$0xff]
  %v5005 = vld [vmem:[%s3 + $0x108] sm:$0xff]
  %v5006 = vld [vmem:[%s3 + $0x110] sm:$0xff]
  %v5007 = vld [vmem:[%s3 + $0x118] sm:$0xff]
  %v5008 = vld [vmem:[%s3 + $0x120] sm:$0xff]
  %v5009 = vld [vmem:[%s3 + $0x128] sm:$0xff]
  %v5010 = vld [vmem:[%s3 + $0x130] sm:$0xff]
  %v5011 = vld [vmem:[%s3 + $0x138] sm:$0xff]
  %v5012 = vld [vmem:[%s3 + $0x140] sm:$0xff]
  %v5013 = vld [vmem:[%s3 + $0x148] sm:$0xff]
  %v5014 = vld [vmem:[%s3 + $0x150] sm:$0xff]
  %v5015 = vld [vmem:[%s3 + $0x158] sm:$0xff]
  %v5016 = vld [vmem:[%s3 + $0x160] sm:$0xff]
  %v5017 = vld [vmem:[%s3 + $0x168] sm:$0xff]
  %v5018 = vld [vmem:[%s3 + $0x170] sm:$0xff]
  %v5019 = vld [vmem:[%s3 + $0x178] sm:$0xff]
  %v5020 = vld [vmem:[%s3 + $0x180] sm:$0xff]
  %v5021 = vld [vmem:[%s3 + $0x188] sm:$0xff]
  %v5022 = vld [vmem:[%s3 + $0x190] sm:$0xff]
  %v5023 = vld [vmem:[%s3 + $0x198] sm:$0xff]
  %v5024 = vld [vmem:[%s3 + $0x1a0] sm:$0xff]
  %v5025 = vld [vmem:[%s3 + $0x1a8] sm:$0xff]
  %v5026 = vld [vmem:[%s3 + $0x1b0] sm:$0xff]
  %v5027 = vld [vmem:[%s3 + $0x1b8] sm:$0xff]
  %v5028 = vld [vmem:[%s3 + $0x1c0] sm:$0xff]
  %v5029 = vld [vmem:[%s3 + $0x1c8] sm:$0xff]
  %v5030 = vld [vmem:[%s3 + $0x1d0] sm:$0xff]
  %v5031 = vld [vmem:[%s3 + $0x1d8] sm:$0xff]
  %v5032 = vld [vmem:[%s3 + $0x1e0] sm:$0xff]
  %v5033 = vld [vmem:[%s3 + $0x1e8] sm:$0xff]
  %v5034 = vld [vmem:[%s3 + $0x1f0] sm:$0xff]
  %v5035 = vld [vmem:[%s3 + $0x1f8] sm:$0xff]
  %v5036 = vld [vmem:[%s3 + $0x200] sm:$0xff]
  %v5037 = vld [vmem:[%s3 + $0x208] sm:$0xff]
  %v5038 = vld [vmem:[%s3 + $0x210] sm:$0xff]
  %v5039 = vld [vmem:[%s3 + $0x218] sm:$0xff]
  %v5040 = vld [vmem:[%s3 + $0x220] sm:$0xff]
  %v5041 = vld [vmem:[%s3 + $0x228] sm:$0xff]
  %v5042 = vld [vmem:[%s3 + $0x230] sm:$0xff]
  %v5043 = vld [vmem:[%s3 + $0x238] sm:$0xff]
  %v5044 = vld [vmem:[%s3 + $0x240] sm:$0xff]
  %v5045 = vld [vmem:[%s3 + $0x248] sm:$0xff]
  %v5046 = vld [vmem:[%s3 + $0x250] sm:$0xff]
  %v5047 = vld [vmem:[%s3 + $0x258] sm:$0xff]
  %v5048 = vld [vmem:[%s3 + $0x260] sm:$0xff]
  %v5049 = vld [vmem:[%s3 + $0x268] sm:$0xff]
  %v5050 = vld [vmem:[%s3 + $0x270] sm:$0xff]
  %v5051 = vld [vmem:[%s3 + $0x278] sm:$0xff]
  %v5052 = vld [vmem:[%s3 + $0x280] sm:$0xff]
  %v5053 = vld [vmem:[%s3 + $0x288] sm:$0xff]
  %v5054 = vld [vmem:[%s3 + $0x290] sm:$0xff]
  %v5055 = vld [vmem:[%s3 + $0x298] sm:$0xff]
  %v5056 = vld [vmem:[%s3 + $0x2a0] sm:$0xff]
  %v5057 = vld [vmem:[%s3 + $0x2a8] sm:$0xff]
  %v5058 = vld [vmem:[%s3 + $0x2b0] sm:$0xff]
  %v5059 = vld [vmem:[%s3 + $0x2b8] sm:$0xff]
  %v5060 = vld [vmem:[%s3 + $0x2c0] sm:$0xff]
  %v5061 = vld [vmem:[%s3 + $0x2c8] sm:$0xff]
  %v5062 = vld [vmem:[%s3 + $0x2d0] sm:$0xff]
  %v5063 = vld [vmem:[%s3 + $0x2d8] sm:$0xff]
  %v5064 = vld [vmem:[%s3 + $0x2e0] sm:$0xff]
  %v5065 = vld [vmem:[%s3 + $0x2e8] sm:$0xff]
  %v5066 = vld [vmem:[%s3 + $0x2f0] sm:$0xff]
  %v5067 = vld [vmem:[%s3 + $0x2f8] sm:$0xff]
  %v5068 = vld [vmem:[%s3 + $0x300] sm:$0xff]
  %v5069 = vld [vmem:[%s3 + $0x308] sm:$0xff]
  %v5070 = vld [vmem:[%s3 + $0x310] sm:$0xff]
  %v5071 = vld [vmem:[%s3 + $0x318] sm:$0xff]
  %v5072 = vld [vmem:[%s3 + $0x320] sm:$0xff]
  %v5073 = vld [vmem:[%s3 + $0x328] sm:$0xff]
  %v5074 = vld [vmem:[%s3 + $0x330] sm:$0xff]
  %v5075 = vld [vmem:[%s3 + $0x338] sm:$0xff]
  %v5076 = vld [vmem:[%s3 + $0x340] sm:$0xff]
  %v5077 = vld [vmem:[%s3 + $0x348] sm:$0xff]
  %v5078 = vld [vmem:[%s3 + $0x350] sm:$0xff]
  %v5079 = vld [vmem:[%s3 + $0x358] sm:$0xff]
  %v5080 = vld [vmem:[%s3 + $0x360] sm:$0xff]
  %v5081 = vld [vmem:[%s3 + $0x368] sm:$0xff]
  %v5082 = vld [vmem:[%s3 + $0x370] sm:$0xff]
  %v5083 = vld [vmem:[%s3 + $0x378] sm:$0xff]
  %v5084 = vld [vmem:[%s3 + $0x380] sm:$0xff]
  %v5085 = vld [vmem:[%s3 + $0x388] sm:$0xff]
  %v5086 = vld [vmem:[%s3 + $0x390] sm:$0xff]
  %v5087 = vld [vmem:[%s3 + $0x398] sm:$0xff]
  %v5088 = vld [vmem:[%s3 + $0x3a0] sm:$0xff]
  %v5089 = vld [vmem:[%s3 + $0x3a8] sm:$0xff]
  %v5090 = vld [vmem:[%s3 + $0x3b0] sm:$0xff]
  %v5091 = vld [vmem:[%s3 + $0x3b8] sm:$0xff]
  %v5092 = vld [vmem:[%s3 + $0x3c0] sm:$0xff]
  %v5093 = vld [vmem:[%s3 + $0x3c8] sm:$0xff]
  %v5094 = vld [vmem:[%s3 + $0x3d0] sm:$0xff]
  %v5095 = vld [vmem:[%s3 + $0x3d8] sm:$0xff]
  %v5096 = vld [vmem:[%s3 + $0x3e0] sm:$0xff]
  %v5097 = vld [vmem:[%s3 + $0x3e8] sm:$0xff]
  %v5098 = vld [vmem:[%s3 + $0x3f0] sm:$0xff]
  %v5099 = vld [vmem:[%s3 + $0x3f8] sm:$0xff]
  %v5228 = vunpack.c.l.b16 %v4972
  %v5229 = vunpack.c.h.b16 %v4972
  %v5230 = vunpack.c.l.b16 %v4973
  %v5231 = vunpack.c.h.b16 %v4973
  %v5232 = vunpack.c.l.b16 %v4974
  %v5233 = vunpack.c.h.b16 %v4974
  %v5234 = vunpack.c.l.b16 %v4975
  %v5235 = vunpack.c.h.b16 %v4975
  %v5236 = vunpack.c.l.b16 %v4976
  %v5237 = vunpack.c.h.b16 %v4976
  %v5238 = vunpack.c.l.b16 %v4977
  %v5239 = vunpack.c.h.b16 %v4977
  %v5240 = vunpack.c.l.b16 %v4978
  %v5241 = vunpack.c.h.b16 %v4978
  %v5242 = vunpack.c.l.b16 %v4979
  %v5243 = vunpack.c.h.b16 %v4979
  %v5244 = vunpack.c.l.b16 %v4980
  %v5245 = vunpack.c.h.b16 %v4980
  %v5246 = vunpack.c.l.b16 %v4981
  %v5247 = vunpack.c.h.b16 %v4981
  %v5248 = vunpack.c.l.b16 %v4982
  %v5249 = vunpack.c.h.b16 %v4982
  %v5250 = vunpack.c.l.b16 %v4983
  %v5251 = vunpack.c.h.b16 %v4983
  %v5252 = vunpack.c.l.b16 %v4984
  %v5253 = vunpack.c.h.b16 %v4984
  %v5254 = vunpack.c.l.b16 %v4985
  %v5255 = vunpack.c.h.b16 %v4985
  %v5256 = vunpack.c.l.b16 %v4986
  %v5257 = vunpack.c.h.b16 %v4986
  %v5258 = vunpack.c.l.b16 %v4987
  %v5259 = vunpack.c.h.b16 %v4987
  %v5260 = vunpack.c.l.b16 %v4988
  %v5261 = vunpack.c.h.b16 %v4988
  %v5262 = vunpack.c.l.b16 %v4989
  %v5263 = vunpack.c.h.b16 %v4989
  %v5264 = vunpack.c.l.b16 %v4990
  %v5265 = vunpack.c.h.b16 %v4990
  %v5266 = vunpack.c.l.b16 %v4991
  %v5267 = vunpack.c.h.b16 %v4991
  %v5268 = vunpack.c.l.b16 %v4992
  %v5269 = vunpack.c.h.b16 %v4992
  %v5270 = vunpack.c.l.b16 %v4993
  %v5271 = vunpack.c.h.b16 %v4993
  %v5272 = vunpack.c.l.b16 %v4994
  %v5273 = vunpack.c.h.b16 %v4994
  %v5274 = vunpack.c.l.b16 %v4995
  %v5275 = vunpack.c.h.b16 %v4995
  %v5276 = vunpack.c.l.b16 %v4996
  %v5277 = vunpack.c.h.b16 %v4996
  %v5278 = vunpack.c.l.b16 %v4997
  %v5279 = vunpack.c.h.b16 %v4997
  %v5280 = vunpack.c.l.b16 %v4998
  %v5281 = vunpack.c.h.b16 %v4998
  %v5282 = vunpack.c.l.b16 %v4999
  %v5283 = vunpack.c.h.b16 %v4999
  %v5284 = vunpack.c.l.b16 %v5000
  %v5285 = vunpack.c.h.b16 %v5000
  %v5286 = vunpack.c.l.b16 %v5001
  %v5287 = vunpack.c.h.b16 %v5001
  %v5288 = vunpack.c.l.b16 %v5002
  %v5289 = vunpack.c.h.b16 %v5002
  %v5290 = vunpack.c.l.b16 %v5003
  %v5291 = vunpack.c.h.b16 %v5003
  %v5292 = vunpack.c.l.b16 %v5004
  %v5293 = vunpack.c.h.b16 %v5004
  %v5294 = vunpack.c.l.b16 %v5005
  %v5295 = vunpack.c.h.b16 %v5005
  %v5296 = vunpack.c.l.b16 %v5006
  %v5297 = vunpack.c.h.b16 %v5006
  %v5298 = vunpack.c.l.b16 %v5007
  %v5299 = vunpack.c.h.b16 %v5007
  %v5300 = vunpack.c.l.b16 %v5008
  %v5301 = vunpack.c.h.b16 %v5008
  %v5302 = vunpack.c.l.b16 %v5009
  %v5303 = vunpack.c.h.b16 %v5009
  %v5304 = vunpack.c.l.b16 %v5010
  %v5305 = vunpack.c.h.b16 %v5010
  %v5306 = vunpack.c.l.b16 %v5011
  %v5307 = vunpack.c.h.b16 %v5011
  %v5308 = vunpack.c.l.b16 %v5012
  %v5309 = vunpack.c.h.b16 %v5012
  %v5310 = vunpack.c.l.b16 %v5013
  %v5311 = vunpack.c.h.b16 %v5013
  %v5312 = vunpack.c.l.b16 %v5014
  %v5313 = vunpack.c.h.b16 %v5014
  %v5314 = vunpack.c.l.b16 %v5015
  %v5315 = vunpack.c.h.b16 %v5015
  %v5316 = vunpack.c.l.b16 %v5016
  %v5317 = vunpack.c.h.b16 %v5016
  %v5318 = vunpack.c.l.b16 %v5017
  %v5319 = vunpack.c.h.b16 %v5017
  %v5320 = vunpack.c.l.b16 %v5018
  %v5321 = vunpack.c.h.b16 %v5018
  %v5322 = vunpack.c.l.b16 %v5019
  %v5323 = vunpack.c.h.b16 %v5019
  %v5324 = vunpack.c.l.b16 %v5020
  %v5325 = vunpack.c.h.b16 %v5020
  %v5326 = vunpack.c.l.b16 %v5021
  %v5327 = vunpack.c.h.b16 %v5021
  %v5328 = vunpack.c.l.b16 %v5022
  %v5329 = vunpack.c.h.b16 %v5022
  %v5330 = vunpack.c.l.b16 %v5023
  %v5331 = vunpack.c.h.b16 %v5023
  %v5332 = vunpack.c.l.b16 %v5024
  %v5333 = vunpack.c.h.b16 %v5024
  %v5334 = vunpack.c.l.b16 %v5025
  %v5335 = vunpack.c.h.b16 %v5025
  %v5336 = vunpack.c.l.b16 %v5026
  %v5337 = vunpack.c.h.b16 %v5026
  %v5338 = vunpack.c.l.b16 %v5027
  %v5339 = vunpack.c.h.b16 %v5027
  %v5340 = vunpack.c.l.b16 %v5028
  %v5341 = vunpack.c.h.b16 %v5028
  %v5342 = vunpack.c.l.b16 %v5029
  %v5343 = vunpack.c.h.b16 %v5029
  %v5344 = vunpack.c.l.b16 %v5030
  %v5345 = vunpack.c.h.b16 %v5030
  %v5346 = vunpack.c.l.b16 %v5031
  %v5347 = vunpack.c.h.b16 %v5031
  %v5348 = vunpack.c.l.b16 %v5032
  %v5349 = vunpack.c.h.b16 %v5032
  %v5350 = vunpack.c.l.b16 %v5033
  %v5351 = vunpack.c.h.b16 %v5033
  %v5352 = vunpack.c.l.b16 %v5034
  %v5353 = vunpack.c.h.b16 %v5034
  %v5354 = vunpack.c.l.b16 %v5035
  %v5355 = vunpack.c.h.b16 %v5035
  %v5356 = vunpack.c.l.b16 %v5036
  %v5357 = vunpack.c.h.b16 %v5036
  %v5358 = vunpack.c.l.b16 %v5037
  %v5359 = vunpack.c.h.b16 %v5037
  %v5360 = vunpack.c.l.b16 %v5038
  %v5361 = vunpack.c.h.b16 %v5038
  %v5362 = vunpack.c.l.b16 %v5039
  %v5363 = vunpack.c.h.b16 %v5039
  %v5364 = vunpack.c.l.b16 %v5040
  %v5365 = vunpack.c.h.b16 %v5040
  %v5366 = vunpack.c.l.b16 %v5041
  %v5367 = vunpack.c.h.b16 %v5041
  %v5368 = vunpack.c.l.b16 %v5042
  %v5369 = vunpack.c.h.b16 %v5042
  %v5370 = vunpack.c.l.b16 %v5043
  %v5371 = vunpack.c.h.b16 %v5043
  %v5372 = vunpack.c.l.b16 %v5044
  %v5373 = vunpack.c.h.b16 %v5044
  %v5374 = vunpack.c.l.b16 %v5045
  %v5375 = vunpack.c.h.b16 %v5045
  %v5376 = vunpack.c.l.b16 %v5046
  %v5377 = vunpack.c.h.b16 %v5046
  %v5378 = vunpack.c.l.b16 %v5047
  %v5379 = vunpack.c.h.b16 %v5047
  %v5380 = vunpack.c.l.b16 %v5048
  %v5381 = vunpack.c.h.b16 %v5048
  %v5382 = vunpack.c.l.b16 %v5049
  %v5383 = vunpack.c.h.b16 %v5049
  %v5384 = vunpack.c.l.b16 %v5050
  %v5385 = vunpack.c.h.b16 %v5050
  %v5386 = vunpack.c.l.b16 %v5051
  %v5387 = vunpack.c.h.b16 %v5051
  %v5388 = vunpack.c.l.b16 %v5052
  %v5389 = vunpack.c.h.b16 %v5052
  %v5390 = vunpack.c.l.b16 %v5053
  %v5391 = vunpack.c.h.b16 %v5053
  %v5392 = vunpack.c.l.b16 %v5054
  %v5393 = vunpack.c.h.b16 %v5054
  %v5394 = vunpack.c.l.b16 %v5055
  %v5395 = vunpack.c.h.b16 %v5055
  %v5396 = vunpack.c.l.b16 %v5056
  %v5397 = vunpack.c.h.b16 %v5056
  %v5398 = vunpack.c.l.b16 %v5057
  %v5399 = vunpack.c.h.b16 %v5057
  %v5400 = vunpack.c.l.b16 %v5058
  %v5401 = vunpack.c.h.b16 %v5058
  %v5402 = vunpack.c.l.b16 %v5059
  %v5403 = vunpack.c.h.b16 %v5059
  %v5404 = vunpack.c.l.b16 %v5060
  %v5405 = vunpack.c.h.b16 %v5060
  %v5406 = vunpack.c.l.b16 %v5061
  %v5407 = vunpack.c.h.b16 %v5061
  %v5408 = vunpack.c.l.b16 %v5062
  %v5409 = vunpack.c.h.b16 %v5062
  %v5410 = vunpack.c.l.b16 %v5063
  %v5411 = vunpack.c.h.b16 %v5063
  %v5412 = vunpack.c.l.b16 %v5064
  %v5413 = vunpack.c.h.b16 %v5064
  %v5414 = vunpack.c.l.b16 %v5065
  %v5415 = vunpack.c.h.b16 %v5065
  %v5416 = vunpack.c.l.b16 %v5066
  %v5417 = vunpack.c.h.b16 %v5066
  %v5418 = vunpack.c.l.b16 %v5067
  %v5419 = vunpack.c.h.b16 %v5067
  %v5420 = vunpack.c.l.b16 %v5068
  %v5421 = vunpack.c.h.b16 %v5068
  %v5422 = vunpack.c.l.b16 %v5069
  %v5423 = vunpack.c.h.b16 %v5069
  %v5424 = vunpack.c.l.b16 %v5070
  %v5425 = vunpack.c.h.b16 %v5070
  %v5426 = vunpack.c.l.b16 %v5071
  %v5427 = vunpack.c.h.b16 %v5071
  %v5428 = vunpack.c.l.b16 %v5072
  %v5429 = vunpack.c.h.b16 %v5072
  %v5430 = vunpack.c.l.b16 %v5073
  %v5431 = vunpack.c.h.b16 %v5073
  %v5432 = vunpack.c.l.b16 %v5074
  %v5433 = vunpack.c.h.b16 %v5074
  %v5434 = vunpack.c.l.b16 %v5075
  %v5435 = vunpack.c.h.b16 %v5075
  %v5436 = vunpack.c.l.b16 %v5076
  %v5437 = vunpack.c.h.b16 %v5076
  %v5438 = vunpack.c.l.b16 %v5077
  %v5439 = vunpack.c.h.b16 %v5077
  %v5440 = vunpack.c.l.b16 %v5078
  %v5441 = vunpack.c.h.b16 %v5078
  %v5442 = vunpack.c.l.b16 %v5079
  %v5443 = vunpack.c.h.b16 %v5079
  %v5444 = vunpack.c.l.b16 %v5080
  %v5445 = vunpack.c.h.b16 %v5080
  %v5446 = vunpack.c.l.b16 %v5081
  %v5447 = vunpack.c.h.b16 %v5081
  %v5448 = vunpack.c.l.b16 %v5082
  %v5449 = vunpack.c.h.b16 %v5082
  %v5450 = vunpack.c.l.b16 %v5083
  %v5451 = vunpack.c.h.b16 %v5083
  %v5452 = vunpack.c.l.b16 %v5084
  %v5453 = vunpack.c.h.b16 %v5084
  %v5454 = vunpack.c.l.b16 %v5085
  %v5455 = vunpack.c.h.b16 %v5085
  %v5456 = vunpack.c.l.b16 %v5086
  %v5457 = vunpack.c.h.b16 %v5086
  %v5458 = vunpack.c.l.b16 %v5087
  %v5459 = vunpack.c.h.b16 %v5087
  %v5460 = vunpack.c.l.b16 %v5088
  %v5461 = vunpack.c.h.b16 %v5088
  %v5462 = vunpack.c.l.b16 %v5089
  %v5463 = vunpack.c.h.b16 %v5089
  %v5464 = vunpack.c.l.b16 %v5090
  %v5465 = vunpack.c.h.b16 %v5090
  %v5466 = vunpack.c.l.b16 %v5091
  %v5467 = vunpack.c.h.b16 %v5091
  %v5468 = vunpack.c.l.b16 %v5092
  %v5469 = vunpack.c.h.b16 %v5092
  %v5470 = vunpack.c.l.b16 %v5093
  %v5471 = vunpack.c.h.b16 %v5093
  %v5472 = vunpack.c.l.b16 %v5094
  %v5473 = vunpack.c.h.b16 %v5094
  %v5474 = vunpack.c.l.b16 %v5095
  %v5475 = vunpack.c.h.b16 %v5095
  %v5476 = vunpack.c.l.b16 %v5096
  %v5477 = vunpack.c.h.b16 %v5096
  %v5478 = vunpack.c.l.b16 %v5097
  %v5479 = vunpack.c.h.b16 %v5097
  %v5480 = vunpack.c.l.b16 %v5098
  %v5481 = vunpack.c.h.b16 %v5098
  %v5482 = vunpack.c.l.b16 %v5099
  %v5483 = vunpack.c.h.b16 %v5099
  %v5484 = vpack.c.b16 %v5236, %v5228
  %v5485 = vpack.c.b16 %v5237, %v5229
  %v5486 = vpack.c.b16 %v5238, %v5230
  %v5487 = vpack.c.b16 %v5239, %v5231
  %v5488 = vpack.c.b16 %v5240, %v5232
  %v5489 = vpack.c.b16 %v5241, %v5233
  %v5490 = vpack.c.b16 %v5242, %v5234
  %v5491 = vpack.c.b16 %v5243, %v5235
  %v5492 = vpack.c.b16 %v5252, %v5244
  %v5493 = vpack.c.b16 %v5253, %v5245
  %v5494 = vpack.c.b16 %v5254, %v5246
  %v5495 = vpack.c.b16 %v5255, %v5247
  %v5496 = vpack.c.b16 %v5256, %v5248
  %v5497 = vpack.c.b16 %v5257, %v5249
  %v5498 = vpack.c.b16 %v5258, %v5250
  %v5499 = vpack.c.b16 %v5259, %v5251
  %v5500 = vpack.c.b16 %v5268, %v5260
  %v5501 = vpack.c.b16 %v5269, %v5261
  %v5502 = vpack.c.b16 %v5270, %v5262
  %v5503 = vpack.c.b16 %v5271, %v5263
  %v5504 = vpack.c.b16 %v5272, %v5264
  %v5505 = vpack.c.b16 %v5273, %v5265
  %v5506 = vpack.c.b16 %v5274, %v5266
  %v5507 = vpack.c.b16 %v5275, %v5267
  %v5508 = vpack.c.b16 %v5284, %v5276
  %v5509 = vpack.c.b16 %v5285, %v5277
  %v5510 = vpack.c.b16 %v5286, %v5278
  %v5511 = vpack.c.b16 %v5287, %v5279
  %v5512 = vpack.c.b16 %v5288, %v5280
  %v5513 = vpack.c.b16 %v5289, %v5281
  %v5514 = vpack.c.b16 %v5290, %v5282
  %v5515 = vpack.c.b16 %v5291, %v5283
  %v5516 = vpack.c.b16 %v5300, %v5292
  %v5517 = vpack.c.b16 %v5301, %v5293
  %v5518 = vpack.c.b16 %v5302, %v5294
  %v5519 = vpack.c.b16 %v5303, %v5295
  %v5520 = vpack.c.b16 %v5304, %v5296
  %v5521 = vpack.c.b16 %v5305, %v5297
  %v5522 = vpack.c.b16 %v5306, %v5298
  %v5523 = vpack.c.b16 %v5307, %v5299
  %v5524 = vpack.c.b16 %v5316, %v5308
  %v5525 = vpack.c.b16 %v5317, %v5309
  %v5526 = vpack.c.b16 %v5318, %v5310
  %v5527 = vpack.c.b16 %v5319, %v5311
  %v5528 = vpack.c.b16 %v5320, %v5312
  %v5529 = vpack.c.b16 %v5321, %v5313
  %v5530 = vpack.c.b16 %v5322, %v5314
  %v5531 = vpack.c.b16 %v5323, %v5315
  %v5532 = vpack.c.b16 %v5332, %v5324
  %v5533 = vpack.c.b16 %v5333, %v5325
  %v5534 = vpack.c.b16 %v5334, %v5326
  %v5535 = vpack.c.b16 %v5335, %v5327
  %v5536 = vpack.c.b16 %v5336, %v5328
  %v5537 = vpack.c.b16 %v5337, %v5329
  %v5538 = vpack.c.b16 %v5338, %v5330
  %v5539 = vpack.c.b16 %v5339, %v5331
  %v5540 = vpack.c.b16 %v5348, %v5340
  %v5541 = vpack.c.b16 %v5349, %v5341
  %v5542 = vpack.c.b16 %v5350, %v5342
  %v5543 = vpack.c.b16 %v5351, %v5343
  %v5544 = vpack.c.b16 %v5352, %v5344
  %v5545 = vpack.c.b16 %v5353, %v5345
  %v5546 = vpack.c.b16 %v5354, %v5346
  %v5547 = vpack.c.b16 %v5355, %v5347
  %v5548 = vpack.c.b16 %v5364, %v5356
  %v5549 = vpack.c.b16 %v5365, %v5357
  %v5550 = vpack.c.b16 %v5366, %v5358
  %v5551 = vpack.c.b16 %v5367, %v5359
  %v5552 = vpack.c.b16 %v5368, %v5360
  %v5553 = vpack.c.b16 %v5369, %v5361
  %v5554 = vpack.c.b16 %v5370, %v5362
  %v5555 = vpack.c.b16 %v5371, %v5363
  %v5556 = vpack.c.b16 %v5380, %v5372
  %v5557 = vpack.c.b16 %v5381, %v5373
  %v5558 = vpack.c.b16 %v5382, %v5374
  %v5559 = vpack.c.b16 %v5383, %v5375
  %v5560 = vpack.c.b16 %v5384, %v5376
  %v5561 = vpack.c.b16 %v5385, %v5377
  %v5562 = vpack.c.b16 %v5386, %v5378
  %v5563 = vpack.c.b16 %v5387, %v5379
  %v5564 = vpack.c.b16 %v5396, %v5388
  %v5565 = vpack.c.b16 %v5397, %v5389
  %v5566 = vpack.c.b16 %v5398, %v5390
  %v5567 = vpack.c.b16 %v5399, %v5391
  %v5568 = vpack.c.b16 %v5400, %v5392
  %v5569 = vpack.c.b16 %v5401, %v5393
  %v5570 = vpack.c.b16 %v5402, %v5394
  %v5571 = vpack.c.b16 %v5403, %v5395
  %v5572 = vpack.c.b16 %v5412, %v5404
  %v5573 = vpack.c.b16 %v5413, %v5405
  %v5574 = vpack.c.b16 %v5414, %v5406
  %v5575 = vpack.c.b16 %v5415, %v5407
  %v5576 = vpack.c.b16 %v5416, %v5408
  %v5577 = vpack.c.b16 %v5417, %v5409
  %v5578 = vpack.c.b16 %v5418, %v5410
  %v5579 = vpack.c.b16 %v5419, %v5411
  %v5580 = vpack.c.b16 %v5428, %v5420
  %v5581 = vpack.c.b16 %v5429, %v5421
  %v5582 = vpack.c.b16 %v5430, %v5422
  %v5583 = vpack.c.b16 %v5431, %v5423
  %v5584 = vpack.c.b16 %v5432, %v5424
  %v5585 = vpack.c.b16 %v5433, %v5425
  %v5586 = vpack.c.b16 %v5434, %v5426
  %v5587 = vpack.c.b16 %v5435, %v5427
  %v5588 = vpack.c.b16 %v5444, %v5436
  %v5589 = vpack.c.b16 %v5445, %v5437
  %v5590 = vpack.c.b16 %v5446, %v5438
  %v5591 = vpack.c.b16 %v5447, %v5439
  %v5592 = vpack.c.b16 %v5448, %v5440
  %v5593 = vpack.c.b16 %v5449, %v5441
  %v5594 = vpack.c.b16 %v5450, %v5442
  %v5595 = vpack.c.b16 %v5451, %v5443
  %v5596 = vpack.c.b16 %v5460, %v5452
  %v5597 = vpack.c.b16 %v5461, %v5453
  %v5598 = vpack.c.b16 %v5462, %v5454
  %v5599 = vpack.c.b16 %v5463, %v5455
  %v5600 = vpack.c.b16 %v5464, %v5456
  %v5601 = vpack.c.b16 %v5465, %v5457
  %v5602 = vpack.c.b16 %v5466, %v5458
  %v5603 = vpack.c.b16 %v5467, %v5459
  %v5604 = vpack.c.b16 %v5476, %v5468
  %v5605 = vpack.c.b16 %v5477, %v5469
  %v5606 = vpack.c.b16 %v5478, %v5470
  %v5607 = vpack.c.b16 %v5479, %v5471
  %v5608 = vpack.c.b16 %v5480, %v5472
  %v5609 = vpack.c.b16 %v5481, %v5473
  %v5610 = vpack.c.b16 %v5482, %v5474
  %v5611 = vpack.c.b16 %v5483, %v5475
  %5740 = vmatpush.bf16.msra.mxu0 %v5540
  %5741 = vmatpush.bf16.msra.mxu0 %v5532
  %5742 = vmatpush.bf16.msra.mxu0 %v5524
  %5743 = vmatpush.bf16.msra.mxu0 %v5516
  %5744 = vmatpush.bf16.msra.mxu0 %v5508
  %5745 = vmatpush.bf16.msra.mxu0 %v5500
  %5746 = vmatpush.bf16.msra.mxu0 %v5492
  %5747 = vmatpush.bf16.msra.mxu0 %v5484
  %5748 = vmatmul.bf16.gmra.mxu0 %v4970
  %v5749 = vpop.f32.mrf.mxu0
  %v5750 = vadd.f32 0.0, %v5749
  %v5751 = vpop.f32.mrf.mxu0
  %5752 = vdwg.mxu0
  %5753 = vmatpush.bf16.msra.mxu0 %v5604
  %5754 = vmatpush.bf16.msra.mxu0 %v5596
  %5755 = vmatpush.bf16.msra.mxu0 %v5588
  %5756 = vmatpush.bf16.msra.mxu0 %v5580
  %5757 = vmatpush.bf16.msra.mxu0 %v5572
  %5758 = vmatpush.bf16.msra.mxu0 %v5564
  %5759 = vmatpush.bf16.msra.mxu0 %v5556
  %5760 = vmatpush.bf16.msra.mxu0 %v5548
  %5761 = vmatmul.bf16.gmra.mxu0 %v4971
  %v5762 = vpop.f32.mrf.mxu0
  %v5763 = vadd.f32 %v5750, %v5762
  %v5764 = vpop.f32.mrf.mxu0
  %5765 = vdwg.mxu0
  %5766 = vmatpush.bf16.msra.mxu0 %v5541
  %5767 = vmatpush.bf16.msra.mxu0 %v5533
  %5768 = vmatpush.bf16.msra.mxu0 %v5525
  %5769 = vmatpush.bf16.msra.mxu0 %v5517
  %5770 = vmatpush.bf16.msra.mxu0 %v5509
  %5771 = vmatpush.bf16.msra.mxu0 %v5501
  %5772 = vmatpush.bf16.msra.mxu0 %v5493
  %5773 = vmatpush.bf16.msra.mxu0 %v5485
  %5774 = vmatmul.bf16.gmra.mxu0 %v4970
  %v5775 = vpop.f32.mrf.mxu0
  %v5776 = vadd.f32 0.0, %v5775
  %v5777 = vpop.f32.mrf.mxu0
  %5778 = vdwg.mxu0
  %5779 = vmatpush.bf16.msra.mxu0 %v5605
  %5780 = vmatpush.bf16.msra.mxu0 %v5597
  %5781 = vmatpush.bf16.msra.mxu0 %v5589
  %5782 = vmatpush.bf16.msra.mxu0 %v5581
  %5783 = vmatpush.bf16.msra.mxu0 %v5573
  %5784 = vmatpush.bf16.msra.mxu0 %v5565
  %5785 = vmatpush.bf16.msra.mxu0 %v5557
  %5786 = vmatpush.bf16.msra.mxu0 %v5549
  %5787 = vmatmul.bf16.gmra.mxu0 %v4971
  %v5788 = vpop.f32.mrf.mxu0
  %v5789 = vadd.f32 %v5776, %v5788
  %v5790 = vpop.f32.mrf.mxu0
  %5791 = vdwg.mxu0
  %5792 = vmatpush.bf16.msra.mxu0 %v5542
  %5793 = vmatpush.bf16.msra.mxu0 %v5534
  %5794 = vmatpush.bf16.msra.mxu0 %v5526
  %5795 = vmatpush.bf16.msra.mxu0 %v5518
  %5796 = vmatpush.bf16.msra.mxu0 %v5510
  %5797 = vmatpush.bf16.msra.mxu0 %v5502
  %5798 = vmatpush.bf16.msra.mxu0 %v5494
  %5799 = vmatpush.bf16.msra.mxu0 %v5486
  %5800 = vmatmul.bf16.gmra.mxu0 %v4970
  %v5801 = vpop.f32.mrf.mxu0
  %v5802 = vadd.f32 0.0, %v5801
  %v5803 = vpop.f32.mrf.mxu0
  %5804 = vdwg.mxu0
  %5805 = vmatpush.bf16.msra.mxu0 %v5606
  %5806 = vmatpush.bf16.msra.mxu0 %v5598
  %5807 = vmatpush.bf16.msra.mxu0 %v5590
  %5808 = vmatpush.bf16.msra.mxu0 %v5582
  %5809 = vmatpush.bf16.msra.mxu0 %v5574
  %5810 = vmatpush.bf16.msra.mxu0 %v5566
  %5811 = vmatpush.bf16.msra.mxu0 %v5558
  %5812 = vmatpush.bf16.msra.mxu0 %v5550
  %5813 = vmatmul.bf16.gmra.mxu0 %v4971
  %v5814 = vpop.f32.mrf.mxu0
  %v5815 = vadd.f32 %v5802, %v5814
  %v5816 = vpop.f32.mrf.mxu0
  %5817 = vdwg.mxu0
  %5818 = vmatpush.bf16.msra.mxu0 %v5543
  %5819 = vmatpush.bf16.msra.mxu0 %v5535
  %5820 = vmatpush.bf16.msra.mxu0 %v5527
  %5821 = vmatpush.bf16.msra.mxu0 %v5519
  %5822 = vmatpush.bf16.msra.mxu0 %v5511
  %5823 = vmatpush.bf16.msra.mxu0 %v5503
  %5824 = vmatpush.bf16.msra.mxu0 %v5495
  %5825 = vmatpush.bf16.msra.mxu0 %v5487
  %5826 = vmatmul.bf16.gmra.mxu0 %v4970
  %v5827 = vpop.f32.mrf.mxu0
  %v5828 = vadd.f32 0.0, %v5827
  %v5829 = vpop.f32.mrf.mxu0
  %5830 = vdwg.mxu0
  %5831 = vmatpush.bf16.msra.mxu0 %v5607
  %5832 = vmatpush.bf16.msra.mxu0 %v5599
  %5833 = vmatpush.bf16.msra.mxu0 %v5591
  %5834 = vmatpush.bf16.msra.mxu0 %v5583
  %5835 = vmatpush.bf16.msra.mxu0 %v5575
  %5836 = vmatpush.bf16.msra.mxu0 %v5567
  %5837 = vmatpush.bf16.msra.mxu0 %v5559
  %5838 = vmatpush.bf16.msra.mxu0 %v5551
  %5839 = vmatmul.bf16.gmra.mxu0 %v4971
  %v5840 = vpop.f32.mrf.mxu0
  %v5841 = vadd.f32 %v5828, %v5840
  %v5842 = vpop.f32.mrf.mxu0
  %5843 = vdwg.mxu0
  %5844 = vmatpush.bf16.msra.mxu0 %v5544
  %5845 = vmatpush.bf16.msra.mxu0 %v5536
  %5846 = vmatpush.bf16.msra.mxu0 %v5528
  %5847 = vmatpush.bf16.msra.mxu0 %v5520
  %5848 = vmatpush.bf16.msra.mxu0 %v5512
  %5849 = vmatpush.bf16.msra.mxu0 %v5504
  %5850 = vmatpush.bf16.msra.mxu0 %v5496
  %5851 = vmatpush.bf16.msra.mxu0 %v5488
  %5852 = vmatmul.bf16.gmra.mxu0 %v4970
  %v5853 = vpop.f32.mrf.mxu0
  %v5854 = vadd.f32 0.0, %v5853
  %v5855 = vpop.f32.mrf.mxu0
  %5856 = vdwg.mxu0
  %5857 = vmatpush.bf16.msra.mxu0 %v5608
  %5858 = vmatpush.bf16.msra.mxu0 %v5600
  %5859 = vmatpush.bf16.msra.mxu0 %v5592
  %5860 = vmatpush.bf16.msra.mxu0 %v5584
  %5861 = vmatpush.bf16.msra.mxu0 %v5576
  %5862 = vmatpush.bf16.msra.mxu0 %v5568
  %5863 = vmatpush.bf16.msra.mxu0 %v5560
  %5864 = vmatpush.bf16.msra.mxu0 %v5552
  %5865 = vmatmul.bf16.gmra.mxu0 %v4971
  %v5866 = vpop.f32.mrf.mxu0
  %v5867 = vadd.f32 %v5854, %v5866
  %v5868 = vpop.f32.mrf.mxu0
  %5869 = vdwg.mxu0
  %5870 = vmatpush.bf16.msra.mxu0 %v5545
  %5871 = vmatpush.bf16.msra.mxu0 %v5537
  %5872 = vmatpush.bf16.msra.mxu0 %v5529
  %5873 = vmatpush.bf16.msra.mxu0 %v5521
  %5874 = vmatpush.bf16.msra.mxu0 %v5513
  %5875 = vmatpush.bf16.msra.mxu0 %v5505
  %5876 = vmatpush.bf16.msra.mxu0 %v5497
  %5877 = vmatpush.bf16.msra.mxu0 %v5489
  %5878 = vmatmul.bf16.gmra.mxu0 %v4970
  %v5879 = vpop.f32.mrf.mxu0
  %v5880 = vadd.f32 0.0, %v5879
  %v5881 = vpop.f32.mrf.mxu0
  %5882 = vdwg.mxu0
  %5883 = vmatpush.bf16.msra.mxu0 %v5609
  %5884 = vmatpush.bf16.msra.mxu0 %v5601
  %5885 = vmatpush.bf16.msra.mxu0 %v5593
  %5886 = vmatpush.bf16.msra.mxu0 %v5585
  %5887 = vmatpush.bf16.msra.mxu0 %v5577
  %5888 = vmatpush.bf16.msra.mxu0 %v5569
  %5889 = vmatpush.bf16.msra.mxu0 %v5561
  %5890 = vmatpush.bf16.msra.mxu0 %v5553
  %5891 = vmatmul.bf16.gmra.mxu0 %v4971
  %v5892 = vpop.f32.mrf.mxu0
  %v5893 = vadd.f32 %v5880, %v5892
  %v5894 = vpop.f32.mrf.mxu0
  %5895 = vdwg.mxu0
  %5896 = vmatpush.bf16.msra.mxu0 %v5546
  %5897 = vmatpush.bf16.msra.mxu0 %v5538
  %5898 = vmatpush.bf16.msra.mxu0 %v5530
  %5899 = vmatpush.bf16.msra.mxu0 %v5522
  %5900 = vmatpush.bf16.msra.mxu0 %v5514
  %5901 = vmatpush.bf16.msra.mxu0 %v5506
  %5902 = vmatpush.bf16.msra.mxu0 %v5498
  %5903 = vmatpush.bf16.msra.mxu0 %v5490
  %5904 = vmatmul.bf16.gmra.mxu0 %v4970
  %v5905 = vpop.f32.mrf.mxu0
  %v5906 = vadd.f32 0.0, %v5905
  %v5907 = vpop.f32.mrf.mxu0
  %5908 = vdwg.mxu0
  %5909 = vmatpush.bf16.msra.mxu0 %v5610
  %5910 = vmatpush.bf16.msra.mxu0 %v5602
  %5911 = vmatpush.bf16.msra.mxu0 %v5594
  %5912 = vmatpush.bf16.msra.mxu0 %v5586
  %5913 = vmatpush.bf16.msra.mxu0 %v5578
  %5914 = vmatpush.bf16.msra.mxu0 %v5570
  %5915 = vmatpush.bf16.msra.mxu0 %v5562
  %5916 = vmatpush.bf16.msra.mxu0 %v5554
  %5917 = vmatmul.bf16.gmra.mxu0 %v4971
  %v5918 = vpop.f32.mrf.mxu0
  %v5919 = vadd.f32 %v5906, %v5918
  %v5920 = vpop.f32.mrf.mxu0
  %5921 = vdwg.mxu0
  %5922 = vmatpush.bf16.msra.mxu0 %v5547
  %5923 = vmatpush.bf16.msra.mxu0 %v5539
  %5924 = vmatpush.bf16.msra.mxu0 %v5531
  %5925 = vmatpush.bf16.msra.mxu0 %v5523
  %5926 = vmatpush.bf16.msra.mxu0 %v5515
  %5927 = vmatpush.bf16.msra.mxu0 %v5507
  %5928 = vmatpush.bf16.msra.mxu0 %v5499
  %5929 = vmatpush.bf16.msra.mxu0 %v5491
  %5930 = vmatmul.bf16.gmra.mxu0 %v4970
  %v5931 = vpop.f32.mrf.mxu0
  %v5932 = vadd.f32 0.0, %v5931
  %v5933 = vpop.f32.mrf.mxu0
  %5934 = vdwg.mxu0
  %5935 = vmatpush.bf16.msra.mxu0 %v5611
  %5936 = vmatpush.bf16.msra.mxu0 %v5603
  %5937 = vmatpush.bf16.msra.mxu0 %v5595
  %5938 = vmatpush.bf16.msra.mxu0 %v5587
  %5939 = vmatpush.bf16.msra.mxu0 %v5579
  %5940 = vmatpush.bf16.msra.mxu0 %v5571
  %5941 = vmatpush.bf16.msra.mxu0 %v5563
  %5942 = vmatpush.bf16.msra.mxu0 %v5555
  %5943 = vmatmul.bf16.gmra.mxu0 %v4971
  %v5944 = vpop.f32.mrf.mxu0
  %v5945 = vadd.f32 %v5932, %v5944
  %v5946 = vpop.f32.mrf.mxu0
  %5947 = vdwg.mxu0
  %v5948 = vadd.f32 %v4961, %v5763
  %v5949 = vadd.f32 %v4962, %v5789
  %v5950 = vadd.f32 %v4963, %v5815
  %v5951 = vadd.f32 %v4964, %v5841
  %v5952 = vadd.f32 %v4966, %v5867
  %v5953 = vadd.f32 %v4967, %v5893
  %v5954 = vadd.f32 %v4968, %v5919
  %v5955 = vadd.f32 %v4969, %v5945
  %v5956 = vmul.f32 %v5948, 0.5
  %v5957 = vtanh.pop %v5956
  %v5958 = vmul.f32 %v5957, 0.5
  %v5959 = vadd.f32 %v5958, 0.5
  %v5960 = vmul.f32 %v5949, 0.5
  %v5961 = vtanh.pop %v5960
  %v5962 = vmul.f32 %v5961, 0.5
  %v5963 = vadd.f32 %v5962, 0.5
  %v5964 = vtanh.pop %v5950
  %v5965 = vmul.f32 %v5951, 0.5
  %v5966 = vtanh.pop %v5965
  %v5967 = vmul.f32 %v5966, 0.5
  %v5968 = vadd.f32 %v5967, 0.5
  %v5969 = vmul.f32 %v5963, %v4927
  %v5970 = vmul.f32 %v5959, %v5964
  %v5971 = vadd.f32 %v5969, %v5970
  %v5972 = vtanh.pop %v5971
  %v5973 = vmul.f32 %v5968, %v5972
  %v5974 = vmul.f32 %v5952, 0.5
  %v5975 = vtanh.pop %v5974
  %v5976 = vmul.f32 %v5975, 0.5
  %v5977 = vadd.f32 %v5976, 0.5
  %v5978 = vmul.f32 %v5953, 0.5
  %v5979 = vtanh.pop %v5978
  %v5980 = vmul.f32 %v5979, 0.5
  %v5981 = vadd.f32 %v5980, 0.5
  %v5982 = vtanh.pop %v5954
  %v5983 = vmul.f32 %v5955, 0.5
  %v5984 = vtanh.pop %v5983
  %v5985 = vmul.f32 %v5984, 0.5
  %v5986 = vadd.f32 %v5985, 0.5
  %v5987 = vmul.f32 %v5981, %v4945
  %v5988 = vmul.f32 %v5977, %v5982
  %v5989 = vadd.f32 %v5987, %v5988
  %v5990 = vtanh.pop %v5989
  %v5991 = vmul.f32 %v5986, %v5990
  %v5992 = vld [vmem:[#allocation3] sm:$0xff]
  %v5993 = vadd.f32 %v5992, %v5973
  %5994 = vst [vmem:[#allocation3] sm:$0xff] %v5993
  %v5995 = vld [vmem:[#allocation3 + $0x8] sm:$0xff]
  %v5996 = vadd.f32 %v5995, %v5991
  %5997 = vst [vmem:[#allocation3 + $0x8] sm:$0xff] %v5996
  %v5998 = vld [vmem:[#allocation3 + $0x10] sm:$0xff]
  %v5999 = vmax.f32 %v5998, %v5973
  %6000 = vst [vmem:[#allocation3 + $0x10] sm:$0xff] %v5999
  %v6001 = vld [vmem:[#allocation3 + $0x18] sm:$0xff]
  %v6002 = vmax.f32 %v6001, %v5991
  %6003 = vst [vmem:[#allocation3 + $0x18] sm:$0xff] %v6002
  %v6004 = vld [vmem:[%s4965] sm:$0xff]
  %v6005 = vld [vmem:[%s4965 + $0x8] sm:$0xff]
  %v6006 = vld [vmem:[%s4965 + $0x10] sm:$0xff]
  %v6007 = vld [vmem:[%s4965 + $0x18] sm:$0xff]
  %v6008 = vld [vmem:[%s4960 + $0x20] sm:$0xff]
  %v6009 = vld [vmem:[%s4960 + $0x28] sm:$0xff]
  %v6010 = vld [vmem:[%s4960 + $0x30] sm:$0xff]
  %v6011 = vld [vmem:[%s4960 + $0x38] sm:$0xff]
  %v6012 = vpack.c.bf16 %v5973, %v5973
  %v6013 = vpack.c.bf16 %v5991, %v5991
  %v6014 = vld [vmem:[%s3] sm:$0xff]
  %v6015 = vld [vmem:[%s3 + $0x8] sm:$0xff]
  %v6016 = vld [vmem:[%s3 + $0x10] sm:$0xff]
  %v6017 = vld [vmem:[%s3 + $0x18] sm:$0xff]
  %v6018 = vld [vmem:[%s3 + $0x20] sm:$0xff]
  %v6019 = vld [vmem:[%s3 + $0x28] sm:$0xff]
  %v6020 = vld [vmem:[%s3 + $0x30] sm:$0xff]
  %v6021 = vld [vmem:[%s3 + $0x38] sm:$0xff]
  %v6022 = vld [vmem:[%s3 + $0x40] sm:$0xff]
  %v6023 = vld [vmem:[%s3 + $0x48] sm:$0xff]
  %v6024 = vld [vmem:[%s3 + $0x50] sm:$0xff]
  %v6025 = vld [vmem:[%s3 + $0x58] sm:$0xff]
  %v6026 = vld [vmem:[%s3 + $0x60] sm:$0xff]
  %v6027 = vld [vmem:[%s3 + $0x68] sm:$0xff]
  %v6028 = vld [vmem:[%s3 + $0x70] sm:$0xff]
  %v6029 = vld [vmem:[%s3 + $0x78] sm:$0xff]
  %v6030 = vld [vmem:[%s3 + $0x80] sm:$0xff]
  %v6031 = vld [vmem:[%s3 + $0x88] sm:$0xff]
  %v6032 = vld [vmem:[%s3 + $0x90] sm:$0xff]
  %v6033 = vld [vmem:[%s3 + $0x98] sm:$0xff]
  %v6034 = vld [vmem:[%s3 + $0xa0] sm:$0xff]
  %v6035 = vld [vmem:[%s3 + $0xa8] sm:$0xff]
  %v6036 = vld [vmem:[%s3 + $0xb0] sm:$0xff]
  %v6037 = vld [vmem:[%s3 + $0xb8] sm:$0xff]
  %v6038 = vld [vmem:[%s3 + $0xc0] sm:$0xff]
  %v6039 = vld [vmem:[%s3 + $0xc8] sm:$0xff]
  %v6040 = vld [vmem:[%s3 + $0xd0] sm:$0xff]
  %v6041 = vld [vmem:[%s3 + $0xd8] sm:$0xff]
  %v6042 = vld [vmem:[%s3 + $0xe0] sm:$0xff]
  %v6043 = vld [vmem:[%s3 + $0xe8] sm:$0xff]
  %v6044 = vld [vmem:[%s3 + $0xf0] sm:$0xff]
  %v6045 = vld [vmem:[%s3 + $0xf8] sm:$0xff]
  %v6046 = vld [vmem:[%s3 + $0x100] sm:$0xff]
  %v6047 = vld [vmem:[%s3 + $0x108] sm:$0xff]
  %v6048 = vld [vmem:[%s3 + $0x110] sm:$0xff]
  %v6049 = vld [vmem:[%s3 + $0x118] sm:$0xff]
  %v6050 = vld [vmem:[%s3 + $0x120] sm:$0xff]
  %v6051 = vld [vmem:[%s3 + $0x128] sm:$0xff]
  %v6052 = vld [vmem:[%s3 + $0x130] sm:$0xff]
  %v6053 = vld [vmem:[%s3 + $0x138] sm:$0xff]
  %v6054 = vld [vmem:[%s3 + $0x140] sm:$0xff]
  %v6055 = vld [vmem:[%s3 + $0x148] sm:$0xff]
  %v6056 = vld [vmem:[%s3 + $0x150] sm:$0xff]
  %v6057 = vld [vmem:[%s3 + $0x158] sm:$0xff]
  %v6058 = vld [vmem:[%s3 + $0x160] sm:$0xff]
  %v6059 = vld [vmem:[%s3 + $0x168] sm:$0xff]
  %v6060 = vld [vmem:[%s3 + $0x170] sm:$0xff]
  %v6061 = vld [vmem:[%s3 + $0x178] sm:$0xff]
  %v6062 = vld [vmem:[%s3 + $0x180] sm:$0xff]
  %v6063 = vld [vmem:[%s3 + $0x188] sm:$0xff]
  %v6064 = vld [vmem:[%s3 + $0x190] sm:$0xff]
  %v6065 = vld [vmem:[%s3 + $0x198] sm:$0xff]
  %v6066 = vld [vmem:[%s3 + $0x1a0] sm:$0xff]
  %v6067 = vld [vmem:[%s3 + $0x1a8] sm:$0xff]
  %v6068 = vld [vmem:[%s3 + $0x1b0] sm:$0xff]
  %v6069 = vld [vmem:[%s3 + $0x1b8] sm:$0xff]
  %v6070 = vld [vmem:[%s3 + $0x1c0] sm:$0xff]
  %v6071 = vld [vmem:[%s3 + $0x1c8] sm:$0xff]
  %v6072 = vld [vmem:[%s3 + $0x1d0] sm:$0xff]
  %v6073 = vld [vmem:[%s3 + $0x1d8] sm:$0xff]
  %v6074 = vld [vmem:[%s3 + $0x1e0] sm:$0xff]
  %v6075 = vld [vmem:[%s3 + $0x1e8] sm:$0xff]
  %v6076 = vld [vmem:[%s3 + $0x1f0] sm:$0xff]
  %v6077 = vld [vmem:[%s3 + $0x1f8] sm:$0xff]
  %v6078 = vld [vmem:[%s3 + $0x200] sm:$0xff]
  %v6079 = vld [vmem:[%s3 + $0x208] sm:$0xff]
  %v6080 = vld [vmem:[%s3 + $0x210] sm:$0xff]
  %v6081 = vld [vmem:[%s3 + $0x218] sm:$0xff]
  %v6082 = vld [vmem:[%s3 + $0x220] sm:$0xff]
  %v6083 = vld [vmem:[%s3 + $0x228] sm:$0xff]
  %v6084 = vld [vmem:[%s3 + $0x230] sm:$0xff]
  %v6085 = vld [vmem:[%s3 + $0x238] sm:$0xff]
  %v6086 = vld [vmem:[%s3 + $0x240] sm:$0xff]
  %v6087 = vld [vmem:[%s3 + $0x248] sm:$0xff]
  %v6088 = vld [vmem:[%s3 + $0x250] sm:$0xff]
  %v6089 = vld [vmem:[%s3 + $0x258] sm:$0xff]
  %v6090 = vld [vmem:[%s3 + $0x260] sm:$0xff]
  %v6091 = vld [vmem:[%s3 + $0x268] sm:$0xff]
  %v6092 = vld [vmem:[%s3 + $0x270] sm:$0xff]
  %v6093 = vld [vmem:[%s3 + $0x278] sm:$0xff]
  %v6094 = vld [vmem:[%s3 + $0x280] sm:$0xff]
  %v6095 = vld [vmem:[%s3 + $0x288] sm:$0xff]
  %v6096 = vld [vmem:[%s3 + $0x290] sm:$0xff]
  %v6097 = vld [vmem:[%s3 + $0x298] sm:$0xff]
  %v6098 = vld [vmem:[%s3 + $0x2a0] sm:$0xff]
  %v6099 = vld [vmem:[%s3 + $0x2a8] sm:$0xff]
  %v6100 = vld [vmem:[%s3 + $0x2b0] sm:$0xff]
  %v6101 = vld [vmem:[%s3 + $0x2b8] sm:$0xff]
  %v6102 = vld [vmem:[%s3 + $0x2c0] sm:$0xff]
  %v6103 = vld [vmem:[%s3 + $0x2c8] sm:$0xff]
  %v6104 = vld [vmem:[%s3 + $0x2d0] sm:$0xff]
  %v6105 = vld [vmem:[%s3 + $0x2d8] sm:$0xff]
  %v6106 = vld [vmem:[%s3 + $0x2e0] sm:$0xff]
  %v6107 = vld [vmem:[%s3 + $0x2e8] sm:$0xff]
  %v6108 = vld [vmem:[%s3 + $0x2f0] sm:$0xff]
  %v6109 = vld [vmem:[%s3 + $0x2f8] sm:$0xff]
  %v6110 = vld [vmem:[%s3 + $0x300] sm:$0xff]
  %v6111 = vld [vmem:[%s3 + $0x308] sm:$0xff]
  %v6112 = vld [vmem:[%s3 + $0x310] sm:$0xff]
  %v6113 = vld [vmem:[%s3 + $0x318] sm:$0xff]
  %v6114 = vld [vmem:[%s3 + $0x320] sm:$0xff]
  %v6115 = vld [vmem:[%s3 + $0x328] sm:$0xff]
  %v6116 = vld [vmem:[%s3 + $0x330] sm:$0xff]
  %v6117 = vld [vmem:[%s3 + $0x338] sm:$0xff]
  %v6118 = vld [vmem:[%s3 + $0x340] sm:$0xff]
  %v6119 = vld [vmem:[%s3 + $0x348] sm:$0xff]
  %v6120 = vld [vmem:[%s3 + $0x350] sm:$0xff]
  %v6121 = vld [vmem:[%s3 + $0x358] sm:$0xff]
  %v6122 = vld [vmem:[%s3 + $0x360] sm:$0xff]
  %v6123 = vld [vmem:[%s3 + $0x368] sm:$0xff]
  %v6124 = vld [vmem:[%s3 + $0x370] sm:$0xff]
  %v6125 = vld [vmem:[%s3 + $0x378] sm:$0xff]
  %v6126 = vld [vmem:[%s3 + $0x380] sm:$0xff]
  %v6127 = vld [vmem:[%s3 + $0x388] sm:$0xff]
  %v6128 = vld [vmem:[%s3 + $0x390] sm:$0xff]
  %v6129 = vld [vmem:[%s3 + $0x398] sm:$0xff]
  %v6130 = vld [vmem:[%s3 + $0x3a0] sm:$0xff]
  %v6131 = vld [vmem:[%s3 + $0x3a8] sm:$0xff]
  %v6132 = vld [vmem:[%s3 + $0x3b0] sm:$0xff]
  %v6133 = vld [vmem:[%s3 + $0x3b8] sm:$0xff]
  %v6134 = vld [vmem:[%s3 + $0x3c0] sm:$0xff]
  %v6135 = vld [vmem:[%s3 + $0x3c8] sm:$0xff]
  %v6136 = vld [vmem:[%s3 + $0x3d0] sm:$0xff]
  %v6137 = vld [vmem:[%s3 + $0x3d8] sm:$0xff]
  %v6138 = vld [vmem:[%s3 + $0x3e0] sm:$0xff]
  %v6139 = vld [vmem:[%s3 + $0x3e8] sm:$0xff]
  %v6140 = vld [vmem:[%s3 + $0x3f0] sm:$0xff]
  %v6141 = vld [vmem:[%s3 + $0x3f8] sm:$0xff]
  %v6270 = vunpack.c.l.b16 %v6014
  %v6271 = vunpack.c.h.b16 %v6014
  %v6272 = vunpack.c.l.b16 %v6015
  %v6273 = vunpack.c.h.b16 %v6015
  %v6274 = vunpack.c.l.b16 %v6016
  %v6275 = vunpack.c.h.b16 %v6016
  %v6276 = vunpack.c.l.b16 %v6017
  %v6277 = vunpack.c.h.b16 %v6017
  %v6278 = vunpack.c.l.b16 %v6018
  %v6279 = vunpack.c.h.b16 %v6018
  %v6280 = vunpack.c.l.b16 %v6019
  %v6281 = vunpack.c.h.b16 %v6019
  %v6282 = vunpack.c.l.b16 %v6020
  %v6283 = vunpack.c.h.b16 %v6020
  %v6284 = vunpack.c.l.b16 %v6021
  %v6285 = vunpack.c.h.b16 %v6021
  %v6286 = vunpack.c.l.b16 %v6022
  %v6287 = vunpack.c.h.b16 %v6022
  %v6288 = vunpack.c.l.b16 %v6023
  %v6289 = vunpack.c.h.b16 %v6023
  %v6290 = vunpack.c.l.b16 %v6024
  %v6291 = vunpack.c.h.b16 %v6024
  %v6292 = vunpack.c.l.b16 %v6025
  %v6293 = vunpack.c.h.b16 %v6025
  %v6294 = vunpack.c.l.b16 %v6026
  %v6295 = vunpack.c.h.b16 %v6026
  %v6296 = vunpack.c.l.b16 %v6027
  %v6297 = vunpack.c.h.b16 %v6027
  %v6298 = vunpack.c.l.b16 %v6028
  %v6299 = vunpack.c.h.b16 %v6028
  %v6300 = vunpack.c.l.b16 %v6029
  %v6301 = vunpack.c.h.b16 %v6029
  %v6302 = vunpack.c.l.b16 %v6030
  %v6303 = vunpack.c.h.b16 %v6030
  %v6304 = vunpack.c.l.b16 %v6031
  %v6305 = vunpack.c.h.b16 %v6031
  %v6306 = vunpack.c.l.b16 %v6032
  %v6307 = vunpack.c.h.b16 %v6032
  %v6308 = vunpack.c.l.b16 %v6033
  %v6309 = vunpack.c.h.b16 %v6033
  %v6310 = vunpack.c.l.b16 %v6034
  %v6311 = vunpack.c.h.b16 %v6034
  %v6312 = vunpack.c.l.b16 %v6035
  %v6313 = vunpack.c.h.b16 %v6035
  %v6314 = vunpack.c.l.b16 %v6036
  %v6315 = vunpack.c.h.b16 %v6036
  %v6316 = vunpack.c.l.b16 %v6037
  %v6317 = vunpack.c.h.b16 %v6037
  %v6318 = vunpack.c.l.b16 %v6038
  %v6319 = vunpack.c.h.b16 %v6038
  %v6320 = vunpack.c.l.b16 %v6039
  %v6321 = vunpack.c.h.b16 %v6039
  %v6322 = vunpack.c.l.b16 %v6040
  %v6323 = vunpack.c.h.b16 %v6040
  %v6324 = vunpack.c.l.b16 %v6041
  %v6325 = vunpack.c.h.b16 %v6041
  %v6326 = vunpack.c.l.b16 %v6042
  %v6327 = vunpack.c.h.b16 %v6042
  %v6328 = vunpack.c.l.b16 %v6043
  %v6329 = vunpack.c.h.b16 %v6043
  %v6330 = vunpack.c.l.b16 %v6044
  %v6331 = vunpack.c.h.b16 %v6044
  %v6332 = vunpack.c.l.b16 %v6045
  %v6333 = vunpack.c.h.b16 %v6045
  %v6334 = vunpack.c.l.b16 %v6046
  %v6335 = vunpack.c.h.b16 %v6046
  %v6336 = vunpack.c.l.b16 %v6047
  %v6337 = vunpack.c.h.b16 %v6047
  %v6338 = vunpack.c.l.b16 %v6048
  %v6339 = vunpack.c.h.b16 %v6048
  %v6340 = vunpack.c.l.b16 %v6049
  %v6341 = vunpack.c.h.b16 %v6049
  %v6342 = vunpack.c.l.b16 %v6050
  %v6343 = vunpack.c.h.b16 %v6050
  %v6344 = vunpack.c.l.b16 %v6051
  %v6345 = vunpack.c.h.b16 %v6051
  %v6346 = vunpack.c.l.b16 %v6052
  %v6347 = vunpack.c.h.b16 %v6052
  %v6348 = vunpack.c.l.b16 %v6053
  %v6349 = vunpack.c.h.b16 %v6053
  %v6350 = vunpack.c.l.b16 %v6054
  %v6351 = vunpack.c.h.b16 %v6054
  %v6352 = vunpack.c.l.b16 %v6055
  %v6353 = vunpack.c.h.b16 %v6055
  %v6354 = vunpack.c.l.b16 %v6056
  %v6355 = vunpack.c.h.b16 %v6056
  %v6356 = vunpack.c.l.b16 %v6057
  %v6357 = vunpack.c.h.b16 %v6057
  %v6358 = vunpack.c.l.b16 %v6058
  %v6359 = vunpack.c.h.b16 %v6058
  %v6360 = vunpack.c.l.b16 %v6059
  %v6361 = vunpack.c.h.b16 %v6059
  %v6362 = vunpack.c.l.b16 %v6060
  %v6363 = vunpack.c.h.b16 %v6060
  %v6364 = vunpack.c.l.b16 %v6061
  %v6365 = vunpack.c.h.b16 %v6061
  %v6366 = vunpack.c.l.b16 %v6062
  %v6367 = vunpack.c.h.b16 %v6062
  %v6368 = vunpack.c.l.b16 %v6063
  %v6369 = vunpack.c.h.b16 %v6063
  %v6370 = vunpack.c.l.b16 %v6064
  %v6371 = vunpack.c.h.b16 %v6064
  %v6372 = vunpack.c.l.b16 %v6065
  %v6373 = vunpack.c.h.b16 %v6065
  %v6374 = vunpack.c.l.b16 %v6066
  %v6375 = vunpack.c.h.b16 %v6066
  %v6376 = vunpack.c.l.b16 %v6067
  %v6377 = vunpack.c.h.b16 %v6067
  %v6378 = vunpack.c.l.b16 %v6068
  %v6379 = vunpack.c.h.b16 %v6068
  %v6380 = vunpack.c.l.b16 %v6069
  %v6381 = vunpack.c.h.b16 %v6069
  %v6382 = vunpack.c.l.b16 %v6070
  %v6383 = vunpack.c.h.b16 %v6070
  %v6384 = vunpack.c.l.b16 %v6071
  %v6385 = vunpack.c.h.b16 %v6071
  %v6386 = vunpack.c.l.b16 %v6072
  %v6387 = vunpack.c.h.b16 %v6072
  %v6388 = vunpack.c.l.b16 %v6073
  %v6389 = vunpack.c.h.b16 %v6073
  %v6390 = vunpack.c.l.b16 %v6074
  %v6391 = vunpack.c.h.b16 %v6074
  %v6392 = vunpack.c.l.b16 %v6075
  %v6393 = vunpack.c.h.b16 %v6075
  %v6394 = vunpack.c.l.b16 %v6076
  %v6395 = vunpack.c.h.b16 %v6076
  %v6396 = vunpack.c.l.b16 %v6077
  %v6397 = vunpack.c.h.b16 %v6077
  %v6398 = vunpack.c.l.b16 %v6078
  %v6399 = vunpack.c.h.b16 %v6078
  %v6400 = vunpack.c.l.b16 %v6079
  %v6401 = vunpack.c.h.b16 %v6079
  %v6402 = vunpack.c.l.b16 %v6080
  %v6403 = vunpack.c.h.b16 %v6080
  %v6404 = vunpack.c.l.b16 %v6081
  %v6405 = vunpack.c.h.b16 %v6081
  %v6406 = vunpack.c.l.b16 %v6082
  %v6407 = vunpack.c.h.b16 %v6082
  %v6408 = vunpack.c.l.b16 %v6083
  %v6409 = vunpack.c.h.b16 %v6083
  %v6410 = vunpack.c.l.b16 %v6084
  %v6411 = vunpack.c.h.b16 %v6084
  %v6412 = vunpack.c.l.b16 %v6085
  %v6413 = vunpack.c.h.b16 %v6085
  %v6414 = vunpack.c.l.b16 %v6086
  %v6415 = vunpack.c.h.b16 %v6086
  %v6416 = vunpack.c.l.b16 %v6087
  %v6417 = vunpack.c.h.b16 %v6087
  %v6418 = vunpack.c.l.b16 %v6088
  %v6419 = vunpack.c.h.b16 %v6088
  %v6420 = vunpack.c.l.b16 %v6089
  %v6421 = vunpack.c.h.b16 %v6089
  %v6422 = vunpack.c.l.b16 %v6090
  %v6423 = vunpack.c.h.b16 %v6090
  %v6424 = vunpack.c.l.b16 %v6091
  %v6425 = vunpack.c.h.b16 %v6091
  %v6426 = vunpack.c.l.b16 %v6092
  %v6427 = vunpack.c.h.b16 %v6092
  %v6428 = vunpack.c.l.b16 %v6093
  %v6429 = vunpack.c.h.b16 %v6093
  %v6430 = vunpack.c.l.b16 %v6094
  %v6431 = vunpack.c.h.b16 %v6094
  %v6432 = vunpack.c.l.b16 %v6095
  %v6433 = vunpack.c.h.b16 %v6095
  %v6434 = vunpack.c.l.b16 %v6096
  %v6435 = vunpack.c.h.b16 %v6096
  %v6436 = vunpack.c.l.b16 %v6097
  %v6437 = vunpack.c.h.b16 %v6097
  %v6438 = vunpack.c.l.b16 %v6098
  %v6439 = vunpack.c.h.b16 %v6098
  %v6440 = vunpack.c.l.b16 %v6099
  %v6441 = vunpack.c.h.b16 %v6099
  %v6442 = vunpack.c.l.b16 %v6100
  %v6443 = vunpack.c.h.b16 %v6100
  %v6444 = vunpack.c.l.b16 %v6101
  %v6445 = vunpack.c.h.b16 %v6101
  %v6446 = vunpack.c.l.b16 %v6102
  %v6447 = vunpack.c.h.b16 %v6102
  %v6448 = vunpack.c.l.b16 %v6103
  %v6449 = vunpack.c.h.b16 %v6103
  %v6450 = vunpack.c.l.b16 %v6104
  %v6451 = vunpack.c.h.b16 %v6104
  %v6452 = vunpack.c.l.b16 %v6105
  %v6453 = vunpack.c.h.b16 %v6105
  %v6454 = vunpack.c.l.b16 %v6106
  %v6455 = vunpack.c.h.b16 %v6106
  %v6456 = vunpack.c.l.b16 %v6107
  %v6457 = vunpack.c.h.b16 %v6107
  %v6458 = vunpack.c.l.b16 %v6108
  %v6459 = vunpack.c.h.b16 %v6108
  %v6460 = vunpack.c.l.b16 %v6109
  %v6461 = vunpack.c.h.b16 %v6109
  %v6462 = vunpack.c.l.b16 %v6110
  %v6463 = vunpack.c.h.b16 %v6110
  %v6464 = vunpack.c.l.b16 %v6111
  %v6465 = vunpack.c.h.b16 %v6111
  %v6466 = vunpack.c.l.b16 %v6112
  %v6467 = vunpack.c.h.b16 %v6112
  %v6468 = vunpack.c.l.b16 %v6113
  %v6469 = vunpack.c.h.b16 %v6113
  %v6470 = vunpack.c.l.b16 %v6114
  %v6471 = vunpack.c.h.b16 %v6114
  %v6472 = vunpack.c.l.b16 %v6115
  %v6473 = vunpack.c.h.b16 %v6115
  %v6474 = vunpack.c.l.b16 %v6116
  %v6475 = vunpack.c.h.b16 %v6116
  %v6476 = vunpack.c.l.b16 %v6117
  %v6477 = vunpack.c.h.b16 %v6117
  %v6478 = vunpack.c.l.b16 %v6118
  %v6479 = vunpack.c.h.b16 %v6118
  %v6480 = vunpack.c.l.b16 %v6119
  %v6481 = vunpack.c.h.b16 %v6119
  %v6482 = vunpack.c.l.b16 %v6120
  %v6483 = vunpack.c.h.b16 %v6120
  %v6484 = vunpack.c.l.b16 %v6121
  %v6485 = vunpack.c.h.b16 %v6121
  %v6486 = vunpack.c.l.b16 %v6122
  %v6487 = vunpack.c.h.b16 %v6122
  %v6488 = vunpack.c.l.b16 %v6123
  %v6489 = vunpack.c.h.b16 %v6123
  %v6490 = vunpack.c.l.b16 %v6124
  %v6491 = vunpack.c.h.b16 %v6124
  %v6492 = vunpack.c.l.b16 %v6125
  %v6493 = vunpack.c.h.b16 %v6125
  %v6494 = vunpack.c.l.b16 %v6126
  %v6495 = vunpack.c.h.b16 %v6126
  %v6496 = vunpack.c.l.b16 %v6127
  %v6497 = vunpack.c.h.b16 %v6127
  %v6498 = vunpack.c.l.b16 %v6128
  %v6499 = vunpack.c.h.b16 %v6128
  %v6500 = vunpack.c.l.b16 %v6129
  %v6501 = vunpack.c.h.b16 %v6129
  %v6502 = vunpack.c.l.b16 %v6130
  %v6503 = vunpack.c.h.b16 %v6130
  %v6504 = vunpack.c.l.b16 %v6131
  %v6505 = vunpack.c.h.b16 %v6131
  %v6506 = vunpack.c.l.b16 %v6132
  %v6507 = vunpack.c.h.b16 %v6132
  %v6508 = vunpack.c.l.b16 %v6133
  %v6509 = vunpack.c.h.b16 %v6133
  %v6510 = vunpack.c.l.b16 %v6134
  %v6511 = vunpack.c.h.b16 %v6134
  %v6512 = vunpack.c.l.b16 %v6135
  %v6513 = vunpack.c.h.b16 %v6135
  %v6514 = vunpack.c.l.b16 %v6136
  %v6515 = vunpack.c.h.b16 %v6136
  %v6516 = vunpack.c.l.b16 %v6137
  %v6517 = vunpack.c.h.b16 %v6137
  %v6518 = vunpack.c.l.b16 %v6138
  %v6519 = vunpack.c.h.b16 %v6138
  %v6520 = vunpack.c.l.b16 %v6139
  %v6521 = vunpack.c.h.b16 %v6139
  %v6522 = vunpack.c.l.b16 %v6140
  %v6523 = vunpack.c.h.b16 %v6140
  %v6524 = vunpack.c.l.b16 %v6141
  %v6525 = vunpack.c.h.b16 %v6141
  %v6526 = vpack.c.b16 %v6278, %v6270
  %v6527 = vpack.c.b16 %v6279, %v6271
  %v6528 = vpack.c.b16 %v6280, %v6272
  %v6529 = vpack.c.b16 %v6281, %v6273
  %v6530 = vpack.c.b16 %v6282, %v6274
  %v6531 = vpack.c.b16 %v6283, %v6275
  %v6532 = vpack.c.b16 %v6284, %v6276
  %v6533 = vpack.c.b16 %v6285, %v6277
  %v6534 = vpack.c.b16 %v6294, %v6286
  %v6535 = vpack.c.b16 %v6295, %v6287
  %v6536 = vpack.c.b16 %v6296, %v6288
  %v6537 = vpack.c.b16 %v6297, %v6289
  %v6538 = vpack.c.b16 %v6298, %v6290
  %v6539 = vpack.c.b16 %v6299, %v6291
  %v6540 = vpack.c.b16 %v6300, %v6292
  %v6541 = vpack.c.b16 %v6301, %v6293
  %v6542 = vpack.c.b16 %v6310, %v6302
  %v6543 = vpack.c.b16 %v6311, %v6303
  %v6544 = vpack.c.b16 %v6312, %v6304
  %v6545 = vpack.c.b16 %v6313, %v6305
  %v6546 = vpack.c.b16 %v6314, %v6306
  %v6547 = vpack.c.b16 %v6315, %v6307
  %v6548 = vpack.c.b16 %v6316, %v6308
  %v6549 = vpack.c.b16 %v6317, %v6309
  %v6550 = vpack.c.b16 %v6326, %v6318
  %v6551 = vpack.c.b16 %v6327, %v6319
  %v6552 = vpack.c.b16 %v6328, %v6320
  %v6553 = vpack.c.b16 %v6329, %v6321
  %v6554 = vpack.c.b16 %v6330, %v6322
  %v6555 = vpack.c.b16 %v6331, %v6323
  %v6556 = vpack.c.b16 %v6332, %v6324
  %v6557 = vpack.c.b16 %v6333, %v6325
  %v6558 = vpack.c.b16 %v6342, %v6334
  %v6559 = vpack.c.b16 %v6343, %v6335
  %v6560 = vpack.c.b16 %v6344, %v6336
  %v6561 = vpack.c.b16 %v6345, %v6337
  %v6562 = vpack.c.b16 %v6346, %v6338
  %v6563 = vpack.c.b16 %v6347, %v6339
  %v6564 = vpack.c.b16 %v6348, %v6340
  %v6565 = vpack.c.b16 %v6349, %v6341
  %v6566 = vpack.c.b16 %v6358, %v6350
  %v6567 = vpack.c.b16 %v6359, %v6351
  %v6568 = vpack.c.b16 %v6360, %v6352
  %v6569 = vpack.c.b16 %v6361, %v6353
  %v6570 = vpack.c.b16 %v6362, %v6354
  %v6571 = vpack.c.b16 %v6363, %v6355
  %v6572 = vpack.c.b16 %v6364, %v6356
  %v6573 = vpack.c.b16 %v6365, %v6357
  %v6574 = vpack.c.b16 %v6374, %v6366
  %v6575 = vpack.c.b16 %v6375, %v6367
  %v6576 = vpack.c.b16 %v6376, %v6368
  %v6577 = vpack.c.b16 %v6377, %v6369
  %v6578 = vpack.c.b16 %v6378, %v6370
  %v6579 = vpack.c.b16 %v6379, %v6371
  %v6580 = vpack.c.b16 %v6380, %v6372
  %v6581 = vpack.c.b16 %v6381, %v6373
  %v6582 = vpack.c.b16 %v6390, %v6382
  %v6583 = vpack.c.b16 %v6391, %v6383
  %v6584 = vpack.c.b16 %v6392, %v6384
  %v6585 = vpack.c.b16 %v6393, %v6385
  %v6586 = vpack.c.b16 %v6394, %v6386
  %v6587 = vpack.c.b16 %v6395, %v6387
  %v6588 = vpack.c.b16 %v6396, %v6388
  %v6589 = vpack.c.b16 %v6397, %v6389
  %v6590 = vpack.c.b16 %v6406, %v6398
  %v6591 = vpack.c.b16 %v6407, %v6399
  %v6592 = vpack.c.b16 %v6408, %v6400
  %v6593 = vpack.c.b16 %v6409, %v6401
  %v6594 = vpack.c.b16 %v6410, %v6402
  %v6595 = vpack.c.b16 %v6411, %v6403
  %v6596 = vpack.c.b16 %v6412, %v6404
  %v6597 = vpack.c.b16 %v6413, %v6405
  %v6598 = vpack.c.b16 %v6422, %v6414
  %v6599 = vpack.c.b16 %v6423, %v6415
  %v6600 = vpack.c.b16 %v6424, %v6416
  %v6601 = vpack.c.b16 %v6425, %v6417
  %v6602 = vpack.c.b16 %v6426, %v6418
  %v6603 = vpack.c.b16 %v6427, %v6419
  %v6604 = vpack.c.b16 %v6428, %v6420
  %v6605 = vpack.c.b16 %v6429, %v6421
  %v6606 = vpack.c.b16 %v6438, %v6430
  %v6607 = vpack.c.b16 %v6439, %v6431
  %v6608 = vpack.c.b16 %v6440, %v6432
  %v6609 = vpack.c.b16 %v6441, %v6433
  %v6610 = vpack.c.b16 %v6442, %v6434
  %v6611 = vpack.c.b16 %v6443, %v6435
  %v6612 = vpack.c.b16 %v6444, %v6436
  %v6613 = vpack.c.b16 %v6445, %v6437
  %v6614 = vpack.c.b16 %v6454, %v6446
  %v6615 = vpack.c.b16 %v6455, %v6447
  %v6616 = vpack.c.b16 %v6456, %v6448
  %v6617 = vpack.c.b16 %v6457, %v6449
  %v6618 = vpack.c.b16 %v6458, %v6450
  %v6619 = vpack.c.b16 %v6459, %v6451
  %v6620 = vpack.c.b16 %v6460, %v6452
  %v6621 = vpack.c.b16 %v6461, %v6453
  %v6622 = vpack.c.b16 %v6470, %v6462
  %v6623 = vpack.c.b16 %v6471, %v6463
  %v6624 = vpack.c.b16 %v6472, %v6464
  %v6625 = vpack.c.b16 %v6473, %v6465
  %v6626 = vpack.c.b16 %v6474, %v6466
  %v6627 = vpack.c.b16 %v6475, %v6467
  %v6628 = vpack.c.b16 %v6476, %v6468
  %v6629 = vpack.c.b16 %v6477, %v6469
  %v6630 = vpack.c.b16 %v6486, %v6478
  %v6631 = vpack.c.b16 %v6487, %v6479
  %v6632 = vpack.c.b16 %v6488, %v6480
  %v6633 = vpack.c.b16 %v6489, %v6481
  %v6634 = vpack.c.b16 %v6490, %v6482
  %v6635 = vpack.c.b16 %v6491, %v6483
  %v6636 = vpack.c.b16 %v6492, %v6484
  %v6637 = vpack.c.b16 %v6493, %v6485
  %v6638 = vpack.c.b16 %v6502, %v6494
  %v6639 = vpack.c.b16 %v6503, %v6495
  %v6640 = vpack.c.b16 %v6504, %v6496
  %v6641 = vpack.c.b16 %v6505, %v6497
  %v6642 = vpack.c.b16 %v6506, %v6498
  %v6643 = vpack.c.b16 %v6507, %v6499
  %v6644 = vpack.c.b16 %v6508, %v6500
  %v6645 = vpack.c.b16 %v6509, %v6501
  %v6646 = vpack.c.b16 %v6518, %v6510
  %v6647 = vpack.c.b16 %v6519, %v6511
  %v6648 = vpack.c.b16 %v6520, %v6512
  %v6649 = vpack.c.b16 %v6521, %v6513
  %v6650 = vpack.c.b16 %v6522, %v6514
  %v6651 = vpack.c.b16 %v6523, %v6515
  %v6652 = vpack.c.b16 %v6524, %v6516
  %v6653 = vpack.c.b16 %v6525, %v6517
  %6782 = vmatpush.bf16.msra.mxu0 %v6582
  %6783 = vmatpush.bf16.msra.mxu0 %v6574
  %6784 = vmatpush.bf16.msra.mxu0 %v6566
  %6785 = vmatpush.bf16.msra.mxu0 %v6558
  %6786 = vmatpush.bf16.msra.mxu0 %v6550
  %6787 = vmatpush.bf16.msra.mxu0 %v6542
  %6788 = vmatpush.bf16.msra.mxu0 %v6534
  %6789 = vmatpush.bf16.msra.mxu0 %v6526
  %6790 = vmatmul.bf16.gmra.mxu0 %v6012
  %v6791 = vpop.f32.mrf.mxu0
  %v6792 = vadd.f32 0.0, %v6791
  %v6793 = vpop.f32.mrf.mxu0
  %6794 = vdwg.mxu0
  %6795 = vmatpush.bf16.msra.mxu0 %v6646
  %6796 = vmatpush.bf16.msra.mxu0 %v6638
  %6797 = vmatpush.bf16.msra.mxu0 %v6630
  %6798 = vmatpush.bf16.msra.mxu0 %v6622
  %6799 = vmatpush.bf16.msra.mxu0 %v6614
  %6800 = vmatpush.bf16.msra.mxu0 %v6606
  %6801 = vmatpush.bf16.msra.mxu0 %v6598
  %6802 = vmatpush.bf16.msra.mxu0 %v6590
  %6803 = vmatmul.bf16.gmra.mxu0 %v6013
  %v6804 = vpop.f32.mrf.mxu0
  %v6805 = vadd.f32 %v6792, %v6804
  %v6806 = vpop.f32.mrf.mxu0
  %6807 = vdwg.mxu0
  %6808 = vmatpush.bf16.msra.mxu0 %v6583
  %6809 = vmatpush.bf16.msra.mxu0 %v6575
  %6810 = vmatpush.bf16.msra.mxu0 %v6567
  %6811 = vmatpush.bf16.msra.mxu0 %v6559
  %6812 = vmatpush.bf16.msra.mxu0 %v6551
  %6813 = vmatpush.bf16.msra.mxu0 %v6543
  %6814 = vmatpush.bf16.msra.mxu0 %v6535
  %6815 = vmatpush.bf16.msra.mxu0 %v6527
  %6816 = vmatmul.bf16.gmra.mxu0 %v6012
  %v6817 = vpop.f32.mrf.mxu0
  %v6818 = vadd.f32 0.0, %v6817
  %v6819 = vpop.f32.mrf.mxu0
  %6820 = vdwg.mxu0
  %6821 = vmatpush.bf16.msra.mxu0 %v6647
  %6822 = vmatpush.bf16.msra.mxu0 %v6639
  %6823 = vmatpush.bf16.msra.mxu0 %v6631
  %6824 = vmatpush.bf16.msra.mxu0 %v6623
  %6825 = vmatpush.bf16.msra.mxu0 %v6615
  %6826 = vmatpush.bf16.msra.mxu0 %v6607
  %6827 = vmatpush.bf16.msra.mxu0 %v6599
  %6828 = vmatpush.bf16.msra.mxu0 %v6591
  %6829 = vmatmul.bf16.gmra.mxu0 %v6013
  %v6830 = vpop.f32.mrf.mxu0
  %v6831 = vadd.f32 %v6818, %v6830
  %v6832 = vpop.f32.mrf.mxu0
  %6833 = vdwg.mxu0
  %6834 = vmatpush.bf16.msra.mxu0 %v6584
  %6835 = vmatpush.bf16.msra.mxu0 %v6576
  %6836 = vmatpush.bf16.msra.mxu0 %v6568
  %6837 = vmatpush.bf16.msra.mxu0 %v6560
  %6838 = vmatpush.bf16.msra.mxu0 %v6552
  %6839 = vmatpush.bf16.msra.mxu0 %v6544
  %6840 = vmatpush.bf16.msra.mxu0 %v6536
  %6841 = vmatpush.bf16.msra.mxu0 %v6528
  %6842 = vmatmul.bf16.gmra.mxu0 %v6012
  %v6843 = vpop.f32.mrf.mxu0
  %v6844 = vadd.f32 0.0, %v6843
  %v6845 = vpop.f32.mrf.mxu0
  %6846 = vdwg.mxu0
  %6847 = vmatpush.bf16.msra.mxu0 %v6648
  %6848 = vmatpush.bf16.msra.mxu0 %v6640
  %6849 = vmatpush.bf16.msra.mxu0 %v6632
  %6850 = vmatpush.bf16.msra.mxu0 %v6624
  %6851 = vmatpush.bf16.msra.mxu0 %v6616
  %6852 = vmatpush.bf16.msra.mxu0 %v6608
  %6853 = vmatpush.bf16.msra.mxu0 %v6600
  %6854 = vmatpush.bf16.msra.mxu0 %v6592
  %6855 = vmatmul.bf16.gmra.mxu0 %v6013
  %v6856 = vpop.f32.mrf.mxu0
  %v6857 = vadd.f32 %v6844, %v6856
  %v6858 = vpop.f32.mrf.mxu0
  %6859 = vdwg.mxu0
  %6860 = vmatpush.bf16.msra.mxu0 %v6585
  %6861 = vmatpush.bf16.msra.mxu0 %v6577
  %6862 = vmatpush.bf16.msra.mxu0 %v6569
  %6863 = vmatpush.bf16.msra.mxu0 %v6561
  %6864 = vmatpush.bf16.msra.mxu0 %v6553
  %6865 = vmatpush.bf16.msra.mxu0 %v6545
  %6866 = vmatpush.bf16.msra.mxu0 %v6537
  %6867 = vmatpush.bf16.msra.mxu0 %v6529
  %6868 = vmatmul.bf16.gmra.mxu0 %v6012
  %v6869 = vpop.f32.mrf.mxu0
  %v6870 = vadd.f32 0.0, %v6869
  %v6871 = vpop.f32.mrf.mxu0
  %6872 = vdwg.mxu0
  %6873 = vmatpush.bf16.msra.mxu0 %v6649
  %6874 = vmatpush.bf16.msra.mxu0 %v6641
  %6875 = vmatpush.bf16.msra.mxu0 %v6633
  %6876 = vmatpush.bf16.msra.mxu0 %v6625
  %6877 = vmatpush.bf16.msra.mxu0 %v6617
  %6878 = vmatpush.bf16.msra.mxu0 %v6609
  %6879 = vmatpush.bf16.msra.mxu0 %v6601
  %6880 = vmatpush.bf16.msra.mxu0 %v6593
  %6881 = vmatmul.bf16.gmra.mxu0 %v6013
  %v6882 = vpop.f32.mrf.mxu0
  %v6883 = vadd.f32 %v6870, %v6882
  %v6884 = vpop.f32.mrf.mxu0
  %6885 = vdwg.mxu0
  %6886 = vmatpush.bf16.msra.mxu0 %v6586
  %6887 = vmatpush.bf16.msra.mxu0 %v6578
  %6888 = vmatpush.bf16.msra.mxu0 %v6570
  %6889 = vmatpush.bf16.msra.mxu0 %v6562
  %6890 = vmatpush.bf16.msra.mxu0 %v6554
  %6891 = vmatpush.bf16.msra.mxu0 %v6546
  %6892 = vmatpush.bf16.msra.mxu0 %v6538
  %6893 = vmatpush.bf16.msra.mxu0 %v6530
  %6894 = vmatmul.bf16.gmra.mxu0 %v6012
  %v6895 = vpop.f32.mrf.mxu0
  %v6896 = vadd.f32 0.0, %v6895
  %v6897 = vpop.f32.mrf.mxu0
  %6898 = vdwg.mxu0
  %6899 = vmatpush.bf16.msra.mxu0 %v6650
  %6900 = vmatpush.bf16.msra.mxu0 %v6642
  %6901 = vmatpush.bf16.msra.mxu0 %v6634
  %6902 = vmatpush.bf16.msra.mxu0 %v6626
  %6903 = vmatpush.bf16.msra.mxu0 %v6618
  %6904 = vmatpush.bf16.msra.mxu0 %v6610
  %6905 = vmatpush.bf16.msra.mxu0 %v6602
  %6906 = vmatpush.bf16.msra.mxu0 %v6594
  %6907 = vmatmul.bf16.gmra.mxu0 %v6013
  %v6908 = vpop.f32.mrf.mxu0
  %v6909 = vadd.f32 %v6896, %v6908
  %v6910 = vpop.f32.mrf.mxu0
  %6911 = vdwg.mxu0
  %6912 = vmatpush.bf16.msra.mxu0 %v6587
  %6913 = vmatpush.bf16.msra.mxu0 %v6579
  %6914 = vmatpush.bf16.msra.mxu0 %v6571
  %6915 = vmatpush.bf16.msra.mxu0 %v6563
  %6916 = vmatpush.bf16.msra.mxu0 %v6555
  %6917 = vmatpush.bf16.msra.mxu0 %v6547
  %6918 = vmatpush.bf16.msra.mxu0 %v6539
  %6919 = vmatpush.bf16.msra.mxu0 %v6531
  %6920 = vmatmul.bf16.gmra.mxu0 %v6012
  %v6921 = vpop.f32.mrf.mxu0
  %v6922 = vadd.f32 0.0, %v6921
  %v6923 = vpop.f32.mrf.mxu0
  %6924 = vdwg.mxu0
  %6925 = vmatpush.bf16.msra.mxu0 %v6651
  %6926 = vmatpush.bf16.msra.mxu0 %v6643
  %6927 = vmatpush.bf16.msra.mxu0 %v6635
  %6928 = vmatpush.bf16.msra.mxu0 %v6627
  %6929 = vmatpush.bf16.msra.mxu0 %v6619
  %6930 = vmatpush.bf16.msra.mxu0 %v6611
  %6931 = vmatpush.bf16.msra.mxu0 %v6603
  %6932 = vmatpush.bf16.msra.mxu0 %v6595
  %6933 = vmatmul.bf16.gmra.mxu0 %v6013
  %v6934 = vpop.f32.mrf.mxu0
  %v6935 = vadd.f32 %v6922, %v6934
  %v6936 = vpop.f32.mrf.mxu0
  %6937 = vdwg.mxu0
  %6938 = vmatpush.bf16.msra.mxu0 %v6588
  %6939 = vmatpush.bf16.msra.mxu0 %v6580
  %6940 = vmatpush.bf16.msra.mxu0 %v6572
  %6941 = vmatpush.bf16.msra.mxu0 %v6564
  %6942 = vmatpush.bf16.msra.mxu0 %v6556
  %6943 = vmatpush.bf16.msra.mxu0 %v6548
  %6944 = vmatpush.bf16.msra.mxu0 %v6540
  %6945 = vmatpush.bf16.msra.mxu0 %v6532
  %6946 = vmatmul.bf16.gmra.mxu0 %v6012
  %v6947 = vpop.f32.mrf.mxu0
  %v6948 = vadd.f32 0.0, %v6947
  %v6949 = vpop.f32.mrf.mxu0
  %6950 = vdwg.mxu0
  %6951 = vmatpush.bf16.msra.mxu0 %v6652
  %6952 = vmatpush.bf16.msra.mxu0 %v6644
  %6953 = vmatpush.bf16.msra.mxu0 %v6636
  %6954 = vmatpush.bf16.msra.mxu0 %v6628
  %6955 = vmatpush.bf16.msra.mxu0 %v6620
  %6956 = vmatpush.bf16.msra.mxu0 %v6612
  %6957 = vmatpush.bf16.msra.mxu0 %v6604
  %6958 = vmatpush.bf16.msra.mxu0 %v6596
  %6959 = vmatmul.bf16.gmra.mxu0 %v6013
  %v6960 = vpop.f32.mrf.mxu0
  %v6961 = vadd.f32 %v6948, %v6960
  %v6962 = vpop.f32.mrf.mxu0
  %6963 = vdwg.mxu0
  %6964 = vmatpush.bf16.msra.mxu0 %v6589
  %6965 = vmatpush.bf16.msra.mxu0 %v6581
  %6966 = vmatpush.bf16.msra.mxu0 %v6573
  %6967 = vmatpush.bf16.msra.mxu0 %v6565
  %6968 = vmatpush.bf16.msra.mxu0 %v6557
  %6969 = vmatpush.bf16.msra.mxu0 %v6549
  %6970 = vmatpush.bf16.msra.mxu0 %v6541
  %6971 = vmatpush.bf16.msra.mxu0 %v6533
  %6972 = vmatmul.bf16.gmra.mxu0 %v6012
  %v6973 = vpop.f32.mrf.mxu0
  %v6974 = vadd.f32 0.0, %v6973
  %v6975 = vpop.f32.mrf.mxu0
  %6976 = vdwg.mxu0
  %6977 = vmatpush.bf16.msra.mxu0 %v6653
  %6978 = vmatpush.bf16.msra.mxu0 %v6645
  %6979 = vmatpush.bf16.msra.mxu0 %v6637
  %6980 = vmatpush.bf16.msra.mxu0 %v6629
  %6981 = vmatpush.bf16.msra.mxu0 %v6621
  %6982 = vmatpush.bf16.msra.mxu0 %v6613
  %6983 = vmatpush.bf16.msra.mxu0 %v6605
  %6984 = vmatpush.bf16.msra.mxu0 %v6597
  %6985 = vmatmul.bf16.gmra.mxu0 %v6013
  %v6986 = vpop.f32.mrf.mxu0
  %v6987 = vadd.f32 %v6974, %v6986
  %v6988 = vpop.f32.mrf.mxu0
  %6989 = vdwg.mxu0
  %v6990 = vadd.f32 %v6004, %v6805
  %v6991 = vadd.f32 %v6005, %v6831
  %v6992 = vadd.f32 %v6006, %v6857
  %v6993 = vadd.f32 %v6007, %v6883
  %v6994 = vadd.f32 %v6008, %v6909
  %v6995 = vadd.f32 %v6009, %v6935
  %v6996 = vadd.f32 %v6010, %v6961
  %v6997 = vadd.f32 %v6011, %v6987
  %v6998 = vmul.f32 %v6990, 0.5
  %v6999 = vtanh.pop %v6998
  %v7000 = vmul.f32 %v6999, 0.5
  %v7001 = vadd.f32 %v7000, 0.5
  %v7002 = vmul.f32 %v6991, 0.5
  %v7003 = vtanh.pop %v7002
  %v7004 = vmul.f32 %v7003, 0.5
  %v7005 = vadd.f32 %v7004, 0.5
  %v7006 = vtanh.pop %v6992
  %v7007 = vmul.f32 %v6993, 0.5
  %v7008 = vtanh.pop %v7007
  %v7009 = vmul.f32 %v7008, 0.5
  %v7010 = vadd.f32 %v7009, 0.5
  %v7011 = vmul.f32 %v7005, %v5971
  %v7012 = vmul.f32 %v7001, %v7006
  %v7013 = vadd.f32 %v7011, %v7012
  %v7014 = vtanh.pop %v7013
  %v7015 = vmul.f32 %v7010, %v7014
  %v7016 = vmul.f32 %v6994, 0.5
  %v7017 = vtanh.pop %v7016
  %v7018 = vmul.f32 %v7017, 0.5
  %v7019 = vadd.f32 %v7018, 0.5
  %v7020 = vmul.f32 %v6995, 0.5
  %v7021 = vtanh.pop %v7020
  %v7022 = vmul.f32 %v7021, 0.5
  %v7023 = vadd.f32 %v7022, 0.5
  %v7024 = vtanh.pop %v6996
  %v7025 = vmul.f32 %v6997, 0.5
  %v7026 = vtanh.pop %v7025
  %v7027 = vmul.f32 %v7026, 0.5
  %v7028 = vadd.f32 %v7027, 0.5
  %v7029 = vmul.f32 %v7023, %v5989
  %v7030 = vmul.f32 %v7019, %v7024
  %v7031 = vadd.f32 %v7029, %v7030
  %v7032 = vtanh.pop %v7031
  %v7033 = vmul.f32 %v7028, %v7032
  %v7034 = vld [vmem:[#allocation3] sm:$0xff]
  %v7035 = vadd.f32 %v7034, %v7015
  %7036 = vst [vmem:[#allocation3] sm:$0xff] %v7035
  %v7037 = vld [vmem:[#allocation3 + $0x8] sm:$0xff]
  %v7038 = vadd.f32 %v7037, %v7033
  %7039 = vst [vmem:[#allocation3 + $0x8] sm:$0xff] %v7038
  %v7040 = vld [vmem:[#allocation3 + $0x10] sm:$0xff]
  %v7041 = vmax.f32 %v7040, %v7015
  %7042 = vst [vmem:[#allocation3 + $0x10] sm:$0xff] %v7041
  %v7043 = vld [vmem:[#allocation3 + $0x18] sm:$0xff]
  %v7044 = vmax.f32 %v7043, %v7033
  %7045 = vst [vmem:[#allocation3 + $0x18] sm:$0xff] %v7044
  %v7046 = vld [vmem:[%s3921] sm:$0xff]
  %v7047 = vld [vmem:[%s3921 + $0x8] sm:$0xff]
  %v7048 = vld [vmem:[%s3921 + $0x10] sm:$0xff]
  %v7049 = vld [vmem:[%s3921 + $0x18] sm:$0xff]
  %v7050 = vld [vmem:[%s3916 + $0x20] sm:$0xff]
  %v7051 = vld [vmem:[%s3916 + $0x28] sm:$0xff]
  %v7052 = vld [vmem:[%s3916 + $0x30] sm:$0xff]
  %v7053 = vld [vmem:[%s3916 + $0x38] sm:$0xff]
  %v7054 = vpack.c.bf16 %v7015, %v7015
  %v7055 = vpack.c.bf16 %v7033, %v7033
  %v7056 = vld [vmem:[%s3] sm:$0xff]
  %v7057 = vld [vmem:[%s3 + $0x8] sm:$0xff]
  %v7058 = vld [vmem:[%s3 + $0x10] sm:$0xff]
  %v7059 = vld [vmem:[%s3 + $0x18] sm:$0xff]
  %v7060 = vld [vmem:[%s3 + $0x20] sm:$0xff]
  %v7061 = vld [vmem:[%s3 + $0x28] sm:$0xff]
  %v7062 = vld [vmem:[%s3 + $0x30] sm:$0xff]
  %v7063 = vld [vmem:[%s3 + $0x38] sm:$0xff]
  %v7064 = vld [vmem:[%s3 + $0x40] sm:$0xff]
  %v7065 = vld [vmem:[%s3 + $0x48] sm:$0xff]
  %v7066 = vld [vmem:[%s3 + $0x50] sm:$0xff]
  %v7067 = vld [vmem:[%s3 + $0x58] sm:$0xff]
  %v7068 = vld [vmem:[%s3 + $0x60] sm:$0xff]
  %v7069 = vld [vmem:[%s3 + $0x68] sm:$0xff]
  %v7070 = vld [vmem:[%s3 + $0x70] sm:$0xff]
  %v7071 = vld [vmem:[%s3 + $0x78] sm:$0xff]
  %v7072 = vld [vmem:[%s3 + $0x80] sm:$0xff]
  %v7073 = vld [vmem:[%s3 + $0x88] sm:$0xff]
  %v7074 = vld [vmem:[%s3 + $0x90] sm:$0xff]
  %v7075 = vld [vmem:[%s3 + $0x98] sm:$0xff]
  %v7076 = vld [vmem:[%s3 + $0xa0] sm:$0xff]
  %v7077 = vld [vmem:[%s3 + $0xa8] sm:$0xff]
  %v7078 = vld [vmem:[%s3 + $0xb0] sm:$0xff]
  %v7079 = vld [vmem:[%s3 + $0xb8] sm:$0xff]
  %v7080 = vld [vmem:[%s3 + $0xc0] sm:$0xff]
  %v7081 = vld [vmem:[%s3 + $0xc8] sm:$0xff]
  %v7082 = vld [vmem:[%s3 + $0xd0] sm:$0xff]
  %v7083 = vld [vmem:[%s3 + $0xd8] sm:$0xff]
  %v7084 = vld [vmem:[%s3 + $0xe0] sm:$0xff]
  %v7085 = vld [vmem:[%s3 + $0xe8] sm:$0xff]
  %v7086 = vld [vmem:[%s3 + $0xf0] sm:$0xff]
  %v7087 = vld [vmem:[%s3 + $0xf8] sm:$0xff]
  %v7088 = vld [vmem:[%s3 + $0x100] sm:$0xff]
  %v7089 = vld [vmem:[%s3 + $0x108] sm:$0xff]
  %v7090 = vld [vmem:[%s3 + $0x110] sm:$0xff]
  %v7091 = vld [vmem:[%s3 + $0x118] sm:$0xff]
  %v7092 = vld [vmem:[%s3 + $0x120] sm:$0xff]
  %v7093 = vld [vmem:[%s3 + $0x128] sm:$0xff]
  %v7094 = vld [vmem:[%s3 + $0x130] sm:$0xff]
  %v7095 = vld [vmem:[%s3 + $0x138] sm:$0xff]
  %v7096 = vld [vmem:[%s3 + $0x140] sm:$0xff]
  %v7097 = vld [vmem:[%s3 + $0x148] sm:$0xff]
  %v7098 = vld [vmem:[%s3 + $0x150] sm:$0xff]
  %v7099 = vld [vmem:[%s3 + $0x158] sm:$0xff]
  %v7100 = vld [vmem:[%s3 + $0x160] sm:$0xff]
  %v7101 = vld [vmem:[%s3 + $0x168] sm:$0xff]
  %v7102 = vld [vmem:[%s3 + $0x170] sm:$0xff]
  %v7103 = vld [vmem:[%s3 + $0x178] sm:$0xff]
  %v7104 = vld [vmem:[%s3 + $0x180] sm:$0xff]
  %v7105 = vld [vmem:[%s3 + $0x188] sm:$0xff]
  %v7106 = vld [vmem:[%s3 + $0x190] sm:$0xff]
  %v7107 = vld [vmem:[%s3 + $0x198] sm:$0xff]
  %v7108 = vld [vmem:[%s3 + $0x1a0] sm:$0xff]
  %v7109 = vld [vmem:[%s3 + $0x1a8] sm:$0xff]
  %v7110 = vld [vmem:[%s3 + $0x1b0] sm:$0xff]
  %v7111 = vld [vmem:[%s3 + $0x1b8] sm:$0xff]
  %v7112 = vld [vmem:[%s3 + $0x1c0] sm:$0xff]
  %v7113 = vld [vmem:[%s3 + $0x1c8] sm:$0xff]
  %v7114 = vld [vmem:[%s3 + $0x1d0] sm:$0xff]
  %v7115 = vld [vmem:[%s3 + $0x1d8] sm:$0xff]
  %v7116 = vld [vmem:[%s3 + $0x1e0] sm:$0xff]
  %v7117 = vld [vmem:[%s3 + $0x1e8] sm:$0xff]
  %v7118 = vld [vmem:[%s3 + $0x1f0] sm:$0xff]
  %v7119 = vld [vmem:[%s3 + $0x1f8] sm:$0xff]
  %v7120 = vld [vmem:[%s3 + $0x200] sm:$0xff]
  %v7121 = vld [vmem:[%s3 + $0x208] sm:$0xff]
  %v7122 = vld [vmem:[%s3 + $0x210] sm:$0xff]
  %v7123 = vld [vmem:[%s3 + $0x218] sm:$0xff]
  %v7124 = vld [vmem:[%s3 + $0x220] sm:$0xff]
  %v7125 = vld [vmem:[%s3 + $0x228] sm:$0xff]
  %v7126 = vld [vmem:[%s3 + $0x230] sm:$0xff]
  %v7127 = vld [vmem:[%s3 + $0x238] sm:$0xff]
  %v7128 = vld [vmem:[%s3 + $0x240] sm:$0xff]
  %v7129 = vld [vmem:[%s3 + $0x248] sm:$0xff]
  %v7130 = vld [vmem:[%s3 + $0x250] sm:$0xff]
  %v7131 = vld [vmem:[%s3 + $0x258] sm:$0xff]
  %v7132 = vld [vmem:[%s3 + $0x260] sm:$0xff]
  %v7133 = vld [vmem:[%s3 + $0x268] sm:$0xff]
  %v7134 = vld [vmem:[%s3 + $0x270] sm:$0xff]
  %v7135 = vld [vmem:[%s3 + $0x278] sm:$0xff]
  %v7136 = vld [vmem:[%s3 + $0x280] sm:$0xff]
  %v7137 = vld [vmem:[%s3 + $0x288] sm:$0xff]
  %v7138 = vld [vmem:[%s3 + $0x290] sm:$0xff]
  %v7139 = vld [vmem:[%s3 + $0x298] sm:$0xff]
  %v7140 = vld [vmem:[%s3 + $0x2a0] sm:$0xff]
  %v7141 = vld [vmem:[%s3 + $0x2a8] sm:$0xff]
  %v7142 = vld [vmem:[%s3 + $0x2b0] sm:$0xff]
  %v7143 = vld [vmem:[%s3 + $0x2b8] sm:$0xff]
  %v7144 = vld [vmem:[%s3 + $0x2c0] sm:$0xff]
  %v7145 = vld [vmem:[%s3 + $0x2c8] sm:$0xff]
  %v7146 = vld [vmem:[%s3 + $0x2d0] sm:$0xff]
  %v7147 = vld [vmem:[%s3 + $0x2d8] sm:$0xff]
  %v7148 = vld [vmem:[%s3 + $0x2e0] sm:$0xff]
  %v7149 = vld [vmem:[%s3 + $0x2e8] sm:$0xff]
  %v7150 = vld [vmem:[%s3 + $0x2f0] sm:$0xff]
  %v7151 = vld [vmem:[%s3 + $0x2f8] sm:$0xff]
  %v7152 = vld [vmem:[%s3 + $0x300] sm:$0xff]
  %v7153 = vld [vmem:[%s3 + $0x308] sm:$0xff]
  %v7154 = vld [vmem:[%s3 + $0x310] sm:$0xff]
  %v7155 = vld [vmem:[%s3 + $0x318] sm:$0xff]
  %v7156 = vld [vmem:[%s3 + $0x320] sm:$0xff]
  %v7157 = vld [vmem:[%s3 + $0x328] sm:$0xff]
  %v7158 = vld [vmem:[%s3 + $0x330] sm:$0xff]
  %v7159 = vld [vmem:[%s3 + $0x338] sm:$0xff]
  %v7160 = vld [vmem:[%s3 + $0x340] sm:$0xff]
  %v7161 = vld [vmem:[%s3 + $0x348] sm:$0xff]
  %v7162 = vld [vmem:[%s3 + $0x350] sm:$0xff]
  %v7163 = vld [vmem:[%s3 + $0x358] sm:$0xff]
  %v7164 = vld [vmem:[%s3 + $0x360] sm:$0xff]
  %v7165 = vld [vmem:[%s3 + $0x368] sm:$0xff]
  %v7166 = vld [vmem:[%s3 + $0x370] sm:$0xff]
  %v7167 = vld [vmem:[%s3 + $0x378] sm:$0xff]
  %v7168 = vld [vmem:[%s3 + $0x380] sm:$0xff]
  %v7169 = vld [vmem:[%s3 + $0x388] sm:$0xff]
  %v7170 = vld [vmem:[%s3 + $0x390] sm:$0xff]
  %v7171 = vld [vmem:[%s3 + $0x398] sm:$0xff]
  %v7172 = vld [vmem:[%s3 + $0x3a0] sm:$0xff]
  %v7173 = vld [vmem:[%s3 + $0x3a8] sm:$0xff]
  %v7174 = vld [vmem:[%s3 + $0x3b0] sm:$0xff]
  %v7175 = vld [vmem:[%s3 + $0x3b8] sm:$0xff]
  %v7176 = vld [vmem:[%s3 + $0x3c0] sm:$0xff]
  %v7177 = vld [vmem:[%s3 + $0x3c8] sm:$0xff]
  %v7178 = vld [vmem:[%s3 + $0x3d0] sm:$0xff]
  %v7179 = vld [vmem:[%s3 + $0x3d8] sm:$0xff]
  %v7180 = vld [vmem:[%s3 + $0x3e0] sm:$0xff]
  %v7181 = vld [vmem:[%s3 + $0x3e8] sm:$0xff]
  %v7182 = vld [vmem:[%s3 + $0x3f0] sm:$0xff]
  %v7183 = vld [vmem:[%s3 + $0x3f8] sm:$0xff]
  %v7312 = vunpack.c.l.b16 %v7056
  %v7313 = vunpack.c.h.b16 %v7056
  %v7314 = vunpack.c.l.b16 %v7057
  %v7315 = vunpack.c.h.b16 %v7057
  %v7316 = vunpack.c.l.b16 %v7058
  %v7317 = vunpack.c.h.b16 %v7058
  %v7318 = vunpack.c.l.b16 %v7059
  %v7319 = vunpack.c.h.b16 %v7059
  %v7320 = vunpack.c.l.b16 %v7060
  %v7321 = vunpack.c.h.b16 %v7060
  %v7322 = vunpack.c.l.b16 %v7061
  %v7323 = vunpack.c.h.b16 %v7061
  %v7324 = vunpack.c.l.b16 %v7062
  %v7325 = vunpack.c.h.b16 %v7062
  %v7326 = vunpack.c.l.b16 %v7063
  %v7327 = vunpack.c.h.b16 %v7063
  %v7328 = vunpack.c.l.b16 %v7064
  %v7329 = vunpack.c.h.b16 %v7064
  %v7330 = vunpack.c.l.b16 %v7065
  %v7331 = vunpack.c.h.b16 %v7065
  %v7332 = vunpack.c.l.b16 %v7066
  %v7333 = vunpack.c.h.b16 %v7066
  %v7334 = vunpack.c.l.b16 %v7067
  %v7335 = vunpack.c.h.b16 %v7067
  %v7336 = vunpack.c.l.b16 %v7068
  %v7337 = vunpack.c.h.b16 %v7068
  %v7338 = vunpack.c.l.b16 %v7069
  %v7339 = vunpack.c.h.b16 %v7069
  %v7340 = vunpack.c.l.b16 %v7070
  %v7341 = vunpack.c.h.b16 %v7070
  %v7342 = vunpack.c.l.b16 %v7071
  %v7343 = vunpack.c.h.b16 %v7071
  %v7344 = vunpack.c.l.b16 %v7072
  %v7345 = vunpack.c.h.b16 %v7072
  %v7346 = vunpack.c.l.b16 %v7073
  %v7347 = vunpack.c.h.b16 %v7073
  %v7348 = vunpack.c.l.b16 %v7074
  %v7349 = vunpack.c.h.b16 %v7074
  %v7350 = vunpack.c.l.b16 %v7075
  %v7351 = vunpack.c.h.b16 %v7075
  %v7352 = vunpack.c.l.b16 %v7076
  %v7353 = vunpack.c.h.b16 %v7076
  %v7354 = vunpack.c.l.b16 %v7077
  %v7355 = vunpack.c.h.b16 %v7077
  %v7356 = vunpack.c.l.b16 %v7078
  %v7357 = vunpack.c.h.b16 %v7078
  %v7358 = vunpack.c.l.b16 %v7079
  %v7359 = vunpack.c.h.b16 %v7079
  %v7360 = vunpack.c.l.b16 %v7080
  %v7361 = vunpack.c.h.b16 %v7080
  %v7362 = vunpack.c.l.b16 %v7081
  %v7363 = vunpack.c.h.b16 %v7081
  %v7364 = vunpack.c.l.b16 %v7082
  %v7365 = vunpack.c.h.b16 %v7082
  %v7366 = vunpack.c.l.b16 %v7083
  %v7367 = vunpack.c.h.b16 %v7083
  %v7368 = vunpack.c.l.b16 %v7084
  %v7369 = vunpack.c.h.b16 %v7084
  %v7370 = vunpack.c.l.b16 %v7085
  %v7371 = vunpack.c.h.b16 %v7085
  %v7372 = vunpack.c.l.b16 %v7086
  %v7373 = vunpack.c.h.b16 %v7086
  %v7374 = vunpack.c.l.b16 %v7087
  %v7375 = vunpack.c.h.b16 %v7087
  %v7376 = vunpack.c.l.b16 %v7088
  %v7377 = vunpack.c.h.b16 %v7088
  %v7378 = vunpack.c.l.b16 %v7089
  %v7379 = vunpack.c.h.b16 %v7089
  %v7380 = vunpack.c.l.b16 %v7090
  %v7381 = vunpack.c.h.b16 %v7090
  %v7382 = vunpack.c.l.b16 %v7091
  %v7383 = vunpack.c.h.b16 %v7091
  %v7384 = vunpack.c.l.b16 %v7092
  %v7385 = vunpack.c.h.b16 %v7092
  %v7386 = vunpack.c.l.b16 %v7093
  %v7387 = vunpack.c.h.b16 %v7093
  %v7388 = vunpack.c.l.b16 %v7094
  %v7389 = vunpack.c.h.b16 %v7094
  %v7390 = vunpack.c.l.b16 %v7095
  %v7391 = vunpack.c.h.b16 %v7095
  %v7392 = vunpack.c.l.b16 %v7096
  %v7393 = vunpack.c.h.b16 %v7096
  %v7394 = vunpack.c.l.b16 %v7097
  %v7395 = vunpack.c.h.b16 %v7097
  %v7396 = vunpack.c.l.b16 %v7098
  %v7397 = vunpack.c.h.b16 %v7098
  %v7398 = vunpack.c.l.b16 %v7099
  %v7399 = vunpack.c.h.b16 %v7099
  %v7400 = vunpack.c.l.b16 %v7100
  %v7401 = vunpack.c.h.b16 %v7100
  %v7402 = vunpack.c.l.b16 %v7101
  %v7403 = vunpack.c.h.b16 %v7101
  %v7404 = vunpack.c.l.b16 %v7102
  %v7405 = vunpack.c.h.b16 %v7102
  %v7406 = vunpack.c.l.b16 %v7103
  %v7407 = vunpack.c.h.b16 %v7103
  %v7408 = vunpack.c.l.b16 %v7104
  %v7409 = vunpack.c.h.b16 %v7104
  %v7410 = vunpack.c.l.b16 %v7105
  %v7411 = vunpack.c.h.b16 %v7105
  %v7412 = vunpack.c.l.b16 %v7106
  %v7413 = vunpack.c.h.b16 %v7106
  %v7414 = vunpack.c.l.b16 %v7107
  %v7415 = vunpack.c.h.b16 %v7107
  %v7416 = vunpack.c.l.b16 %v7108
  %v7417 = vunpack.c.h.b16 %v7108
  %v7418 = vunpack.c.l.b16 %v7109
  %v7419 = vunpack.c.h.b16 %v7109
  %v7420 = vunpack.c.l.b16 %v7110
  %v7421 = vunpack.c.h.b16 %v7110
  %v7422 = vunpack.c.l.b16 %v7111
  %v7423 = vunpack.c.h.b16 %v7111
  %v7424 = vunpack.c.l.b16 %v7112
  %v7425 = vunpack.c.h.b16 %v7112
  %v7426 = vunpack.c.l.b16 %v7113
  %v7427 = vunpack.c.h.b16 %v7113
  %v7428 = vunpack.c.l.b16 %v7114
  %v7429 = vunpack.c.h.b16 %v7114
  %v7430 = vunpack.c.l.b16 %v7115
  %v7431 = vunpack.c.h.b16 %v7115
  %v7432 = vunpack.c.l.b16 %v7116
  %v7433 = vunpack.c.h.b16 %v7116
  %v7434 = vunpack.c.l.b16 %v7117
  %v7435 = vunpack.c.h.b16 %v7117
  %v7436 = vunpack.c.l.b16 %v7118
  %v7437 = vunpack.c.h.b16 %v7118
  %v7438 = vunpack.c.l.b16 %v7119
  %v7439 = vunpack.c.h.b16 %v7119
  %v7440 = vunpack.c.l.b16 %v7120
  %v7441 = vunpack.c.h.b16 %v7120
  %v7442 = vunpack.c.l.b16 %v7121
  %v7443 = vunpack.c.h.b16 %v7121
  %v7444 = vunpack.c.l.b16 %v7122
  %v7445 = vunpack.c.h.b16 %v7122
  %v7446 = vunpack.c.l.b16 %v7123
  %v7447 = vunpack.c.h.b16 %v7123
  %v7448 = vunpack.c.l.b16 %v7124
  %v7449 = vunpack.c.h.b16 %v7124
  %v7450 = vunpack.c.l.b16 %v7125
  %v7451 = vunpack.c.h.b16 %v7125
  %v7452 = vunpack.c.l.b16 %v7126
  %v7453 = vunpack.c.h.b16 %v7126
  %v7454 = vunpack.c.l.b16 %v7127
  %v7455 = vunpack.c.h.b16 %v7127
  %v7456 = vunpack.c.l.b16 %v7128
  %v7457 = vunpack.c.h.b16 %v7128
  %v7458 = vunpack.c.l.b16 %v7129
  %v7459 = vunpack.c.h.b16 %v7129
  %v7460 = vunpack.c.l.b16 %v7130
  %v7461 = vunpack.c.h.b16 %v7130
  %v7462 = vunpack.c.l.b16 %v7131
  %v7463 = vunpack.c.h.b16 %v7131
  %v7464 = vunpack.c.l.b16 %v7132
  %v7465 = vunpack.c.h.b16 %v7132
  %v7466 = vunpack.c.l.b16 %v7133
  %v7467 = vunpack.c.h.b16 %v7133
  %v7468 = vunpack.c.l.b16 %v7134
  %v7469 = vunpack.c.h.b16 %v7134
  %v7470 = vunpack.c.l.b16 %v7135
  %v7471 = vunpack.c.h.b16 %v7135
  %v7472 = vunpack.c.l.b16 %v7136
  %v7473 = vunpack.c.h.b16 %v7136
  %v7474 = vunpack.c.l.b16 %v7137
  %v7475 = vunpack.c.h.b16 %v7137
  %v7476 = vunpack.c.l.b16 %v7138
  %v7477 = vunpack.c.h.b16 %v7138
  %v7478 = vunpack.c.l.b16 %v7139
  %v7479 = vunpack.c.h.b16 %v7139
  %v7480 = vunpack.c.l.b16 %v7140
  %v7481 = vunpack.c.h.b16 %v7140
  %v7482 = vunpack.c.l.b16 %v7141
  %v7483 = vunpack.c.h.b16 %v7141
  %v7484 = vunpack.c.l.b16 %v7142
  %v7485 = vunpack.c.h.b16 %v7142
  %v7486 = vunpack.c.l.b16 %v7143
  %v7487 = vunpack.c.h.b16 %v7143
  %v7488 = vunpack.c.l.b16 %v7144
  %v7489 = vunpack.c.h.b16 %v7144
  %v7490 = vunpack.c.l.b16 %v7145
  %v7491 = vunpack.c.h.b16 %v7145
  %v7492 = vunpack.c.l.b16 %v7146
  %v7493 = vunpack.c.h.b16 %v7146
  %v7494 = vunpack.c.l.b16 %v7147
  %v7495 = vunpack.c.h.b16 %v7147
  %v7496 = vunpack.c.l.b16 %v7148
  %v7497 = vunpack.c.h.b16 %v7148
  %v7498 = vunpack.c.l.b16 %v7149
  %v7499 = vunpack.c.h.b16 %v7149
  %v7500 = vunpack.c.l.b16 %v7150
  %v7501 = vunpack.c.h.b16 %v7150
  %v7502 = vunpack.c.l.b16 %v7151
  %v7503 = vunpack.c.h.b16 %v7151
  %v7504 = vunpack.c.l.b16 %v7152
  %v7505 = vunpack.c.h.b16 %v7152
  %v7506 = vunpack.c.l.b16 %v7153
  %v7507 = vunpack.c.h.b16 %v7153
  %v7508 = vunpack.c.l.b16 %v7154
  %v7509 = vunpack.c.h.b16 %v7154
  %v7510 = vunpack.c.l.b16 %v7155
  %v7511 = vunpack.c.h.b16 %v7155
  %v7512 = vunpack.c.l.b16 %v7156
  %v7513 = vunpack.c.h.b16 %v7156
  %v7514 = vunpack.c.l.b16 %v7157
  %v7515 = vunpack.c.h.b16 %v7157
  %v7516 = vunpack.c.l.b16 %v7158
  %v7517 = vunpack.c.h.b16 %v7158
  %v7518 = vunpack.c.l.b16 %v7159
  %v7519 = vunpack.c.h.b16 %v7159
  %v7520 = vunpack.c.l.b16 %v7160
  %v7521 = vunpack.c.h.b16 %v7160
  %v7522 = vunpack.c.l.b16 %v7161
  %v7523 = vunpack.c.h.b16 %v7161
  %v7524 = vunpack.c.l.b16 %v7162
  %v7525 = vunpack.c.h.b16 %v7162
  %v7526 = vunpack.c.l.b16 %v7163
  %v7527 = vunpack.c.h.b16 %v7163
  %v7528 = vunpack.c.l.b16 %v7164
  %v7529 = vunpack.c.h.b16 %v7164
  %v7530 = vunpack.c.l.b16 %v7165
  %v7531 = vunpack.c.h.b16 %v7165
  %v7532 = vunpack.c.l.b16 %v7166
  %v7533 = vunpack.c.h.b16 %v7166
  %v7534 = vunpack.c.l.b16 %v7167
  %v7535 = vunpack.c.h.b16 %v7167
  %v7536 = vunpack.c.l.b16 %v7168
  %v7537 = vunpack.c.h.b16 %v7168
  %v7538 = vunpack.c.l.b16 %v7169
  %v7539 = vunpack.c.h.b16 %v7169
  %v7540 = vunpack.c.l.b16 %v7170
  %v7541 = vunpack.c.h.b16 %v7170
  %v7542 = vunpack.c.l.b16 %v7171
  %v7543 = vunpack.c.h.b16 %v7171
  %v7544 = vunpack.c.l.b16 %v7172
  %v7545 = vunpack.c.h.b16 %v7172
  %v7546 = vunpack.c.l.b16 %v7173
  %v7547 = vunpack.c.h.b16 %v7173
  %v7548 = vunpack.c.l.b16 %v7174
  %v7549 = vunpack.c.h.b16 %v7174
  %v7550 = vunpack.c.l.b16 %v7175
  %v7551 = vunpack.c.h.b16 %v7175
  %v7552 = vunpack.c.l.b16 %v7176
  %v7553 = vunpack.c.h.b16 %v7176
  %v7554 = vunpack.c.l.b16 %v7177
  %v7555 = vunpack.c.h.b16 %v7177
  %v7556 = vunpack.c.l.b16 %v7178
  %v7557 = vunpack.c.h.b16 %v7178
  %v7558 = vunpack.c.l.b16 %v7179
  %v7559 = vunpack.c.h.b16 %v7179
  %v7560 = vunpack.c.l.b16 %v7180
  %v7561 = vunpack.c.h.b16 %v7180
  %v7562 = vunpack.c.l.b16 %v7181
  %v7563 = vunpack.c.h.b16 %v7181
  %v7564 = vunpack.c.l.b16 %v7182
  %v7565 = vunpack.c.h.b16 %v7182
  %v7566 = vunpack.c.l.b16 %v7183
  %v7567 = vunpack.c.h.b16 %v7183
  %v7568 = vpack.c.b16 %v7320, %v7312
  %v7569 = vpack.c.b16 %v7321, %v7313
  %v7570 = vpack.c.b16 %v7322, %v7314
  %v7571 = vpack.c.b16 %v7323, %v7315
  %v7572 = vpack.c.b16 %v7324, %v7316
  %v7573 = vpack.c.b16 %v7325, %v7317
  %v7574 = vpack.c.b16 %v7326, %v7318
  %v7575 = vpack.c.b16 %v7327, %v7319
  %v7576 = vpack.c.b16 %v7336, %v7328
  %v7577 = vpack.c.b16 %v7337, %v7329
  %v7578 = vpack.c.b16 %v7338, %v7330
  %v7579 = vpack.c.b16 %v7339, %v7331
  %v7580 = vpack.c.b16 %v7340, %v7332
  %v7581 = vpack.c.b16 %v7341, %v7333
  %v7582 = vpack.c.b16 %v7342, %v7334
  %v7583 = vpack.c.b16 %v7343, %v7335
  %v7584 = vpack.c.b16 %v7352, %v7344
  %v7585 = vpack.c.b16 %v7353, %v7345
  %v7586 = vpack.c.b16 %v7354, %v7346
  %v7587 = vpack.c.b16 %v7355, %v7347
  %v7588 = vpack.c.b16 %v7356, %v7348
  %v7589 = vpack.c.b16 %v7357, %v7349
  %v7590 = vpack.c.b16 %v7358, %v7350
  %v7591 = vpack.c.b16 %v7359, %v7351
  %v7592 = vpack.c.b16 %v7368, %v7360
  %v7593 = vpack.c.b16 %v7369, %v7361
  %v7594 = vpack.c.b16 %v7370, %v7362
  %v7595 = vpack.c.b16 %v7371, %v7363
  %v7596 = vpack.c.b16 %v7372, %v7364
  %v7597 = vpack.c.b16 %v7373, %v7365
  %v7598 = vpack.c.b16 %v7374, %v7366
  %v7599 = vpack.c.b16 %v7375, %v7367
  %v7600 = vpack.c.b16 %v7384, %v7376
  %v7601 = vpack.c.b16 %v7385, %v7377
  %v7602 = vpack.c.b16 %v7386, %v7378
  %v7603 = vpack.c.b16 %v7387, %v7379
  %v7604 = vpack.c.b16 %v7388, %v7380
  %v7605 = vpack.c.b16 %v7389, %v7381
  %v7606 = vpack.c.b16 %v7390, %v7382
  %v7607 = vpack.c.b16 %v7391, %v7383
  %v7608 = vpack.c.b16 %v7400, %v7392
  %v7609 = vpack.c.b16 %v7401, %v7393
  %v7610 = vpack.c.b16 %v7402, %v7394
  %v7611 = vpack.c.b16 %v7403, %v7395
  %v7612 = vpack.c.b16 %v7404, %v7396
  %v7613 = vpack.c.b16 %v7405, %v7397
  %v7614 = vpack.c.b16 %v7406, %v7398
  %v7615 = vpack.c.b16 %v7407, %v7399
  %v7616 = vpack.c.b16 %v7416, %v7408
  %v7617 = vpack.c.b16 %v7417, %v7409
  %v7618 = vpack.c.b16 %v7418, %v7410
  %v7619 = vpack.c.b16 %v7419, %v7411
  %v7620 = vpack.c.b16 %v7420, %v7412
  %v7621 = vpack.c.b16 %v7421, %v7413
  %v7622 = vpack.c.b16 %v7422, %v7414
  %v7623 = vpack.c.b16 %v7423, %v7415
  %v7624 = vpack.c.b16 %v7432, %v7424
  %v7625 = vpack.c.b16 %v7433, %v7425
  %v7626 = vpack.c.b16 %v7434, %v7426
  %v7627 = vpack.c.b16 %v7435, %v7427
  %v7628 = vpack.c.b16 %v7436, %v7428
  %v7629 = vpack.c.b16 %v7437, %v7429
  %v7630 = vpack.c.b16 %v7438, %v7430
  %v7631 = vpack.c.b16 %v7439, %v7431
  %v7632 = vpack.c.b16 %v7448, %v7440
  %v7633 = vpack.c.b16 %v7449, %v7441
  %v7634 = vpack.c.b16 %v7450, %v7442
  %v7635 = vpack.c.b16 %v7451, %v7443
  %v7636 = vpack.c.b16 %v7452, %v7444
  %v7637 = vpack.c.b16 %v7453, %v7445
  %v7638 = vpack.c.b16 %v7454, %v7446
  %v7639 = vpack.c.b16 %v7455, %v7447
  %v7640 = vpack.c.b16 %v7464, %v7456
  %v7641 = vpack.c.b16 %v7465, %v7457
  %v7642 = vpack.c.b16 %v7466, %v7458
  %v7643 = vpack.c.b16 %v7467, %v7459
  %v7644 = vpack.c.b16 %v7468, %v7460
  %v7645 = vpack.c.b16 %v7469, %v7461
  %v7646 = vpack.c.b16 %v7470, %v7462
  %v7647 = vpack.c.b16 %v7471, %v7463
  %v7648 = vpack.c.b16 %v7480, %v7472
  %v7649 = vpack.c.b16 %v7481, %v7473
  %v7650 = vpack.c.b16 %v7482, %v7474
  %v7651 = vpack.c.b16 %v7483, %v7475
  %v7652 = vpack.c.b16 %v7484, %v7476
  %v7653 = vpack.c.b16 %v7485, %v7477
  %v7654 = vpack.c.b16 %v7486, %v7478
  %v7655 = vpack.c.b16 %v7487, %v7479
  %v7656 = vpack.c.b16 %v7496, %v7488
  %v7657 = vpack.c.b16 %v7497, %v7489
  %v7658 = vpack.c.b16 %v7498, %v7490
  %v7659 = vpack.c.b16 %v7499, %v7491
  %v7660 = vpack.c.b16 %v7500, %v7492
  %v7661 = vpack.c.b16 %v7501, %v7493
  %v7662 = vpack.c.b16 %v7502, %v7494
  %v7663 = vpack.c.b16 %v7503, %v7495
  %v7664 = vpack.c.b16 %v7512, %v7504
  %v7665 = vpack.c.b16 %v7513, %v7505
  %v7666 = vpack.c.b16 %v7514, %v7506
  %v7667 = vpack.c.b16 %v7515, %v7507
  %v7668 = vpack.c.b16 %v7516, %v7508
  %v7669 = vpack.c.b16 %v7517, %v7509
  %v7670 = vpack.c.b16 %v7518, %v7510
  %v7671 = vpack.c.b16 %v7519, %v7511
  %v7672 = vpack.c.b16 %v7528, %v7520
  %v7673 = vpack.c.b16 %v7529, %v7521
  %v7674 = vpack.c.b16 %v7530, %v7522
  %v7675 = vpack.c.b16 %v7531, %v7523
  %v7676 = vpack.c.b16 %v7532, %v7524
  %v7677 = vpack.c.b16 %v7533, %v7525
  %v7678 = vpack.c.b16 %v7534, %v7526
  %v7679 = vpack.c.b16 %v7535, %v7527
  %v7680 = vpack.c.b16 %v7544, %v7536
  %v7681 = vpack.c.b16 %v7545, %v7537
  %v7682 = vpack.c.b16 %v7546, %v7538
  %v7683 = vpack.c.b16 %v7547, %v7539
  %v7684 = vpack.c.b16 %v7548, %v7540
  %v7685 = vpack.c.b16 %v7549, %v7541
  %v7686 = vpack.c.b16 %v7550, %v7542
  %v7687 = vpack.c.b16 %v7551, %v7543
  %v7688 = vpack.c.b16 %v7560, %v7552
  %v7689 = vpack.c.b16 %v7561, %v7553
  %v7690 = vpack.c.b16 %v7562, %v7554
  %v7691 = vpack.c.b16 %v7563, %v7555
  %v7692 = vpack.c.b16 %v7564, %v7556
  %v7693 = vpack.c.b16 %v7565, %v7557
  %v7694 = vpack.c.b16 %v7566, %v7558
  %v7695 = vpack.c.b16 %v7567, %v7559
  %7824 = vmatpush.bf16.msra.mxu0 %v7624
  %7825 = vmatpush.bf16.msra.mxu0 %v7616
  %7826 = vmatpush.bf16.msra.mxu0 %v7608
  %7827 = vmatpush.bf16.msra.mxu0 %v7600
  %7828 = vmatpush.bf16.msra.mxu0 %v7592
  %7829 = vmatpush.bf16.msra.mxu0 %v7584
  %7830 = vmatpush.bf16.msra.mxu0 %v7576
  %7831 = vmatpush.bf16.msra.mxu0 %v7568
  %7832 = vmatmul.bf16.gmra.mxu0 %v7054
  %v7833 = vpop.f32.mrf.mxu0
  %v7834 = vadd.f32 0.0, %v7833
  %v7835 = vpop.f32.mrf.mxu0
  %7836 = vdwg.mxu0
  %7837 = vmatpush.bf16.msra.mxu0 %v7688
  %7838 = vmatpush.bf16.msra.mxu0 %v7680
  %7839 = vmatpush.bf16.msra.mxu0 %v7672
  %7840 = vmatpush.bf16.msra.mxu0 %v7664
  %7841 = vmatpush.bf16.msra.mxu0 %v7656
  %7842 = vmatpush.bf16.msra.mxu0 %v7648
  %7843 = vmatpush.bf16.msra.mxu0 %v7640
  %7844 = vmatpush.bf16.msra.mxu0 %v7632
  %7845 = vmatmul.bf16.gmra.mxu0 %v7055
  %v7846 = vpop.f32.mrf.mxu0
  %v7847 = vadd.f32 %v7834, %v7846
  %v7848 = vpop.f32.mrf.mxu0
  %7849 = vdwg.mxu0
  %7850 = vmatpush.bf16.msra.mxu0 %v7625
  %7851 = vmatpush.bf16.msra.mxu0 %v7617
  %7852 = vmatpush.bf16.msra.mxu0 %v7609
  %7853 = vmatpush.bf16.msra.mxu0 %v7601
  %7854 = vmatpush.bf16.msra.mxu0 %v7593
  %7855 = vmatpush.bf16.msra.mxu0 %v7585
  %7856 = vmatpush.bf16.msra.mxu0 %v7577
  %7857 = vmatpush.bf16.msra.mxu0 %v7569
  %7858 = vmatmul.bf16.gmra.mxu0 %v7054
  %v7859 = vpop.f32.mrf.mxu0
  %v7860 = vadd.f32 0.0, %v7859
  %v7861 = vpop.f32.mrf.mxu0
  %7862 = vdwg.mxu0
  %7863 = vmatpush.bf16.msra.mxu0 %v7689
  %7864 = vmatpush.bf16.msra.mxu0 %v7681
  %7865 = vmatpush.bf16.msra.mxu0 %v7673
  %7866 = vmatpush.bf16.msra.mxu0 %v7665
  %7867 = vmatpush.bf16.msra.mxu0 %v7657
  %7868 = vmatpush.bf16.msra.mxu0 %v7649
  %7869 = vmatpush.bf16.msra.mxu0 %v7641
  %7870 = vmatpush.bf16.msra.mxu0 %v7633
  %7871 = vmatmul.bf16.gmra.mxu0 %v7055
  %v7872 = vpop.f32.mrf.mxu0
  %v7873 = vadd.f32 %v7860, %v7872
  %v7874 = vpop.f32.mrf.mxu0
  %7875 = vdwg.mxu0
  %7876 = vmatpush.bf16.msra.mxu0 %v7626
  %7877 = vmatpush.bf16.msra.mxu0 %v7618
  %7878 = vmatpush.bf16.msra.mxu0 %v7610
  %7879 = vmatpush.bf16.msra.mxu0 %v7602
  %7880 = vmatpush.bf16.msra.mxu0 %v7594
  %7881 = vmatpush.bf16.msra.mxu0 %v7586
  %7882 = vmatpush.bf16.msra.mxu0 %v7578
  %7883 = vmatpush.bf16.msra.mxu0 %v7570
  %7884 = vmatmul.bf16.gmra.mxu0 %v7054
  %v7885 = vpop.f32.mrf.mxu0
  %v7886 = vadd.f32 0.0, %v7885
  %v7887 = vpop.f32.mrf.mxu0
  %7888 = vdwg.mxu0
  %7889 = vmatpush.bf16.msra.mxu0 %v7690
  %7890 = vmatpush.bf16.msra.mxu0 %v7682
  %7891 = vmatpush.bf16.msra.mxu0 %v7674
  %7892 = vmatpush.bf16.msra.mxu0 %v7666
  %7893 = vmatpush.bf16.msra.mxu0 %v7658
  %7894 = vmatpush.bf16.msra.mxu0 %v7650
  %7895 = vmatpush.bf16.msra.mxu0 %v7642
  %7896 = vmatpush.bf16.msra.mxu0 %v7634
  %7897 = vmatmul.bf16.gmra.mxu0 %v7055
  %v7898 = vpop.f32.mrf.mxu0
  %v7899 = vadd.f32 %v7886, %v7898
  %v7900 = vpop.f32.mrf.mxu0
  %7901 = vdwg.mxu0
  %7902 = vmatpush.bf16.msra.mxu0 %v7627
  %7903 = vmatpush.bf16.msra.mxu0 %v7619
  %7904 = vmatpush.bf16.msra.mxu0 %v7611
  %7905 = vmatpush.bf16.msra.mxu0 %v7603
  %7906 = vmatpush.bf16.msra.mxu0 %v7595
  %7907 = vmatpush.bf16.msra.mxu0 %v7587
  %7908 = vmatpush.bf16.msra.mxu0 %v7579
  %7909 = vmatpush.bf16.msra.mxu0 %v7571
  %7910 = vmatmul.bf16.gmra.mxu0 %v7054
  %v7911 = vpop.f32.mrf.mxu0
  %v7912 = vadd.f32 0.0, %v7911
  %v7913 = vpop.f32.mrf.mxu0
  %7914 = vdwg.mxu0
  %7915 = vmatpush.bf16.msra.mxu0 %v7691
  %7916 = vmatpush.bf16.msra.mxu0 %v7683
  %7917 = vmatpush.bf16.msra.mxu0 %v7675
  %7918 = vmatpush.bf16.msra.mxu0 %v7667
  %7919 = vmatpush.bf16.msra.mxu0 %v7659
  %7920 = vmatpush.bf16.msra.mxu0 %v7651
  %7921 = vmatpush.bf16.msra.mxu0 %v7643
  %7922 = vmatpush.bf16.msra.mxu0 %v7635
  %7923 = vmatmul.bf16.gmra.mxu0 %v7055
  %v7924 = vpop.f32.mrf.mxu0
  %v7925 = vadd.f32 %v7912, %v7924
  %v7926 = vpop.f32.mrf.mxu0
  %7927 = vdwg.mxu0
  %7928 = vmatpush.bf16.msra.mxu0 %v7628
  %7929 = vmatpush.bf16.msra.mxu0 %v7620
  %7930 = vmatpush.bf16.msra.mxu0 %v7612
  %7931 = vmatpush.bf16.msra.mxu0 %v7604
  %7932 = vmatpush.bf16.msra.mxu0 %v7596
  %7933 = vmatpush.bf16.msra.mxu0 %v7588
  %7934 = vmatpush.bf16.msra.mxu0 %v7580
  %7935 = vmatpush.bf16.msra.mxu0 %v7572
  %7936 = vmatmul.bf16.gmra.mxu0 %v7054
  %v7937 = vpop.f32.mrf.mxu0
  %v7938 = vadd.f32 0.0, %v7937
  %v7939 = vpop.f32.mrf.mxu0
  %7940 = vdwg.mxu0
  %7941 = vmatpush.bf16.msra.mxu0 %v7692
  %7942 = vmatpush.bf16.msra.mxu0 %v7684
  %7943 = vmatpush.bf16.msra.mxu0 %v7676
  %7944 = vmatpush.bf16.msra.mxu0 %v7668
  %7945 = vmatpush.bf16.msra.mxu0 %v7660
  %7946 = vmatpush.bf16.msra.mxu0 %v7652
  %7947 = vmatpush.bf16.msra.mxu0 %v7644
  %7948 = vmatpush.bf16.msra.mxu0 %v7636
  %7949 = vmatmul.bf16.gmra.mxu0 %v7055
  %v7950 = vpop.f32.mrf.mxu0
  %v7951 = vadd.f32 %v7938, %v7950
  %v7952 = vpop.f32.mrf.mxu0
  %7953 = vdwg.mxu0
  %7954 = vmatpush.bf16.msra.mxu0 %v7629
  %7955 = vmatpush.bf16.msra.mxu0 %v7621
  %7956 = vmatpush.bf16.msra.mxu0 %v7613
  %7957 = vmatpush.bf16.msra.mxu0 %v7605
  %7958 = vmatpush.bf16.msra.mxu0 %v7597
  %7959 = vmatpush.bf16.msra.mxu0 %v7589
  %7960 = vmatpush.bf16.msra.mxu0 %v7581
  %7961 = vmatpush.bf16.msra.mxu0 %v7573
  %7962 = vmatmul.bf16.gmra.mxu0 %v7054
  %v7963 = vpop.f32.mrf.mxu0
  %v7964 = vadd.f32 0.0, %v7963
  %v7965 = vpop.f32.mrf.mxu0
  %7966 = vdwg.mxu0
  %7967 = vmatpush.bf16.msra.mxu0 %v7693
  %7968 = vmatpush.bf16.msra.mxu0 %v7685
  %7969 = vmatpush.bf16.msra.mxu0 %v7677
  %7970 = vmatpush.bf16.msra.mxu0 %v7669
  %7971 = vmatpush.bf16.msra.mxu0 %v7661
  %7972 = vmatpush.bf16.msra.mxu0 %v7653
  %7973 = vmatpush.bf16.msra.mxu0 %v7645
  %7974 = vmatpush.bf16.msra.mxu0 %v7637
  %7975 = vmatmul.bf16.gmra.mxu0 %v7055
  %v7976 = vpop.f32.mrf.mxu0
  %v7977 = vadd.f32 %v7964, %v7976
  %v7978 = vpop.f32.mrf.mxu0
  %7979 = vdwg.mxu0
  %7980 = vmatpush.bf16.msra.mxu0 %v7630
  %7981 = vmatpush.bf16.msra.mxu0 %v7622
  %7982 = vmatpush.bf16.msra.mxu0 %v7614
  %7983 = vmatpush.bf16.msra.mxu0 %v7606
  %7984 = vmatpush.bf16.msra.mxu0 %v7598
  %7985 = vmatpush.bf16.msra.mxu0 %v7590
  %7986 = vmatpush.bf16.msra.mxu0 %v7582
  %7987 = vmatpush.bf16.msra.mxu0 %v7574
  %7988 = vmatmul.bf16.gmra.mxu0 %v7054
  %v7989 = vpop.f32.mrf.mxu0
  %v7990 = vadd.f32 0.0, %v7989
  %v7991 = vpop.f32.mrf.mxu0
  %7992 = vdwg.mxu0
  %7993 = vmatpush.bf16.msra.mxu0 %v7694
  %7994 = vmatpush.bf16.msra.mxu0 %v7686
  %7995 = vmatpush.bf16.msra.mxu0 %v7678
  %7996 = vmatpush.bf16.msra.mxu0 %v7670
  %7997 = vmatpush.bf16.msra.mxu0 %v7662
  %7998 = vmatpush.bf16.msra.mxu0 %v7654
  %7999 = vmatpush.bf16.msra.mxu0 %v7646
  %8000 = vmatpush.bf16.msra.mxu0 %v7638
  %8001 = vmatmul.bf16.gmra.mxu0 %v7055
  %v8002 = vpop.f32.mrf.mxu0
  %v8003 = vadd.f32 %v7990, %v8002
  %v8004 = vpop.f32.mrf.mxu0
  %8005 = vdwg.mxu0
  %8006 = vmatpush.bf16.msra.mxu0 %v7631
  %8007 = vmatpush.bf16.msra.mxu0 %v7623
  %8008 = vmatpush.bf16.msra.mxu0 %v7615
  %8009 = vmatpush.bf16.msra.mxu0 %v7607
  %8010 = vmatpush.bf16.msra.mxu0 %v7599
  %8011 = vmatpush.bf16.msra.mxu0 %v7591
  %8012 = vmatpush.bf16.msra.mxu0 %v7583
  %8013 = vmatpush.bf16.msra.mxu0 %v7575
  %8014 = vmatmul.bf16.gmra.mxu0 %v7054
  %v8015 = vpop.f32.mrf.mxu0
  %v8016 = vadd.f32 0.0, %v8015
  %v8017 = vpop.f32.mrf.mxu0
  %8018 = vdwg.mxu0
  %8019 = vmatpush.bf16.msra.mxu0 %v7695
  %8020 = vmatpush.bf16.msra.mxu0 %v7687
  %8021 = vmatpush.bf16.msra.mxu0 %v7679
  %8022 = vmatpush.bf16.msra.mxu0 %v7671
  %8023 = vmatpush.bf16.msra.mxu0 %v7663
  %8024 = vmatpush.bf16.msra.mxu0 %v7655
  %8025 = vmatpush.bf16.msra.mxu0 %v7647
  %8026 = vmatpush.bf16.msra.mxu0 %v7639
  %8027 = vmatmul.bf16.gmra.mxu0 %v7055
  %v8028 = vpop.f32.mrf.mxu0
  %v8029 = vadd.f32 %v8016, %v8028
  %v8030 = vpop.f32.mrf.mxu0
  %8031 = vdwg.mxu0
  %v8032 = vadd.f32 %v7046, %v7847
  %v8033 = vadd.f32 %v7047, %v7873
  %v8034 = vadd.f32 %v7048, %v7899
  %v8035 = vadd.f32 %v7049, %v7925
  %v8036 = vadd.f32 %v7050, %v7951
  %v8037 = vadd.f32 %v7051, %v7977
  %v8038 = vadd.f32 %v7052, %v8003
  %v8039 = vadd.f32 %v7053, %v8029
  %v8040 = vmul.f32 %v8032, 0.5
  %v8041 = vtanh.pop %v8040
  %v8042 = vmul.f32 %v8041, 0.5
  %v8043 = vadd.f32 %v8042, 0.5
  %v8044 = vmul.f32 %v8033, 0.5
  %v8045 = vtanh.pop %v8044
  %v8046 = vmul.f32 %v8045, 0.5
  %v8047 = vadd.f32 %v8046, 0.5
  %v8048 = vtanh.pop %v8034
  %v8049 = vmul.f32 %v8035, 0.5
  %v8050 = vtanh.pop %v8049
  %v8051 = vmul.f32 %v8050, 0.5
  %v8052 = vadd.f32 %v8051, 0.5
  %v8053 = vmul.f32 %v8047, %v7013
  %v8054 = vmul.f32 %v8043, %v8048
  %v8055 = vadd.f32 %v8053, %v8054
  %v8056 = vtanh.pop %v8055
  %v8057 = vmul.f32 %v8052, %v8056
  %v8058 = vmul.f32 %v8036, 0.5
  %v8059 = vtanh.pop %v8058
  %v8060 = vmul.f32 %v8059, 0.5
  %v8061 = vadd.f32 %v8060, 0.5
  %v8062 = vmul.f32 %v8037, 0.5
  %v8063 = vtanh.pop %v8062
  %v8064 = vmul.f32 %v8063, 0.5
  %v8065 = vadd.f32 %v8064, 0.5
  %v8066 = vtanh.pop %v8038
  %v8067 = vmul.f32 %v8039, 0.5
  %v8068 = vtanh.pop %v8067
  %v8069 = vmul.f32 %v8068, 0.5
  %v8070 = vadd.f32 %v8069, 0.5
  %v8071 = vmul.f32 %v8065, %v7031
  %v8072 = vmul.f32 %v8061, %v8066
  %v8073 = vadd.f32 %v8071, %v8072
  %v8074 = vtanh.pop %v8073
  %v8075 = vmul.f32 %v8070, %v8074
  %v8076 = vld [vmem:[#allocation3] sm:$0xff]
  %v8077 = vadd.f32 %v8076, %v8057
  %8078 = vst [vmem:[#allocation3] sm:$0xff] %v8077
  %v8079 = vld [vmem:[#allocation3 + $0x8] sm:$0xff]
  %v8080 = vadd.f32 %v8079, %v8075
  %8081 = vst [vmem:[#allocation3 + $0x8] sm:$0xff] %v8080
  %v8082 = vld [vmem:[#allocation3 + $0x10] sm:$0xff]
  %v8083 = vmax.f32 %v8082, %v8057
  %8084 = vst [vmem:[#allocation3 + $0x10] sm:$0xff] %v8083
  %v8085 = vld [vmem:[#allocation3 + $0x18] sm:$0xff]
  %v8086 = vmax.f32 %v8085, %v8075
  %8087 = vst [vmem:[#allocation3 + $0x18] sm:$0xff] %v8086
  %v8088 = vld [vmem:[%s2877] sm:$0xff]
  %v8089 = vld [vmem:[%s2877 + $0x8] sm:$0xff]
  %v8090 = vld [vmem:[%s2877 + $0x10] sm:$0xff]
  %v8091 = vld [vmem:[%s2877 + $0x18] sm:$0xff]
  %v8092 = vld [vmem:[%s2872 + $0x20] sm:$0xff]
  %v8093 = vld [vmem:[%s2872 + $0x28] sm:$0xff]
  %v8094 = vld [vmem:[%s2872 + $0x30] sm:$0xff]
  %v8095 = vld [vmem:[%s2872 + $0x38] sm:$0xff]
  %v8096 = vpack.c.bf16 %v8057, %v8057
  %v8097 = vpack.c.bf16 %v8075, %v8075
  %v8098 = vld [vmem:[%s3] sm:$0xff]
  %v8099 = vld [vmem:[%s3 + $0x8] sm:$0xff]
  %v8100 = vld [vmem:[%s3 + $0x10] sm:$0xff]
  %v8101 = vld [vmem:[%s3 + $0x18] sm:$0xff]
  %v8102 = vld [vmem:[%s3 + $0x20] sm:$0xff]
  %v8103 = vld [vmem:[%s3 + $0x28] sm:$0xff]
  %v8104 = vld [vmem:[%s3 + $0x30] sm:$0xff]
  %v8105 = vld [vmem:[%s3 + $0x38] sm:$0xff]
  %v8106 = vld [vmem:[%s3 + $0x40] sm:$0xff]
  %v8107 = vld [vmem:[%s3 + $0x48] sm:$0xff]
  %v8108 = vld [vmem:[%s3 + $0x50] sm:$0xff]
  %v8109 = vld [vmem:[%s3 + $0x58] sm:$0xff]
  %v8110 = vld [vmem:[%s3 + $0x60] sm:$0xff]
  %v8111 = vld [vmem:[%s3 + $0x68] sm:$0xff]
  %v8112 = vld [vmem:[%s3 + $0x70] sm:$0xff]
  %v8113 = vld [vmem:[%s3 + $0x78] sm:$0xff]
  %v8114 = vld [vmem:[%s3 + $0x80] sm:$0xff]
  %v8115 = vld [vmem:[%s3 + $0x88] sm:$0xff]
  %v8116 = vld [vmem:[%s3 + $0x90] sm:$0xff]
  %v8117 = vld [vmem:[%s3 + $0x98] sm:$0xff]
  %v8118 = vld [vmem:[%s3 + $0xa0] sm:$0xff]
  %v8119 = vld [vmem:[%s3 + $0xa8] sm:$0xff]
  %v8120 = vld [vmem:[%s3 + $0xb0] sm:$0xff]
  %v8121 = vld [vmem:[%s3 + $0xb8] sm:$0xff]
  %v8122 = vld [vmem:[%s3 + $0xc0] sm:$0xff]
  %v8123 = vld [vmem:[%s3 + $0xc8] sm:$0xff]
  %v8124 = vld [vmem:[%s3 + $0xd0] sm:$0xff]
  %v8125 = vld [vmem:[%s3 + $0xd8] sm:$0xff]
  %v8126 = vld [vmem:[%s3 + $0xe0] sm:$0xff]
  %v8127 = vld [vmem:[%s3 + $0xe8] sm:$0xff]
  %v8128 = vld [vmem:[%s3 + $0xf0] sm:$0xff]
  %v8129 = vld [vmem:[%s3 + $0xf8] sm:$0xff]
  %v8130 = vld [vmem:[%s3 + $0x100] sm:$0xff]
  %v8131 = vld [vmem:[%s3 + $0x108] sm:$0xff]
  %v8132 = vld [vmem:[%s3 + $0x110] sm:$0xff]
  %v8133 = vld [vmem:[%s3 + $0x118] sm:$0xff]
  %v8134 = vld [vmem:[%s3 + $0x120] sm:$0xff]
  %v8135 = vld [vmem:[%s3 + $0x128] sm:$0xff]
  %v8136 = vld [vmem:[%s3 + $0x130] sm:$0xff]
  %v8137 = vld [vmem:[%s3 + $0x138] sm:$0xff]
  %v8138 = vld [vmem:[%s3 + $0x140] sm:$0xff]
  %v8139 = vld [vmem:[%s3 + $0x148] sm:$0xff]
  %v8140 = vld [vmem:[%s3 + $0x150] sm:$0xff]
  %v8141 = vld [vmem:[%s3 + $0x158] sm:$0xff]
  %v8142 = vld [vmem:[%s3 + $0x160] sm:$0xff]
  %v8143 = vld [vmem:[%s3 + $0x168] sm:$0xff]
  %v8144 = vld [vmem:[%s3 + $0x170] sm:$0xff]
  %v8145 = vld [vmem:[%s3 + $0x178] sm:$0xff]
  %v8146 = vld [vmem:[%s3 + $0x180] sm:$0xff]
  %v8147 = vld [vmem:[%s3 + $0x188] sm:$0xff]
  %v8148 = vld [vmem:[%s3 + $0x190] sm:$0xff]
  %v8149 = vld [vmem:[%s3 + $0x198] sm:$0xff]
  %v8150 = vld [vmem:[%s3 + $0x1a0] sm:$0xff]
  %v8151 = vld [vmem:[%s3 + $0x1a8] sm:$0xff]
  %v8152 = vld [vmem:[%s3 + $0x1b0] sm:$0xff]
  %v8153 = vld [vmem:[%s3 + $0x1b8] sm:$0xff]
  %v8154 = vld [vmem:[%s3 + $0x1c0] sm:$0xff]
  %v8155 = vld [vmem:[%s3 + $0x1c8] sm:$0xff]
  %v8156 = vld [vmem:[%s3 + $0x1d0] sm:$0xff]
  %v8157 = vld [vmem:[%s3 + $0x1d8] sm:$0xff]
  %v8158 = vld [vmem:[%s3 + $0x1e0] sm:$0xff]
  %v8159 = vld [vmem:[%s3 + $0x1e8] sm:$0xff]
  %v8160 = vld [vmem:[%s3 + $0x1f0] sm:$0xff]
  %v8161 = vld [vmem:[%s3 + $0x1f8] sm:$0xff]
  %v8162 = vld [vmem:[%s3 + $0x200] sm:$0xff]
  %v8163 = vld [vmem:[%s3 + $0x208] sm:$0xff]
  %v8164 = vld [vmem:[%s3 + $0x210] sm:$0xff]
  %v8165 = vld [vmem:[%s3 + $0x218] sm:$0xff]
  %v8166 = vld [vmem:[%s3 + $0x220] sm:$0xff]
  %v8167 = vld [vmem:[%s3 + $0x228] sm:$0xff]
  %v8168 = vld [vmem:[%s3 + $0x230] sm:$0xff]
  %v8169 = vld [vmem:[%s3 + $0x238] sm:$0xff]
  %v8170 = vld [vmem:[%s3 + $0x240] sm:$0xff]
  %v8171 = vld [vmem:[%s3 + $0x248] sm:$0xff]
  %v8172 = vld [vmem:[%s3 + $0x250] sm:$0xff]
  %v8173 = vld [vmem:[%s3 + $0x258] sm:$0xff]
  %v8174 = vld [vmem:[%s3 + $0x260] sm:$0xff]
  %v8175 = vld [vmem:[%s3 + $0x268] sm:$0xff]
  %v8176 = vld [vmem:[%s3 + $0x270] sm:$0xff]
  %v8177 = vld [vmem:[%s3 + $0x278] sm:$0xff]
  %v8178 = vld [vmem:[%s3 + $0x280] sm:$0xff]
  %v8179 = vld [vmem:[%s3 + $0x288] sm:$0xff]
  %v8180 = vld [vmem:[%s3 + $0x290] sm:$0xff]
  %v8181 = vld [vmem:[%s3 + $0x298] sm:$0xff]
  %v8182 = vld [vmem:[%s3 + $0x2a0] sm:$0xff]
  %v8183 = vld [vmem:[%s3 + $0x2a8] sm:$0xff]
  %v8184 = vld [vmem:[%s3 + $0x2b0] sm:$0xff]
  %v8185 = vld [vmem:[%s3 + $0x2b8] sm:$0xff]
  %v8186 = vld [vmem:[%s3 + $0x2c0] sm:$0xff]
  %v8187 = vld [vmem:[%s3 + $0x2c8] sm:$0xff]
  %v8188 = vld [vmem:[%s3 + $0x2d0] sm:$0xff]
  %v8189 = vld [vmem:[%s3 + $0x2d8] sm:$0xff]
  %v8190 = vld [vmem:[%s3 + $0x2e0] sm:$0xff]
  %v8191 = vld [vmem:[%s3 + $0x2e8] sm:$0xff]
  %v8192 = vld [vmem:[%s3 + $0x2f0] sm:$0xff]
  %v8193 = vld [vmem:[%s3 + $0x2f8] sm:$0xff]
  %v8194 = vld [vmem:[%s3 + $0x300] sm:$0xff]
  %v8195 = vld [vmem:[%s3 + $0x308] sm:$0xff]
  %v8196 = vld [vmem:[%s3 + $0x310] sm:$0xff]
  %v8197 = vld [vmem:[%s3 + $0x318] sm:$0xff]
  %v8198 = vld [vmem:[%s3 + $0x320] sm:$0xff]
  %v8199 = vld [vmem:[%s3 + $0x328] sm:$0xff]
  %v8200 = vld [vmem:[%s3 + $0x330] sm:$0xff]
  %v8201 = vld [vmem:[%s3 + $0x338] sm:$0xff]
  %v8202 = vld [vmem:[%s3 + $0x340] sm:$0xff]
  %v8203 = vld [vmem:[%s3 + $0x348] sm:$0xff]
  %v8204 = vld [vmem:[%s3 + $0x350] sm:$0xff]
  %v8205 = vld [vmem:[%s3 + $0x358] sm:$0xff]
  %v8206 = vld [vmem:[%s3 + $0x360] sm:$0xff]
  %v8207 = vld [vmem:[%s3 + $0x368] sm:$0xff]
  %v8208 = vld [vmem:[%s3 + $0x370] sm:$0xff]
  %v8209 = vld [vmem:[%s3 + $0x378] sm:$0xff]
  %v8210 = vld [vmem:[%s3 + $0x380] sm:$0xff]
  %v8211 = vld [vmem:[%s3 + $0x388] sm:$0xff]
  %v8212 = vld [vmem:[%s3 + $0x390] sm:$0xff]
  %v8213 = vld [vmem:[%s3 + $0x398] sm:$0xff]
  %v8214 = vld [vmem:[%s3 + $0x3a0] sm:$0xff]
  %v8215 = vld [vmem:[%s3 + $0x3a8] sm:$0xff]
  %v8216 = vld [vmem:[%s3 + $0x3b0] sm:$0xff]
  %v8217 = vld [vmem:[%s3 + $0x3b8] sm:$0xff]
  %v8218 = vld [vmem:[%s3 + $0x3c0] sm:$0xff]
  %v8219 = vld [vmem:[%s3 + $0x3c8] sm:$0xff]
  %v8220 = vld [vmem:[%s3 + $0x3d0] sm:$0xff]
  %v8221 = vld [vmem:[%s3 + $0x3d8] sm:$0xff]
  %v8222 = vld [vmem:[%s3 + $0x3e0] sm:$0xff]
  %v8223 = vld [vmem:[%s3 + $0x3e8] sm:$0xff]
  %v8224 = vld [vmem:[%s3 + $0x3f0] sm:$0xff]
  %v8225 = vld [vmem:[%s3 + $0x3f8] sm:$0xff]
  %v8354 = vunpack.c.l.b16 %v8098
  %v8355 = vunpack.c.h.b16 %v8098
  %v8356 = vunpack.c.l.b16 %v8099
  %v8357 = vunpack.c.h.b16 %v8099
  %v8358 = vunpack.c.l.b16 %v8100
  %v8359 = vunpack.c.h.b16 %v8100
  %v8360 = vunpack.c.l.b16 %v8101
  %v8361 = vunpack.c.h.b16 %v8101
  %v8362 = vunpack.c.l.b16 %v8102
  %v8363 = vunpack.c.h.b16 %v8102
  %v8364 = vunpack.c.l.b16 %v8103
  %v8365 = vunpack.c.h.b16 %v8103
  %v8366 = vunpack.c.l.b16 %v8104
  %v8367 = vunpack.c.h.b16 %v8104
  %v8368 = vunpack.c.l.b16 %v8105
  %v8369 = vunpack.c.h.b16 %v8105
  %v8370 = vunpack.c.l.b16 %v8106
  %v8371 = vunpack.c.h.b16 %v8106
  %v8372 = vunpack.c.l.b16 %v8107
  %v8373 = vunpack.c.h.b16 %v8107
  %v8374 = vunpack.c.l.b16 %v8108
  %v8375 = vunpack.c.h.b16 %v8108
  %v8376 = vunpack.c.l.b16 %v8109
  %v8377 = vunpack.c.h.b16 %v8109
  %v8378 = vunpack.c.l.b16 %v8110
  %v8379 = vunpack.c.h.b16 %v8110
  %v8380 = vunpack.c.l.b16 %v8111
  %v8381 = vunpack.c.h.b16 %v8111
  %v8382 = vunpack.c.l.b16 %v8112
  %v8383 = vunpack.c.h.b16 %v8112
  %v8384 = vunpack.c.l.b16 %v8113
  %v8385 = vunpack.c.h.b16 %v8113
  %v8386 = vunpack.c.l.b16 %v8114
  %v8387 = vunpack.c.h.b16 %v8114
  %v8388 = vunpack.c.l.b16 %v8115
  %v8389 = vunpack.c.h.b16 %v8115
  %v8390 = vunpack.c.l.b16 %v8116
  %v8391 = vunpack.c.h.b16 %v8116
  %v8392 = vunpack.c.l.b16 %v8117
  %v8393 = vunpack.c.h.b16 %v8117
  %v8394 = vunpack.c.l.b16 %v8118
  %v8395 = vunpack.c.h.b16 %v8118
  %v8396 = vunpack.c.l.b16 %v8119
  %v8397 = vunpack.c.h.b16 %v8119
  %v8398 = vunpack.c.l.b16 %v8120
  %v8399 = vunpack.c.h.b16 %v8120
  %v8400 = vunpack.c.l.b16 %v8121
  %v8401 = vunpack.c.h.b16 %v8121
  %v8402 = vunpack.c.l.b16 %v8122
  %v8403 = vunpack.c.h.b16 %v8122
  %v8404 = vunpack.c.l.b16 %v8123
  %v8405 = vunpack.c.h.b16 %v8123
  %v8406 = vunpack.c.l.b16 %v8124
  %v8407 = vunpack.c.h.b16 %v8124
  %v8408 = vunpack.c.l.b16 %v8125
  %v8409 = vunpack.c.h.b16 %v8125
  %v8410 = vunpack.c.l.b16 %v8126
  %v8411 = vunpack.c.h.b16 %v8126
  %v8412 = vunpack.c.l.b16 %v8127
  %v8413 = vunpack.c.h.b16 %v8127
  %v8414 = vunpack.c.l.b16 %v8128
  %v8415 = vunpack.c.h.b16 %v8128
  %v8416 = vunpack.c.l.b16 %v8129
  %v8417 = vunpack.c.h.b16 %v8129
  %v8418 = vunpack.c.l.b16 %v8130
  %v8419 = vunpack.c.h.b16 %v8130
  %v8420 = vunpack.c.l.b16 %v8131
  %v8421 = vunpack.c.h.b16 %v8131
  %v8422 = vunpack.c.l.b16 %v8132
  %v8423 = vunpack.c.h.b16 %v8132
  %v8424 = vunpack.c.l.b16 %v8133
  %v8425 = vunpack.c.h.b16 %v8133
  %v8426 = vunpack.c.l.b16 %v8134
  %v8427 = vunpack.c.h.b16 %v8134
  %v8428 = vunpack.c.l.b16 %v8135
  %v8429 = vunpack.c.h.b16 %v8135
  %v8430 = vunpack.c.l.b16 %v8136
  %v8431 = vunpack.c.h.b16 %v8136
  %v8432 = vunpack.c.l.b16 %v8137
  %v8433 = vunpack.c.h.b16 %v8137
  %v8434 = vunpack.c.l.b16 %v8138
  %v8435 = vunpack.c.h.b16 %v8138
  %v8436 = vunpack.c.l.b16 %v8139
  %v8437 = vunpack.c.h.b16 %v8139
  %v8438 = vunpack.c.l.b16 %v8140
  %v8439 = vunpack.c.h.b16 %v8140
  %v8440 = vunpack.c.l.b16 %v8141
  %v8441 = vunpack.c.h.b16 %v8141
  %v8442 = vunpack.c.l.b16 %v8142
  %v8443 = vunpack.c.h.b16 %v8142
  %v8444 = vunpack.c.l.b16 %v8143
  %v8445 = vunpack.c.h.b16 %v8143
  %v8446 = vunpack.c.l.b16 %v8144
  %v8447 = vunpack.c.h.b16 %v8144
  %v8448 = vunpack.c.l.b16 %v8145
  %v8449 = vunpack.c.h.b16 %v8145
  %v8450 = vunpack.c.l.b16 %v8146
  %v8451 = vunpack.c.h.b16 %v8146
  %v8452 = vunpack.c.l.b16 %v8147
  %v8453 = vunpack.c.h.b16 %v8147
  %v8454 = vunpack.c.l.b16 %v8148
  %v8455 = vunpack.c.h.b16 %v8148
  %v8456 = vunpack.c.l.b16 %v8149
  %v8457 = vunpack.c.h.b16 %v8149
  %v8458 = vunpack.c.l.b16 %v8150
  %v8459 = vunpack.c.h.b16 %v8150
  %v8460 = vunpack.c.l.b16 %v8151
  %v8461 = vunpack.c.h.b16 %v8151
  %v8462 = vunpack.c.l.b16 %v8152
  %v8463 = vunpack.c.h.b16 %v8152
  %v8464 = vunpack.c.l.b16 %v8153
  %v8465 = vunpack.c.h.b16 %v8153
  %v8466 = vunpack.c.l.b16 %v8154
  %v8467 = vunpack.c.h.b16 %v8154
  %v8468 = vunpack.c.l.b16 %v8155
  %v8469 = vunpack.c.h.b16 %v8155
  %v8470 = vunpack.c.l.b16 %v8156
  %v8471 = vunpack.c.h.b16 %v8156
  %v8472 = vunpack.c.l.b16 %v8157
  %v8473 = vunpack.c.h.b16 %v8157
  %v8474 = vunpack.c.l.b16 %v8158
  %v8475 = vunpack.c.h.b16 %v8158
  %v8476 = vunpack.c.l.b16 %v8159
  %v8477 = vunpack.c.h.b16 %v8159
  %v8478 = vunpack.c.l.b16 %v8160
  %v8479 = vunpack.c.h.b16 %v8160
  %v8480 = vunpack.c.l.b16 %v8161
  %v8481 = vunpack.c.h.b16 %v8161
  %v8482 = vunpack.c.l.b16 %v8162
  %v8483 = vunpack.c.h.b16 %v8162
  %v8484 = vunpack.c.l.b16 %v8163
  %v8485 = vunpack.c.h.b16 %v8163
  %v8486 = vunpack.c.l.b16 %v8164
  %v8487 = vunpack.c.h.b16 %v8164
  %v8488 = vunpack.c.l.b16 %v8165
  %v8489 = vunpack.c.h.b16 %v8165
  %v8490 = vunpack.c.l.b16 %v8166
  %v8491 = vunpack.c.h.b16 %v8166
  %v8492 = vunpack.c.l.b16 %v8167
  %v8493 = vunpack.c.h.b16 %v8167
  %v8494 = vunpack.c.l.b16 %v8168
  %v8495 = vunpack.c.h.b16 %v8168
  %v8496 = vunpack.c.l.b16 %v8169
  %v8497 = vunpack.c.h.b16 %v8169
  %v8498 = vunpack.c.l.b16 %v8170
  %v8499 = vunpack.c.h.b16 %v8170
  %v8500 = vunpack.c.l.b16 %v8171
  %v8501 = vunpack.c.h.b16 %v8171
  %v8502 = vunpack.c.l.b16 %v8172
  %v8503 = vunpack.c.h.b16 %v8172
  %v8504 = vunpack.c.l.b16 %v8173
  %v8505 = vunpack.c.h.b16 %v8173
  %v8506 = vunpack.c.l.b16 %v8174
  %v8507 = vunpack.c.h.b16 %v8174
  %v8508 = vunpack.c.l.b16 %v8175
  %v8509 = vunpack.c.h.b16 %v8175
  %v8510 = vunpack.c.l.b16 %v8176
  %v8511 = vunpack.c.h.b16 %v8176
  %v8512 = vunpack.c.l.b16 %v8177
  %v8513 = vunpack.c.h.b16 %v8177
  %v8514 = vunpack.c.l.b16 %v8178
  %v8515 = vunpack.c.h.b16 %v8178
  %v8516 = vunpack.c.l.b16 %v8179
  %v8517 = vunpack.c.h.b16 %v8179
  %v8518 = vunpack.c.l.b16 %v8180
  %v8519 = vunpack.c.h.b16 %v8180
  %v8520 = vunpack.c.l.b16 %v8181
  %v8521 = vunpack.c.h.b16 %v8181
  %v8522 = vunpack.c.l.b16 %v8182
  %v8523 = vunpack.c.h.b16 %v8182
  %v8524 = vunpack.c.l.b16 %v8183
  %v8525 = vunpack.c.h.b16 %v8183
  %v8526 = vunpack.c.l.b16 %v8184
  %v8527 = vunpack.c.h.b16 %v8184
  %v8528 = vunpack.c.l.b16 %v8185
  %v8529 = vunpack.c.h.b16 %v8185
  %v8530 = vunpack.c.l.b16 %v8186
  %v8531 = vunpack.c.h.b16 %v8186
  %v8532 = vunpack.c.l.b16 %v8187
  %v8533 = vunpack.c.h.b16 %v8187
  %v8534 = vunpack.c.l.b16 %v8188
  %v8535 = vunpack.c.h.b16 %v8188
  %v8536 = vunpack.c.l.b16 %v8189
  %v8537 = vunpack.c.h.b16 %v8189
  %v8538 = vunpack.c.l.b16 %v8190
  %v8539 = vunpack.c.h.b16 %v8190
  %v8540 = vunpack.c.l.b16 %v8191
  %v8541 = vunpack.c.h.b16 %v8191
  %v8542 = vunpack.c.l.b16 %v8192
  %v8543 = vunpack.c.h.b16 %v8192
  %v8544 = vunpack.c.l.b16 %v8193
  %v8545 = vunpack.c.h.b16 %v8193
  %v8546 = vunpack.c.l.b16 %v8194
  %v8547 = vunpack.c.h.b16 %v8194
  %v8548 = vunpack.c.l.b16 %v8195
  %v8549 = vunpack.c.h.b16 %v8195
  %v8550 = vunpack.c.l.b16 %v8196
  %v8551 = vunpack.c.h.b16 %v8196
  %v8552 = vunpack.c.l.b16 %v8197
  %v8553 = vunpack.c.h.b16 %v8197
  %v8554 = vunpack.c.l.b16 %v8198
  %v8555 = vunpack.c.h.b16 %v8198
  %v8556 = vunpack.c.l.b16 %v8199
  %v8557 = vunpack.c.h.b16 %v8199
  %v8558 = vunpack.c.l.b16 %v8200
  %v8559 = vunpack.c.h.b16 %v8200
  %v8560 = vunpack.c.l.b16 %v8201
  %v8561 = vunpack.c.h.b16 %v8201
  %v8562 = vunpack.c.l.b16 %v8202
  %v8563 = vunpack.c.h.b16 %v8202
  %v8564 = vunpack.c.l.b16 %v8203
  %v8565 = vunpack.c.h.b16 %v8203
  %v8566 = vunpack.c.l.b16 %v8204
  %v8567 = vunpack.c.h.b16 %v8204
  %v8568 = vunpack.c.l.b16 %v8205
  %v8569 = vunpack.c.h.b16 %v8205
  %v8570 = vunpack.c.l.b16 %v8206
  %v8571 = vunpack.c.h.b16 %v8206
  %v8572 = vunpack.c.l.b16 %v8207
  %v8573 = vunpack.c.h.b16 %v8207
  %v8574 = vunpack.c.l.b16 %v8208
  %v8575 = vunpack.c.h.b16 %v8208
  %v8576 = vunpack.c.l.b16 %v8209
  %v8577 = vunpack.c.h.b16 %v8209
  %v8578 = vunpack.c.l.b16 %v8210
  %v8579 = vunpack.c.h.b16 %v8210
  %v8580 = vunpack.c.l.b16 %v8211
  %v8581 = vunpack.c.h.b16 %v8211
  %v8582 = vunpack.c.l.b16 %v8212
  %v8583 = vunpack.c.h.b16 %v8212
  %v8584 = vunpack.c.l.b16 %v8213
  %v8585 = vunpack.c.h.b16 %v8213
  %v8586 = vunpack.c.l.b16 %v8214
  %v8587 = vunpack.c.h.b16 %v8214
  %v8588 = vunpack.c.l.b16 %v8215
  %v8589 = vunpack.c.h.b16 %v8215
  %v8590 = vunpack.c.l.b16 %v8216
  %v8591 = vunpack.c.h.b16 %v8216
  %v8592 = vunpack.c.l.b16 %v8217
  %v8593 = vunpack.c.h.b16 %v8217
  %v8594 = vunpack.c.l.b16 %v8218
  %v8595 = vunpack.c.h.b16 %v8218
  %v8596 = vunpack.c.l.b16 %v8219
  %v8597 = vunpack.c.h.b16 %v8219
  %v8598 = vunpack.c.l.b16 %v8220
  %v8599 = vunpack.c.h.b16 %v8220
  %v8600 = vunpack.c.l.b16 %v8221
  %v8601 = vunpack.c.h.b16 %v8221
  %v8602 = vunpack.c.l.b16 %v8222
  %v8603 = vunpack.c.h.b16 %v8222
  %v8604 = vunpack.c.l.b16 %v8223
  %v8605 = vunpack.c.h.b16 %v8223
  %v8606 = vunpack.c.l.b16 %v8224
  %v8607 = vunpack.c.h.b16 %v8224
  %v8608 = vunpack.c.l.b16 %v8225
  %v8609 = vunpack.c.h.b16 %v8225
  %v8610 = vpack.c.b16 %v8362, %v8354
  %v8611 = vpack.c.b16 %v8363, %v8355
  %v8612 = vpack.c.b16 %v8364, %v8356
  %v8613 = vpack.c.b16 %v8365, %v8357
  %v8614 = vpack.c.b16 %v8366, %v8358
  %v8615 = vpack.c.b16 %v8367, %v8359
  %v8616 = vpack.c.b16 %v8368, %v8360
  %v8617 = vpack.c.b16 %v8369, %v8361
  %v8618 = vpack.c.b16 %v8378, %v8370
  %v8619 = vpack.c.b16 %v8379, %v8371
  %v8620 = vpack.c.b16 %v8380, %v8372
  %v8621 = vpack.c.b16 %v8381, %v8373
  %v8622 = vpack.c.b16 %v8382, %v8374
  %v8623 = vpack.c.b16 %v8383, %v8375
  %v8624 = vpack.c.b16 %v8384, %v8376
  %v8625 = vpack.c.b16 %v8385, %v8377
  %v8626 = vpack.c.b16 %v8394, %v8386
  %v8627 = vpack.c.b16 %v8395, %v8387
  %v8628 = vpack.c.b16 %v8396, %v8388
  %v8629 = vpack.c.b16 %v8397, %v8389
  %v8630 = vpack.c.b16 %v8398, %v8390
  %v8631 = vpack.c.b16 %v8399, %v8391
  %v8632 = vpack.c.b16 %v8400, %v8392
  %v8633 = vpack.c.b16 %v8401, %v8393
  %v8634 = vpack.c.b16 %v8410, %v8402
  %v8635 = vpack.c.b16 %v8411, %v8403
  %v8636 = vpack.c.b16 %v8412, %v8404
  %v8637 = vpack.c.b16 %v8413, %v8405
  %v8638 = vpack.c.b16 %v8414, %v8406
  %v8639 = vpack.c.b16 %v8415, %v8407
  %v8640 = vpack.c.b16 %v8416, %v8408
  %v8641 = vpack.c.b16 %v8417, %v8409
  %v8642 = vpack.c.b16 %v8426, %v8418
  %v8643 = vpack.c.b16 %v8427, %v8419
  %v8644 = vpack.c.b16 %v8428, %v8420
  %v8645 = vpack.c.b16 %v8429, %v8421
  %v8646 = vpack.c.b16 %v8430, %v8422
  %v8647 = vpack.c.b16 %v8431, %v8423
  %v8648 = vpack.c.b16 %v8432, %v8424
  %v8649 = vpack.c.b16 %v8433, %v8425
  %v8650 = vpack.c.b16 %v8442, %v8434
  %v8651 = vpack.c.b16 %v8443, %v8435
  %v8652 = vpack.c.b16 %v8444, %v8436
  %v8653 = vpack.c.b16 %v8445, %v8437
  %v8654 = vpack.c.b16 %v8446, %v8438
  %v8655 = vpack.c.b16 %v8447, %v8439
  %v8656 = vpack.c.b16 %v8448, %v8440
  %v8657 = vpack.c.b16 %v8449, %v8441
  %v8658 = vpack.c.b16 %v8458, %v8450
  %v8659 = vpack.c.b16 %v8459, %v8451
  %v8660 = vpack.c.b16 %v8460, %v8452
  %v8661 = vpack.c.b16 %v8461, %v8453
  %v8662 = vpack.c.b16 %v8462, %v8454
  %v8663 = vpack.c.b16 %v8463, %v8455
  %v8664 = vpack.c.b16 %v8464, %v8456
  %v8665 = vpack.c.b16 %v8465, %v8457
  %v8666 = vpack.c.b16 %v8474, %v8466
  %v8667 = vpack.c.b16 %v8475, %v8467
  %v8668 = vpack.c.b16 %v8476, %v8468
  %v8669 = vpack.c.b16 %v8477, %v8469
  %v8670 = vpack.c.b16 %v8478, %v8470
  %v8671 = vpack.c.b16 %v8479, %v8471
  %v8672 = vpack.c.b16 %v8480, %v8472
  %v8673 = vpack.c.b16 %v8481, %v8473
  %v8674 = vpack.c.b16 %v8490, %v8482
  %v8675 = vpack.c.b16 %v8491, %v8483
  %v8676 = vpack.c.b16 %v8492, %v8484
  %v8677 = vpack.c.b16 %v8493, %v8485
  %v8678 = vpack.c.b16 %v8494, %v8486
  %v8679 = vpack.c.b16 %v8495, %v8487
  %v8680 = vpack.c.b16 %v8496, %v8488
  %v8681 = vpack.c.b16 %v8497, %v8489
  %v8682 = vpack.c.b16 %v8506, %v8498
  %v8683 = vpack.c.b16 %v8507, %v8499
  %v8684 = vpack.c.b16 %v8508, %v8500
  %v8685 = vpack.c.b16 %v8509, %v8501
  %v8686 = vpack.c.b16 %v8510, %v8502
  %v8687 = vpack.c.b16 %v8511, %v8503
  %v8688 = vpack.c.b16 %v8512, %v8504
  %v8689 = vpack.c.b16 %v8513, %v8505
  %v8690 = vpack.c.b16 %v8522, %v8514
  %v8691 = vpack.c.b16 %v8523, %v8515
  %v8692 = vpack.c.b16 %v8524, %v8516
  %v8693 = vpack.c.b16 %v8525, %v8517
  %v8694 = vpack.c.b16 %v8526, %v8518
  %v8695 = vpack.c.b16 %v8527, %v8519
  %v8696 = vpack.c.b16 %v8528, %v8520
  %v8697 = vpack.c.b16 %v8529, %v8521
  %v8698 = vpack.c.b16 %v8538, %v8530
  %v8699 = vpack.c.b16 %v8539, %v8531
  %v8700 = vpack.c.b16 %v8540, %v8532
  %v8701 = vpack.c.b16 %v8541, %v8533
  %v8702 = vpack.c.b16 %v8542, %v8534
  %v8703 = vpack.c.b16 %v8543, %v8535
  %v8704 = vpack.c.b16 %v8544, %v8536
  %v8705 = vpack.c.b16 %v8545, %v8537
  %v8706 = vpack.c.b16 %v8554, %v8546
  %v8707 = vpack.c.b16 %v8555, %v8547
  %v8708 = vpack.c.b16 %v8556, %v8548
  %v8709 = vpack.c.b16 %v8557, %v8549
  %v8710 = vpack.c.b16 %v8558, %v8550
  %v8711 = vpack.c.b16 %v8559, %v8551
  %v8712 = vpack.c.b16 %v8560, %v8552
  %v8713 = vpack.c.b16 %v8561, %v8553
  %v8714 = vpack.c.b16 %v8570, %v8562
  %v8715 = vpack.c.b16 %v8571, %v8563
  %v8716 = vpack.c.b16 %v8572, %v8564
  %v8717 = vpack.c.b16 %v8573, %v8565
  %v8718 = vpack.c.b16 %v8574, %v8566
  %v8719 = vpack.c.b16 %v8575, %v8567
  %v8720 = vpack.c.b16 %v8576, %v8568
  %v8721 = vpack.c.b16 %v8577, %v8569
  %v8722 = vpack.c.b16 %v8586, %v8578
  %v8723 = vpack.c.b16 %v8587, %v8579
  %v8724 = vpack.c.b16 %v8588, %v8580
  %v8725 = vpack.c.b16 %v8589, %v8581
  %v8726 = vpack.c.b16 %v8590, %v8582
  %v8727 = vpack.c.b16 %v8591, %v8583
  %v8728 = vpack.c.b16 %v8592, %v8584
  %v8729 = vpack.c.b16 %v8593, %v8585
  %v8730 = vpack.c.b16 %v8602, %v8594
  %v8731 = vpack.c.b16 %v8603, %v8595
  %v8732 = vpack.c.b16 %v8604, %v8596
  %v8733 = vpack.c.b16 %v8605, %v8597
  %v8734 = vpack.c.b16 %v8606, %v8598
  %v8735 = vpack.c.b16 %v8607, %v8599
  %v8736 = vpack.c.b16 %v8608, %v8600
  %v8737 = vpack.c.b16 %v8609, %v8601
  %8866 = vmatpush.bf16.msra.mxu0 %v8666
  %8867 = vmatpush.bf16.msra.mxu0 %v8658
  %8868 = vmatpush.bf16.msra.mxu0 %v8650
  %8869 = vmatpush.bf16.msra.mxu0 %v8642
  %8870 = vmatpush.bf16.msra.mxu0 %v8634
  %8871 = vmatpush.bf16.msra.mxu0 %v8626
  %8872 = vmatpush.bf16.msra.mxu0 %v8618
  %8873 = vmatpush.bf16.msra.mxu0 %v8610
  %8874 = vmatmul.bf16.gmra.mxu0 %v8096
  %v8875 = vpop.f32.mrf.mxu0
  %v8876 = vadd.f32 0.0, %v8875
  %v8877 = vpop.f32.mrf.mxu0
  %8878 = vdwg.mxu0
  %8879 = vmatpush.bf16.msra.mxu0 %v8730
  %8880 = vmatpush.bf16.msra.mxu0 %v8722
  %8881 = vmatpush.bf16.msra.mxu0 %v8714
  %8882 = vmatpush.bf16.msra.mxu0 %v8706
  %8883 = vmatpush.bf16.msra.mxu0 %v8698
  %8884 = vmatpush.bf16.msra.mxu0 %v8690
  %8885 = vmatpush.bf16.msra.mxu0 %v8682
  %8886 = vmatpush.bf16.msra.mxu0 %v8674
  %8887 = vmatmul.bf16.gmra.mxu0 %v8097
  %v8888 = vpop.f32.mrf.mxu0
  %v8889 = vadd.f32 %v8876, %v8888
  %v8890 = vpop.f32.mrf.mxu0
  %8891 = vdwg.mxu0
  %8892 = vmatpush.bf16.msra.mxu0 %v8667
  %8893 = vmatpush.bf16.msra.mxu0 %v8659
  %8894 = vmatpush.bf16.msra.mxu0 %v8651
  %8895 = vmatpush.bf16.msra.mxu0 %v8643
  %8896 = vmatpush.bf16.msra.mxu0 %v8635
  %8897 = vmatpush.bf16.msra.mxu0 %v8627
  %8898 = vmatpush.bf16.msra.mxu0 %v8619
  %8899 = vmatpush.bf16.msra.mxu0 %v8611
  %8900 = vmatmul.bf16.gmra.mxu0 %v8096
  %v8901 = vpop.f32.mrf.mxu0
  %v8902 = vadd.f32 0.0, %v8901
  %v8903 = vpop.f32.mrf.mxu0
  %8904 = vdwg.mxu0
  %8905 = vmatpush.bf16.msra.mxu0 %v8731
  %8906 = vmatpush.bf16.msra.mxu0 %v8723
  %8907 = vmatpush.bf16.msra.mxu0 %v8715
  %8908 = vmatpush.bf16.msra.mxu0 %v8707
  %8909 = vmatpush.bf16.msra.mxu0 %v8699
  %8910 = vmatpush.bf16.msra.mxu0 %v8691
  %8911 = vmatpush.bf16.msra.mxu0 %v8683
  %8912 = vmatpush.bf16.msra.mxu0 %v8675
  %8913 = vmatmul.bf16.gmra.mxu0 %v8097
  %v8914 = vpop.f32.mrf.mxu0
  %v8915 = vadd.f32 %v8902, %v8914
  %v8916 = vpop.f32.mrf.mxu0
  %8917 = vdwg.mxu0
  %8918 = vmatpush.bf16.msra.mxu0 %v8668
  %8919 = vmatpush.bf16.msra.mxu0 %v8660
  %8920 = vmatpush.bf16.msra.mxu0 %v8652
  %8921 = vmatpush.bf16.msra.mxu0 %v8644
  %8922 = vmatpush.bf16.msra.mxu0 %v8636
  %8923 = vmatpush.bf16.msra.mxu0 %v8628
  %8924 = vmatpush.bf16.msra.mxu0 %v8620
  %8925 = vmatpush.bf16.msra.mxu0 %v8612
  %8926 = vmatmul.bf16.gmra.mxu0 %v8096
  %v8927 = vpop.f32.mrf.mxu0
  %v8928 = vadd.f32 0.0, %v8927
  %v8929 = vpop.f32.mrf.mxu0
  %8930 = vdwg.mxu0
  %8931 = vmatpush.bf16.msra.mxu0 %v8732
  %8932 = vmatpush.bf16.msra.mxu0 %v8724
  %8933 = vmatpush.bf16.msra.mxu0 %v8716
  %8934 = vmatpush.bf16.msra.mxu0 %v8708
  %8935 = vmatpush.bf16.msra.mxu0 %v8700
  %8936 = vmatpush.bf16.msra.mxu0 %v8692
  %8937 = vmatpush.bf16.msra.mxu0 %v8684
  %8938 = vmatpush.bf16.msra.mxu0 %v8676
  %8939 = vmatmul.bf16.gmra.mxu0 %v8097
  %v8940 = vpop.f32.mrf.mxu0
  %v8941 = vadd.f32 %v8928, %v8940
  %v8942 = vpop.f32.mrf.mxu0
  %8943 = vdwg.mxu0
  %8944 = vmatpush.bf16.msra.mxu0 %v8669
  %8945 = vmatpush.bf16.msra.mxu0 %v8661
  %8946 = vmatpush.bf16.msra.mxu0 %v8653
  %8947 = vmatpush.bf16.msra.mxu0 %v8645
  %8948 = vmatpush.bf16.msra.mxu0 %v8637
  %8949 = vmatpush.bf16.msra.mxu0 %v8629
  %8950 = vmatpush.bf16.msra.mxu0 %v8621
  %8951 = vmatpush.bf16.msra.mxu0 %v8613
  %8952 = vmatmul.bf16.gmra.mxu0 %v8096
  %v8953 = vpop.f32.mrf.mxu0
  %v8954 = vadd.f32 0.0, %v8953
  %v8955 = vpop.f32.mrf.mxu0
  %8956 = vdwg.mxu0
  %8957 = vmatpush.bf16.msra.mxu0 %v8733
  %8958 = vmatpush.bf16.msra.mxu0 %v8725
  %8959 = vmatpush.bf16.msra.mxu0 %v8717
  %8960 = vmatpush.bf16.msra.mxu0 %v8709
  %8961 = vmatpush.bf16.msra.mxu0 %v8701
  %8962 = vmatpush.bf16.msra.mxu0 %v8693
  %8963 = vmatpush.bf16.msra.mxu0 %v8685
  %8964 = vmatpush.bf16.msra.mxu0 %v8677
  %8965 = vmatmul.bf16.gmra.mxu0 %v8097
  %v8966 = vpop.f32.mrf.mxu0
  %v8967 = vadd.f32 %v8954, %v8966
  %v8968 = vpop.f32.mrf.mxu0
  %8969 = vdwg.mxu0
  %8970 = vmatpush.bf16.msra.mxu0 %v8670
  %8971 = vmatpush.bf16.msra.mxu0 %v8662
  %8972 = vmatpush.bf16.msra.mxu0 %v8654
  %8973 = vmatpush.bf16.msra.mxu0 %v8646
  %8974 = vmatpush.bf16.msra.mxu0 %v8638
  %8975 = vmatpush.bf16.msra.mxu0 %v8630
  %8976 = vmatpush.bf16.msra.mxu0 %v8622
  %8977 = vmatpush.bf16.msra.mxu0 %v8614
  %8978 = vmatmul.bf16.gmra.mxu0 %v8096
  %v8979 = vpop.f32.mrf.mxu0
  %v8980 = vadd.f32 0.0, %v8979
  %v8981 = vpop.f32.mrf.mxu0
  %8982 = vdwg.mxu0
  %8983 = vmatpush.bf16.msra.mxu0 %v8734
  %8984 = vmatpush.bf16.msra.mxu0 %v8726
  %8985 = vmatpush.bf16.msra.mxu0 %v8718
  %8986 = vmatpush.bf16.msra.mxu0 %v8710
  %8987 = vmatpush.bf16.msra.mxu0 %v8702
  %8988 = vmatpush.bf16.msra.mxu0 %v8694
  %8989 = vmatpush.bf16.msra.mxu0 %v8686
  %8990 = vmatpush.bf16.msra.mxu0 %v8678
  %8991 = vmatmul.bf16.gmra.mxu0 %v8097
  %v8992 = vpop.f32.mrf.mxu0
  %v8993 = vadd.f32 %v8980, %v8992
  %v8994 = vpop.f32.mrf.mxu0
  %8995 = vdwg.mxu0
  %8996 = vmatpush.bf16.msra.mxu0 %v8671
  %8997 = vmatpush.bf16.msra.mxu0 %v8663
  %8998 = vmatpush.bf16.msra.mxu0 %v8655
  %8999 = vmatpush.bf16.msra.mxu0 %v8647
  %9000 = vmatpush.bf16.msra.mxu0 %v8639
  %9001 = vmatpush.bf16.msra.mxu0 %v8631
  %9002 = vmatpush.bf16.msra.mxu0 %v8623
  %9003 = vmatpush.bf16.msra.mxu0 %v8615
  %9004 = vmatmul.bf16.gmra.mxu0 %v8096
  %v9005 = vpop.f32.mrf.mxu0
  %v9006 = vadd.f32 0.0, %v9005
  %v9007 = vpop.f32.mrf.mxu0
  %9008 = vdwg.mxu0
  %9009 = vmatpush.bf16.msra.mxu0 %v8735
  %9010 = vmatpush.bf16.msra.mxu0 %v8727
  %9011 = vmatpush.bf16.msra.mxu0 %v8719
  %9012 = vmatpush.bf16.msra.mxu0 %v8711
  %9013 = vmatpush.bf16.msra.mxu0 %v8703
  %9014 = vmatpush.bf16.msra.mxu0 %v8695
  %9015 = vmatpush.bf16.msra.mxu0 %v8687
  %9016 = vmatpush.bf16.msra.mxu0 %v8679
  %9017 = vmatmul.bf16.gmra.mxu0 %v8097
  %v9018 = vpop.f32.mrf.mxu0
  %v9019 = vadd.f32 %v9006, %v9018
  %v9020 = vpop.f32.mrf.mxu0
  %9021 = vdwg.mxu0
  %9022 = vmatpush.bf16.msra.mxu0 %v8672
  %9023 = vmatpush.bf16.msra.mxu0 %v8664
  %9024 = vmatpush.bf16.msra.mxu0 %v8656
  %9025 = vmatpush.bf16.msra.mxu0 %v8648
  %9026 = vmatpush.bf16.msra.mxu0 %v8640
  %9027 = vmatpush.bf16.msra.mxu0 %v8632
  %9028 = vmatpush.bf16.msra.mxu0 %v8624
  %9029 = vmatpush.bf16.msra.mxu0 %v8616
  %9030 = vmatmul.bf16.gmra.mxu0 %v8096
  %v9031 = vpop.f32.mrf.mxu0
  %v9032 = vadd.f32 0.0, %v9031
  %v9033 = vpop.f32.mrf.mxu0
  %9034 = vdwg.mxu0
  %9035 = vmatpush.bf16.msra.mxu0 %v8736
  %9036 = vmatpush.bf16.msra.mxu0 %v8728
  %9037 = vmatpush.bf16.msra.mxu0 %v8720
  %9038 = vmatpush.bf16.msra.mxu0 %v8712
  %9039 = vmatpush.bf16.msra.mxu0 %v8704
  %9040 = vmatpush.bf16.msra.mxu0 %v8696
  %9041 = vmatpush.bf16.msra.mxu0 %v8688
  %9042 = vmatpush.bf16.msra.mxu0 %v8680
  %9043 = vmatmul.bf16.gmra.mxu0 %v8097
  %v9044 = vpop.f32.mrf.mxu0
  %v9045 = vadd.f32 %v9032, %v9044
  %v9046 = vpop.f32.mrf.mxu0
  %9047 = vdwg.mxu0
  %9048 = vmatpush.bf16.msra.mxu0 %v8673
  %9049 = vmatpush.bf16.msra.mxu0 %v8665
  %9050 = vmatpush.bf16.msra.mxu0 %v8657
  %9051 = vmatpush.bf16.msra.mxu0 %v8649
  %9052 = vmatpush.bf16.msra.mxu0 %v8641
  %9053 = vmatpush.bf16.msra.mxu0 %v8633
  %9054 = vmatpush.bf16.msra.mxu0 %v8625
  %9055 = vmatpush.bf16.msra.mxu0 %v8617
  %9056 = vmatmul.bf16.gmra.mxu0 %v8096
  %v9057 = vpop.f32.mrf.mxu0
  %v9058 = vadd.f32 0.0, %v9057
  %v9059 = vpop.f32.mrf.mxu0
  %9060 = vdwg.mxu0
  %9061 = vmatpush.bf16.msra.mxu0 %v8737
  %9062 = vmatpush.bf16.msra.mxu0 %v8729
  %9063 = vmatpush.bf16.msra.mxu0 %v8721
  %9064 = vmatpush.bf16.msra.mxu0 %v8713
  %9065 = vmatpush.bf16.msra.mxu0 %v8705
  %9066 = vmatpush.bf16.msra.mxu0 %v8697
  %9067 = vmatpush.bf16.msra.mxu0 %v8689
  %9068 = vmatpush.bf16.msra.mxu0 %v8681
  %9069 = vmatmul.bf16.gmra.mxu0 %v8097
  %v9070 = vpop.f32.mrf.mxu0
  %v9071 = vadd.f32 %v9058, %v9070
  %v9072 = vpop.f32.mrf.mxu0
  %9073 = vdwg.mxu0
  %v9074 = vadd.f32 %v8088, %v8889
  %v9075 = vadd.f32 %v8089, %v8915
  %v9076 = vadd.f32 %v8090, %v8941
  %v9077 = vadd.f32 %v8091, %v8967
  %v9078 = vadd.f32 %v8092, %v8993
  %v9079 = vadd.f32 %v8093, %v9019
  %v9080 = vadd.f32 %v8094, %v9045
  %v9081 = vadd.f32 %v8095, %v9071
  %v9082 = vmul.f32 %v9074, 0.5
  %v9083 = vtanh.pop %v9082
  %v9084 = vmul.f32 %v9083, 0.5
  %v9085 = vadd.f32 %v9084, 0.5
  %v9086 = vmul.f32 %v9075, 0.5
  %v9087 = vtanh.pop %v9086
  %v9088 = vmul.f32 %v9087, 0.5
  %v9089 = vadd.f32 %v9088, 0.5
  %v9090 = vtanh.pop %v9076
  %v9091 = vmul.f32 %v9077, 0.5
  %v9092 = vtanh.pop %v9091
  %v9093 = vmul.f32 %v9092, 0.5
  %v9094 = vadd.f32 %v9093, 0.5
  %v9095 = vmul.f32 %v9089, %v8055
  %v9096 = vmul.f32 %v9085, %v9090
  %v9097 = vadd.f32 %v9095, %v9096
  %v9098 = vtanh.pop %v9097
  %v9099 = vmul.f32 %v9094, %v9098
  %v9100 = vmul.f32 %v9078, 0.5
  %v9101 = vtanh.pop %v9100
  %v9102 = vmul.f32 %v9101, 0.5
  %v9103 = vadd.f32 %v9102, 0.5
  %v9104 = vmul.f32 %v9079, 0.5
  %v9105 = vtanh.pop %v9104
  %v9106 = vmul.f32 %v9105, 0.5
  %v9107 = vadd.f32 %v9106, 0.5
  %v9108 = vtanh.pop %v9080
  %v9109 = vmul.f32 %v9081, 0.5
  %v9110 = vtanh.pop %v9109
  %v9111 = vmul.f32 %v9110, 0.5
  %v9112 = vadd.f32 %v9111, 0.5
  %v9113 = vmul.f32 %v9107, %v8073
  %v9114 = vmul.f32 %v9103, %v9108
  %v9115 = vadd.f32 %v9113, %v9114
  %v9116 = vtanh.pop %v9115
  %v9117 = vmul.f32 %v9112, %v9116
  %v9118 = vld [vmem:[#allocation3] sm:$0xff]
  %v9119 = vadd.f32 %v9118, %v9099
  %9120 = vst [vmem:[#allocation3] sm:$0xff] %v9119
  %v9121 = vld [vmem:[#allocation3 + $0x8] sm:$0xff]
  %v9122 = vadd.f32 %v9121, %v9117
  %9123 = vst [vmem:[#allocation3 + $0x8] sm:$0xff] %v9122
  %v9124 = vld [vmem:[#allocation3 + $0x10] sm:$0xff]
  %v9125 = vmax.f32 %v9124, %v9099
  %9126 = vst [vmem:[#allocation3 + $0x10] sm:$0xff] %v9125
  %v9127 = vld [vmem:[#allocation3 + $0x18] sm:$0xff]
  %v9128 = vmax.f32 %v9127, %v9117
  %9129 = vst [vmem:[#allocation3 + $0x18] sm:$0xff] %v9128
  %v9130 = vld [vmem:[%s1834] sm:$0xff]
  %v9131 = vld [vmem:[%s1834 + $0x8] sm:$0xff]
  %v9132 = vld [vmem:[%s1834 + $0x10] sm:$0xff]
  %v9133 = vld [vmem:[%s1834 + $0x18] sm:$0xff]
  %v9134 = vld [vmem:[#allocation2 + $0x20] sm:$0xff]
  %v9135 = vld [vmem:[#allocation2 + $0x28] sm:$0xff]
  %v9136 = vld [vmem:[#allocation2 + $0x30] sm:$0xff]
  %v9137 = vld [vmem:[#allocation2 + $0x38] sm:$0xff]
  %v9138 = vpack.c.bf16 %v9099, %v9099
  %v9139 = vpack.c.bf16 %v9117, %v9117
  %v9140 = vld [vmem:[%s3] sm:$0xff]
  %v9141 = vld [vmem:[%s3 + $0x8] sm:$0xff]
  %v9142 = vld [vmem:[%s3 + $0x10] sm:$0xff]
  %v9143 = vld [vmem:[%s3 + $0x18] sm:$0xff]
  %v9144 = vld [vmem:[%s3 + $0x20] sm:$0xff]
  %v9145 = vld [vmem:[%s3 + $0x28] sm:$0xff]
  %v9146 = vld [vmem:[%s3 + $0x30] sm:$0xff]
  %v9147 = vld [vmem:[%s3 + $0x38] sm:$0xff]
  %v9148 = vld [vmem:[%s3 + $0x40] sm:$0xff]
  %v9149 = vld [vmem:[%s3 + $0x48] sm:$0xff]
  %v9150 = vld [vmem:[%s3 + $0x50] sm:$0xff]
  %v9151 = vld [vmem:[%s3 + $0x58] sm:$0xff]
  %v9152 = vld [vmem:[%s3 + $0x60] sm:$0xff]
  %v9153 = vld [vmem:[%s3 + $0x68] sm:$0xff]
  %v9154 = vld [vmem:[%s3 + $0x70] sm:$0xff]
  %v9155 = vld [vmem:[%s3 + $0x78] sm:$0xff]
  %v9156 = vld [vmem:[%s3 + $0x80] sm:$0xff]
  %v9157 = vld [vmem:[%s3 + $0x88] sm:$0xff]
  %v9158 = vld [vmem:[%s3 + $0x90] sm:$0xff]
  %v9159 = vld [vmem:[%s3 + $0x98] sm:$0xff]
  %v9160 = vld [vmem:[%s3 + $0xa0] sm:$0xff]
  %v9161 = vld [vmem:[%s3 + $0xa8] sm:$0xff]
  %v9162 = vld [vmem:[%s3 + $0xb0] sm:$0xff]
  %v9163 = vld [vmem:[%s3 + $0xb8] sm:$0xff]
  %v9164 = vld [vmem:[%s3 + $0xc0] sm:$0xff]
  %v9165 = vld [vmem:[%s3 + $0xc8] sm:$0xff]
  %v9166 = vld [vmem:[%s3 + $0xd0] sm:$0xff]
  %v9167 = vld [vmem:[%s3 + $0xd8] sm:$0xff]
  %v9168 = vld [vmem:[%s3 + $0xe0] sm:$0xff]
  %v9169 = vld [vmem:[%s3 + $0xe8] sm:$0xff]
  %v9170 = vld [vmem:[%s3 + $0xf0] sm:$0xff]
  %v9171 = vld [vmem:[%s3 + $0xf8] sm:$0xff]
  %v9172 = vld [vmem:[%s3 + $0x100] sm:$0xff]
  %v9173 = vld [vmem:[%s3 + $0x108] sm:$0xff]
  %v9174 = vld [vmem:[%s3 + $0x110] sm:$0xff]
  %v9175 = vld [vmem:[%s3 + $0x118] sm:$0xff]
  %v9176 = vld [vmem:[%s3 + $0x120] sm:$0xff]
  %v9177 = vld [vmem:[%s3 + $0x128] sm:$0xff]
  %v9178 = vld [vmem:[%s3 + $0x130] sm:$0xff]
  %v9179 = vld [vmem:[%s3 + $0x138] sm:$0xff]
  %v9180 = vld [vmem:[%s3 + $0x140] sm:$0xff]
  %v9181 = vld [vmem:[%s3 + $0x148] sm:$0xff]
  %v9182 = vld [vmem:[%s3 + $0x150] sm:$0xff]
  %v9183 = vld [vmem:[%s3 + $0x158] sm:$0xff]
  %v9184 = vld [vmem:[%s3 + $0x160] sm:$0xff]
  %v9185 = vld [vmem:[%s3 + $0x168] sm:$0xff]
  %v9186 = vld [vmem:[%s3 + $0x170] sm:$0xff]
  %v9187 = vld [vmem:[%s3 + $0x178] sm:$0xff]
  %v9188 = vld [vmem:[%s3 + $0x180] sm:$0xff]
  %v9189 = vld [vmem:[%s3 + $0x188] sm:$0xff]
  %v9190 = vld [vmem:[%s3 + $0x190] sm:$0xff]
  %v9191 = vld [vmem:[%s3 + $0x198] sm:$0xff]
  %v9192 = vld [vmem:[%s3 + $0x1a0] sm:$0xff]
  %v9193 = vld [vmem:[%s3 + $0x1a8] sm:$0xff]
  %v9194 = vld [vmem:[%s3 + $0x1b0] sm:$0xff]
  %v9195 = vld [vmem:[%s3 + $0x1b8] sm:$0xff]
  %v9196 = vld [vmem:[%s3 + $0x1c0] sm:$0xff]
  %v9197 = vld [vmem:[%s3 + $0x1c8] sm:$0xff]
  %v9198 = vld [vmem:[%s3 + $0x1d0] sm:$0xff]
  %v9199 = vld [vmem:[%s3 + $0x1d8] sm:$0xff]
  %v9200 = vld [vmem:[%s3 + $0x1e0] sm:$0xff]
  %v9201 = vld [vmem:[%s3 + $0x1e8] sm:$0xff]
  %v9202 = vld [vmem:[%s3 + $0x1f0] sm:$0xff]
  %v9203 = vld [vmem:[%s3 + $0x1f8] sm:$0xff]
  %v9204 = vld [vmem:[%s3 + $0x200] sm:$0xff]
  %v9205 = vld [vmem:[%s3 + $0x208] sm:$0xff]
  %v9206 = vld [vmem:[%s3 + $0x210] sm:$0xff]
  %v9207 = vld [vmem:[%s3 + $0x218] sm:$0xff]
  %v9208 = vld [vmem:[%s3 + $0x220] sm:$0xff]
  %v9209 = vld [vmem:[%s3 + $0x228] sm:$0xff]
  %v9210 = vld [vmem:[%s3 + $0x230] sm:$0xff]
  %v9211 = vld [vmem:[%s3 + $0x238] sm:$0xff]
  %v9212 = vld [vmem:[%s3 + $0x240] sm:$0xff]
  %v9213 = vld [vmem:[%s3 + $0x248] sm:$0xff]
  %v9214 = vld [vmem:[%s3 + $0x250] sm:$0xff]
  %v9215 = vld [vmem:[%s3 + $0x258] sm:$0xff]
  %v9216 = vld [vmem:[%s3 + $0x260] sm:$0xff]
  %v9217 = vld [vmem:[%s3 + $0x268] sm:$0xff]
  %v9218 = vld [vmem:[%s3 + $0x270] sm:$0xff]
  %v9219 = vld [vmem:[%s3 + $0x278] sm:$0xff]
  %v9220 = vld [vmem:[%s3 + $0x280] sm:$0xff]
  %v9221 = vld [vmem:[%s3 + $0x288] sm:$0xff]
  %v9222 = vld [vmem:[%s3 + $0x290] sm:$0xff]
  %v9223 = vld [vmem:[%s3 + $0x298] sm:$0xff]
  %v9224 = vld [vmem:[%s3 + $0x2a0] sm:$0xff]
  %v9225 = vld [vmem:[%s3 + $0x2a8] sm:$0xff]
  %v9226 = vld [vmem:[%s3 + $0x2b0] sm:$0xff]
  %v9227 = vld [vmem:[%s3 + $0x2b8] sm:$0xff]
  %v9228 = vld [vmem:[%s3 + $0x2c0] sm:$0xff]
  %v9229 = vld [vmem:[%s3 + $0x2c8] sm:$0xff]
  %v9230 = vld [vmem:[%s3 + $0x2d0] sm:$0xff]
  %v9231 = vld [vmem:[%s3 + $0x2d8] sm:$0xff]
  %v9232 = vld [vmem:[%s3 + $0x2e0] sm:$0xff]
  %v9233 = vld [vmem:[%s3 + $0x2e8] sm:$0xff]
  %v9234 = vld [vmem:[%s3 + $0x2f0] sm:$0xff]
  %v9235 = vld [vmem:[%s3 + $0x2f8] sm:$0xff]
  %v9236 = vld [vmem:[%s3 + $0x300] sm:$0xff]
  %v9237 = vld [vmem:[%s3 + $0x308] sm:$0xff]
  %v9238 = vld [vmem:[%s3 + $0x310] sm:$0xff]
  %v9239 = vld [vmem:[%s3 + $0x318] sm:$0xff]
  %v9240 = vld [vmem:[%s3 + $0x320] sm:$0xff]
  %v9241 = vld [vmem:[%s3 + $0x328] sm:$0xff]
  %v9242 = vld [vmem:[%s3 + $0x330] sm:$0xff]
  %v9243 = vld [vmem:[%s3 + $0x338] sm:$0xff]
  %v9244 = vld [vmem:[%s3 + $0x340] sm:$0xff]
  %v9245 = vld [vmem:[%s3 + $0x348] sm:$0xff]
  %v9246 = vld [vmem:[%s3 + $0x350] sm:$0xff]
  %v9247 = vld [vmem:[%s3 + $0x358] sm:$0xff]
  %v9248 = vld [vmem:[%s3 + $0x360] sm:$0xff]
  %v9249 = vld [vmem:[%s3 + $0x368] sm:$0xff]
  %v9250 = vld [vmem:[%s3 + $0x370] sm:$0xff]
  %v9251 = vld [vmem:[%s3 + $0x378] sm:$0xff]
  %v9252 = vld [vmem:[%s3 + $0x380] sm:$0xff]
  %v9253 = vld [vmem:[%s3 + $0x388] sm:$0xff]
  %v9254 = vld [vmem:[%s3 + $0x390] sm:$0xff]
  %v9255 = vld [vmem:[%s3 + $0x398] sm:$0xff]
  %v9256 = vld [vmem:[%s3 + $0x3a0] sm:$0xff]
  %v9257 = vld [vmem:[%s3 + $0x3a8] sm:$0xff]
  %v9258 = vld [vmem:[%s3 + $0x3b0] sm:$0xff]
  %v9259 = vld [vmem:[%s3 + $0x3b8] sm:$0xff]
  %v9260 = vld [vmem:[%s3 + $0x3c0] sm:$0xff]
  %v9261 = vld [vmem:[%s3 + $0x3c8] sm:$0xff]
  %v9262 = vld [vmem:[%s3 + $0x3d0] sm:$0xff]
  %v9263 = vld [vmem:[%s3 + $0x3d8] sm:$0xff]
  %v9264 = vld [vmem:[%s3 + $0x3e0] sm:$0xff]
  %v9265 = vld [vmem:[%s3 + $0x3e8] sm:$0xff]
  %v9266 = vld [vmem:[%s3 + $0x3f0] sm:$0xff]
  %v9267 = vld [vmem:[%s3 + $0x3f8] sm:$0xff]
  %v9396 = vunpack.c.l.b16 %v9140
  %v9397 = vunpack.c.h.b16 %v9140
  %v9398 = vunpack.c.l.b16 %v9141
  %v9399 = vunpack.c.h.b16 %v9141
  %v9400 = vunpack.c.l.b16 %v9142
  %v9401 = vunpack.c.h.b16 %v9142
  %v9402 = vunpack.c.l.b16 %v9143
  %v9403 = vunpack.c.h.b16 %v9143
  %v9404 = vunpack.c.l.b16 %v9144
  %v9405 = vunpack.c.h.b16 %v9144
  %v9406 = vunpack.c.l.b16 %v9145
  %v9407 = vunpack.c.h.b16 %v9145
  %v9408 = vunpack.c.l.b16 %v9146
  %v9409 = vunpack.c.h.b16 %v9146
  %v9410 = vunpack.c.l.b16 %v9147
  %v9411 = vunpack.c.h.b16 %v9147
  %v9412 = vunpack.c.l.b16 %v9148
  %v9413 = vunpack.c.h.b16 %v9148
  %v9414 = vunpack.c.l.b16 %v9149
  %v9415 = vunpack.c.h.b16 %v9149
  %v9416 = vunpack.c.l.b16 %v9150
  %v9417 = vunpack.c.h.b16 %v9150
  %v9418 = vunpack.c.l.b16 %v9151
  %v9419 = vunpack.c.h.b16 %v9151
  %v9420 = vunpack.c.l.b16 %v9152
  %v9421 = vunpack.c.h.b16 %v9152
  %v9422 = vunpack.c.l.b16 %v9153
  %v9423 = vunpack.c.h.b16 %v9153
  %v9424 = vunpack.c.l.b16 %v9154
  %v9425 = vunpack.c.h.b16 %v9154
  %v9426 = vunpack.c.l.b16 %v9155
  %v9427 = vunpack.c.h.b16 %v9155
  %v9428 = vunpack.c.l.b16 %v9156
  %v9429 = vunpack.c.h.b16 %v9156
  %v9430 = vunpack.c.l.b16 %v9157
  %v9431 = vunpack.c.h.b16 %v9157
  %v9432 = vunpack.c.l.b16 %v9158
  %v9433 = vunpack.c.h.b16 %v9158
  %v9434 = vunpack.c.l.b16 %v9159
  %v9435 = vunpack.c.h.b16 %v9159
  %v9436 = vunpack.c.l.b16 %v9160
  %v9437 = vunpack.c.h.b16 %v9160
  %v9438 = vunpack.c.l.b16 %v9161
  %v9439 = vunpack.c.h.b16 %v9161
  %v9440 = vunpack.c.l.b16 %v9162
  %v9441 = vunpack.c.h.b16 %v9162
  %v9442 = vunpack.c.l.b16 %v9163
  %v9443 = vunpack.c.h.b16 %v9163
  %v9444 = vunpack.c.l.b16 %v9164
  %v9445 = vunpack.c.h.b16 %v9164
  %v9446 = vunpack.c.l.b16 %v9165
  %v9447 = vunpack.c.h.b16 %v9165
  %v9448 = vunpack.c.l.b16 %v9166
  %v9449 = vunpack.c.h.b16 %v9166
  %v9450 = vunpack.c.l.b16 %v9167
  %v9451 = vunpack.c.h.b16 %v9167
  %v9452 = vunpack.c.l.b16 %v9168
  %v9453 = vunpack.c.h.b16 %v9168
  %v9454 = vunpack.c.l.b16 %v9169
  %v9455 = vunpack.c.h.b16 %v9169
  %v9456 = vunpack.c.l.b16 %v9170
  %v9457 = vunpack.c.h.b16 %v9170
  %v9458 = vunpack.c.l.b16 %v9171
  %v9459 = vunpack.c.h.b16 %v9171
  %v9460 = vunpack.c.l.b16 %v9172
  %v9461 = vunpack.c.h.b16 %v9172
  %v9462 = vunpack.c.l.b16 %v9173
  %v9463 = vunpack.c.h.b16 %v9173
  %v9464 = vunpack.c.l.b16 %v9174
  %v9465 = vunpack.c.h.b16 %v9174
  %v9466 = vunpack.c.l.b16 %v9175
  %v9467 = vunpack.c.h.b16 %v9175
  %v9468 = vunpack.c.l.b16 %v9176
  %v9469 = vunpack.c.h.b16 %v9176
  %v9470 = vunpack.c.l.b16 %v9177
  %v9471 = vunpack.c.h.b16 %v9177
  %v9472 = vunpack.c.l.b16 %v9178
  %v9473 = vunpack.c.h.b16 %v9178
  %v9474 = vunpack.c.l.b16 %v9179
  %v9475 = vunpack.c.h.b16 %v9179
  %v9476 = vunpack.c.l.b16 %v9180
  %v9477 = vunpack.c.h.b16 %v9180
  %v9478 = vunpack.c.l.b16 %v9181
  %v9479 = vunpack.c.h.b16 %v9181
  %v9480 = vunpack.c.l.b16 %v9182
  %v9481 = vunpack.c.h.b16 %v9182
  %v9482 = vunpack.c.l.b16 %v9183
  %v9483 = vunpack.c.h.b16 %v9183
  %v9484 = vunpack.c.l.b16 %v9184
  %v9485 = vunpack.c.h.b16 %v9184
  %v9486 = vunpack.c.l.b16 %v9185
  %v9487 = vunpack.c.h.b16 %v9185
  %v9488 = vunpack.c.l.b16 %v9186
  %v9489 = vunpack.c.h.b16 %v9186
  %v9490 = vunpack.c.l.b16 %v9187
  %v9491 = vunpack.c.h.b16 %v9187
  %v9492 = vunpack.c.l.b16 %v9188
  %v9493 = vunpack.c.h.b16 %v9188
  %v9494 = vunpack.c.l.b16 %v9189
  %v9495 = vunpack.c.h.b16 %v9189
  %v9496 = vunpack.c.l.b16 %v9190
  %v9497 = vunpack.c.h.b16 %v9190
  %v9498 = vunpack.c.l.b16 %v9191
  %v9499 = vunpack.c.h.b16 %v9191
  %v9500 = vunpack.c.l.b16 %v9192
  %v9501 = vunpack.c.h.b16 %v9192
  %v9502 = vunpack.c.l.b16 %v9193
  %v9503 = vunpack.c.h.b16 %v9193
  %v9504 = vunpack.c.l.b16 %v9194
  %v9505 = vunpack.c.h.b16 %v9194
  %v9506 = vunpack.c.l.b16 %v9195
  %v9507 = vunpack.c.h.b16 %v9195
  %v9508 = vunpack.c.l.b16 %v9196
  %v9509 = vunpack.c.h.b16 %v9196
  %v9510 = vunpack.c.l.b16 %v9197
  %v9511 = vunpack.c.h.b16 %v9197
  %v9512 = vunpack.c.l.b16 %v9198
  %v9513 = vunpack.c.h.b16 %v9198
  %v9514 = vunpack.c.l.b16 %v9199
  %v9515 = vunpack.c.h.b16 %v9199
  %v9516 = vunpack.c.l.b16 %v9200
  %v9517 = vunpack.c.h.b16 %v9200
  %v9518 = vunpack.c.l.b16 %v9201
  %v9519 = vunpack.c.h.b16 %v9201
  %v9520 = vunpack.c.l.b16 %v9202
  %v9521 = vunpack.c.h.b16 %v9202
  %v9522 = vunpack.c.l.b16 %v9203
  %v9523 = vunpack.c.h.b16 %v9203
  %v9524 = vunpack.c.l.b16 %v9204
  %v9525 = vunpack.c.h.b16 %v9204
  %v9526 = vunpack.c.l.b16 %v9205
  %v9527 = vunpack.c.h.b16 %v9205
  %v9528 = vunpack.c.l.b16 %v9206
  %v9529 = vunpack.c.h.b16 %v9206
  %v9530 = vunpack.c.l.b16 %v9207
  %v9531 = vunpack.c.h.b16 %v9207
  %v9532 = vunpack.c.l.b16 %v9208
  %v9533 = vunpack.c.h.b16 %v9208
  %v9534 = vunpack.c.l.b16 %v9209
  %v9535 = vunpack.c.h.b16 %v9209
  %v9536 = vunpack.c.l.b16 %v9210
  %v9537 = vunpack.c.h.b16 %v9210
  %v9538 = vunpack.c.l.b16 %v9211
  %v9539 = vunpack.c.h.b16 %v9211
  %v9540 = vunpack.c.l.b16 %v9212
  %v9541 = vunpack.c.h.b16 %v9212
  %v9542 = vunpack.c.l.b16 %v9213
  %v9543 = vunpack.c.h.b16 %v9213
  %v9544 = vunpack.c.l.b16 %v9214
  %v9545 = vunpack.c.h.b16 %v9214
  %v9546 = vunpack.c.l.b16 %v9215
  %v9547 = vunpack.c.h.b16 %v9215
  %v9548 = vunpack.c.l.b16 %v9216
  %v9549 = vunpack.c.h.b16 %v9216
  %v9550 = vunpack.c.l.b16 %v9217
  %v9551 = vunpack.c.h.b16 %v9217
  %v9552 = vunpack.c.l.b16 %v9218
  %v9553 = vunpack.c.h.b16 %v9218
  %v9554 = vunpack.c.l.b16 %v9219
  %v9555 = vunpack.c.h.b16 %v9219
  %v9556 = vunpack.c.l.b16 %v9220
  %v9557 = vunpack.c.h.b16 %v9220
  %v9558 = vunpack.c.l.b16 %v9221
  %v9559 = vunpack.c.h.b16 %v9221
  %v9560 = vunpack.c.l.b16 %v9222
  %v9561 = vunpack.c.h.b16 %v9222
  %v9562 = vunpack.c.l.b16 %v9223
  %v9563 = vunpack.c.h.b16 %v9223
  %v9564 = vunpack.c.l.b16 %v9224
  %v9565 = vunpack.c.h.b16 %v9224
  %v9566 = vunpack.c.l.b16 %v9225
  %v9567 = vunpack.c.h.b16 %v9225
  %v9568 = vunpack.c.l.b16 %v9226
  %v9569 = vunpack.c.h.b16 %v9226
  %v9570 = vunpack.c.l.b16 %v9227
  %v9571 = vunpack.c.h.b16 %v9227
  %v9572 = vunpack.c.l.b16 %v9228
  %v9573 = vunpack.c.h.b16 %v9228
  %v9574 = vunpack.c.l.b16 %v9229
  %v9575 = vunpack.c.h.b16 %v9229
  %v9576 = vunpack.c.l.b16 %v9230
  %v9577 = vunpack.c.h.b16 %v9230
  %v9578 = vunpack.c.l.b16 %v9231
  %v9579 = vunpack.c.h.b16 %v9231
  %v9580 = vunpack.c.l.b16 %v9232
  %v9581 = vunpack.c.h.b16 %v9232
  %v9582 = vunpack.c.l.b16 %v9233
  %v9583 = vunpack.c.h.b16 %v9233
  %v9584 = vunpack.c.l.b16 %v9234
  %v9585 = vunpack.c.h.b16 %v9234
  %v9586 = vunpack.c.l.b16 %v9235
  %v9587 = vunpack.c.h.b16 %v9235
  %v9588 = vunpack.c.l.b16 %v9236
  %v9589 = vunpack.c.h.b16 %v9236
  %v9590 = vunpack.c.l.b16 %v9237
  %v9591 = vunpack.c.h.b16 %v9237
  %v9592 = vunpack.c.l.b16 %v9238
  %v9593 = vunpack.c.h.b16 %v9238
  %v9594 = vunpack.c.l.b16 %v9239
  %v9595 = vunpack.c.h.b16 %v9239
  %v9596 = vunpack.c.l.b16 %v9240
  %v9597 = vunpack.c.h.b16 %v9240
  %v9598 = vunpack.c.l.b16 %v9241
  %v9599 = vunpack.c.h.b16 %v9241
  %v9600 = vunpack.c.l.b16 %v9242
  %v9601 = vunpack.c.h.b16 %v9242
  %v9602 = vunpack.c.l.b16 %v9243
  %v9603 = vunpack.c.h.b16 %v9243
  %v9604 = vunpack.c.l.b16 %v9244
  %v9605 = vunpack.c.h.b16 %v9244
  %v9606 = vunpack.c.l.b16 %v9245
  %v9607 = vunpack.c.h.b16 %v9245
  %v9608 = vunpack.c.l.b16 %v9246
  %v9609 = vunpack.c.h.b16 %v9246
  %v9610 = vunpack.c.l.b16 %v9247
  %v9611 = vunpack.c.h.b16 %v9247
  %v9612 = vunpack.c.l.b16 %v9248
  %v9613 = vunpack.c.h.b16 %v9248
  %v9614 = vunpack.c.l.b16 %v9249
  %v9615 = vunpack.c.h.b16 %v9249
  %v9616 = vunpack.c.l.b16 %v9250
  %v9617 = vunpack.c.h.b16 %v9250
  %v9618 = vunpack.c.l.b16 %v9251
  %v9619 = vunpack.c.h.b16 %v9251
  %v9620 = vunpack.c.l.b16 %v9252
  %v9621 = vunpack.c.h.b16 %v9252
  %v9622 = vunpack.c.l.b16 %v9253
  %v9623 = vunpack.c.h.b16 %v9253
  %v9624 = vunpack.c.l.b16 %v9254
  %v9625 = vunpack.c.h.b16 %v9254
  %v9626 = vunpack.c.l.b16 %v9255
  %v9627 = vunpack.c.h.b16 %v9255
  %v9628 = vunpack.c.l.b16 %v9256
  %v9629 = vunpack.c.h.b16 %v9256
  %v9630 = vunpack.c.l.b16 %v9257
  %v9631 = vunpack.c.h.b16 %v9257
  %v9632 = vunpack.c.l.b16 %v9258
  %v9633 = vunpack.c.h.b16 %v9258
  %v9634 = vunpack.c.l.b16 %v9259
  %v9635 = vunpack.c.h.b16 %v9259
  %v9636 = vunpack.c.l.b16 %v9260
  %v9637 = vunpack.c.h.b16 %v9260
  %v9638 = vunpack.c.l.b16 %v9261
  %v9639 = vunpack.c.h.b16 %v9261
  %v9640 = vunpack.c.l.b16 %v9262
  %v9641 = vunpack.c.h.b16 %v9262
  %v9642 = vunpack.c.l.b16 %v9263
  %v9643 = vunpack.c.h.b16 %v9263
  %v9644 = vunpack.c.l.b16 %v9264
  %v9645 = vunpack.c.h.b16 %v9264
  %v9646 = vunpack.c.l.b16 %v9265
  %v9647 = vunpack.c.h.b16 %v9265
  %v9648 = vunpack.c.l.b16 %v9266
  %v9649 = vunpack.c.h.b16 %v9266
  %v9650 = vunpack.c.l.b16 %v9267
  %v9651 = vunpack.c.h.b16 %v9267
  %v9652 = vpack.c.b16 %v9404, %v9396
  %v9653 = vpack.c.b16 %v9405, %v9397
  %v9654 = vpack.c.b16 %v9406, %v9398
  %v9655 = vpack.c.b16 %v9407, %v9399
  %v9656 = vpack.c.b16 %v9408, %v9400
  %v9657 = vpack.c.b16 %v9409, %v9401
  %v9658 = vpack.c.b16 %v9410, %v9402
  %v9659 = vpack.c.b16 %v9411, %v9403
  %v9660 = vpack.c.b16 %v9420, %v9412
  %v9661 = vpack.c.b16 %v9421, %v9413
  %v9662 = vpack.c.b16 %v9422, %v9414
  %v9663 = vpack.c.b16 %v9423, %v9415
  %v9664 = vpack.c.b16 %v9424, %v9416
  %v9665 = vpack.c.b16 %v9425, %v9417
  %v9666 = vpack.c.b16 %v9426, %v9418
  %v9667 = vpack.c.b16 %v9427, %v9419
  %v9668 = vpack.c.b16 %v9436, %v9428
  %v9669 = vpack.c.b16 %v9437, %v9429
  %v9670 = vpack.c.b16 %v9438, %v9430
  %v9671 = vpack.c.b16 %v9439, %v9431
  %v9672 = vpack.c.b16 %v9440, %v9432
  %v9673 = vpack.c.b16 %v9441, %v9433
  %v9674 = vpack.c.b16 %v9442, %v9434
  %v9675 = vpack.c.b16 %v9443, %v9435
  %v9676 = vpack.c.b16 %v9452, %v9444
  %v9677 = vpack.c.b16 %v9453, %v9445
  %v9678 = vpack.c.b16 %v9454, %v9446
  %v9679 = vpack.c.b16 %v9455, %v9447
  %v9680 = vpack.c.b16 %v9456, %v9448
  %v9681 = vpack.c.b16 %v9457, %v9449
  %v9682 = vpack.c.b16 %v9458, %v9450
  %v9683 = vpack.c.b16 %v9459, %v9451
  %v9684 = vpack.c.b16 %v9468, %v9460
  %v9685 = vpack.c.b16 %v9469, %v9461
  %v9686 = vpack.c.b16 %v9470, %v9462
  %v9687 = vpack.c.b16 %v9471, %v9463
  %v9688 = vpack.c.b16 %v9472, %v9464
  %v9689 = vpack.c.b16 %v9473, %v9465
  %v9690 = vpack.c.b16 %v9474, %v9466
  %v9691 = vpack.c.b16 %v9475, %v9467
  %v9692 = vpack.c.b16 %v9484, %v9476
  %v9693 = vpack.c.b16 %v9485, %v9477
  %v9694 = vpack.c.b16 %v9486, %v9478
  %v9695 = vpack.c.b16 %v9487, %v9479
  %v9696 = vpack.c.b16 %v9488, %v9480
  %v9697 = vpack.c.b16 %v9489, %v9481
  %v9698 = vpack.c.b16 %v9490, %v9482
  %v9699 = vpack.c.b16 %v9491, %v9483
  %v9700 = vpack.c.b16 %v9500, %v9492
  %v9701 = vpack.c.b16 %v9501, %v9493
  %v9702 = vpack.c.b16 %v9502, %v9494
  %v9703 = vpack.c.b16 %v9503, %v9495
  %v9704 = vpack.c.b16 %v9504, %v9496
  %v9705 = vpack.c.b16 %v9505, %v9497
  %v9706 = vpack.c.b16 %v9506, %v9498
  %v9707 = vpack.c.b16 %v9507, %v9499
  %v9708 = vpack.c.b16 %v9516, %v9508
  %v9709 = vpack.c.b16 %v9517, %v9509
  %v9710 = vpack.c.b16 %v9518, %v9510
  %v9711 = vpack.c.b16 %v9519, %v9511
  %v9712 = vpack.c.b16 %v9520, %v9512
  %v9713 = vpack.c.b16 %v9521, %v9513
  %v9714 = vpack.c.b16 %v9522, %v9514
  %v9715 = vpack.c.b16 %v9523, %v9515
  %v9716 = vpack.c.b16 %v9532, %v9524
  %v9717 = vpack.c.b16 %v9533, %v9525
  %v9718 = vpack.c.b16 %v9534, %v9526
  %v9719 = vpack.c.b16 %v9535, %v9527
  %v9720 = vpack.c.b16 %v9536, %v9528
  %v9721 = vpack.c.b16 %v9537, %v9529
  %v9722 = vpack.c.b16 %v9538, %v9530
  %v9723 = vpack.c.b16 %v9539, %v9531
  %v9724 = vpack.c.b16 %v9548, %v9540
  %v9725 = vpack.c.b16 %v9549, %v9541
  %v9726 = vpack.c.b16 %v9550, %v9542
  %v9727 = vpack.c.b16 %v9551, %v9543
  %v9728 = vpack.c.b16 %v9552, %v9544
  %v9729 = vpack.c.b16 %v9553, %v9545
  %v9730 = vpack.c.b16 %v9554, %v9546
  %v9731 = vpack.c.b16 %v9555, %v9547
  %v9732 = vpack.c.b16 %v9564, %v9556
  %v9733 = vpack.c.b16 %v9565, %v9557
  %v9734 = vpack.c.b16 %v9566, %v9558
  %v9735 = vpack.c.b16 %v9567, %v9559
  %v9736 = vpack.c.b16 %v9568, %v9560
  %v9737 = vpack.c.b16 %v9569, %v9561
  %v9738 = vpack.c.b16 %v9570, %v9562
  %v9739 = vpack.c.b16 %v9571, %v9563
  %v9740 = vpack.c.b16 %v9580, %v9572
  %v9741 = vpack.c.b16 %v9581, %v9573
  %v9742 = vpack.c.b16 %v9582, %v9574
  %v9743 = vpack.c.b16 %v9583, %v9575
  %v9744 = vpack.c.b16 %v9584, %v9576
  %v9745 = vpack.c.b16 %v9585, %v9577
  %v9746 = vpack.c.b16 %v9586, %v9578
  %v9747 = vpack.c.b16 %v9587, %v9579
  %v9748 = vpack.c.b16 %v9596, %v9588
  %v9749 = vpack.c.b16 %v9597, %v9589
  %v9750 = vpack.c.b16 %v9598, %v9590
  %v9751 = vpack.c.b16 %v9599, %v9591
  %v9752 = vpack.c.b16 %v9600, %v9592
  %v9753 = vpack.c.b16 %v9601, %v9593
  %v9754 = vpack.c.b16 %v9602, %v9594
  %v9755 = vpack.c.b16 %v9603, %v9595
  %v9756 = vpack.c.b16 %v9612, %v9604
  %v9757 = vpack.c.b16 %v9613, %v9605
  %v9758 = vpack.c.b16 %v9614, %v9606
  %v9759 = vpack.c.b16 %v9615, %v9607
  %v9760 = vpack.c.b16 %v9616, %v9608
  %v9761 = vpack.c.b16 %v9617, %v9609
  %v9762 = vpack.c.b16 %v9618, %v9610
  %v9763 = vpack.c.b16 %v9619, %v9611
  %v9764 = vpack.c.b16 %v9628, %v9620
  %v9765 = vpack.c.b16 %v9629, %v9621
  %v9766 = vpack.c.b16 %v9630, %v9622
  %v9767 = vpack.c.b16 %v9631, %v9623
  %v9768 = vpack.c.b16 %v9632, %v9624
  %v9769 = vpack.c.b16 %v9633, %v9625
  %v9770 = vpack.c.b16 %v9634, %v9626
  %v9771 = vpack.c.b16 %v9635, %v9627
  %v9772 = vpack.c.b16 %v9644, %v9636
  %v9773 = vpack.c.b16 %v9645, %v9637
  %v9774 = vpack.c.b16 %v9646, %v9638
  %v9775 = vpack.c.b16 %v9647, %v9639
  %v9776 = vpack.c.b16 %v9648, %v9640
  %v9777 = vpack.c.b16 %v9649, %v9641
  %v9778 = vpack.c.b16 %v9650, %v9642
  %v9779 = vpack.c.b16 %v9651, %v9643
  %9908 = vmatpush.bf16.msra.mxu0 %v9708
  %9909 = vmatpush.bf16.msra.mxu0 %v9700
  %9910 = vmatpush.bf16.msra.mxu0 %v9692
  %9911 = vmatpush.bf16.msra.mxu0 %v9684
  %9912 = vmatpush.bf16.msra.mxu0 %v9676
  %9913 = vmatpush.bf16.msra.mxu0 %v9668
  %9914 = vmatpush.bf16.msra.mxu0 %v9660
  %9915 = vmatpush.bf16.msra.mxu0 %v9652
  %9916 = vmatmul.bf16.gmra.mxu0 %v9138
  %v9917 = vpop.f32.mrf.mxu0
  %v9918 = vadd.f32 0.0, %v9917
  %v9919 = vpop.f32.mrf.mxu0
  %9920 = vdwg.mxu0
  %9921 = vmatpush.bf16.msra.mxu0 %v9772
  %9922 = vmatpush.bf16.msra.mxu0 %v9764
  %9923 = vmatpush.bf16.msra.mxu0 %v9756
  %9924 = vmatpush.bf16.msra.mxu0 %v9748
  %9925 = vmatpush.bf16.msra.mxu0 %v9740
  %9926 = vmatpush.bf16.msra.mxu0 %v9732
  %9927 = vmatpush.bf16.msra.mxu0 %v9724
  %9928 = vmatpush.bf16.msra.mxu0 %v9716
  %9929 = vmatmul.bf16.gmra.mxu0 %v9139
  %v9930 = vpop.f32.mrf.mxu0
  %v9931 = vadd.f32 %v9918, %v9930
  %v9932 = vpop.f32.mrf.mxu0
  %9933 = vdwg.mxu0
  %9934 = vmatpush.bf16.msra.mxu0 %v9709
  %9935 = vmatpush.bf16.msra.mxu0 %v9701
  %9936 = vmatpush.bf16.msra.mxu0 %v9693
  %9937 = vmatpush.bf16.msra.mxu0 %v9685
  %9938 = vmatpush.bf16.msra.mxu0 %v9677
  %9939 = vmatpush.bf16.msra.mxu0 %v9669
  %9940 = vmatpush.bf16.msra.mxu0 %v9661
  %9941 = vmatpush.bf16.msra.mxu0 %v9653
  %9942 = vmatmul.bf16.gmra.mxu0 %v9138
  %v9943 = vpop.f32.mrf.mxu0
  %v9944 = vadd.f32 0.0, %v9943
  %v9945 = vpop.f32.mrf.mxu0
  %9946 = vdwg.mxu0
  %9947 = vmatpush.bf16.msra.mxu0 %v9773
  %9948 = vmatpush.bf16.msra.mxu0 %v9765
  %9949 = vmatpush.bf16.msra.mxu0 %v9757
  %9950 = vmatpush.bf16.msra.mxu0 %v9749
  %9951 = vmatpush.bf16.msra.mxu0 %v9741
  %9952 = vmatpush.bf16.msra.mxu0 %v9733
  %9953 = vmatpush.bf16.msra.mxu0 %v9725
  %9954 = vmatpush.bf16.msra.mxu0 %v9717
  %9955 = vmatmul.bf16.gmra.mxu0 %v9139
  %v9956 = vpop.f32.mrf.mxu0
  %v9957 = vadd.f32 %v9944, %v9956
  %v9958 = vpop.f32.mrf.mxu0
  %9959 = vdwg.mxu0
  %9960 = vmatpush.bf16.msra.mxu0 %v9710
  %9961 = vmatpush.bf16.msra.mxu0 %v9702
  %9962 = vmatpush.bf16.msra.mxu0 %v9694
  %9963 = vmatpush.bf16.msra.mxu0 %v9686
  %9964 = vmatpush.bf16.msra.mxu0 %v9678
  %9965 = vmatpush.bf16.msra.mxu0 %v9670
  %9966 = vmatpush.bf16.msra.mxu0 %v9662
  %9967 = vmatpush.bf16.msra.mxu0 %v9654
  %9968 = vmatmul.bf16.gmra.mxu0 %v9138
  %v9969 = vpop.f32.mrf.mxu0
  %v9970 = vadd.f32 0.0, %v9969
  %v9971 = vpop.f32.mrf.mxu0
  %9972 = vdwg.mxu0
  %9973 = vmatpush.bf16.msra.mxu0 %v9774
  %9974 = vmatpush.bf16.msra.mxu0 %v9766
  %9975 = vmatpush.bf16.msra.mxu0 %v9758
  %9976 = vmatpush.bf16.msra.mxu0 %v9750
  %9977 = vmatpush.bf16.msra.mxu0 %v9742
  %9978 = vmatpush.bf16.msra.mxu0 %v9734
  %9979 = vmatpush.bf16.msra.mxu0 %v9726
  %9980 = vmatpush.bf16.msra.mxu0 %v9718
  %9981 = vmatmul.bf16.gmra.mxu0 %v9139
  %v9982 = vpop.f32.mrf.mxu0
  %v9983 = vadd.f32 %v9970, %v9982
  %v9984 = vpop.f32.mrf.mxu0
  %9985 = vdwg.mxu0
  %9986 = vmatpush.bf16.msra.mxu0 %v9711
  %9987 = vmatpush.bf16.msra.mxu0 %v9703
  %9988 = vmatpush.bf16.msra.mxu0 %v9695
  %9989 = vmatpush.bf16.msra.mxu0 %v9687
  %9990 = vmatpush.bf16.msra.mxu0 %v9679
  %9991 = vmatpush.bf16.msra.mxu0 %v9671
  %9992 = vmatpush.bf16.msra.mxu0 %v9663
  %9993 = vmatpush.bf16.msra.mxu0 %v9655
  %9994 = vmatmul.bf16.gmra.mxu0 %v9138
  %v9995 = vpop.f32.mrf.mxu0
  %v9996 = vadd.f32 0.0, %v9995
  %v9997 = vpop.f32.mrf.mxu0
  %9998 = vdwg.mxu0
  %9999 = vmatpush.bf16.msra.mxu0 %v9775
  %10000 = vmatpush.bf16.msra.mxu0 %v9767
  %10001 = vmatpush.bf16.msra.mxu0 %v9759
  %10002 = vmatpush.bf16.msra.mxu0 %v9751
  %10003 = vmatpush.bf16.msra.mxu0 %v9743
  %10004 = vmatpush.bf16.msra.mxu0 %v9735
  %10005 = vmatpush.bf16.msra.mxu0 %v9727
  %10006 = vmatpush.bf16.msra.mxu0 %v9719
  %10007 = vmatmul.bf16.gmra.mxu0 %v9139
  %v10008 = vpop.f32.mrf.mxu0
  %v10009 = vadd.f32 %v9996, %v10008
  %v10010 = vpop.f32.mrf.mxu0
  %10011 = vdwg.mxu0
  %10012 = vmatpush.bf16.msra.mxu0 %v9712
  %10013 = vmatpush.bf16.msra.mxu0 %v9704
  %10014 = vmatpush.bf16.msra.mxu0 %v9696
  %10015 = vmatpush.bf16.msra.mxu0 %v9688
  %10016 = vmatpush.bf16.msra.mxu0 %v9680
  %10017 = vmatpush.bf16.msra.mxu0 %v9672
  %10018 = vmatpush.bf16.msra.mxu0 %v9664
  %10019 = vmatpush.bf16.msra.mxu0 %v9656
  %10020 = vmatmul.bf16.gmra.mxu0 %v9138
  %v10021 = vpop.f32.mrf.mxu0
  %v10022 = vadd.f32 0.0, %v10021
  %v10023 = vpop.f32.mrf.mxu0
  %10024 = vdwg.mxu0
  %10025 = vmatpush.bf16.msra.mxu0 %v9776
  %10026 = vmatpush.bf16.msra.mxu0 %v9768
  %10027 = vmatpush.bf16.msra.mxu0 %v9760
  %10028 = vmatpush.bf16.msra.mxu0 %v9752
  %10029 = vmatpush.bf16.msra.mxu0 %v9744
  %10030 = vmatpush.bf16.msra.mxu0 %v9736
  %10031 = vmatpush.bf16.msra.mxu0 %v9728
  %10032 = vmatpush.bf16.msra.mxu0 %v9720
  %10033 = vmatmul.bf16.gmra.mxu0 %v9139
  %v10034 = vpop.f32.mrf.mxu0
  %v10035 = vadd.f32 %v10022, %v10034
  %v10036 = vpop.f32.mrf.mxu0
  %10037 = vdwg.mxu0
  %10038 = vmatpush.bf16.msra.mxu0 %v9713
  %10039 = vmatpush.bf16.msra.mxu0 %v9705
  %10040 = vmatpush.bf16.msra.mxu0 %v9697
  %10041 = vmatpush.bf16.msra.mxu0 %v9689
  %10042 = vmatpush.bf16.msra.mxu0 %v9681
  %10043 = vmatpush.bf16.msra.mxu0 %v9673
  %10044 = vmatpush.bf16.msra.mxu0 %v9665
  %10045 = vmatpush.bf16.msra.mxu0 %v9657
  %10046 = vmatmul.bf16.gmra.mxu0 %v9138
  %v10047 = vpop.f32.mrf.mxu0
  %v10048 = vadd.f32 0.0, %v10047
  %v10049 = vpop.f32.mrf.mxu0
  %10050 = vdwg.mxu0
  %10051 = vmatpush.bf16.msra.mxu0 %v9777
  %10052 = vmatpush.bf16.msra.mxu0 %v9769
  %10053 = vmatpush.bf16.msra.mxu0 %v9761
  %10054 = vmatpush.bf16.msra.mxu0 %v9753
  %10055 = vmatpush.bf16.msra.mxu0 %v9745
  %10056 = vmatpush.bf16.msra.mxu0 %v9737
  %10057 = vmatpush.bf16.msra.mxu0 %v9729
  %10058 = vmatpush.bf16.msra.mxu0 %v9721
  %10059 = vmatmul.bf16.gmra.mxu0 %v9139
  %v10060 = vpop.f32.mrf.mxu0
  %v10061 = vadd.f32 %v10048, %v10060
  %v10062 = vpop.f32.mrf.mxu0
  %10063 = vdwg.mxu0
  %10064 = vmatpush.bf16.msra.mxu0 %v9714
  %10065 = vmatpush.bf16.msra.mxu0 %v9706
  %10066 = vmatpush.bf16.msra.mxu0 %v9698
  %10067 = vmatpush.bf16.msra.mxu0 %v9690
  %10068 = vmatpush.bf16.msra.mxu0 %v9682
  %10069 = vmatpush.bf16.msra.mxu0 %v9674
  %10070 = vmatpush.bf16.msra.mxu0 %v9666
  %10071 = vmatpush.bf16.msra.mxu0 %v9658
  %10072 = vmatmul.bf16.gmra.mxu0 %v9138
  %v10073 = vpop.f32.mrf.mxu0
  %v10074 = vadd.f32 0.0, %v10073
  %v10075 = vpop.f32.mrf.mxu0
  %10076 = vdwg.mxu0
  %10077 = vmatpush.bf16.msra.mxu0 %v9778
  %10078 = vmatpush.bf16.msra.mxu0 %v9770
  %10079 = vmatpush.bf16.msra.mxu0 %v9762
  %10080 = vmatpush.bf16.msra.mxu0 %v9754
  %10081 = vmatpush.bf16.msra.mxu0 %v9746
  %10082 = vmatpush.bf16.msra.mxu0 %v9738
  %10083 = vmatpush.bf16.msra.mxu0 %v9730
  %10084 = vmatpush.bf16.msra.mxu0 %v9722
  %10085 = vmatmul.bf16.gmra.mxu0 %v9139
  %v10086 = vpop.f32.mrf.mxu0
  %v10087 = vadd.f32 %v10074, %v10086
  %v10088 = vpop.f32.mrf.mxu0
  %10089 = vdwg.mxu0
  %10090 = vmatpush.bf16.msra.mxu0 %v9715
  %10091 = vmatpush.bf16.msra.mxu0 %v9707
  %10092 = vmatpush.bf16.msra.mxu0 %v9699
  %10093 = vmatpush.bf16.msra.mxu0 %v9691
  %10094 = vmatpush.bf16.msra.mxu0 %v9683
  %10095 = vmatpush.bf16.msra.mxu0 %v9675
  %10096 = vmatpush.bf16.msra.mxu0 %v9667
  %10097 = vmatpush.bf16.msra.mxu0 %v9659
  %10098 = vmatmul.bf16.gmra.mxu0 %v9138
  %v10099 = vpop.f32.mrf.mxu0
  %v10100 = vadd.f32 0.0, %v10099
  %v10101 = vpop.f32.mrf.mxu0
  %10102 = vdwg.mxu0
  %10103 = vmatpush.bf16.msra.mxu0 %v9779
  %10104 = vmatpush.bf16.msra.mxu0 %v9771
  %10105 = vmatpush.bf16.msra.mxu0 %v9763
  %10106 = vmatpush.bf16.msra.mxu0 %v9755
  %10107 = vmatpush.bf16.msra.mxu0 %v9747
  %10108 = vmatpush.bf16.msra.mxu0 %v9739
  %10109 = vmatpush.bf16.msra.mxu0 %v9731
  %10110 = vmatpush.bf16.msra.mxu0 %v9723
  %10111 = vmatmul.bf16.gmra.mxu0 %v9139
  %v10112 = vpop.f32.mrf.mxu0
  %v10113 = vadd.f32 %v10100, %v10112
  %v10114 = vpop.f32.mrf.mxu0
  %10115 = vdwg.mxu0
  %v10116 = vadd.f32 %v9130, %v9931
  %v10117 = vadd.f32 %v9131, %v9957
  %v10118 = vadd.f32 %v9132, %v9983
  %v10119 = vadd.f32 %v9133, %v10009
  %v10120 = vadd.f32 %v9134, %v10035
  %v10121 = vadd.f32 %v9135, %v10061
  %v10122 = vadd.f32 %v9136, %v10087
  %v10123 = vadd.f32 %v9137, %v10113
  %v10124 = vmul.f32 %v10116, 0.5
  %v10125 = vtanh.pop %v10124
  %v10126 = vmul.f32 %v10125, 0.5
  %v10127 = vadd.f32 %v10126, 0.5
  %v10128 = vmul.f32 %v10117, 0.5
  %v10129 = vtanh.pop %v10128
  %v10130 = vmul.f32 %v10129, 0.5
  %v10131 = vadd.f32 %v10130, 0.5
  %v10132 = vtanh.pop %v10118
  %v10133 = vmul.f32 %v10119, 0.5
  %v10134 = vtanh.pop %v10133
  %v10135 = vmul.f32 %v10134, 0.5
  %v10136 = vadd.f32 %v10135, 0.5
  %v10137 = vmul.f32 %v10131, %v9097
  %v10138 = vmul.f32 %v10127, %v10132
  %v10139 = vadd.f32 %v10137, %v10138
  %v10140 = vtanh.pop %v10139
  %v10141 = vmul.f32 %v10136, %v10140
  %v10142 = vmul.f32 %v10120, 0.5
  %v10143 = vtanh.pop %v10142
  %v10144 = vmul.f32 %v10143, 0.5
  %v10145 = vadd.f32 %v10144, 0.5
  %v10146 = vmul.f32 %v10121, 0.5
  %v10147 = vtanh.pop %v10146
  %v10148 = vmul.f32 %v10147, 0.5
  %v10149 = vadd.f32 %v10148, 0.5
  %v10150 = vtanh.pop %v10122
  %v10151 = vmul.f32 %v10123, 0.5
  %v10152 = vtanh.pop %v10151
  %v10153 = vmul.f32 %v10152, 0.5
  %v10154 = vadd.f32 %v10153, 0.5
  %v10155 = vmul.f32 %v10149, %v9115
  %v10156 = vmul.f32 %v10145, %v10150
  %v10157 = vadd.f32 %v10155, %v10156
  %v10158 = vtanh.pop %v10157
  %v10159 = vmul.f32 %v10154, %v10158
  %v10160 = vld [vmem:[#allocation3] sm:$0xff]
  %v10161 = vadd.f32 %v10160, %v10141
  %10162 = vst [vmem:[#allocation3] sm:$0xff] %v10161
  %v10163 = vld [vmem:[#allocation3 + $0x8] sm:$0xff]
  %v10164 = vadd.f32 %v10163, %v10159
  %10165 = vst [vmem:[#allocation3 + $0x8] sm:$0xff] %v10164
  %v10166 = vld [vmem:[#allocation3 + $0x10] sm:$0xff]
  %v10167 = vmax.f32 %v10166, %v10141
  %10168 = vst [vmem:[#allocation3 + $0x10] sm:$0xff] %v10167
  %v10169 = vld [vmem:[#allocation3 + $0x18] sm:$0xff]
  %v10170 = vmax.f32 %v10169, %v10159
  %10171 = vst [vmem:[#allocation3 + $0x18] sm:$0xff] %v10170
  %v10172 = vld [vmem:[#allocation3] sm:$0xff]
  %v10173 = vld [vmem:[#allocation3 + $0x8] sm:$0xff]
  %v10174 = vmul.f32 %v10172, 0.125
  %v10175 = vmul.f32 %v10173, 0.125
  %10176 = vst [vmem:[#allocation3] sm:$0xff] %v10174
  %10177 = vst [vmem:[#allocation3 + $0x8] sm:$0xff] %v10175
  %v10178 = vld [vmem:[#allocation3] sm:$0xff]
  %v10179 = vld [vmem:[#allocation3 + $0x8] sm:$0xff]
  %v10180 = vld [vmem:[#allocation3 + $0x10] sm:$0xff]
  %v10181 = vld [vmem:[#allocation3 + $0x18] sm:$0xff]
  %v10182 = vld [vmem:[%s4] sm:$0xff]
  %v10183 = vld [vmem:[%s4 + $0x8] sm:$0xff]
  %v10184 = vld [vmem:[%s4 + $0x10] sm:$0xff]
  %v10185 = vld [vmem:[%s4 + $0x18] sm:$0xff]
  %v10186 = vld [vmem:[%s4 + $0x20] sm:$0xff]
  %v10187 = vld [vmem:[%s4 + $0x28] sm:$0xff]
  %v10188 = vld [vmem:[%s4 + $0x30] sm:$0xff]
  %v10189 = vld [vmem:[%s4 + $0x38] sm:$0xff]
  %v10190 = vld [vmem:[%s4 + $0x40] sm:$0xff]
  %v10191 = vld [vmem:[%s4 + $0x48] sm:$0xff]
  %v10192 = vld [vmem:[%s4 + $0x50] sm:$0xff]
  %v10193 = vld [vmem:[%s4 + $0x58] sm:$0xff]
  %v10194 = vld [vmem:[%s4 + $0x60] sm:$0xff]
  %v10195 = vld [vmem:[%s4 + $0x68] sm:$0xff]
  %v10196 = vld [vmem:[%s4 + $0x70] sm:$0xff]
  %v10197 = vld [vmem:[%s4 + $0x78] sm:$0xff]
  %v10198 = vld [vmem:[%s4 + $0x80] sm:$0xff]
  %v10199 = vld [vmem:[%s4 + $0x88] sm:$0xff]
  %v10200 = vld [vmem:[%s4 + $0x90] sm:$0xff]
  %v10201 = vld [vmem:[%s4 + $0x98] sm:$0xff]
  %v10202 = vld [vmem:[%s4 + $0xa0] sm:$0xff]
  %v10203 = vld [vmem:[%s4 + $0xa8] sm:$0xff]
  %v10204 = vld [vmem:[%s4 + $0xb0] sm:$0xff]
  %v10205 = vld [vmem:[%s4 + $0xb8] sm:$0xff]
  %v10206 = vld [vmem:[%s4 + $0xc0] sm:$0xff]
  %v10207 = vld [vmem:[%s4 + $0xc8] sm:$0xff]
  %v10208 = vld [vmem:[%s4 + $0xd0] sm:$0xff]
  %v10209 = vld [vmem:[%s4 + $0xd8] sm:$0xff]
  %v10210 = vld [vmem:[%s4 + $0xe0] sm:$0xff]
  %v10211 = vld [vmem:[%s4 + $0xe8] sm:$0xff]
  %v10212 = vld [vmem:[%s4 + $0xf0] sm:$0xff]
  %v10213 = vld [vmem:[%s4 + $0xf8] sm:$0xff]
  %v10214 = vld [vmem:[%s4 + $0x100] sm:$0xff]
  %v10215 = vld [vmem:[%s4 + $0x108] sm:$0xff]
  %v10216 = vld [vmem:[%s4 + $0x110] sm:$0xff]
  %v10217 = vld [vmem:[%s4 + $0x118] sm:$0xff]
  %v10218 = vld [vmem:[%s4 + $0x120] sm:$0xff]
  %v10219 = vld [vmem:[%s4 + $0x128] sm:$0xff]
  %v10220 = vld [vmem:[%s4 + $0x130] sm:$0xff]
  %v10221 = vld [vmem:[%s4 + $0x138] sm:$0xff]
  %v10222 = vld [vmem:[%s4 + $0x140] sm:$0xff]
  %v10223 = vld [vmem:[%s4 + $0x148] sm:$0xff]
  %v10224 = vld [vmem:[%s4 + $0x150] sm:$0xff]
  %v10225 = vld [vmem:[%s4 + $0x158] sm:$0xff]
  %v10226 = vld [vmem:[%s4 + $0x160] sm:$0xff]
  %v10227 = vld [vmem:[%s4 + $0x168] sm:$0xff]
  %v10228 = vld [vmem:[%s4 + $0x170] sm:$0xff]
  %v10229 = vld [vmem:[%s4 + $0x178] sm:$0xff]
  %v10230 = vld [vmem:[%s4 + $0x180] sm:$0xff]
  %v10231 = vld [vmem:[%s4 + $0x188] sm:$0xff]
  %v10232 = vld [vmem:[%s4 + $0x190] sm:$0xff]
  %v10233 = vld [vmem:[%s4 + $0x198] sm:$0xff]
  %v10234 = vld [vmem:[%s4 + $0x1a0] sm:$0xff]
  %v10235 = vld [vmem:[%s4 + $0x1a8] sm:$0xff]
  %v10236 = vld [vmem:[%s4 + $0x1b0] sm:$0xff]
  %v10237 = vld [vmem:[%s4 + $0x1b8] sm:$0xff]
  %v10238 = vld [vmem:[%s4 + $0x1c0] sm:$0xff]
  %v10239 = vld [vmem:[%s4 + $0x1c8] sm:$0xff]
  %v10240 = vld [vmem:[%s4 + $0x1d0] sm:$0xff]
  %v10241 = vld [vmem:[%s4 + $0x1d8] sm:$0xff]
  %v10242 = vld [vmem:[%s4 + $0x1e0] sm:$0xff]
  %v10243 = vld [vmem:[%s4 + $0x1e8] sm:$0xff]
  %v10244 = vld [vmem:[%s4 + $0x1f0] sm:$0xff]
  %v10245 = vld [vmem:[%s4 + $0x1f8] sm:$0xff]
  %v10246 = vld [vmem:[%s5] sm:$0x1]
  %v10248 = vperm.slane %v10246, 0
  %10250 = vmatpush.msra.mxu0 %v10197
  %10251 = vmatpush.msra.mxu0 %v10196
  %10252 = vmatpush.msra.mxu0 %v10195
  %10253 = vmatpush.msra.mxu0 %v10194
  %10254 = vmatpush.msra.mxu0 %v10193
  %10255 = vmatpush.msra.mxu0 %v10192
  %10256 = vmatpush.msra.mxu0 %v10191
  %10257 = vmatpush.msra.mxu0 %v10190
  %10258 = vmatpush.msra.mxu0 %v10189
  %10259 = vmatpush.msra.mxu0 %v10188
  %10260 = vmatpush.msra.mxu0 %v10187
  %10261 = vmatpush.msra.mxu0 %v10186
  %10262 = vmatpush.msra.mxu0 %v10185
  %10263 = vmatpush.msra.mxu0 %v10184
  %10264 = vmatpush.msra.mxu0 %v10183
  %10265 = vmatpush.msra.mxu0 %v10182
  %10266 = vmatmul.f32.gmra.mxu0 %v10178
  %v10267 = vpop.f32.mrf.mxu0
  %v10268 = vadd.f32 %v10248, %v10267
  %10269 = vdwg.mxu0
  %10270 = vmatpush.msra.mxu0 %v10213
  %10271 = vmatpush.msra.mxu0 %v10212
  %10272 = vmatpush.msra.mxu0 %v10211
  %10273 = vmatpush.msra.mxu0 %v10210
  %10274 = vmatpush.msra.mxu0 %v10209
  %10275 = vmatpush.msra.mxu0 %v10208
  %10276 = vmatpush.msra.mxu0 %v10207
  %10277 = vmatpush.msra.mxu0 %v10206
  %10278 = vmatpush.msra.mxu0 %v10205
  %10279 = vmatpush.msra.mxu0 %v10204
  %10280 = vmatpush.msra.mxu0 %v10203
  %10281 = vmatpush.msra.mxu0 %v10202
  %10282 = vmatpush.msra.mxu0 %v10201
  %10283 = vmatpush.msra.mxu0 %v10200
  %10284 = vmatpush.msra.mxu0 %v10199
  %10285 = vmatpush.msra.mxu0 %v10198
  %10286 = vmatmul.f32.gmra.mxu0 %v10179
  %v10287 = vpop.f32.mrf.mxu0
  %v10288 = vadd.f32 %v10268, %v10287
  %10289 = vdwg.mxu0
  %10290 = vmatpush.msra.mxu0 %v10229
  %10291 = vmatpush.msra.mxu0 %v10228
  %10292 = vmatpush.msra.mxu0 %v10227
  %10293 = vmatpush.msra.mxu0 %v10226
  %10294 = vmatpush.msra.mxu0 %v10225
  %10295 = vmatpush.msra.mxu0 %v10224
  %10296 = vmatpush.msra.mxu0 %v10223
  %10297 = vmatpush.msra.mxu0 %v10222
  %10298 = vmatpush.msra.mxu0 %v10221
  %10299 = vmatpush.msra.mxu0 %v10220
  %10300 = vmatpush.msra.mxu0 %v10219
  %10301 = vmatpush.msra.mxu0 %v10218
  %10302 = vmatpush.msra.mxu0 %v10217
  %10303 = vmatpush.msra.mxu0 %v10216
  %10304 = vmatpush.msra.mxu0 %v10215
  %10305 = vmatpush.msra.mxu0 %v10214
  %10306 = vmatmul.f32.gmra.mxu0 %v10180
  %v10307 = vpop.f32.mrf.mxu0
  %v10308 = vadd.f32 %v10288, %v10307
  %10309 = vdwg.mxu0
  %10310 = vmatpush.msra.mxu0 %v10245
  %10311 = vmatpush.msra.mxu0 %v10244
  %10312 = vmatpush.msra.mxu0 %v10243
  %10313 = vmatpush.msra.mxu0 %v10242
  %10314 = vmatpush.msra.mxu0 %v10241
  %10315 = vmatpush.msra.mxu0 %v10240
  %10316 = vmatpush.msra.mxu0 %v10239
  %10317 = vmatpush.msra.mxu0 %v10238
  %10318 = vmatpush.msra.mxu0 %v10237
  %10319 = vmatpush.msra.mxu0 %v10236
  %10320 = vmatpush.msra.mxu0 %v10235
  %10321 = vmatpush.msra.mxu0 %v10234
  %10322 = vmatpush.msra.mxu0 %v10233
  %10323 = vmatpush.msra.mxu0 %v10232
  %10324 = vmatpush.msra.mxu0 %v10231
  %10325 = vmatpush.msra.mxu0 %v10230
  %10326 = vmatmul.f32.gmra.mxu0 %v10181
  %v10327 = vpop.f32.mrf.mxu0
  %v10328 = vadd.f32 %v10308, %v10327
  %10329 = vdwg.mxu0
  %v10330 = vmax.f32 %v10328, 0.0
  %v10331 = vld [vmem:[%s6] sm:$0xff]
  %v10332 = vld [vmem:[%s6 + $0x8] sm:$0xff]
  %v10333 = vld [vmem:[%s6 + $0x10] sm:$0xff]
  %v10334 = vld [vmem:[%s6 + $0x18] sm:$0xff]
  %v10335 = vld [vmem:[%s6 + $0x20] sm:$0xff]
  %v10336 = vld [vmem:[%s6 + $0x28] sm:$0xff]
  %v10337 = vld [vmem:[%s6 + $0x30] sm:$0xff]
  %v10338 = vld [vmem:[%s6 + $0x38] sm:$0xff]
  %v10339 = vld [vmem:[%s6 + $0x40] sm:$0xff]
  %v10340 = vld [vmem:[%s6 + $0x48] sm:$0xff]
  %v10341 = vld [vmem:[%s6 + $0x50] sm:$0xff]
  %v10342 = vld [vmem:[%s6 + $0x58] sm:$0xff]
  %v10343 = vld [vmem:[%s6 + $0x60] sm:$0xff]
  %v10344 = vld [vmem:[%s6 + $0x68] sm:$0xff]
  %v10345 = vld [vmem:[%s6 + $0x70] sm:$0xff]
  %v10346 = vld [vmem:[%s6 + $0x78] sm:$0xff]
  %v10347 = vld [vmem:[%s7] sm:$0x1]
  %v10349 = vperm.slane %v10347, 0
  %10351 = vmatpush.msra.mxu0 %v10346
  %10352 = vmatpush.msra.mxu0 %v10345
  %10353 = vmatpush.msra.mxu0 %v10344
  %10354 = vmatpush.msra.mxu0 %v10343
  %10355 = vmatpush.msra.mxu0 %v10342
  %10356 = vmatpush.msra.mxu0 %v10341
  %10357 = vmatpush.msra.mxu0 %v10340
  %10358 = vmatpush.msra.mxu0 %v10339
  %10359 = vmatpush.msra.mxu0 %v10338
  %10360 = vmatpush.msra.mxu0 %v10337
  %10361 = vmatpush.msra.mxu0 %v10336
  %10362 = vmatpush.msra.mxu0 %v10335
  %10363 = vmatpush.msra.mxu0 %v10334
  %10364 = vmatpush.msra.mxu0 %v10333
  %10365 = vmatpush.msra.mxu0 %v10332
  %10366 = vmatpush.msra.mxu0 %v10331
  %10367 = vmatmul.f32.gmra.mxu0 %v10330
  %v10368 = vpop.f32.mrf.mxu0
  %v10369 = vadd.f32 %v10349, %v10368
  %10370 = vdwg.mxu0
  %10371 = vst [vmem:[%s8] sm:$0xff] %v10369
  // Predicated region
  $region34: #{bilstm_forward.1} parent=0 // pred_check
    _
  $region35: #{bilstm_forward.1} parent=0 // pred_check_branch
    %10373 = sbr.rel (0) target = $region37
  $region36: #{bilstm_forward.1} parent=0 // pred_region
    _
  $region37: #{bilstm_forward.1} parent=0 // pred_fallthru
    _
  // Predicated region
  $region38: #{bilstm_forward.1} parent=0 // pred_check
    _
  $region39: #{bilstm_forward.1} parent=0 // pred_check_branch
    %10375 = sbr.rel (0) target = $region41
  $region40: #{bilstm_forward.1} parent=0 // pred_region
    _
  $region41: #{bilstm_forward.1} parent=0 // pred_fallthru
    _

</llo_original>
